<compile_context>
chip_gen: v7x
topology: tpu7x:2x2x1
jax: 0.10.0
libtpu: 0.0.40
codegen_flags: <defaults>
</compile_context>

<pallas_src>
import functools
import math

import jax
import jax.numpy as jnp
from jax.experimental import pallas as pl
from jax.experimental.pallas import tpu as pltpu

# Small DistilBERT-ish config for the demo run.
BS = 2
SEQ = 8
DIM = 32
N_HEADS = 4
DH = DIM // N_HEADS

# MXU operand dtype. Kept f32 here so the small-shape accuracy check stays tight.
# On v6e/v7x at production shapes (dim=768) set to jnp.bfloat16: accumulation stays
# f32 via preferred_element_type and the softmax math stays f32 on the VPU/EUP.
MATMUL_DTYPE = jnp.float32


def _mha_kernel(q_ref, k_ref, v_ref, bias_ref,
                wq_ref, bq_ref, wk_ref, bk_ref, wv_ref, bv_ref, wo_ref, bo_ref,
                out_ref, *, n_heads):
    """Whole batch in one grid step.

    q_ref/k_ref/v_ref : (bs*q_len, dim) / (bs*kv_len, dim) activations
    bias_ref          : (bs, 1, kv_len) additive mask bias (0 or -1e9), f32
    w*_ref            : (dim, dim) projection weights, (in, out) layout;
                        q weight/bias pre-scaled by 1/sqrt(dh)
    b*_ref            : (1, dim)
    out_ref           : (bs*q_len, dim)
    """
    bs = bias_ref.shape[0]
    kv_len = bias_ref.shape[2]
    rows, dim = q_ref.shape
    q_len = rows // bs
    dh = dim // n_heads

    # --- QKV projections: three (rows, dim) x (dim, dim) MXU matmuls, f32 accum.
    q2 = jnp.dot(q_ref[...].astype(MATMUL_DTYPE), wq_ref[...],
                 preferred_element_type=jnp.float32) + bq_ref[...]
    k2 = jnp.dot(k_ref[...].astype(MATMUL_DTYPE), wk_ref[...],
                 preferred_element_type=jnp.float32) + bk_ref[...]
    v2 = jnp.dot(v_ref[...].astype(MATMUL_DTYPE), wv_ref[...],
                 preferred_element_type=jnp.float32) + bv_ref[...]

    # Free major-dim splits to (bs, len, dim) for batched-over-batch attention.
    q3 = q2.reshape(bs, q_len, dim)
    k3 = k2.reshape(bs, kv_len, dim)
    v3 = v2.reshape(bs, kv_len, dim)

    # Mask bias broadcast hoisted out of the head loop (single broadcast_in_dim).
    bias = jnp.broadcast_to(bias_ref[...], (bs, q_len, kv_len))

    wo = wo_ref[...]                                    # (dim, dim), loaded once

    # Head loop: contractions batched over the whole batch; head merge folded
    # directly into the output projection accumulator (no ctx scratch).
    out = jnp.zeros((rows, dim), jnp.float32)
    for h in range(n_heads):                            # static, short unroll
        c0 = h * dh
        q_h = q3[:, :, c0:c0 + dh]                      # (bs, q, dh), pre-scaled
        k_h = k3[:, :, c0:c0 + dh]                      # (bs, kv, dh)
        v_h = v3[:, :, c0:c0 + dh]                      # (bs, kv, dh)

        scores = jnp.einsum('bqd,bkd->bqk', q_h, k_h,
                            preferred_element_type=jnp.float32) + bias

        # Softmax over the key axis -- exact normalization (no approx reciprocal).
        m = jnp.max(scores, axis=-1, keepdims=True)
        p = jnp.exp(scores - m)
        w = p * pl.reciprocal(jnp.sum(p, axis=-1, keepdims=True), approx=False)
        # TODO(synk): attention dropout is identity at inference; no RNG applied.

        ctx_h = jnp.einsum('bqk,bkd->bqd',
                           w.astype(MATMUL_DTYPE), v_h.astype(MATMUL_DTYPE),
                           preferred_element_type=jnp.float32)   # (bs, q, dh)

        # out_lin applied per head: wo row-slice is sublane-aligned (multiple of 8).
        out = out + jnp.dot(ctx_h.reshape(rows, dh).astype(MATMUL_DTYPE),
                            wo[c0:c0 + dh, :],
                            preferred_element_type=jnp.float32)

    out_ref[...] = (out + bo_ref[...]).astype(out_ref.dtype)


def prepare_attention_params(params, n_heads=N_HEADS):
    """One-time (model-init) weight preprocessing -- keep out of the per-call path.

    Transposes PyTorch (out, in) Linear weights to (in, out), folds 1/sqrt(dh) into
    the q projection, reshapes biases to (1, dim).
    """
    wq, bq, wk, bk, wv, bv, wo, bo = params
    dim = wq.shape[0]
    scale = 1.0 / math.sqrt(dim // n_heads)
    return (
        (wq.T * scale).astype(MATMUL_DTYPE),
        (bq * scale).reshape(1, dim).astype(jnp.float32),
        wk.T.astype(MATMUL_DTYPE), bk.reshape(1, dim).astype(jnp.float32),
        wv.T.astype(MATMUL_DTYPE), bv.reshape(1, dim).astype(jnp.float32),
        wo.T.astype(MATMUL_DTYPE), bo.reshape(1, dim).astype(jnp.float32),
    )


def multi_head_self_attention(query, key, value, mask, prepared, n_heads=N_HEADS):
    """Returns (context,) with context: (bs, q_len, dim)."""
    bs, q_len, dim = query.shape
    kv_len = key.shape[1]
    wq_t, bq, wk_t, bk, wv_t, bv, wo_t, bo = prepared

    q2d = query.reshape(bs * q_len, dim)
    k2d = key.reshape(bs * kv_len, dim)
    v2d = value.reshape(bs * kv_len, dim)

    # Finite additive mask bias (0 = attend, -1e9 = masked), shaped (bs, 1, kv_len).
    # TODO(synk): fully-masked rows give a uniform attention row here, whereas the
    # PyTorch -inf path yields NaN; DistilBERT never feeds fully-masked rows.
    bias = jnp.where(mask == 0, -1e9, 0.0).astype(jnp.float32).reshape(bs, 1, kv_len)

    def full(shape):
        return pl.BlockSpec(shape, lambda i: (0,) * len(shape))

    kernel = functools.partial(_mha_kernel, n_heads=n_heads)

    out2d = pl.pallas_call(
        kernel,
        out_shape=jax.ShapeDtypeStruct((bs * q_len, dim), query.dtype),
        grid_spec=pltpu.PrefetchScalarGridSpec(
            num_scalar_prefetch=0,
            # Single step: whole problem is VMEM-resident at these shapes
            # (review: keep single-step on v5e/v6e; on v7x split over batch and
            # mark "parallel" to use both TensorCores).
            grid=(1,),
            in_specs=[full((bs * q_len, dim)),
                      full((bs * kv_len, dim)),
                      full((bs * kv_len, dim)),
                      full((bs, 1, kv_len)),
                      full((dim, dim)), full((1, dim)),
                      full((dim, dim)), full((1, dim)),
                      full((dim, dim)), full((1, dim)),
                      full((dim, dim)), full((1, dim))],
            out_specs=full((bs * q_len, dim)),
        ),
        compiler_params=pltpu.CompilerParams(
            dimension_semantics=("arbitrary",)),
    )(q2d, k2d, v2d, bias, wq_t, bq, wk_t, bk, wv_t, bv, wo_t, bo)

    return (out2d.reshape(bs, q_len, dim),)


def _reference(query, key, value, mask, params):
    """Pure-JAX reference mirroring the PyTorch forward."""
    wq, bq, wk, bk, wv, bv, wo, bo = params
    bs, s, d = query.shape
    dh = d // N_HEADS

    def lin(x, w, b):
        return x @ w.T + b

    def shape(x):  # (bs, s, d) -> (bs, H, s, dh)
        return x.reshape(bs, s, N_HEADS, dh).transpose(0, 2, 1, 3)

    q = shape(lin(query, wq, bq)) / math.sqrt(dh)
    k = shape(lin(key, wk, bk))
    v = shape(lin(value, wv, bv))
    scores = jnp.einsum("bhqd,bhkd->bhqk", q, k)
    neg = (mask == 0).reshape(bs, 1, 1, s)
    scores = jnp.where(neg, -jnp.inf, scores)
    weights = jax.nn.softmax(scores, axis=-1)
    ctx = jnp.einsum("bhqk,bhkd->bhqd", weights, v)
    ctx = ctx.transpose(0, 2, 1, 3).reshape(bs, s, d)
    return lin(ctx, wo, bo)


if __name__ == "__main__":
    jax.config.update("jax_default_matmul_precision", "highest")

    key0 = jax.random.PRNGKey(0)
    keys = jax.random.split(key0, 12)

    # Deterministic synthetic parameters (PyTorch Linear layout: (out, in))
    winit = lambda k: (jax.random.normal(k, (DIM, DIM), jnp.float32) * 0.05)
    binit = lambda k: (jax.random.normal(k, (DIM,), jnp.float32) * 0.01)
    params = (winit(keys[0]), binit(keys[1]),   # q_lin
              winit(keys[2]), binit(keys[3]),   # k_lin
              winit(keys[4]), binit(keys[5]),   # v_lin
              winit(keys[6]), binit(keys[7]))   # out_lin

    query = jax.random.normal(keys[8], (BS, SEQ, DIM), jnp.float32)
    key_in = jax.random.normal(keys[9], (BS, SEQ, DIM), jnp.float32)
    value = jax.random.normal(keys[10], (BS, SEQ, DIM), jnp.float32)

    # attention mask: 1 = attend, 0 = masked (pad last 2 positions of batch 1)
    mask = jnp.ones((BS, SEQ), jnp.int32).at[1, -2:].set(0)

    prepared = prepare_attention_params(params)      # init-time, not per-call
    (context,) = multi_head_self_attention(query, key_in, value, mask, prepared)
    context = jax.block_until_ready(context)

    ref = _reference(query, key_in, value, mask, params)
    assert context.shape == (BS, SEQ, DIM)
    assert not bool(jnp.any(jnp.isnan(context))), "NaNs in kernel output"
    # Exact softmax normalization -> tighter tolerance than the previous version.
    assert jnp.allclose(context, ref, atol=2e-3, rtol=2e-3), "mismatch vs reference"

    print("KERNEL_OK")
</pallas_src>

<mosaic_0001>
module attributes {stable_mosaic.version = 11 : i64} {
  func.func @_mha_kernel(%arg0: i32, %arg1: memref<16x32xf32, #tpu.memory_space<vmem>>, %arg2: memref<16x32xf32, #tpu.memory_space<vmem>>, %arg3: memref<16x32xf32, #tpu.memory_space<vmem>>, %arg4: memref<2x1x8xf32, #tpu.memory_space<vmem>>, %arg5: memref<32x32xf32, #tpu.memory_space<vmem>>, %arg6: memref<1x32xf32, #tpu.memory_space<vmem>>, %arg7: memref<32x32xf32, #tpu.memory_space<vmem>>, %arg8: memref<1x32xf32, #tpu.memory_space<vmem>>, %arg9: memref<32x32xf32, #tpu.memory_space<vmem>>, %arg10: memref<1x32xf32, #tpu.memory_space<vmem>>, %arg11: memref<32x32xf32, #tpu.memory_space<vmem>>, %arg12: memref<1x32xf32, #tpu.memory_space<vmem>>, %arg13: memref<16x32xf32, #tpu.memory_space<vmem>>) attributes {dimension_semantics = [#tpu.dimension_semantics<arbitrary>], iteration_bounds = array<i64: 1>, scalar_prefetch = 0 : i64, scratch_operands = 0 : i64, tpu.core_type = #tpu.core_type<tc>, window_params = [{pipeline_mode = #tpu.pipeline_mode<synchronous>, transform_indices = @transform_0, window_bounds = array<i64: 16, 32>}, {pipeline_mode = #tpu.pipeline_mode<synchronous>, transform_indices = @transform_1, window_bounds = array<i64: 16, 32>}, {pipeline_mode = #tpu.pipeline_mode<synchronous>, transform_indices = @transform_2, window_bounds = array<i64: 16, 32>}, {pipeline_mode = #tpu.pipeline_mode<synchronous>, transform_indices = @transform_3, window_bounds = array<i64: 2, 1, 8>}, {pipeline_mode = #tpu.pipeline_mode<synchronous>, transform_indices = @transform_4, window_bounds = array<i64: 32, 32>}, {pipeline_mode = #tpu.pipeline_mode<synchronous>, transform_indices = @transform_5, window_bounds = array<i64: 1, 32>}, {pipeline_mode = #tpu.pipeline_mode<synchronous>, transform_indices = @transform_6, window_bounds = array<i64: 32, 32>}, {pipeline_mode = #tpu.pipeline_mode<synchronous>, transform_indices = @transform_7, window_bounds = array<i64: 1, 32>}, {pipeline_mode = #tpu.pipeline_mode<synchronous>, transform_indices = @transform_8, window_bounds = array<i64: 32, 32>}, {pipeline_mode = #tpu.pipeline_mode<synchronous>, transform_indices = @transform_9, window_bounds = array<i64: 1, 32>}, {pipeline_mode = #tpu.pipeline_mode<synchronous>, transform_indices = @transform_10, window_bounds = array<i64: 32, 32>}, {pipeline_mode = #tpu.pipeline_mode<synchronous>, transform_indices = @transform_11, window_bounds = array<i64: 1, 32>}, {pipeline_mode = #tpu.pipeline_mode<synchronous>, transform_indices = @transform_12, window_bounds = array<i64: 16, 32>}]} {
    %c0 = arith.constant 0 : index
    %c0_0 = arith.constant 0 : index
    %0 = vector.load %arg1[%c0, %c0_0] : memref<16x32xf32, #tpu.memory_space<vmem>>, vector<16x32xf32>
    %c0_1 = arith.constant 0 : index
    %c0_2 = arith.constant 0 : index
    %1 = vector.load %arg5[%c0_1, %c0_2] : memref<32x32xf32, #tpu.memory_space<vmem>>, vector<32x32xf32>
    %cst = arith.constant dense<0.000000e+00> : vector<16x32xf32>
    %2 = tpu.matmul %0, %1, %cst {dimension_numbers = #tpu.dot_dimension_numbers<[1], [0], [0], [1], [0, 0, 1, 1], [], []>, precision = #tpu.contract_precision<fp32>} : vector<16x32xf32>, vector<32x32xf32>, vector<16x32xf32> -> vector<16x32xf32>
    %c0_3 = arith.constant 0 : index
    %c0_4 = arith.constant 0 : index
    %3 = vector.load %arg6[%c0_3, %c0_4] : memref<1x32xf32, #tpu.memory_space<vmem>>, vector<1x32xf32>
    %4 = vector.broadcast %3 : vector<1x32xf32> to vector<16x32xf32>
    %5 = arith.addf %2, %4 : vector<16x32xf32>
    %c0_5 = arith.constant 0 : index
    %c0_6 = arith.constant 0 : index
    %6 = vector.load %arg2[%c0_5, %c0_6] : memref<16x32xf32, #tpu.memory_space<vmem>>, vector<16x32xf32>
    %c0_7 = arith.constant 0 : index
    %c0_8 = arith.constant 0 : index
    %7 = vector.load %arg7[%c0_7, %c0_8] : memref<32x32xf32, #tpu.memory_space<vmem>>, vector<32x32xf32>
    %cst_9 = arith.constant dense<0.000000e+00> : vector<16x32xf32>
    %8 = tpu.matmul %6, %7, %cst_9 {dimension_numbers = #tpu.dot_dimension_numbers<[1], [0], [0], [1], [0, 0, 1, 1], [], []>, precision = #tpu.contract_precision<fp32>} : vector<16x32xf32>, vector<32x32xf32>, vector<16x32xf32> -> vector<16x32xf32>
    %c0_10 = arith.constant 0 : index
    %c0_11 = arith.constant 0 : index
    %9 = vector.load %arg8[%c0_10, %c0_11] : memref<1x32xf32, #tpu.memory_space<vmem>>, vector<1x32xf32>
    %10 = vector.broadcast %9 : vector<1x32xf32> to vector<16x32xf32>
    %11 = arith.addf %8, %10 : vector<16x32xf32>
    %c0_12 = arith.constant 0 : index
    %c0_13 = arith.constant 0 : index
    %12 = vector.load %arg3[%c0_12, %c0_13] : memref<16x32xf32, #tpu.memory_space<vmem>>, vector<16x32xf32>
    %c0_14 = arith.constant 0 : index
    %c0_15 = arith.constant 0 : index
    %13 = vector.load %arg9[%c0_14, %c0_15] : memref<32x32xf32, #tpu.memory_space<vmem>>, vector<32x32xf32>
    %cst_16 = arith.constant dense<0.000000e+00> : vector<16x32xf32>
    %14 = tpu.matmul %12, %13, %cst_16 {dimension_numbers = #tpu.dot_dimension_numbers<[1], [0], [0], [1], [0, 0, 1, 1], [], []>, precision = #tpu.contract_precision<fp32>} : vector<16x32xf32>, vector<32x32xf32>, vector<16x32xf32> -> vector<16x32xf32>
    %c0_17 = arith.constant 0 : index
    %c0_18 = arith.constant 0 : index
    %15 = vector.load %arg10[%c0_17, %c0_18] : memref<1x32xf32, #tpu.memory_space<vmem>>, vector<1x32xf32>
    %16 = vector.broadcast %15 : vector<1x32xf32> to vector<16x32xf32>
    %17 = arith.addf %14, %16 : vector<16x32xf32>
    %18 = vector.shape_cast %5 : vector<16x32xf32> to vector<2x8x32xf32>
    %19 = vector.shape_cast %11 : vector<16x32xf32> to vector<2x8x32xf32>
    %20 = vector.shape_cast %17 : vector<16x32xf32> to vector<2x8x32xf32>
    %c0_19 = arith.constant 0 : index
    %c0_20 = arith.constant 0 : index
    %c0_21 = arith.constant 0 : index
    %21 = vector.load %arg4[%c0_19, %c0_20, %c0_21] : memref<2x1x8xf32, #tpu.memory_space<vmem>>, vector<2x1x8xf32>
    %22 = vector.shape_cast %21 : vector<2x1x8xf32> to vector<2x1x8xf32>
    %23 = vector.broadcast %22 : vector<2x1x8xf32> to vector<2x8x8xf32>
    %c0_22 = arith.constant 0 : index
    %c0_23 = arith.constant 0 : index
    %24 = vector.load %arg11[%c0_22, %c0_23] : memref<32x32xf32, #tpu.memory_space<vmem>>, vector<32x32xf32>
    %cst_24 = arith.constant 0.000000e+00 : f32
    %25 = vector.broadcast %cst_24 : f32 to vector<16x32xf32>
    %26 = vector.extract_strided_slice %18 {offsets = [0, 0, 0], sizes = [2, 8, 8], strides = [1, 1, 1]} : vector<2x8x32xf32> to vector<2x8x8xf32>
    %27 = vector.extract_strided_slice %19 {offsets = [0, 0, 0], sizes = [2, 8, 8], strides = [1, 1, 1]} : vector<2x8x32xf32> to vector<2x8x8xf32>
    %28 = vector.extract_strided_slice %20 {offsets = [0, 0, 0], sizes = [2, 8, 8], strides = [1, 1, 1]} : vector<2x8x32xf32> to vector<2x8x8xf32>
    "tpu.trace_start"() <{level = 10 : i32, message = "bqd,bkd->bqk"}> : () -> ()
    %cst_25 = arith.constant dense<0.000000e+00> : vector<2x8x8xf32>
    %29 = tpu.matmul %26, %27, %cst_25 {dimension_numbers = #tpu.dot_dimension_numbers<[2], [2], [1], [1], [0, 0, 0, 1, 1, 1], [0], [0]>, precision = #tpu.contract_precision<fp32>} : vector<2x8x8xf32>, vector<2x8x8xf32>, vector<2x8x8xf32> -> vector<2x8x8xf32>
    "tpu.trace_stop"() : () -> ()
    %30 = arith.addf %29, %23 : vector<2x8x8xf32>
    %cst_26 = arith.constant dense<0xFF800000> : vector<2x8xf32>
    %31 = vector.multi_reduction <maximumf>, %30, %cst_26 [2] : vector<2x8x8xf32> to vector<2x8xf32>
    %32 = vector.shape_cast %31 : vector<2x8xf32> to vector<2x8x1xf32>
    %33 = vector.broadcast %32 : vector<2x8x1xf32> to vector<2x8x8xf32>
    %34 = arith.subf %30, %33 : vector<2x8x8xf32>
    %35 = math.exp %34 : vector<2x8x8xf32>
    %cst_27 = arith.constant dense<0.000000e+00> : vector<2x8xf32>
    %36 = vector.multi_reduction <add>, %35, %cst_27 [2] : vector<2x8x8xf32> to vector<2x8xf32>
    %37 = vector.shape_cast %36 : vector<2x8xf32> to vector<2x8x1xf32>
    %38 = tpu.reciprocal %37 : vector<2x8x1xf32> -> vector<2x8x1xf32>
    %39 = vector.broadcast %38 : vector<2x8x1xf32> to vector<2x8x8xf32>
    %40 = arith.mulf %35, %39 : vector<2x8x8xf32>
    "tpu.trace_start"() <{level = 10 : i32, message = "bqk,bkd->bqd"}> : () -> ()
    %cst_28 = arith.constant dense<0.000000e+00> : vector<2x8x8xf32>
    %41 = tpu.matmul %40, %28, %cst_28 {dimension_numbers = #tpu.dot_dimension_numbers<[2], [1], [1], [2], [0, 0, 0, 1, 1, 2], [0], [0]>, precision = #tpu.contract_precision<fp32>} : vector<2x8x8xf32>, vector<2x8x8xf32>, vector<2x8x8xf32> -> vector<2x8x8xf32>
    "tpu.trace_stop"() : () -> ()
    %42 = vector.shape_cast %41 : vector<2x8x8xf32> to vector<16x8xf32>
    %43 = vector.extract_strided_slice %24 {offsets = [0, 0], sizes = [8, 32], strides = [1, 1]} : vector<32x32xf32> to vector<8x32xf32>
    %cst_29 = arith.constant dense<0.000000e+00> : vector<16x32xf32>
    %44 = tpu.matmul %42, %43, %cst_29 {dimension_numbers = #tpu.dot_dimension_numbers<[1], [0], [0], [1], [0, 0, 1, 1], [], []>, precision = #tpu.contract_precision<fp32>} : vector<16x8xf32>, vector<8x32xf32>, vector<16x32xf32> -> vector<16x32xf32>
    %45 = arith.addf %25, %44 : vector<16x32xf32>
    %46 = vector.extract_strided_slice %18 {offsets = [0, 0, 8], sizes = [2, 8, 8], strides = [1, 1, 1]} : vector<2x8x32xf32> to vector<2x8x8xf32>
    %47 = vector.extract_strided_slice %19 {offsets = [0, 0, 8], sizes = [2, 8, 8], strides = [1, 1, 1]} : vector<2x8x32xf32> to vector<2x8x8xf32>
    %48 = vector.extract_strided_slice %20 {offsets = [0, 0, 8], sizes = [2, 8, 8], strides = [1, 1, 1]} : vector<2x8x32xf32> to vector<2x8x8xf32>
    "tpu.trace_start"() <{level = 10 : i32, message = "bqd,bkd->bqk"}> : () -> ()
    %cst_30 = arith.constant dense<0.000000e+00> : vector<2x8x8xf32>
    %49 = tpu.matmul %46, %47, %cst_30 {dimension_numbers = #tpu.dot_dimension_numbers<[2], [2], [1], [1], [0, 0, 0, 1, 1, 1], [0], [0]>, precision = #tpu.contract_precision<fp32>} : vector<2x8x8xf32>, vector<2x8x8xf32>, vector<2x8x8xf32> -> vector<2x8x8xf32>
    "tpu.trace_stop"() : () -> ()
    %50 = arith.addf %49, %23 : vector<2x8x8xf32>
    %cst_31 = arith.constant dense<0xFF800000> : vector<2x8xf32>
    %51 = vector.multi_reduction <maximumf>, %50, %cst_31 [2] : vector<2x8x8xf32> to vector<2x8xf32>
    %52 = vector.shape_cast %51 : vector<2x8xf32> to vector<2x8x1xf32>
    %53 = vector.broadcast %52 : vector<2x8x1xf32> to vector<2x8x8xf32>
    %54 = arith.subf %50, %53 : vector<2x8x8xf32>
    %55 = math.exp %54 : vector<2x8x8xf32>
    %cst_32 = arith.constant dense<0.000000e+00> : vector<2x8xf32>
    %56 = vector.multi_reduction <add>, %55, %cst_32 [2] : vector<2x8x8xf32> to vector<2x8xf32>
    %57 = vector.shape_cast %56 : vector<2x8xf32> to vector<2x8x1xf32>
    %58 = tpu.reciprocal %57 : vector<2x8x1xf32> -> vector<2x8x1xf32>
    %59 = vector.broadcast %58 : vector<2x8x1xf32> to vector<2x8x8xf32>
    %60 = arith.mulf %55, %59 : vector<2x8x8xf32>
    "tpu.trace_start"() <{level = 10 : i32, message = "bqk,bkd->bqd"}> : () -> ()
    %cst_33 = arith.constant dense<0.000000e+00> : vector<2x8x8xf32>
    %61 = tpu.matmul %60, %48, %cst_33 {dimension_numbers = #tpu.dot_dimension_numbers<[2], [1], [1], [2], [0, 0, 0, 1, 1, 2], [0], [0]>, precision = #tpu.contract_precision<fp32>} : vector<2x8x8xf32>, vector<2x8x8xf32>, vector<2x8x8xf32> -> vector<2x8x8xf32>
    "tpu.trace_stop"() : () -> ()
    %62 = vector.shape_cast %61 : vector<2x8x8xf32> to vector<16x8xf32>
    %63 = vector.extract_strided_slice %24 {offsets = [8, 0], sizes = [8, 32], strides = [1, 1]} : vector<32x32xf32> to vector<8x32xf32>
    %cst_34 = arith.constant dense<0.000000e+00> : vector<16x32xf32>
    %64 = tpu.matmul %62, %63, %cst_34 {dimension_numbers = #tpu.dot_dimension_numbers<[1], [0], [0], [1], [0, 0, 1, 1], [], []>, precision = #tpu.contract_precision<fp32>} : vector<16x8xf32>, vector<8x32xf32>, vector<16x32xf32> -> vector<16x32xf32>
    %65 = arith.addf %45, %64 : vector<16x32xf32>
    %66 = vector.extract_strided_slice %18 {offsets = [0, 0, 16], sizes = [2, 8, 8], strides = [1, 1, 1]} : vector<2x8x32xf32> to vector<2x8x8xf32>
    %67 = vector.extract_strided_slice %19 {offsets = [0, 0, 16], sizes = [2, 8, 8], strides = [1, 1, 1]} : vector<2x8x32xf32> to vector<2x8x8xf32>
    %68 = vector.extract_strided_slice %20 {offsets = [0, 0, 16], sizes = [2, 8, 8], strides = [1, 1, 1]} : vector<2x8x32xf32> to vector<2x8x8xf32>
    "tpu.trace_start"() <{level = 10 : i32, message = "bqd,bkd->bqk"}> : () -> ()
    %cst_35 = arith.constant dense<0.000000e+00> : vector<2x8x8xf32>
    %69 = tpu.matmul %66, %67, %cst_35 {dimension_numbers = #tpu.dot_dimension_numbers<[2], [2], [1], [1], [0, 0, 0, 1, 1, 1], [0], [0]>, precision = #tpu.contract_precision<fp32>} : vector<2x8x8xf32>, vector<2x8x8xf32>, vector<2x8x8xf32> -> vector<2x8x8xf32>
    "tpu.trace_stop"() : () -> ()
    %70 = arith.addf %69, %23 : vector<2x8x8xf32>
    %cst_36 = arith.constant dense<0xFF800000> : vector<2x8xf32>
    %71 = vector.multi_reduction <maximumf>, %70, %cst_36 [2] : vector<2x8x8xf32> to vector<2x8xf32>
    %72 = vector.shape_cast %71 : vector<2x8xf32> to vector<2x8x1xf32>
    %73 = vector.broadcast %72 : vector<2x8x1xf32> to vector<2x8x8xf32>
    %74 = arith.subf %70, %73 : vector<2x8x8xf32>
    %75 = math.exp %74 : vector<2x8x8xf32>
    %cst_37 = arith.constant dense<0.000000e+00> : vector<2x8xf32>
    %76 = vector.multi_reduction <add>, %75, %cst_37 [2] : vector<2x8x8xf32> to vector<2x8xf32>
    %77 = vector.shape_cast %76 : vector<2x8xf32> to vector<2x8x1xf32>
    %78 = tpu.reciprocal %77 : vector<2x8x1xf32> -> vector<2x8x1xf32>
    %79 = vector.broadcast %78 : vector<2x8x1xf32> to vector<2x8x8xf32>
    %80 = arith.mulf %75, %79 : vector<2x8x8xf32>
    "tpu.trace_start"() <{level = 10 : i32, message = "bqk,bkd->bqd"}> : () -> ()
    %cst_38 = arith.constant dense<0.000000e+00> : vector<2x8x8xf32>
    %81 = tpu.matmul %80, %68, %cst_38 {dimension_numbers = #tpu.dot_dimension_numbers<[2], [1], [1], [2], [0, 0, 0, 1, 1, 2], [0], [0]>, precision = #tpu.contract_precision<fp32>} : vector<2x8x8xf32>, vector<2x8x8xf32>, vector<2x8x8xf32> -> vector<2x8x8xf32>
    "tpu.trace_stop"() : () -> ()
    %82 = vector.shape_cast %81 : vector<2x8x8xf32> to vector<16x8xf32>
    %83 = vector.extract_strided_slice %24 {offsets = [16, 0], sizes = [8, 32], strides = [1, 1]} : vector<32x32xf32> to vector<8x32xf32>
    %cst_39 = arith.constant dense<0.000000e+00> : vector<16x32xf32>
    %84 = tpu.matmul %82, %83, %cst_39 {dimension_numbers = #tpu.dot_dimension_numbers<[1], [0], [0], [1], [0, 0, 1, 1], [], []>, precision = #tpu.contract_precision<fp32>} : vector<16x8xf32>, vector<8x32xf32>, vector<16x32xf32> -> vector<16x32xf32>
    %85 = arith.addf %65, %84 : vector<16x32xf32>
    %86 = vector.extract_strided_slice %18 {offsets = [0, 0, 24], sizes = [2, 8, 8], strides = [1, 1, 1]} : vector<2x8x32xf32> to vector<2x8x8xf32>
    %87 = vector.extract_strided_slice %19 {offsets = [0, 0, 24], sizes = [2, 8, 8], strides = [1, 1, 1]} : vector<2x8x32xf32> to vector<2x8x8xf32>
    %88 = vector.extract_strided_slice %20 {offsets = [0, 0, 24], sizes = [2, 8, 8], strides = [1, 1, 1]} : vector<2x8x32xf32> to vector<2x8x8xf32>
    "tpu.trace_start"() <{level = 10 : i32, message = "bqd,bkd->bqk"}> : () -> ()
    %cst_40 = arith.constant dense<0.000000e+00> : vector<2x8x8xf32>
    %89 = tpu.matmul %86, %87, %cst_40 {dimension_numbers = #tpu.dot_dimension_numbers<[2], [2], [1], [1], [0, 0, 0, 1, 1, 1], [0], [0]>, precision = #tpu.contract_precision<fp32>} : vector<2x8x8xf32>, vector<2x8x8xf32>, vector<2x8x8xf32> -> vector<2x8x8xf32>
    "tpu.trace_stop"() : () -> ()
    %90 = arith.addf %89, %23 : vector<2x8x8xf32>
    %cst_41 = arith.constant dense<0xFF800000> : vector<2x8xf32>
    %91 = vector.multi_reduction <maximumf>, %90, %cst_41 [2] : vector<2x8x8xf32> to vector<2x8xf32>
    %92 = vector.shape_cast %91 : vector<2x8xf32> to vector<2x8x1xf32>
    %93 = vector.broadcast %92 : vector<2x8x1xf32> to vector<2x8x8xf32>
    %94 = arith.subf %90, %93 : vector<2x8x8xf32>
    %95 = math.exp %94 : vector<2x8x8xf32>
    %cst_42 = arith.constant dense<0.000000e+00> : vector<2x8xf32>
    %96 = vector.multi_reduction <add>, %95, %cst_42 [2] : vector<2x8x8xf32> to vector<2x8xf32>
    %97 = vector.shape_cast %96 : vector<2x8xf32> to vector<2x8x1xf32>
    %98 = tpu.reciprocal %97 : vector<2x8x1xf32> -> vector<2x8x1xf32>
    %99 = vector.broadcast %98 : vector<2x8x1xf32> to vector<2x8x8xf32>
    %100 = arith.mulf %95, %99 : vector<2x8x8xf32>
    "tpu.trace_start"() <{level = 10 : i32, message = "bqk,bkd->bqd"}> : () -> ()
    %cst_43 = arith.constant dense<0.000000e+00> : vector<2x8x8xf32>
    %101 = tpu.matmul %100, %88, %cst_43 {dimension_numbers = #tpu.dot_dimension_numbers<[2], [1], [1], [2], [0, 0, 0, 1, 1, 2], [0], [0]>, precision = #tpu.contract_precision<fp32>} : vector<2x8x8xf32>, vector<2x8x8xf32>, vector<2x8x8xf32> -> vector<2x8x8xf32>
    "tpu.trace_stop"() : () -> ()
    %102 = vector.shape_cast %101 : vector<2x8x8xf32> to vector<16x8xf32>
    %103 = vector.extract_strided_slice %24 {offsets = [24, 0], sizes = [8, 32], strides = [1, 1]} : vector<32x32xf32> to vector<8x32xf32>
    %cst_44 = arith.constant dense<0.000000e+00> : vector<16x32xf32>
    %104 = tpu.matmul %102, %103, %cst_44 {dimension_numbers = #tpu.dot_dimension_numbers<[1], [0], [0], [1], [0, 0, 1, 1], [], []>, precision = #tpu.contract_precision<fp32>} : vector<16x8xf32>, vector<8x32xf32>, vector<16x32xf32> -> vector<16x32xf32>
    %105 = arith.addf %85, %104 : vector<16x32xf32>
    %c0_45 = arith.constant 0 : index
    %c0_46 = arith.constant 0 : index
    %106 = vector.load %arg12[%c0_45, %c0_46] : memref<1x32xf32, #tpu.memory_space<vmem>>, vector<1x32xf32>
    %107 = vector.broadcast %106 : vector<1x32xf32> to vector<16x32xf32>
    %108 = arith.addf %105, %107 : vector<16x32xf32>
    %c0_47 = arith.constant 0 : index
    %c0_48 = arith.constant 0 : index
    %109 = vector.load %arg13[%c0_47, %c0_48] : memref<16x32xf32, #tpu.memory_space<vmem>>, vector<16x32xf32>
    tpu.vector_store %arg13[%c0_47, %c0_48], %108 {strides = array<i32>} : memref<16x32xf32, #tpu.memory_space<vmem>>, vector<16x32xf32>,
    return
  }
  func.func @transform_0(%arg0: i32) -> (i32, i32) {
    %c0_i32 = arith.constant 0 : i32
    %c0_i32_0 = arith.constant 0 : i32
    %c0_i32_1 = arith.constant 0 : i32
    return %c0_i32, %c0_i32_0 : i32, i32
  }
  func.func @transform_1(%arg0: i32) -> (i32, i32) {
    %c0_i32 = arith.constant 0 : i32
    %c0_i32_0 = arith.constant 0 : i32
    %c0_i32_1 = arith.constant 0 : i32
    return %c0_i32, %c0_i32_0 : i32, i32
  }
  func.func @transform_2(%arg0: i32) -> (i32, i32) {
    %c0_i32 = arith.constant 0 : i32
    %c0_i32_0 = arith.constant 0 : i32
    %c0_i32_1 = arith.constant 0 : i32
    return %c0_i32, %c0_i32_0 : i32, i32
  }
  func.func @transform_3(%arg0: i32) -> (i32, i32, i32) {
    %c0_i32 = arith.constant 0 : i32
    %c0_i32_0 = arith.constant 0 : i32
    %c0_i32_1 = arith.constant 0 : i32
    %c0_i32_2 = arith.constant 0 : i32
    return %c0_i32, %c0_i32_0, %c0_i32_1 : i32, i32, i32
  }
  func.func @transform_4(%arg0: i32) -> (i32, i32) {
    %c0_i32 = arith.constant 0 : i32
    %c0_i32_0 = arith.constant 0 : i32
    %c0_i32_1 = arith.constant 0 : i32
    return %c0_i32, %c0_i32_0 : i32, i32
  }
  func.func @transform_5(%arg0: i32) -> (i32, i32) {
    %c0_i32 = arith.constant 0 : i32
    %c0_i32_0 = arith.constant 0 : i32
    %c0_i32_1 = arith.constant 0 : i32
    return %c0_i32, %c0_i32_0 : i32, i32
  }
  func.func @transform_6(%arg0: i32) -> (i32, i32) {
    %c0_i32 = arith.constant 0 : i32
    %c0_i32_0 = arith.constant 0 : i32
    %c0_i32_1 = arith.constant 0 : i32
    return %c0_i32, %c0_i32_0 : i32, i32
  }
  func.func @transform_7(%arg0: i32) -> (i32, i32) {
    %c0_i32 = arith.constant 0 : i32
    %c0_i32_0 = arith.constant 0 : i32
    %c0_i32_1 = arith.constant 0 : i32
    return %c0_i32, %c0_i32_0 : i32, i32
  }
  func.func @transform_8(%arg0: i32) -> (i32, i32) {
    %c0_i32 = arith.constant 0 : i32
    %c0_i32_0 = arith.constant 0 : i32
    %c0_i32_1 = arith.constant 0 : i32
    return %c0_i32, %c0_i32_0 : i32, i32
  }
  func.func @transform_9(%arg0: i32) -> (i32, i32) {
    %c0_i32 = arith.constant 0 : i32
    %c0_i32_0 = arith.constant 0 : i32
    %c0_i32_1 = arith.constant 0 : i32
    return %c0_i32, %c0_i32_0 : i32, i32
  }
  func.func @transform_10(%arg0: i32) -> (i32, i32) {
    %c0_i32 = arith.constant 0 : i32
    %c0_i32_0 = arith.constant 0 : i32
    %c0_i32_1 = arith.constant 0 : i32
    return %c0_i32, %c0_i32_0 : i32, i32
  }
  func.func @transform_11(%arg0: i32) -> (i32, i32) {
    %c0_i32 = arith.constant 0 : i32
    %c0_i32_0 = arith.constant 0 : i32
    %c0_i32_1 = arith.constant 0 : i32
    return %c0_i32, %c0_i32_0 : i32, i32
  }
  func.func @transform_12(%arg0: i32) -> (i32, i32) {
    %c0_i32 = arith.constant 0 : i32
    %c0_i32_0 = arith.constant 0 : i32
    %c0_i32_1 = arith.constant 0 : i32
    return %c0_i32, %c0_i32_0 : i32, i32
  }
}

</mosaic_0001>

<llo_original>
// kernel: tpu_custom_call.1
$region0: #{tpu_custom_call.1}
  #allocation0 [shape = 'u32[]', space=smem, size = 0x4, offset = 0x4, fixed_abs, tag = 'smem constant byte address 0x4 - core index']
  #allocation1 [shape = 'u32[144,128]{1,0:T(1,128)}', space=vmem, size = 0x12000, scoped, tag = 'internal scratch']
  %s0 = inlined_call_operand.hbm [shape: f32[16,32], index: 0, kind: input, shape index: {}]
  %s1 = inlined_call_operand.hbm [shape: f32[16,32], index: 1, kind: input, shape index: {}]
  %s2 = inlined_call_operand.hbm [shape: f32[16,32], index: 2, kind: input, shape index: {}]
  %s3 = inlined_call_operand.vmem [shape: f32[2,1,8], index: 3, kind: input, shape index: {}]
  %s4 = inlined_call_operand.hbm [shape: f32[32,32], index: 4, kind: input, shape index: {}]
  %s5 = inlined_call_operand.vmem [shape: f32[1,32], index: 5, kind: input, shape index: {}]
  %s6 = inlined_call_operand.hbm [shape: f32[32,32], index: 6, kind: input, shape index: {}]
  %s7 = inlined_call_operand.vmem [shape: f32[1,32], index: 7, kind: input, shape index: {}]
  %s8 = inlined_call_operand.hbm [shape: f32[32,32], index: 8, kind: input, shape index: {}]
  %s9 = inlined_call_operand.vmem [shape: f32[1,32], index: 9, kind: input, shape index: {}]
  %s10 = inlined_call_operand.vmem [shape: f32[32,32], index: 10, kind: input, shape index: {}]
  %s11 = inlined_call_operand.vmem [shape: f32[1,32], index: 11, kind: input, shape index: {}]
  %s12 = inlined_call_operand.hbm [shape: f32[16,32], index: 12, kind: output, shape index: {}]
  %s13 = sld [smem:[#allocation0]]
  $region82: #{tpu_custom_call.1} parent=0
    _
  %s15 = ssub.s32 1, %s13
  %s16 = scalar_select 0, %s15, %s13
  $region1: #{tpu_custom_call.1} parent=0
    #allocation2 [shape = 'u8[8192]{0}', space=vmem, size = 0x2000, scoped, tag = 'input window, operand 0, single buffered']
    #allocation3 [shape = 's32[1]{0}', space=sflag, size = 0x4, scoped, tag = 'scoped memory for tpu_custom_call.1']
    #allocation4 [shape = 's32[1]{0}', space=sflag, size = 0x4, scoped, tag = 'scoped memory for tpu_custom_call.1']
    #allocation5 [shape = 'u8[8192]{0}', space=vmem, size = 0x2000, scoped, tag = 'input window, operand 1, single buffered']
    #allocation6 [shape = 's32[1]{0}', space=sflag, size = 0x4, scoped, tag = 'scoped memory for tpu_custom_call.1']
    #allocation7 [shape = 'u8[8192]{0}', space=vmem, size = 0x2000, scoped, tag = 'input window, operand 2, single buffered']
    #allocation8 [shape = 'u8[16384]{0}', space=vmem, size = 0x4000, scoped, tag = 'input window, operand 4, single buffered']
    #allocation9 [shape = 's32[1]{0}', space=sflag, size = 0x4, scoped, tag = 'scoped memory for tpu_custom_call.1']
    #allocation10 [shape = 'u8[16384]{0}', space=vmem, size = 0x4000, scoped, tag = 'input window, operand 6, single buffered']
    #allocation11 [shape = 'u8[16384]{0}', space=vmem, size = 0x4000, scoped, tag = 'input window, operand 8, single buffered']
    #allocation12 [shape = 's32[1]{0}', space=sflag, size = 0x4, scoped, tag = 'scoped memory for tpu_custom_call.1']
    #allocation13 [shape = 'u8[8192]{0}', space=vmem, size = 0x2000, scoped, tag = 'output window, operand 0, single buffered']
    %17 = vsyncpa [#allocation3], 0
    %18 = vsyncpa [#allocation6], 0
    %19 = vsyncpa [#allocation9], 0
    %20 = vsyncpa [#allocation12], 0
    %21 = vsyncpa [#allocation4], 0
    // Predicated region
    $region2: #{tpu_custom_call.1} parent=1 // pred_check
      _
    $region3: #{tpu_custom_call.1} parent=1 // pred_check_branch
      %23 = sbr.rel (0) target = $region5
    $region4: #{tpu_custom_call.1} parent=1 // pred_region
      %s25 = ssub.s32 256, 256
      %26 = vsyncadd [#allocation3], %s25
      %s27 = sshll.u32 [#allocation2], 4
      %s28 = int_to_ptr.vmem [resolvable:$true] %s27
      %33 = dma.hbm_to_vmem [thread:$0]  %s0, 256, %s28, [#allocation3], 128, 128, 8
    $region5: #{tpu_custom_call.1} parent=1 // pred_fallthru
      _
    // Predicated region
    $region6: #{tpu_custom_call.1} parent=1 // pred_check
      _
    $region7: #{tpu_custom_call.1} parent=1 // pred_check_branch
      %35 = sbr.rel (0) target = $region9
    $region8: #{tpu_custom_call.1} parent=1 // pred_region
      %s37 = ssub.s32 256, 256
      %38 = vsyncadd [#allocation6], %s37
      %s39 = sshll.u32 [#allocation5], 4
      %s40 = int_to_ptr.vmem [resolvable:$true] %s39
      %45 = dma.hbm_to_vmem [thread:$0]  %s1, 256, %s40, [#allocation6], 128, 128, 8
    $region9: #{tpu_custom_call.1} parent=1 // pred_fallthru
      _
    // Predicated region
    $region10: #{tpu_custom_call.1} parent=1 // pred_check
      _
    $region11: #{tpu_custom_call.1} parent=1 // pred_check_branch
      %47 = sbr.rel (0) target = $region13
    $region12: #{tpu_custom_call.1} parent=1 // pred_region
      %s49 = ssub.s32 256, 256
      %50 = vsyncadd [#allocation6], %s49
      %s51 = sshll.u32 [#allocation7], 4
      %s52 = int_to_ptr.vmem [resolvable:$true] %s51
      %57 = dma.hbm_to_vmem [thread:$0]  %s2, 256, %s52, [#allocation6], 128, 128, 8
    $region13: #{tpu_custom_call.1} parent=1 // pred_fallthru
      _
    // Predicated region
    $region14: #{tpu_custom_call.1} parent=1 // pred_check
      _
    $region15: #{tpu_custom_call.1} parent=1 // pred_check_branch
      %59 = sbr.rel (0) target = $region17
    $region16: #{tpu_custom_call.1} parent=1 // pred_region
      _
    $region17: #{tpu_custom_call.1} parent=1 // pred_fallthru
      _
    // Predicated region
    $region18: #{tpu_custom_call.1} parent=1 // pred_check
      _
    $region19: #{tpu_custom_call.1} parent=1 // pred_check_branch
      %61 = sbr.rel (0) target = $region21
    $region20: #{tpu_custom_call.1} parent=1 // pred_region
      %s63 = ssub.s32 512, 512
      %64 = vsyncadd [#allocation9], %s63
      %s65 = sshll.u32 [#allocation8], 4
      %s66 = int_to_ptr.vmem [resolvable:$true] %s65
      %71 = dma.hbm_to_vmem [thread:$0]  %s4, 512, %s66, [#allocation9], 128, 128, 8
    $region21: #{tpu_custom_call.1} parent=1 // pred_fallthru
      _
    // Predicated region
    $region22: #{tpu_custom_call.1} parent=1 // pred_check
      _
    $region23: #{tpu_custom_call.1} parent=1 // pred_check_branch
      %73 = sbr.rel (0) target = $region25
    $region24: #{tpu_custom_call.1} parent=1 // pred_region
      _
    $region25: #{tpu_custom_call.1} parent=1 // pred_fallthru
      _
    // Predicated region
    $region26: #{tpu_custom_call.1} parent=1 // pred_check
      _
    $region27: #{tpu_custom_call.1} parent=1 // pred_check_branch
      %75 = sbr.rel (0) target = $region29
    $region28: #{tpu_custom_call.1} parent=1 // pred_region
      %s77 = ssub.s32 512, 512
      %78 = vsyncadd [#allocation9], %s77
      %s79 = sshll.u32 [#allocation10], 4
      %s80 = int_to_ptr.vmem [resolvable:$true] %s79
      %85 = dma.hbm_to_vmem [thread:$0]  %s6, 512, %s80, [#allocation9], 128, 128, 8
    $region29: #{tpu_custom_call.1} parent=1 // pred_fallthru
      _
    // Predicated region
    $region30: #{tpu_custom_call.1} parent=1 // pred_check
      _
    $region31: #{tpu_custom_call.1} parent=1 // pred_check_branch
      %87 = sbr.rel (0) target = $region33
    $region32: #{tpu_custom_call.1} parent=1 // pred_region
      _
    $region33: #{tpu_custom_call.1} parent=1 // pred_fallthru
      _
    // Predicated region
    $region34: #{tpu_custom_call.1} parent=1 // pred_check
      _
    $region35: #{tpu_custom_call.1} parent=1 // pred_check_branch
      %89 = sbr.rel (0) target = $region37
    $region36: #{tpu_custom_call.1} parent=1 // pred_region
      %s91 = ssub.s32 512, 512
      %92 = vsyncadd [#allocation12], %s91
      %s93 = sshll.u32 [#allocation11], 4
      %s94 = int_to_ptr.vmem [resolvable:$true] %s93
      %99 = dma.hbm_to_vmem [thread:$0]  %s8, 512, %s94, [#allocation12], 128, 128, 8
    $region37: #{tpu_custom_call.1} parent=1 // pred_fallthru
      _
    // Predicated region
    $region38: #{tpu_custom_call.1} parent=1 // pred_check
      _
    $region39: #{tpu_custom_call.1} parent=1 // pred_check_branch
      %101 = sbr.rel (0) target = $region41
    $region40: #{tpu_custom_call.1} parent=1 // pred_region
      _
    $region41: #{tpu_custom_call.1} parent=1 // pred_fallthru
      _
    // Predicated region
    $region42: #{tpu_custom_call.1} parent=1 // pred_check
      _
    $region43: #{tpu_custom_call.1} parent=1 // pred_check_branch
      %103 = sbr.rel (0) target = $region45
    $region44: #{tpu_custom_call.1} parent=1 // pred_region
      _
    $region45: #{tpu_custom_call.1} parent=1 // pred_fallthru
      _
    // Predicated region
    $region46: #{tpu_custom_call.1} parent=1 // pred_check
      _
    $region47: #{tpu_custom_call.1} parent=1 // pred_check_branch
      %105 = sbr.rel (0) target = $region49
    $region48: #{tpu_custom_call.1} parent=1 // pred_region
      _
    $region49: #{tpu_custom_call.1} parent=1 // pred_fallthru
      _
    // Predicated region
    $region50: #{tpu_custom_call.1} parent=1 // pred_check
      _
    $region51: #{tpu_custom_call.1} parent=1 // pred_check_branch
      %107 = sbr.rel (0) target = $region53
    $region52: #{tpu_custom_call.1} parent=1 // pred_region
      %108 = dma.done [#allocation3], 256
    $region53: #{tpu_custom_call.1} parent=1 // pred_fallthru
      _
    // Predicated region
    $region54: #{tpu_custom_call.1} parent=1 // pred_check
      _
    $region55: #{tpu_custom_call.1} parent=1 // pred_check_branch
      %110 = sbr.rel (0) target = $region57
    $region56: #{tpu_custom_call.1} parent=1 // pred_region
      %111 = dma.done [#allocation6], 256
    $region57: #{tpu_custom_call.1} parent=1 // pred_fallthru
      _
    // Predicated region
    $region58: #{tpu_custom_call.1} parent=1 // pred_check
      _
    $region59: #{tpu_custom_call.1} parent=1 // pred_check_branch
      %113 = sbr.rel (0) target = $region61
    $region60: #{tpu_custom_call.1} parent=1 // pred_region
      %114 = dma.done [#allocation6], 256
    $region61: #{tpu_custom_call.1} parent=1 // pred_fallthru
      _
    // Predicated region
    $region62: #{tpu_custom_call.1} parent=1 // pred_check
      _
    $region63: #{tpu_custom_call.1} parent=1 // pred_check_branch
      %116 = sbr.rel (0) target = $region65
    $region64: #{tpu_custom_call.1} parent=1 // pred_region
      %117 = dma.done [#allocation9], 512
    $region65: #{tpu_custom_call.1} parent=1 // pred_fallthru
      _
    // Predicated region
    $region66: #{tpu_custom_call.1} parent=1 // pred_check
      _
    $region67: #{tpu_custom_call.1} parent=1 // pred_check_branch
      %119 = sbr.rel (0) target = $region69
    $region68: #{tpu_custom_call.1} parent=1 // pred_region
      %120 = dma.done [#allocation9], 512
    $region69: #{tpu_custom_call.1} parent=1 // pred_fallthru
      _
    // Predicated region
    $region70: #{tpu_custom_call.1} parent=1 // pred_check
      _
    $region71: #{tpu_custom_call.1} parent=1 // pred_check_branch
      %122 = sbr.rel (0) target = $region73
    $region72: #{tpu_custom_call.1} parent=1 // pred_region
      %123 = dma.done [#allocation12], 512
    $region73: #{tpu_custom_call.1} parent=1 // pred_fallthru
      _
    %v124 = vld [vmem:[#allocation2] sm:$0xff]
    %v125 = vld [vmem:[#allocation2 + $0x8] sm:$0xff]
    %v126 = vld [vmem:[#allocation8] sm:$0xff]
    %v127 = vld [vmem:[#allocation8 + $0x8] sm:$0xff]
    %v128 = vld [vmem:[#allocation8 + $0x10] sm:$0xff]
    %v129 = vld [vmem:[#allocation8 + $0x18] sm:$0xff]
    %v130 = vld [vmem:[%s5] sm:$0x1]
    %v132 = vlaneseq
    %v133 = vshrl.u32 %v132, 7
    %v134 = vsub.s32 0, %v133
    %v135 = vrot.slane %v130, %v134
    %vm137 = vcmask 261120
    %v139 = vsel %vm137, %v124, 0
    %v142 = vsel %vm137, %v125, 0
    %144 = vmatprep.subr.mxu0 0.0
    %v145 = vand.u32 %v126, 4294901760
    %146 = vmatpush1.msra.mxu0 %v145
    %147 = vmatprep.subr.mxu0 0.0
    %v148 = vand.u32 %v127, 4294901760
    %149 = vmatpush1.msra.mxu0 %v148
    %150 = vmatprep.subr.mxu0 0.0
    %v151 = vand.u32 %v128, 4294901760
    %152 = vmatpush1.msra.mxu0 %v151
    %153 = vmatprep.subr.mxu0 0.0
    %v154 = vand.u32 %v129, 4294901760
    %155 = vmatpush1.msra.mxu0 %v154
    %156 = vmatprep.subr.mxu0 0.0
    %157 = vmatpush1.msra.mxu0 0.0
    %158 = vmatprep.subr.mxu0 0.0
    %159 = vmatpush1.msra.mxu0 0.0
    %160 = vmatprep.subr.mxu0 0.0
    %161 = vmatpush1.msra.mxu0 0.0
    %162 = vmatprep.subr.mxu0 0.0
    %163 = vmatpush1.msra.mxu0 0.0
    %164 = vmatprep.subr.mxu0 0.0
    %165 = vmatpush1.msra.mxu0 0.0
    %166 = vmatprep.subr.mxu0 0.0
    %167 = vmatpush1.msra.mxu0 0.0
    %168 = vmatprep.subr.mxu0 0.0
    %169 = vmatpush1.msra.mxu0 0.0
    %170 = vmatprep.subr.mxu0 0.0
    %171 = vmatpush1.msra.mxu0 0.0
    %172 = vmatprep.subr.mxu0 0.0
    %173 = vmatpush1.msra.mxu0 0.0
    %174 = vmatprep.subr.mxu0 0.0
    %175 = vmatpush1.msra.mxu0 0.0
    %176 = vmatprep.subr.mxu0 0.0
    %177 = vmatpush1.msra.mxu0 0.0
    %178 = vmatprep.subr.mxu0 0.0
    %179 = vmatpush1.msra.mxu0 0.0
    %180 = vmatprep.subr.mxu0 0.0
    %181 = vmatpush1.msra.mxu0 0.0
    %182 = vmatprep.subr.mxu0 0.0
    %183 = vmatpush1.msra.mxu0 0.0
    %184 = vmatprep.subr.mxu0 0.0
    %185 = vmatpush1.msra.mxu0 0.0
    %186 = vmatprep.subr.mxu0 0.0
    %187 = vmatpush1.msra.mxu0 0.0
    %188 = vmatprep.subr.mxu0 0.0
    %189 = vmatpush1.msra.mxu0 0.0
    %190 = vmatprep.subr.mxu0 0.0
    %191 = vmatpush1.msra.mxu0 0.0
    %192 = vmatprep.subr.mxu0 0.0
    %193 = vmatpush1.msra.mxu0 0.0
    %194 = vmatprep.subr.mxu0 0.0
    %195 = vmatpush1.msra.mxu0 0.0
    %196 = vmatprep.subr.mxu0 0.0
    %197 = vmatpush1.msra.mxu0 0.0
    %198 = vmatprep.subr.mxu0 0.0
    %199 = vmatpush1.msra.mxu0 0.0
    %200 = vmatprep.subr.mxu0 0.0
    %201 = vmatpush1.msra.mxu0 0.0
    %202 = vmatprep.subr.mxu0 0.0
    %203 = vmatpush1.msra.mxu0 0.0
    %204 = vmatprep.subr.mxu0 0.0
    %205 = vmatpush1.msra.mxu0 0.0
    %206 = vmatprep.subr.mxu0 0.0
    %207 = vmatpush1.msra.mxu0 0.0
    %208 = vmatprep.subr.mxu0 0.0
    %209 = vmatpush1.msra.mxu0 0.0
    %210 = vmatprep.subr.mxu0 0.0
    %211 = vmatpush1.msra.mxu0 0.0
    %212 = vmatprep.mubr.f32.mxu0 0.0
    %v213 = vand.u32 %v139, 4294901760
    %v214 = vsub.f32 %v139, %v213
    %v215 = vand.u32 %v214, 4294901760
    %v216 = vsub.f32 %v214, %v215
    %v217 = vand.u32 %v216, 4294901760
    %218 = vmatmul.mubr.f32.gmra.mrb[0].mxu0 %v217
    %v219 = vpop.f32.mrb[0].mxu0
    %v220 = vadd.f32 %v135, %v219
    %v221 = vpop.f32.mrb[0].mxu0
    %222 = vmatprep.mubr.f32.mxu0 0.0
    %v223 = vand.u32 %v142, 4294901760
    %v224 = vsub.f32 %v142, %v223
    %v225 = vand.u32 %v224, 4294901760
    %v226 = vsub.f32 %v224, %v225
    %v227 = vand.u32 %v226, 4294901760
    %228 = vmatmul.mubr.f32.gmra.mrb[0].mxu0 %v227
    %v229 = vpop.f32.mrb[0].mxu0
    %v230 = vadd.f32 %v135, %v229
    %v231 = vpop.f32.mrb[0].mxu0
    %232 = vdwg.mxu0
    %233 = vmatprep.subr.mxu0 0.0
    %v234 = vand.u32 %v126, 4294901760
    %v235 = vsub.f32 %v126, %v234
    %v236 = vand.u32 %v235, 4294901760
    %v237 = vsub.f32 %v235, %v236
    %v238 = vand.u32 %v237, 4294901760
    %239 = vmatpush1.msra.mxu0 %v238
    %240 = vmatprep.subr.mxu0 0.0
    %v241 = vand.u32 %v127, 4294901760
    %v242 = vsub.f32 %v127, %v241
    %v243 = vand.u32 %v242, 4294901760
    %v244 = vsub.f32 %v242, %v243
    %v245 = vand.u32 %v244, 4294901760
    %246 = vmatpush1.msra.mxu0 %v245
    %247 = vmatprep.subr.mxu0 0.0
    %v248 = vand.u32 %v128, 4294901760
    %v249 = vsub.f32 %v128, %v248
    %v250 = vand.u32 %v249, 4294901760
    %v251 = vsub.f32 %v249, %v250
    %v252 = vand.u32 %v251, 4294901760
    %253 = vmatpush1.msra.mxu0 %v252
    %254 = vmatprep.subr.mxu0 0.0
    %v255 = vand.u32 %v129, 4294901760
    %v256 = vsub.f32 %v129, %v255
    %v257 = vand.u32 %v256, 4294901760
    %v258 = vsub.f32 %v256, %v257
    %v259 = vand.u32 %v258, 4294901760
    %260 = vmatpush1.msra.mxu0 %v259
    %261 = vmatprep.subr.mxu0 0.0
    %262 = vmatpush1.msra.mxu0 0.0
    %263 = vmatprep.subr.mxu0 0.0
    %264 = vmatpush1.msra.mxu0 0.0
    %265 = vmatprep.subr.mxu0 0.0
    %266 = vmatpush1.msra.mxu0 0.0
    %267 = vmatprep.subr.mxu0 0.0
    %268 = vmatpush1.msra.mxu0 0.0
    %269 = vmatprep.subr.mxu0 0.0
    %270 = vmatpush1.msra.mxu0 0.0
    %271 = vmatprep.subr.mxu0 0.0
    %272 = vmatpush1.msra.mxu0 0.0
    %273 = vmatprep.subr.mxu0 0.0
    %274 = vmatpush1.msra.mxu0 0.0
    %275 = vmatprep.subr.mxu0 0.0
    %276 = vmatpush1.msra.mxu0 0.0
    %277 = vmatprep.subr.mxu0 0.0
    %278 = vmatpush1.msra.mxu0 0.0
    %279 = vmatprep.subr.mxu0 0.0
    %280 = vmatpush1.msra.mxu0 0.0
    %281 = vmatprep.subr.mxu0 0.0
    %282 = vmatpush1.msra.mxu0 0.0
    %283 = vmatprep.subr.mxu0 0.0
    %284 = vmatpush1.msra.mxu0 0.0
    %285 = vmatprep.subr.mxu0 0.0
    %286 = vmatpush1.msra.mxu0 0.0
    %287 = vmatprep.subr.mxu0 0.0
    %288 = vmatpush1.msra.mxu0 0.0
    %289 = vmatprep.subr.mxu0 0.0
    %290 = vmatpush1.msra.mxu0 0.0
    %291 = vmatprep.subr.mxu0 0.0
    %292 = vmatpush1.msra.mxu0 0.0
    %293 = vmatprep.subr.mxu0 0.0
    %294 = vmatpush1.msra.mxu0 0.0
    %295 = vmatprep.subr.mxu0 0.0
    %296 = vmatpush1.msra.mxu0 0.0
    %297 = vmatprep.subr.mxu0 0.0
    %298 = vmatpush1.msra.mxu0 0.0
    %299 = vmatprep.subr.mxu0 0.0
    %300 = vmatpush1.msra.mxu0 0.0
    %301 = vmatprep.subr.mxu0 0.0
    %302 = vmatpush1.msra.mxu0 0.0
    %303 = vmatprep.subr.mxu0 0.0
    %304 = vmatpush1.msra.mxu0 0.0
    %305 = vmatprep.subr.mxu0 0.0
    %306 = vmatpush1.msra.mxu0 0.0
    %307 = vmatprep.subr.mxu0 0.0
    %308 = vmatpush1.msra.mxu0 0.0
    %309 = vmatprep.subr.mxu0 0.0
    %310 = vmatpush1.msra.mxu0 0.0
    %311 = vmatprep.subr.mxu0 0.0
    %312 = vmatpush1.msra.mxu0 0.0
    %313 = vmatprep.subr.mxu0 0.0
    %314 = vmatpush1.msra.mxu0 0.0
    %315 = vmatprep.subr.mxu0 0.0
    %316 = vmatpush1.msra.mxu0 0.0
    %317 = vmatprep.mubr.f32.mxu0 0.0
    %v318 = vand.u32 %v139, 4294901760
    %319 = vmatmul.mubr.f32.gmra.mrb[0].mxu0 %v318
    %v320 = vpop.f32.mrb[0].mxu0
    %v321 = vadd.f32 %v220, %v320
    %v322 = vpop.f32.mrb[0].mxu0
    %323 = vmatprep.mubr.f32.mxu0 0.0
    %v324 = vand.u32 %v142, 4294901760
    %325 = vmatmul.mubr.f32.gmra.mrb[0].mxu0 %v324
    %v326 = vpop.f32.mrb[0].mxu0
    %v327 = vadd.f32 %v230, %v326
    %v328 = vpop.f32.mrb[0].mxu0
    %329 = vdwg.mxu0
    %330 = vmatprep.subr.mxu0 0.0
    %v331 = vand.u32 %v126, 4294901760
    %v332 = vsub.f32 %v126, %v331
    %333 = vmatpush1.msra.mxu0 %v332
    %334 = vmatprep.subr.mxu0 0.0
    %v335 = vand.u32 %v127, 4294901760
    %v336 = vsub.f32 %v127, %v335
    %337 = vmatpush1.msra.mxu0 %v336
    %338 = vmatprep.subr.mxu0 0.0
    %v339 = vand.u32 %v128, 4294901760
    %v340 = vsub.f32 %v128, %v339
    %341 = vmatpush1.msra.mxu0 %v340
    %342 = vmatprep.subr.mxu0 0.0
    %v343 = vand.u32 %v129, 4294901760
    %v344 = vsub.f32 %v129, %v343
    %345 = vmatpush1.msra.mxu0 %v344
    %346 = vmatprep.subr.mxu0 0.0
    %347 = vmatpush1.msra.mxu0 0.0
    %348 = vmatprep.subr.mxu0 0.0
    %349 = vmatpush1.msra.mxu0 0.0
    %350 = vmatprep.subr.mxu0 0.0
    %351 = vmatpush1.msra.mxu0 0.0
    %352 = vmatprep.subr.mxu0 0.0
    %353 = vmatpush1.msra.mxu0 0.0
    %354 = vmatprep.subr.mxu0 0.0
    %355 = vmatpush1.msra.mxu0 0.0
    %356 = vmatprep.subr.mxu0 0.0
    %357 = vmatpush1.msra.mxu0 0.0
    %358 = vmatprep.subr.mxu0 0.0
    %359 = vmatpush1.msra.mxu0 0.0
    %360 = vmatprep.subr.mxu0 0.0
    %361 = vmatpush1.msra.mxu0 0.0
    %362 = vmatprep.subr.mxu0 0.0
    %363 = vmatpush1.msra.mxu0 0.0
    %364 = vmatprep.subr.mxu0 0.0
    %365 = vmatpush1.msra.mxu0 0.0
    %366 = vmatprep.subr.mxu0 0.0
    %367 = vmatpush1.msra.mxu0 0.0
    %368 = vmatprep.subr.mxu0 0.0
    %369 = vmatpush1.msra.mxu0 0.0
    %370 = vmatprep.subr.mxu0 0.0
    %371 = vmatpush1.msra.mxu0 0.0
    %372 = vmatprep.subr.mxu0 0.0
    %373 = vmatpush1.msra.mxu0 0.0
    %374 = vmatprep.subr.mxu0 0.0
    %375 = vmatpush1.msra.mxu0 0.0
    %376 = vmatprep.subr.mxu0 0.0
    %377 = vmatpush1.msra.mxu0 0.0
    %378 = vmatprep.subr.mxu0 0.0
    %379 = vmatpush1.msra.mxu0 0.0
    %380 = vmatprep.subr.mxu0 0.0
    %381 = vmatpush1.msra.mxu0 0.0
    %382 = vmatprep.subr.mxu0 0.0
    %383 = vmatpush1.msra.mxu0 0.0
    %384 = vmatprep.subr.mxu0 0.0
    %385 = vmatpush1.msra.mxu0 0.0
    %386 = vmatprep.subr.mxu0 0.0
    %387 = vmatpush1.msra.mxu0 0.0
    %388 = vmatprep.subr.mxu0 0.0
    %389 = vmatpush1.msra.mxu0 0.0
    %390 = vmatprep.subr.mxu0 0.0
    %391 = vmatpush1.msra.mxu0 0.0
    %392 = vmatprep.subr.mxu0 0.0
    %393 = vmatpush1.msra.mxu0 0.0
    %394 = vmatprep.subr.mxu0 0.0
    %395 = vmatpush1.msra.mxu0 0.0
    %396 = vmatprep.subr.mxu0 0.0
    %397 = vmatpush1.msra.mxu0 0.0
    %398 = vmatprep.subr.mxu0 0.0
    %399 = vmatpush1.msra.mxu0 0.0
    %400 = vmatprep.subr.mxu0 0.0
    %401 = vmatpush1.msra.mxu0 0.0
    %402 = vmatprep.mubr.f32.mxu0 0.0
    %v403 = vand.u32 %v139, 4294901760
    %v404 = vsub.f32 %v139, %v403
    %405 = vmatmul.mubr.f32.gmra.mrb[0].mxu0 %v404
    %v406 = vpop.f32.mrb[0].mxu0
    %v407 = vadd.f32 %v321, %v406
    %v408 = vpop.f32.mrb[0].mxu0
    %409 = vmatprep.mubr.f32.mxu0 0.0
    %v410 = vand.u32 %v142, 4294901760
    %v411 = vsub.f32 %v142, %v410
    %412 = vmatmul.mubr.f32.gmra.mrb[0].mxu0 %v411
    %v413 = vpop.f32.mrb[0].mxu0
    %v414 = vadd.f32 %v327, %v413
    %v415 = vpop.f32.mrb[0].mxu0
    %416 = vdwg.mxu0
    %417 = vmatprep.subr.mxu0 0.0
    %v418 = vand.u32 %v126, 4294901760
    %419 = vmatpush1.msra.mxu0 %v418
    %420 = vmatprep.subr.mxu0 0.0
    %v421 = vand.u32 %v127, 4294901760
    %422 = vmatpush1.msra.mxu0 %v421
    %423 = vmatprep.subr.mxu0 0.0
    %v424 = vand.u32 %v128, 4294901760
    %425 = vmatpush1.msra.mxu0 %v424
    %426 = vmatprep.subr.mxu0 0.0
    %v427 = vand.u32 %v129, 4294901760
    %428 = vmatpush1.msra.mxu0 %v427
    %429 = vmatprep.subr.mxu0 0.0
    %430 = vmatpush1.msra.mxu0 0.0
    %431 = vmatprep.subr.mxu0 0.0
    %432 = vmatpush1.msra.mxu0 0.0
    %433 = vmatprep.subr.mxu0 0.0
    %434 = vmatpush1.msra.mxu0 0.0
    %435 = vmatprep.subr.mxu0 0.0
    %436 = vmatpush1.msra.mxu0 0.0
    %437 = vmatprep.subr.mxu0 0.0
    %438 = vmatpush1.msra.mxu0 0.0
    %439 = vmatprep.subr.mxu0 0.0
    %440 = vmatpush1.msra.mxu0 0.0
    %441 = vmatprep.subr.mxu0 0.0
    %442 = vmatpush1.msra.mxu0 0.0
    %443 = vmatprep.subr.mxu0 0.0
    %444 = vmatpush1.msra.mxu0 0.0
    %445 = vmatprep.subr.mxu0 0.0
    %446 = vmatpush1.msra.mxu0 0.0
    %447 = vmatprep.subr.mxu0 0.0
    %448 = vmatpush1.msra.mxu0 0.0
    %449 = vmatprep.subr.mxu0 0.0
    %450 = vmatpush1.msra.mxu0 0.0
    %451 = vmatprep.subr.mxu0 0.0
    %452 = vmatpush1.msra.mxu0 0.0
    %453 = vmatprep.subr.mxu0 0.0
    %454 = vmatpush1.msra.mxu0 0.0
    %455 = vmatprep.subr.mxu0 0.0
    %456 = vmatpush1.msra.mxu0 0.0
    %457 = vmatprep.subr.mxu0 0.0
    %458 = vmatpush1.msra.mxu0 0.0
    %459 = vmatprep.subr.mxu0 0.0
    %460 = vmatpush1.msra.mxu0 0.0
    %461 = vmatprep.subr.mxu0 0.0
    %462 = vmatpush1.msra.mxu0 0.0
    %463 = vmatprep.subr.mxu0 0.0
    %464 = vmatpush1.msra.mxu0 0.0
    %465 = vmatprep.subr.mxu0 0.0
    %466 = vmatpush1.msra.mxu0 0.0
    %467 = vmatprep.subr.mxu0 0.0
    %468 = vmatpush1.msra.mxu0 0.0
    %469 = vmatprep.subr.mxu0 0.0
    %470 = vmatpush1.msra.mxu0 0.0
    %471 = vmatprep.subr.mxu0 0.0
    %472 = vmatpush1.msra.mxu0 0.0
    %473 = vmatprep.subr.mxu0 0.0
    %474 = vmatpush1.msra.mxu0 0.0
    %475 = vmatprep.subr.mxu0 0.0
    %476 = vmatpush1.msra.mxu0 0.0
    %477 = vmatprep.subr.mxu0 0.0
    %478 = vmatpush1.msra.mxu0 0.0
    %479 = vmatprep.subr.mxu0 0.0
    %480 = vmatpush1.msra.mxu0 0.0
    %481 = vmatprep.subr.mxu0 0.0
    %482 = vmatpush1.msra.mxu0 0.0
    %483 = vmatprep.subr.mxu0 0.0
    %484 = vmatpush1.msra.mxu0 0.0
    %485 = vmatprep.mubr.f32.mxu0 0.0
    %v486 = vand.u32 %v139, 4294901760
    %v487 = vsub.f32 %v139, %v486
    %v488 = vand.u32 %v487, 4294901760
    %489 = vmatmul.mubr.f32.gmra.mrb[0].mxu0 %v488
    %v490 = vpop.f32.mrb[0].mxu0
    %v491 = vadd.f32 %v407, %v490
    %v492 = vpop.f32.mrb[0].mxu0
    %493 = vmatprep.mubr.f32.mxu0 0.0
    %v494 = vand.u32 %v142, 4294901760
    %v495 = vsub.f32 %v142, %v494
    %v496 = vand.u32 %v495, 4294901760
    %497 = vmatmul.mubr.f32.gmra.mrb[0].mxu0 %v496
    %v498 = vpop.f32.mrb[0].mxu0
    %v499 = vadd.f32 %v414, %v498
    %v500 = vpop.f32.mrb[0].mxu0
    %501 = vdwg.mxu0
    %502 = vmatprep.subr.mxu0 0.0
    %v503 = vand.u32 %v126, 4294901760
    %v504 = vsub.f32 %v126, %v503
    %v505 = vand.u32 %v504, 4294901760
    %506 = vmatpush1.msra.mxu0 %v505
    %507 = vmatprep.subr.mxu0 0.0
    %v508 = vand.u32 %v127, 4294901760
    %v509 = vsub.f32 %v127, %v508
    %v510 = vand.u32 %v509, 4294901760
    %511 = vmatpush1.msra.mxu0 %v510
    %512 = vmatprep.subr.mxu0 0.0
    %v513 = vand.u32 %v128, 4294901760
    %v514 = vsub.f32 %v128, %v513
    %v515 = vand.u32 %v514, 4294901760
    %516 = vmatpush1.msra.mxu0 %v515
    %517 = vmatprep.subr.mxu0 0.0
    %v518 = vand.u32 %v129, 4294901760
    %v519 = vsub.f32 %v129, %v518
    %v520 = vand.u32 %v519, 4294901760
    %521 = vmatpush1.msra.mxu0 %v520
    %522 = vmatprep.subr.mxu0 0.0
    %523 = vmatpush1.msra.mxu0 0.0
    %524 = vmatprep.subr.mxu0 0.0
    %525 = vmatpush1.msra.mxu0 0.0
    %526 = vmatprep.subr.mxu0 0.0
    %527 = vmatpush1.msra.mxu0 0.0
    %528 = vmatprep.subr.mxu0 0.0
    %529 = vmatpush1.msra.mxu0 0.0
    %530 = vmatprep.subr.mxu0 0.0
    %531 = vmatpush1.msra.mxu0 0.0
    %532 = vmatprep.subr.mxu0 0.0
    %533 = vmatpush1.msra.mxu0 0.0
    %534 = vmatprep.subr.mxu0 0.0
    %535 = vmatpush1.msra.mxu0 0.0
    %536 = vmatprep.subr.mxu0 0.0
    %537 = vmatpush1.msra.mxu0 0.0
    %538 = vmatprep.subr.mxu0 0.0
    %539 = vmatpush1.msra.mxu0 0.0
    %540 = vmatprep.subr.mxu0 0.0
    %541 = vmatpush1.msra.mxu0 0.0
    %542 = vmatprep.subr.mxu0 0.0
    %543 = vmatpush1.msra.mxu0 0.0
    %544 = vmatprep.subr.mxu0 0.0
    %545 = vmatpush1.msra.mxu0 0.0
    %546 = vmatprep.subr.mxu0 0.0
    %547 = vmatpush1.msra.mxu0 0.0
    %548 = vmatprep.subr.mxu0 0.0
    %549 = vmatpush1.msra.mxu0 0.0
    %550 = vmatprep.subr.mxu0 0.0
    %551 = vmatpush1.msra.mxu0 0.0
    %552 = vmatprep.subr.mxu0 0.0
    %553 = vmatpush1.msra.mxu0 0.0
    %554 = vmatprep.subr.mxu0 0.0
    %555 = vmatpush1.msra.mxu0 0.0
    %556 = vmatprep.subr.mxu0 0.0
    %557 = vmatpush1.msra.mxu0 0.0
    %558 = vmatprep.subr.mxu0 0.0
    %559 = vmatpush1.msra.mxu0 0.0
    %560 = vmatprep.subr.mxu0 0.0
    %561 = vmatpush1.msra.mxu0 0.0
    %562 = vmatprep.subr.mxu0 0.0
    %563 = vmatpush1.msra.mxu0 0.0
    %564 = vmatprep.subr.mxu0 0.0
    %565 = vmatpush1.msra.mxu0 0.0
    %566 = vmatprep.subr.mxu0 0.0
    %567 = vmatpush1.msra.mxu0 0.0
    %568 = vmatprep.subr.mxu0 0.0
    %569 = vmatpush1.msra.mxu0 0.0
    %570 = vmatprep.subr.mxu0 0.0
    %571 = vmatpush1.msra.mxu0 0.0
    %572 = vmatprep.subr.mxu0 0.0
    %573 = vmatpush1.msra.mxu0 0.0
    %574 = vmatprep.subr.mxu0 0.0
    %575 = vmatpush1.msra.mxu0 0.0
    %576 = vmatprep.subr.mxu0 0.0
    %577 = vmatpush1.msra.mxu0 0.0
    %578 = vmatprep.mubr.f32.mxu0 0.0
    %v579 = vand.u32 %v139, 4294901760
    %580 = vmatmul.mubr.f32.gmra.mrb[0].mxu0 %v579
    %v581 = vpop.f32.mrb[0].mxu0
    %v582 = vadd.f32 %v491, %v581
    %v583 = vpop.f32.mrb[0].mxu0
    %584 = vmatprep.mubr.f32.mxu0 0.0
    %v585 = vand.u32 %v142, 4294901760
    %586 = vmatmul.mubr.f32.gmra.mrb[0].mxu0 %v585
    %v587 = vpop.f32.mrb[0].mxu0
    %v588 = vadd.f32 %v499, %v587
    %v589 = vpop.f32.mrb[0].mxu0
    %590 = vdwg.mxu0
    %591 = vmatprep.subr.mxu0 0.0
    %v592 = vand.u32 %v126, 4294901760
    %593 = vmatpush1.msra.mxu0 %v592
    %594 = vmatprep.subr.mxu0 0.0
    %v595 = vand.u32 %v127, 4294901760
    %596 = vmatpush1.msra.mxu0 %v595
    %597 = vmatprep.subr.mxu0 0.0
    %v598 = vand.u32 %v128, 4294901760
    %599 = vmatpush1.msra.mxu0 %v598
    %600 = vmatprep.subr.mxu0 0.0
    %v601 = vand.u32 %v129, 4294901760
    %602 = vmatpush1.msra.mxu0 %v601
    %603 = vmatprep.subr.mxu0 0.0
    %604 = vmatpush1.msra.mxu0 0.0
    %605 = vmatprep.subr.mxu0 0.0
    %606 = vmatpush1.msra.mxu0 0.0
    %607 = vmatprep.subr.mxu0 0.0
    %608 = vmatpush1.msra.mxu0 0.0
    %609 = vmatprep.subr.mxu0 0.0
    %610 = vmatpush1.msra.mxu0 0.0
    %611 = vmatprep.subr.mxu0 0.0
    %612 = vmatpush1.msra.mxu0 0.0
    %613 = vmatprep.subr.mxu0 0.0
    %614 = vmatpush1.msra.mxu0 0.0
    %615 = vmatprep.subr.mxu0 0.0
    %616 = vmatpush1.msra.mxu0 0.0
    %617 = vmatprep.subr.mxu0 0.0
    %618 = vmatpush1.msra.mxu0 0.0
    %619 = vmatprep.subr.mxu0 0.0
    %620 = vmatpush1.msra.mxu0 0.0
    %621 = vmatprep.subr.mxu0 0.0
    %622 = vmatpush1.msra.mxu0 0.0
    %623 = vmatprep.subr.mxu0 0.0
    %624 = vmatpush1.msra.mxu0 0.0
    %625 = vmatprep.subr.mxu0 0.0
    %626 = vmatpush1.msra.mxu0 0.0
    %627 = vmatprep.subr.mxu0 0.0
    %628 = vmatpush1.msra.mxu0 0.0
    %629 = vmatprep.subr.mxu0 0.0
    %630 = vmatpush1.msra.mxu0 0.0
    %631 = vmatprep.subr.mxu0 0.0
    %632 = vmatpush1.msra.mxu0 0.0
    %633 = vmatprep.subr.mxu0 0.0
    %634 = vmatpush1.msra.mxu0 0.0
    %635 = vmatprep.subr.mxu0 0.0
    %636 = vmatpush1.msra.mxu0 0.0
    %637 = vmatprep.subr.mxu0 0.0
    %638 = vmatpush1.msra.mxu0 0.0
    %639 = vmatprep.subr.mxu0 0.0
    %640 = vmatpush1.msra.mxu0 0.0
    %641 = vmatprep.subr.mxu0 0.0
    %642 = vmatpush1.msra.mxu0 0.0
    %643 = vmatprep.subr.mxu0 0.0
    %644 = vmatpush1.msra.mxu0 0.0
    %645 = vmatprep.subr.mxu0 0.0
    %646 = vmatpush1.msra.mxu0 0.0
    %647 = vmatprep.subr.mxu0 0.0
    %648 = vmatpush1.msra.mxu0 0.0
    %649 = vmatprep.subr.mxu0 0.0
    %650 = vmatpush1.msra.mxu0 0.0
    %651 = vmatprep.subr.mxu0 0.0
    %652 = vmatpush1.msra.mxu0 0.0
    %653 = vmatprep.subr.mxu0 0.0
    %654 = vmatpush1.msra.mxu0 0.0
    %655 = vmatprep.subr.mxu0 0.0
    %656 = vmatpush1.msra.mxu0 0.0
    %657 = vmatprep.subr.mxu0 0.0
    %658 = vmatpush1.msra.mxu0 0.0
    %659 = vmatprep.mubr.f32.mxu0 0.0
    %v660 = vand.u32 %v139, 4294901760
    %661 = vmatmul.mubr.f32.gmra.mrb[0].mxu0 %v660
    %v662 = vpop.f32.mrb[0].mxu0
    %v663 = vadd.f32 %v582, %v662
    %v664 = vpop.f32.mrb[0].mxu0
    %665 = vmatprep.mubr.f32.mxu0 0.0
    %v666 = vand.u32 %v142, 4294901760
    %667 = vmatmul.mubr.f32.gmra.mrb[0].mxu0 %v666
    %v668 = vpop.f32.mrb[0].mxu0
    %v669 = vadd.f32 %v588, %v668
    %v670 = vpop.f32.mrb[0].mxu0
    %671 = vdwg.mxu0
    %v672 = vld [vmem:[#allocation5] sm:$0xff]
    %v673 = vld [vmem:[#allocation5 + $0x8] sm:$0xff]
    %v674 = vld [vmem:[#allocation10] sm:$0xff]
    %v675 = vld [vmem:[#allocation10 + $0x8] sm:$0xff]
    %v676 = vld [vmem:[#allocation10 + $0x10] sm:$0xff]
    %v677 = vld [vmem:[#allocation10 + $0x18] sm:$0xff]
    %v678 = vld [vmem:[%s7] sm:$0x1]
    %v680 = vlaneseq
    %v681 = vshrl.u32 %v680, 7
    %v682 = vsub.s32 0, %v681
    %v683 = vrot.slane %v678, %v682
    %v686 = vsel %vm137, %v672, 0
    %v689 = vsel %vm137, %v673, 0
    %691 = vmatprep.subr.mxu0 0.0
    %v692 = vand.u32 %v674, 4294901760
    %693 = vmatpush1.msra.mxu0 %v692
    %694 = vmatprep.subr.mxu0 0.0
    %v695 = vand.u32 %v675, 4294901760
    %696 = vmatpush1.msra.mxu0 %v695
    %697 = vmatprep.subr.mxu0 0.0
    %v698 = vand.u32 %v676, 4294901760
    %699 = vmatpush1.msra.mxu0 %v698
    %700 = vmatprep.subr.mxu0 0.0
    %v701 = vand.u32 %v677, 4294901760
    %702 = vmatpush1.msra.mxu0 %v701
    %703 = vmatprep.subr.mxu0 0.0
    %704 = vmatpush1.msra.mxu0 0.0
    %705 = vmatprep.subr.mxu0 0.0
    %706 = vmatpush1.msra.mxu0 0.0
    %707 = vmatprep.subr.mxu0 0.0
    %708 = vmatpush1.msra.mxu0 0.0
    %709 = vmatprep.subr.mxu0 0.0
    %710 = vmatpush1.msra.mxu0 0.0
    %711 = vmatprep.subr.mxu0 0.0
    %712 = vmatpush1.msra.mxu0 0.0
    %713 = vmatprep.subr.mxu0 0.0
    %714 = vmatpush1.msra.mxu0 0.0
    %715 = vmatprep.subr.mxu0 0.0
    %716 = vmatpush1.msra.mxu0 0.0
    %717 = vmatprep.subr.mxu0 0.0
    %718 = vmatpush1.msra.mxu0 0.0
    %719 = vmatprep.subr.mxu0 0.0
    %720 = vmatpush1.msra.mxu0 0.0
    %721 = vmatprep.subr.mxu0 0.0
    %722 = vmatpush1.msra.mxu0 0.0
    %723 = vmatprep.subr.mxu0 0.0
    %724 = vmatpush1.msra.mxu0 0.0
    %725 = vmatprep.subr.mxu0 0.0
    %726 = vmatpush1.msra.mxu0 0.0
    %727 = vmatprep.subr.mxu0 0.0
    %728 = vmatpush1.msra.mxu0 0.0
    %729 = vmatprep.subr.mxu0 0.0
    %730 = vmatpush1.msra.mxu0 0.0
    %731 = vmatprep.subr.mxu0 0.0
    %732 = vmatpush1.msra.mxu0 0.0
    %733 = vmatprep.subr.mxu0 0.0
    %734 = vmatpush1.msra.mxu0 0.0
    %735 = vmatprep.subr.mxu0 0.0
    %736 = vmatpush1.msra.mxu0 0.0
    %737 = vmatprep.subr.mxu0 0.0
    %738 = vmatpush1.msra.mxu0 0.0
    %739 = vmatprep.subr.mxu0 0.0
    %740 = vmatpush1.msra.mxu0 0.0
    %741 = vmatprep.subr.mxu0 0.0
    %742 = vmatpush1.msra.mxu0 0.0
    %743 = vmatprep.subr.mxu0 0.0
    %744 = vmatpush1.msra.mxu0 0.0
    %745 = vmatprep.subr.mxu0 0.0
    %746 = vmatpush1.msra.mxu0 0.0
    %747 = vmatprep.subr.mxu0 0.0
    %748 = vmatpush1.msra.mxu0 0.0
    %749 = vmatprep.subr.mxu0 0.0
    %750 = vmatpush1.msra.mxu0 0.0
    %751 = vmatprep.subr.mxu0 0.0
    %752 = vmatpush1.msra.mxu0 0.0
    %753 = vmatprep.subr.mxu0 0.0
    %754 = vmatpush1.msra.mxu0 0.0
    %755 = vmatprep.subr.mxu0 0.0
    %756 = vmatpush1.msra.mxu0 0.0
    %757 = vmatprep.subr.mxu0 0.0
    %758 = vmatpush1.msra.mxu0 0.0
    %759 = vmatprep.mubr.f32.mxu0 0.0
    %v760 = vand.u32 %v686, 4294901760
    %v761 = vsub.f32 %v686, %v760
    %v762 = vand.u32 %v761, 4294901760
    %v763 = vsub.f32 %v761, %v762
    %v764 = vand.u32 %v763, 4294901760
    %765 = vmatmul.mubr.f32.gmra.mrb[0].mxu0 %v764
    %v766 = vpop.f32.mrb[0].mxu0
    %v767 = vadd.f32 %v683, %v766
    %v768 = vpop.f32.mrb[0].mxu0
    %769 = vmatprep.mubr.f32.mxu0 0.0
    %v770 = vand.u32 %v689, 4294901760
    %v771 = vsub.f32 %v689, %v770
    %v772 = vand.u32 %v771, 4294901760
    %v773 = vsub.f32 %v771, %v772
    %v774 = vand.u32 %v773, 4294901760
    %775 = vmatmul.mubr.f32.gmra.mrb[0].mxu0 %v774
    %v776 = vpop.f32.mrb[0].mxu0
    %v777 = vadd.f32 %v683, %v776
    %v778 = vpop.f32.mrb[0].mxu0
    %779 = vdwg.mxu0
    %780 = vmatprep.subr.mxu0 0.0
    %v781 = vand.u32 %v674, 4294901760
    %v782 = vsub.f32 %v674, %v781
    %v783 = vand.u32 %v782, 4294901760
    %v784 = vsub.f32 %v782, %v783
    %v785 = vand.u32 %v784, 4294901760
    %786 = vmatpush1.msra.mxu0 %v785
    %787 = vmatprep.subr.mxu0 0.0
    %v788 = vand.u32 %v675, 4294901760
    %v789 = vsub.f32 %v675, %v788
    %v790 = vand.u32 %v789, 4294901760
    %v791 = vsub.f32 %v789, %v790
    %v792 = vand.u32 %v791, 4294901760
    %793 = vmatpush1.msra.mxu0 %v792
    %794 = vmatprep.subr.mxu0 0.0
    %v795 = vand.u32 %v676, 4294901760
    %v796 = vsub.f32 %v676, %v795
    %v797 = vand.u32 %v796, 4294901760
    %v798 = vsub.f32 %v796, %v797
    %v799 = vand.u32 %v798, 4294901760
    %800 = vmatpush1.msra.mxu0 %v799
    %801 = vmatprep.subr.mxu0 0.0
    %v802 = vand.u32 %v677, 4294901760
    %v803 = vsub.f32 %v677, %v802
    %v804 = vand.u32 %v803, 4294901760
    %v805 = vsub.f32 %v803, %v804
    %v806 = vand.u32 %v805, 4294901760
    %807 = vmatpush1.msra.mxu0 %v806
    %808 = vmatprep.subr.mxu0 0.0
    %809 = vmatpush1.msra.mxu0 0.0
    %810 = vmatprep.subr.mxu0 0.0
    %811 = vmatpush1.msra.mxu0 0.0
    %812 = vmatprep.subr.mxu0 0.0
    %813 = vmatpush1.msra.mxu0 0.0
    %814 = vmatprep.subr.mxu0 0.0
    %815 = vmatpush1.msra.mxu0 0.0
    %816 = vmatprep.subr.mxu0 0.0
    %817 = vmatpush1.msra.mxu0 0.0
    %818 = vmatprep.subr.mxu0 0.0
    %819 = vmatpush1.msra.mxu0 0.0
    %820 = vmatprep.subr.mxu0 0.0
    %821 = vmatpush1.msra.mxu0 0.0
    %822 = vmatprep.subr.mxu0 0.0
    %823 = vmatpush1.msra.mxu0 0.0
    %824 = vmatprep.subr.mxu0 0.0
    %825 = vmatpush1.msra.mxu0 0.0
    %826 = vmatprep.subr.mxu0 0.0
    %827 = vmatpush1.msra.mxu0 0.0
    %828 = vmatprep.subr.mxu0 0.0
    %829 = vmatpush1.msra.mxu0 0.0
    %830 = vmatprep.subr.mxu0 0.0
    %831 = vmatpush1.msra.mxu0 0.0
    %832 = vmatprep.subr.mxu0 0.0
    %833 = vmatpush1.msra.mxu0 0.0
    %834 = vmatprep.subr.mxu0 0.0
    %835 = vmatpush1.msra.mxu0 0.0
    %836 = vmatprep.subr.mxu0 0.0
    %837 = vmatpush1.msra.mxu0 0.0
    %838 = vmatprep.subr.mxu0 0.0
    %839 = vmatpush1.msra.mxu0 0.0
    %840 = vmatprep.subr.mxu0 0.0
    %841 = vmatpush1.msra.mxu0 0.0
    %842 = vmatprep.subr.mxu0 0.0
    %843 = vmatpush1.msra.mxu0 0.0
    %844 = vmatprep.subr.mxu0 0.0
    %845 = vmatpush1.msra.mxu0 0.0
    %846 = vmatprep.subr.mxu0 0.0
    %847 = vmatpush1.msra.mxu0 0.0
    %848 = vmatprep.subr.mxu0 0.0
    %849 = vmatpush1.msra.mxu0 0.0
    %850 = vmatprep.subr.mxu0 0.0
    %851 = vmatpush1.msra.mxu0 0.0
    %852 = vmatprep.subr.mxu0 0.0
    %853 = vmatpush1.msra.mxu0 0.0
    %854 = vmatprep.subr.mxu0 0.0
    %855 = vmatpush1.msra.mxu0 0.0
    %856 = vmatprep.subr.mxu0 0.0
    %857 = vmatpush1.msra.mxu0 0.0
    %858 = vmatprep.subr.mxu0 0.0
    %859 = vmatpush1.msra.mxu0 0.0
    %860 = vmatprep.subr.mxu0 0.0
    %861 = vmatpush1.msra.mxu0 0.0
    %862 = vmatprep.subr.mxu0 0.0
    %863 = vmatpush1.msra.mxu0 0.0
    %864 = vmatprep.mubr.f32.mxu0 0.0
    %v865 = vand.u32 %v686, 4294901760
    %866 = vmatmul.mubr.f32.gmra.mrb[0].mxu0 %v865
    %v867 = vpop.f32.mrb[0].mxu0
    %v868 = vadd.f32 %v767, %v867
    %v869 = vpop.f32.mrb[0].mxu0
    %870 = vmatprep.mubr.f32.mxu0 0.0
    %v871 = vand.u32 %v689, 4294901760
    %872 = vmatmul.mubr.f32.gmra.mrb[0].mxu0 %v871
    %v873 = vpop.f32.mrb[0].mxu0
    %v874 = vadd.f32 %v777, %v873
    %v875 = vpop.f32.mrb[0].mxu0
    %876 = vdwg.mxu0
    %877 = vmatprep.subr.mxu0 0.0
    %v878 = vand.u32 %v674, 4294901760
    %v879 = vsub.f32 %v674, %v878
    %880 = vmatpush1.msra.mxu0 %v879
    %881 = vmatprep.subr.mxu0 0.0
    %v882 = vand.u32 %v675, 4294901760
    %v883 = vsub.f32 %v675, %v882
    %884 = vmatpush1.msra.mxu0 %v883
    %885 = vmatprep.subr.mxu0 0.0
    %v886 = vand.u32 %v676, 4294901760
    %v887 = vsub.f32 %v676, %v886
    %888 = vmatpush1.msra.mxu0 %v887
    %889 = vmatprep.subr.mxu0 0.0
    %v890 = vand.u32 %v677, 4294901760
    %v891 = vsub.f32 %v677, %v890
    %892 = vmatpush1.msra.mxu0 %v891
    %893 = vmatprep.subr.mxu0 0.0
    %894 = vmatpush1.msra.mxu0 0.0
    %895 = vmatprep.subr.mxu0 0.0
    %896 = vmatpush1.msra.mxu0 0.0
    %897 = vmatprep.subr.mxu0 0.0
    %898 = vmatpush1.msra.mxu0 0.0
    %899 = vmatprep.subr.mxu0 0.0
    %900 = vmatpush1.msra.mxu0 0.0
    %901 = vmatprep.subr.mxu0 0.0
    %902 = vmatpush1.msra.mxu0 0.0
    %903 = vmatprep.subr.mxu0 0.0
    %904 = vmatpush1.msra.mxu0 0.0
    %905 = vmatprep.subr.mxu0 0.0
    %906 = vmatpush1.msra.mxu0 0.0
    %907 = vmatprep.subr.mxu0 0.0
    %908 = vmatpush1.msra.mxu0 0.0
    %909 = vmatprep.subr.mxu0 0.0
    %910 = vmatpush1.msra.mxu0 0.0
    %911 = vmatprep.subr.mxu0 0.0
    %912 = vmatpush1.msra.mxu0 0.0
    %913 = vmatprep.subr.mxu0 0.0
    %914 = vmatpush1.msra.mxu0 0.0
    %915 = vmatprep.subr.mxu0 0.0
    %916 = vmatpush1.msra.mxu0 0.0
    %917 = vmatprep.subr.mxu0 0.0
    %918 = vmatpush1.msra.mxu0 0.0
    %919 = vmatprep.subr.mxu0 0.0
    %920 = vmatpush1.msra.mxu0 0.0
    %921 = vmatprep.subr.mxu0 0.0
    %922 = vmatpush1.msra.mxu0 0.0
    %923 = vmatprep.subr.mxu0 0.0
    %924 = vmatpush1.msra.mxu0 0.0
    %925 = vmatprep.subr.mxu0 0.0
    %926 = vmatpush1.msra.mxu0 0.0
    %927 = vmatprep.subr.mxu0 0.0
    %928 = vmatpush1.msra.mxu0 0.0
    %929 = vmatprep.subr.mxu0 0.0
    %930 = vmatpush1.msra.mxu0 0.0
    %931 = vmatprep.subr.mxu0 0.0
    %932 = vmatpush1.msra.mxu0 0.0
    %933 = vmatprep.subr.mxu0 0.0
    %934 = vmatpush1.msra.mxu0 0.0
    %935 = vmatprep.subr.mxu0 0.0
    %936 = vmatpush1.msra.mxu0 0.0
    %937 = vmatprep.subr.mxu0 0.0
    %938 = vmatpush1.msra.mxu0 0.0
    %939 = vmatprep.subr.mxu0 0.0
    %940 = vmatpush1.msra.mxu0 0.0
    %941 = vmatprep.subr.mxu0 0.0
    %942 = vmatpush1.msra.mxu0 0.0
    %943 = vmatprep.subr.mxu0 0.0
    %944 = vmatpush1.msra.mxu0 0.0
    %945 = vmatprep.subr.mxu0 0.0
    %946 = vmatpush1.msra.mxu0 0.0
    %947 = vmatprep.subr.mxu0 0.0
    %948 = vmatpush1.msra.mxu0 0.0
    %949 = vmatprep.mubr.f32.mxu0 0.0
    %v950 = vand.u32 %v686, 4294901760
    %v951 = vsub.f32 %v686, %v950
    %952 = vmatmul.mubr.f32.gmra.mrb[0].mxu0 %v951
    %v953 = vpop.f32.mrb[0].mxu0
    %v954 = vadd.f32 %v868, %v953
    %v955 = vpop.f32.mrb[0].mxu0
    %956 = vmatprep.mubr.f32.mxu0 0.0
    %v957 = vand.u32 %v689, 4294901760
    %v958 = vsub.f32 %v689, %v957
    %959 = vmatmul.mubr.f32.gmra.mrb[0].mxu0 %v958
    %v960 = vpop.f32.mrb[0].mxu0
    %v961 = vadd.f32 %v874, %v960
    %v962 = vpop.f32.mrb[0].mxu0
    %963 = vdwg.mxu0
    %964 = vmatprep.subr.mxu0 0.0
    %v965 = vand.u32 %v674, 4294901760
    %966 = vmatpush1.msra.mxu0 %v965
    %967 = vmatprep.subr.mxu0 0.0
    %v968 = vand.u32 %v675, 4294901760
    %969 = vmatpush1.msra.mxu0 %v968
    %970 = vmatprep.subr.mxu0 0.0
    %v971 = vand.u32 %v676, 4294901760
    %972 = vmatpush1.msra.mxu0 %v971
    %973 = vmatprep.subr.mxu0 0.0
    %v974 = vand.u32 %v677, 4294901760
    %975 = vmatpush1.msra.mxu0 %v974
    %976 = vmatprep.subr.mxu0 0.0
    %977 = vmatpush1.msra.mxu0 0.0
    %978 = vmatprep.subr.mxu0 0.0
    %979 = vmatpush1.msra.mxu0 0.0
    %980 = vmatprep.subr.mxu0 0.0
    %981 = vmatpush1.msra.mxu0 0.0
    %982 = vmatprep.subr.mxu0 0.0
    %983 = vmatpush1.msra.mxu0 0.0
    %984 = vmatprep.subr.mxu0 0.0
    %985 = vmatpush1.msra.mxu0 0.0
    %986 = vmatprep.subr.mxu0 0.0
    %987 = vmatpush1.msra.mxu0 0.0
    %988 = vmatprep.subr.mxu0 0.0
    %989 = vmatpush1.msra.mxu0 0.0
    %990 = vmatprep.subr.mxu0 0.0
    %991 = vmatpush1.msra.mxu0 0.0
    %992 = vmatprep.subr.mxu0 0.0
    %993 = vmatpush1.msra.mxu0 0.0
    %994 = vmatprep.subr.mxu0 0.0
    %995 = vmatpush1.msra.mxu0 0.0
    %996 = vmatprep.subr.mxu0 0.0
    %997 = vmatpush1.msra.mxu0 0.0
    %998 = vmatprep.subr.mxu0 0.0
    %999 = vmatpush1.msra.mxu0 0.0
    %1000 = vmatprep.subr.mxu0 0.0
    %1001 = vmatpush1.msra.mxu0 0.0
    %1002 = vmatprep.subr.mxu0 0.0
    %1003 = vmatpush1.msra.mxu0 0.0
    %1004 = vmatprep.subr.mxu0 0.0
    %1005 = vmatpush1.msra.mxu0 0.0
    %1006 = vmatprep.subr.mxu0 0.0
    %1007 = vmatpush1.msra.mxu0 0.0
    %1008 = vmatprep.subr.mxu0 0.0
    %1009 = vmatpush1.msra.mxu0 0.0
    %1010 = vmatprep.subr.mxu0 0.0
    %1011 = vmatpush1.msra.mxu0 0.0
    %1012 = vmatprep.subr.mxu0 0.0
    %1013 = vmatpush1.msra.mxu0 0.0
    %1014 = vmatprep.subr.mxu0 0.0
    %1015 = vmatpush1.msra.mxu0 0.0
    %1016 = vmatprep.subr.mxu0 0.0
    %1017 = vmatpush1.msra.mxu0 0.0
    %1018 = vmatprep.subr.mxu0 0.0
    %1019 = vmatpush1.msra.mxu0 0.0
    %1020 = vmatprep.subr.mxu0 0.0
    %1021 = vmatpush1.msra.mxu0 0.0
    %1022 = vmatprep.subr.mxu0 0.0
    %1023 = vmatpush1.msra.mxu0 0.0
    %1024 = vmatprep.subr.mxu0 0.0
    %1025 = vmatpush1.msra.mxu0 0.0
    %1026 = vmatprep.subr.mxu0 0.0
    %1027 = vmatpush1.msra.mxu0 0.0
    %1028 = vmatprep.subr.mxu0 0.0
    %1029 = vmatpush1.msra.mxu0 0.0
    %1030 = vmatprep.subr.mxu0 0.0
    %1031 = vmatpush1.msra.mxu0 0.0
    %1032 = vmatprep.mubr.f32.mxu0 0.0
    %v1033 = vand.u32 %v686, 4294901760
    %v1034 = vsub.f32 %v686, %v1033
    %v1035 = vand.u32 %v1034, 4294901760
    %1036 = vmatmul.mubr.f32.gmra.mrb[0].mxu0 %v1035
    %v1037 = vpop.f32.mrb[0].mxu0
    %v1038 = vadd.f32 %v954, %v1037
    %v1039 = vpop.f32.mrb[0].mxu0
    %1040 = vmatprep.mubr.f32.mxu0 0.0
    %v1041 = vand.u32 %v689, 4294901760
    %v1042 = vsub.f32 %v689, %v1041
    %v1043 = vand.u32 %v1042, 4294901760
    %1044 = vmatmul.mubr.f32.gmra.mrb[0].mxu0 %v1043
    %v1045 = vpop.f32.mrb[0].mxu0
    %v1046 = vadd.f32 %v961, %v1045
    %v1047 = vpop.f32.mrb[0].mxu0
    %1048 = vdwg.mxu0
    %1049 = vmatprep.subr.mxu0 0.0
    %v1050 = vand.u32 %v674, 4294901760
    %v1051 = vsub.f32 %v674, %v1050
    %v1052 = vand.u32 %v1051, 4294901760
    %1053 = vmatpush1.msra.mxu0 %v1052
    %1054 = vmatprep.subr.mxu0 0.0
    %v1055 = vand.u32 %v675, 4294901760
    %v1056 = vsub.f32 %v675, %v1055
    %v1057 = vand.u32 %v1056, 4294901760
    %1058 = vmatpush1.msra.mxu0 %v1057
    %1059 = vmatprep.subr.mxu0 0.0
    %v1060 = vand.u32 %v676, 4294901760
    %v1061 = vsub.f32 %v676, %v1060
    %v1062 = vand.u32 %v1061, 4294901760
    %1063 = vmatpush1.msra.mxu0 %v1062
    %1064 = vmatprep.subr.mxu0 0.0
    %v1065 = vand.u32 %v677, 4294901760
    %v1066 = vsub.f32 %v677, %v1065
    %v1067 = vand.u32 %v1066, 4294901760
    %1068 = vmatpush1.msra.mxu0 %v1067
    %1069 = vmatprep.subr.mxu0 0.0
    %1070 = vmatpush1.msra.mxu0 0.0
    %1071 = vmatprep.subr.mxu0 0.0
    %1072 = vmatpush1.msra.mxu0 0.0
    %1073 = vmatprep.subr.mxu0 0.0
    %1074 = vmatpush1.msra.mxu0 0.0
    %1075 = vmatprep.subr.mxu0 0.0
    %1076 = vmatpush1.msra.mxu0 0.0
    %1077 = vmatprep.subr.mxu0 0.0
    %1078 = vmatpush1.msra.mxu0 0.0
    %1079 = vmatprep.subr.mxu0 0.0
    %1080 = vmatpush1.msra.mxu0 0.0
    %1081 = vmatprep.subr.mxu0 0.0
    %1082 = vmatpush1.msra.mxu0 0.0
    %1083 = vmatprep.subr.mxu0 0.0
    %1084 = vmatpush1.msra.mxu0 0.0
    %1085 = vmatprep.subr.mxu0 0.0
    %1086 = vmatpush1.msra.mxu0 0.0
    %1087 = vmatprep.subr.mxu0 0.0
    %1088 = vmatpush1.msra.mxu0 0.0
    %1089 = vmatprep.subr.mxu0 0.0
    %1090 = vmatpush1.msra.mxu0 0.0
    %1091 = vmatprep.subr.mxu0 0.0
    %1092 = vmatpush1.msra.mxu0 0.0
    %1093 = vmatprep.subr.mxu0 0.0
    %1094 = vmatpush1.msra.mxu0 0.0
    %1095 = vmatprep.subr.mxu0 0.0
    %1096 = vmatpush1.msra.mxu0 0.0
    %1097 = vmatprep.subr.mxu0 0.0
    %1098 = vmatpush1.msra.mxu0 0.0
    %1099 = vmatprep.subr.mxu0 0.0
    %1100 = vmatpush1.msra.mxu0 0.0
    %1101 = vmatprep.subr.mxu0 0.0
    %1102 = vmatpush1.msra.mxu0 0.0
    %1103 = vmatprep.subr.mxu0 0.0
    %1104 = vmatpush1.msra.mxu0 0.0
    %1105 = vmatprep.subr.mxu0 0.0
    %1106 = vmatpush1.msra.mxu0 0.0
    %1107 = vmatprep.subr.mxu0 0.0
    %1108 = vmatpush1.msra.mxu0 0.0
    %1109 = vmatprep.subr.mxu0 0.0
    %1110 = vmatpush1.msra.mxu0 0.0
    %1111 = vmatprep.subr.mxu0 0.0
    %1112 = vmatpush1.msra.mxu0 0.0
    %1113 = vmatprep.subr.mxu0 0.0
    %1114 = vmatpush1.msra.mxu0 0.0
    %1115 = vmatprep.subr.mxu0 0.0
    %1116 = vmatpush1.msra.mxu0 0.0
    %1117 = vmatprep.subr.mxu0 0.0
    %1118 = vmatpush1.msra.mxu0 0.0
    %1119 = vmatprep.subr.mxu0 0.0
    %1120 = vmatpush1.msra.mxu0 0.0
    %1121 = vmatprep.subr.mxu0 0.0
    %1122 = vmatpush1.msra.mxu0 0.0
    %1123 = vmatprep.subr.mxu0 0.0
    %1124 = vmatpush1.msra.mxu0 0.0
    %1125 = vmatprep.mubr.f32.mxu0 0.0
    %v1126 = vand.u32 %v686, 4294901760
    %1127 = vmatmul.mubr.f32.gmra.mrb[0].mxu0 %v1126
    %v1128 = vpop.f32.mrb[0].mxu0
    %v1129 = vadd.f32 %v1038, %v1128
    %v1130 = vpop.f32.mrb[0].mxu0
    %1131 = vmatprep.mubr.f32.mxu0 0.0
    %v1132 = vand.u32 %v689, 4294901760
    %1133 = vmatmul.mubr.f32.gmra.mrb[0].mxu0 %v1132
    %v1134 = vpop.f32.mrb[0].mxu0
    %v1135 = vadd.f32 %v1046, %v1134
    %v1136 = vpop.f32.mrb[0].mxu0
    %1137 = vdwg.mxu0
    %1138 = vmatprep.subr.mxu0 0.0
    %v1139 = vand.u32 %v674, 4294901760
    %1140 = vmatpush1.msra.mxu0 %v1139
    %1141 = vmatprep.subr.mxu0 0.0
    %v1142 = vand.u32 %v675, 4294901760
    %1143 = vmatpush1.msra.mxu0 %v1142
    %1144 = vmatprep.subr.mxu0 0.0
    %v1145 = vand.u32 %v676, 4294901760
    %1146 = vmatpush1.msra.mxu0 %v1145
    %1147 = vmatprep.subr.mxu0 0.0
    %v1148 = vand.u32 %v677, 4294901760
    %1149 = vmatpush1.msra.mxu0 %v1148
    %1150 = vmatprep.subr.mxu0 0.0
    %1151 = vmatpush1.msra.mxu0 0.0
    %1152 = vmatprep.subr.mxu0 0.0
    %1153 = vmatpush1.msra.mxu0 0.0
    %1154 = vmatprep.subr.mxu0 0.0
    %1155 = vmatpush1.msra.mxu0 0.0
    %1156 = vmatprep.subr.mxu0 0.0
    %1157 = vmatpush1.msra.mxu0 0.0
    %1158 = vmatprep.subr.mxu0 0.0
    %1159 = vmatpush1.msra.mxu0 0.0
    %1160 = vmatprep.subr.mxu0 0.0
    %1161 = vmatpush1.msra.mxu0 0.0
    %1162 = vmatprep.subr.mxu0 0.0
    %1163 = vmatpush1.msra.mxu0 0.0
    %1164 = vmatprep.subr.mxu0 0.0
    %1165 = vmatpush1.msra.mxu0 0.0
    %1166 = vmatprep.subr.mxu0 0.0
    %1167 = vmatpush1.msra.mxu0 0.0
    %1168 = vmatprep.subr.mxu0 0.0
    %1169 = vmatpush1.msra.mxu0 0.0
    %1170 = vmatprep.subr.mxu0 0.0
    %1171 = vmatpush1.msra.mxu0 0.0
    %1172 = vmatprep.subr.mxu0 0.0
    %1173 = vmatpush1.msra.mxu0 0.0
    %1174 = vmatprep.subr.mxu0 0.0
    %1175 = vmatpush1.msra.mxu0 0.0
    %1176 = vmatprep.subr.mxu0 0.0
    %1177 = vmatpush1.msra.mxu0 0.0
    %1178 = vmatprep.subr.mxu0 0.0
    %1179 = vmatpush1.msra.mxu0 0.0
    %1180 = vmatprep.subr.mxu0 0.0
    %1181 = vmatpush1.msra.mxu0 0.0
    %1182 = vmatprep.subr.mxu0 0.0
    %1183 = vmatpush1.msra.mxu0 0.0
    %1184 = vmatprep.subr.mxu0 0.0
    %1185 = vmatpush1.msra.mxu0 0.0
    %1186 = vmatprep.subr.mxu0 0.0
    %1187 = vmatpush1.msra.mxu0 0.0
    %1188 = vmatprep.subr.mxu0 0.0
    %1189 = vmatpush1.msra.mxu0 0.0
    %1190 = vmatprep.subr.mxu0 0.0
    %1191 = vmatpush1.msra.mxu0 0.0
    %1192 = vmatprep.subr.mxu0 0.0
    %1193 = vmatpush1.msra.mxu0 0.0
    %1194 = vmatprep.subr.mxu0 0.0
    %1195 = vmatpush1.msra.mxu0 0.0
    %1196 = vmatprep.subr.mxu0 0.0
    %1197 = vmatpush1.msra.mxu0 0.0
    %1198 = vmatprep.subr.mxu0 0.0
    %1199 = vmatpush1.msra.mxu0 0.0
    %1200 = vmatprep.subr.mxu0 0.0
    %1201 = vmatpush1.msra.mxu0 0.0
    %1202 = vmatprep.subr.mxu0 0.0
    %1203 = vmatpush1.msra.mxu0 0.0
    %1204 = vmatprep.subr.mxu0 0.0
    %1205 = vmatpush1.msra.mxu0 0.0
    %1206 = vmatprep.mubr.f32.mxu0 0.0
    %v1207 = vand.u32 %v686, 4294901760
    %1208 = vmatmul.mubr.f32.gmra.mrb[0].mxu0 %v1207
    %v1209 = vpop.f32.mrb[0].mxu0
    %v1210 = vadd.f32 %v1129, %v1209
    %v1211 = vpop.f32.mrb[0].mxu0
    %1212 = vmatprep.mubr.f32.mxu0 0.0
    %v1213 = vand.u32 %v689, 4294901760
    %1214 = vmatmul.mubr.f32.gmra.mrb[0].mxu0 %v1213
    %v1215 = vpop.f32.mrb[0].mxu0
    %v1216 = vadd.f32 %v1135, %v1215
    %v1217 = vpop.f32.mrb[0].mxu0
    %1218 = vdwg.mxu0
    %v1219 = vld [vmem:[#allocation7] sm:$0xff]
    %v1220 = vld [vmem:[#allocation7 + $0x8] sm:$0xff]
    %v1221 = vld [vmem:[#allocation11] sm:$0xff]
    %v1222 = vld [vmem:[#allocation11 + $0x8] sm:$0xff]
    %v1223 = vld [vmem:[#allocation11 + $0x10] sm:$0xff]
    %v1224 = vld [vmem:[#allocation11 + $0x18] sm:$0xff]
    %v1225 = vld [vmem:[%s9] sm:$0x1]
    %v1227 = vlaneseq
    %v1228 = vshrl.u32 %v1227, 7
    %v1229 = vsub.s32 0, %v1228
    %v1230 = vrot.slane %v1225, %v1229
    %v1233 = vsel %vm137, %v1219, 0
    %v1236 = vsel %vm137, %v1220, 0
    %1238 = vmatprep.subr.mxu0 0.0
    %v1239 = vand.u32 %v1221, 4294901760
    %1240 = vmatpush1.msra.mxu0 %v1239
    %1241 = vmatprep.subr.mxu0 0.0
    %v1242 = vand.u32 %v1222, 4294901760
    %1243 = vmatpush1.msra.mxu0 %v1242
    %1244 = vmatprep.subr.mxu0 0.0
    %v1245 = vand.u32 %v1223, 4294901760
    %1246 = vmatpush1.msra.mxu0 %v1245
    %1247 = vmatprep.subr.mxu0 0.0
    %v1248 = vand.u32 %v1224, 4294901760
    %1249 = vmatpush1.msra.mxu0 %v1248
    %1250 = vmatprep.subr.mxu0 0.0
    %1251 = vmatpush1.msra.mxu0 0.0
    %1252 = vmatprep.subr.mxu0 0.0
    %1253 = vmatpush1.msra.mxu0 0.0
    %1254 = vmatprep.subr.mxu0 0.0
    %1255 = vmatpush1.msra.mxu0 0.0
    %1256 = vmatprep.subr.mxu0 0.0
    %1257 = vmatpush1.msra.mxu0 0.0
    %1258 = vmatprep.subr.mxu0 0.0
    %1259 = vmatpush1.msra.mxu0 0.0
    %1260 = vmatprep.subr.mxu0 0.0
    %1261 = vmatpush1.msra.mxu0 0.0
    %1262 = vmatprep.subr.mxu0 0.0
    %1263 = vmatpush1.msra.mxu0 0.0
    %1264 = vmatprep.subr.mxu0 0.0
    %1265 = vmatpush1.msra.mxu0 0.0
    %1266 = vmatprep.subr.mxu0 0.0
    %1267 = vmatpush1.msra.mxu0 0.0
    %1268 = vmatprep.subr.mxu0 0.0
    %1269 = vmatpush1.msra.mxu0 0.0
    %1270 = vmatprep.subr.mxu0 0.0
    %1271 = vmatpush1.msra.mxu0 0.0
    %1272 = vmatprep.subr.mxu0 0.0
    %1273 = vmatpush1.msra.mxu0 0.0
    %1274 = vmatprep.subr.mxu0 0.0
    %1275 = vmatpush1.msra.mxu0 0.0
    %1276 = vmatprep.subr.mxu0 0.0
    %1277 = vmatpush1.msra.mxu0 0.0
    %1278 = vmatprep.subr.mxu0 0.0
    %1279 = vmatpush1.msra.mxu0 0.0
    %1280 = vmatprep.subr.mxu0 0.0
    %1281 = vmatpush1.msra.mxu0 0.0
    %1282 = vmatprep.subr.mxu0 0.0
    %1283 = vmatpush1.msra.mxu0 0.0
    %1284 = vmatprep.subr.mxu0 0.0
    %1285 = vmatpush1.msra.mxu0 0.0
    %1286 = vmatprep.subr.mxu0 0.0
    %1287 = vmatpush1.msra.mxu0 0.0
    %1288 = vmatprep.subr.mxu0 0.0
    %1289 = vmatpush1.msra.mxu0 0.0
    %1290 = vmatprep.subr.mxu0 0.0
    %1291 = vmatpush1.msra.mxu0 0.0
    %1292 = vmatprep.subr.mxu0 0.0
    %1293 = vmatpush1.msra.mxu0 0.0
    %1294 = vmatprep.subr.mxu0 0.0
    %1295 = vmatpush1.msra.mxu0 0.0
    %1296 = vmatprep.subr.mxu0 0.0
    %1297 = vmatpush1.msra.mxu0 0.0
    %1298 = vmatprep.subr.mxu0 0.0
    %1299 = vmatpush1.msra.mxu0 0.0
    %1300 = vmatprep.subr.mxu0 0.0
    %1301 = vmatpush1.msra.mxu0 0.0
    %1302 = vmatprep.subr.mxu0 0.0
    %1303 = vmatpush1.msra.mxu0 0.0
    %1304 = vmatprep.subr.mxu0 0.0
    %1305 = vmatpush1.msra.mxu0 0.0
    %1306 = vmatprep.mubr.f32.mxu0 0.0
    %v1307 = vand.u32 %v1233, 4294901760
    %v1308 = vsub.f32 %v1233, %v1307
    %v1309 = vand.u32 %v1308, 4294901760
    %v1310 = vsub.f32 %v1308, %v1309
    %v1311 = vand.u32 %v1310, 4294901760
    %1312 = vmatmul.mubr.f32.gmra.mrb[0].mxu0 %v1311
    %v1313 = vpop.f32.mrb[0].mxu0
    %v1314 = vadd.f32 %v1230, %v1313
    %v1315 = vpop.f32.mrb[0].mxu0
    %1316 = vmatprep.mubr.f32.mxu0 0.0
    %v1317 = vand.u32 %v1236, 4294901760
    %v1318 = vsub.f32 %v1236, %v1317
    %v1319 = vand.u32 %v1318, 4294901760
    %v1320 = vsub.f32 %v1318, %v1319
    %v1321 = vand.u32 %v1320, 4294901760
    %1322 = vmatmul.mubr.f32.gmra.mrb[0].mxu0 %v1321
    %v1323 = vpop.f32.mrb[0].mxu0
    %v1324 = vadd.f32 %v1230, %v1323
    %v1325 = vpop.f32.mrb[0].mxu0
    %1326 = vdwg.mxu0
    %1327 = vmatprep.subr.mxu0 0.0
    %v1328 = vand.u32 %v1221, 4294901760
    %v1329 = vsub.f32 %v1221, %v1328
    %v1330 = vand.u32 %v1329, 4294901760
    %v1331 = vsub.f32 %v1329, %v1330
    %v1332 = vand.u32 %v1331, 4294901760
    %1333 = vmatpush1.msra.mxu0 %v1332
    %1334 = vmatprep.subr.mxu0 0.0
    %v1335 = vand.u32 %v1222, 4294901760
    %v1336 = vsub.f32 %v1222, %v1335
    %v1337 = vand.u32 %v1336, 4294901760
    %v1338 = vsub.f32 %v1336, %v1337
    %v1339 = vand.u32 %v1338, 4294901760
    %1340 = vmatpush1.msra.mxu0 %v1339
    %1341 = vmatprep.subr.mxu0 0.0
    %v1342 = vand.u32 %v1223, 4294901760
    %v1343 = vsub.f32 %v1223, %v1342
    %v1344 = vand.u32 %v1343, 4294901760
    %v1345 = vsub.f32 %v1343, %v1344
    %v1346 = vand.u32 %v1345, 4294901760
    %1347 = vmatpush1.msra.mxu0 %v1346
    %1348 = vmatprep.subr.mxu0 0.0
    %v1349 = vand.u32 %v1224, 4294901760
    %v1350 = vsub.f32 %v1224, %v1349
    %v1351 = vand.u32 %v1350, 4294901760
    %v1352 = vsub.f32 %v1350, %v1351
    %v1353 = vand.u32 %v1352, 4294901760
    %1354 = vmatpush1.msra.mxu0 %v1353
    %1355 = vmatprep.subr.mxu0 0.0
    %1356 = vmatpush1.msra.mxu0 0.0
    %1357 = vmatprep.subr.mxu0 0.0
    %1358 = vmatpush1.msra.mxu0 0.0
    %1359 = vmatprep.subr.mxu0 0.0
    %1360 = vmatpush1.msra.mxu0 0.0
    %1361 = vmatprep.subr.mxu0 0.0
    %1362 = vmatpush1.msra.mxu0 0.0
    %1363 = vmatprep.subr.mxu0 0.0
    %1364 = vmatpush1.msra.mxu0 0.0
    %1365 = vmatprep.subr.mxu0 0.0
    %1366 = vmatpush1.msra.mxu0 0.0
    %1367 = vmatprep.subr.mxu0 0.0
    %1368 = vmatpush1.msra.mxu0 0.0
    %1369 = vmatprep.subr.mxu0 0.0
    %1370 = vmatpush1.msra.mxu0 0.0
    %1371 = vmatprep.subr.mxu0 0.0
    %1372 = vmatpush1.msra.mxu0 0.0
    %1373 = vmatprep.subr.mxu0 0.0
    %1374 = vmatpush1.msra.mxu0 0.0
    %1375 = vmatprep.subr.mxu0 0.0
    %1376 = vmatpush1.msra.mxu0 0.0
    %1377 = vmatprep.subr.mxu0 0.0
    %1378 = vmatpush1.msra.mxu0 0.0
    %1379 = vmatprep.subr.mxu0 0.0
    %1380 = vmatpush1.msra.mxu0 0.0
    %1381 = vmatprep.subr.mxu0 0.0
    %1382 = vmatpush1.msra.mxu0 0.0
    %1383 = vmatprep.subr.mxu0 0.0
    %1384 = vmatpush1.msra.mxu0 0.0
    %1385 = vmatprep.subr.mxu0 0.0
    %1386 = vmatpush1.msra.mxu0 0.0
    %1387 = vmatprep.subr.mxu0 0.0
    %1388 = vmatpush1.msra.mxu0 0.0
    %1389 = vmatprep.subr.mxu0 0.0
    %1390 = vmatpush1.msra.mxu0 0.0
    %1391 = vmatprep.subr.mxu0 0.0
    %1392 = vmatpush1.msra.mxu0 0.0
    %1393 = vmatprep.subr.mxu0 0.0
    %1394 = vmatpush1.msra.mxu0 0.0
    %1395 = vmatprep.subr.mxu0 0.0
    %1396 = vmatpush1.msra.mxu0 0.0
    %1397 = vmatprep.subr.mxu0 0.0
    %1398 = vmatpush1.msra.mxu0 0.0
    %1399 = vmatprep.subr.mxu0 0.0
    %1400 = vmatpush1.msra.mxu0 0.0
    %1401 = vmatprep.subr.mxu0 0.0
    %1402 = vmatpush1.msra.mxu0 0.0
    %1403 = vmatprep.subr.mxu0 0.0
    %1404 = vmatpush1.msra.mxu0 0.0
    %1405 = vmatprep.subr.mxu0 0.0
    %1406 = vmatpush1.msra.mxu0 0.0
    %1407 = vmatprep.subr.mxu0 0.0
    %1408 = vmatpush1.msra.mxu0 0.0
    %1409 = vmatprep.subr.mxu0 0.0
    %1410 = vmatpush1.msra.mxu0 0.0
    %1411 = vmatprep.mubr.f32.mxu0 0.0
    %v1412 = vand.u32 %v1233, 4294901760
    %1413 = vmatmul.mubr.f32.gmra.mrb[0].mxu0 %v1412
    %v1414 = vpop.f32.mrb[0].mxu0
    %v1415 = vadd.f32 %v1314, %v1414
    %v1416 = vpop.f32.mrb[0].mxu0
    %1417 = vmatprep.mubr.f32.mxu0 0.0
    %v1418 = vand.u32 %v1236, 4294901760
    %1419 = vmatmul.mubr.f32.gmra.mrb[0].mxu0 %v1418
    %v1420 = vpop.f32.mrb[0].mxu0
    %v1421 = vadd.f32 %v1324, %v1420
    %v1422 = vpop.f32.mrb[0].mxu0
    %1423 = vdwg.mxu0
    %1424 = vmatprep.subr.mxu0 0.0
    %v1425 = vand.u32 %v1221, 4294901760
    %v1426 = vsub.f32 %v1221, %v1425
    %1427 = vmatpush1.msra.mxu0 %v1426
    %1428 = vmatprep.subr.mxu0 0.0
    %v1429 = vand.u32 %v1222, 4294901760
    %v1430 = vsub.f32 %v1222, %v1429
    %1431 = vmatpush1.msra.mxu0 %v1430
    %1432 = vmatprep.subr.mxu0 0.0
    %v1433 = vand.u32 %v1223, 4294901760
    %v1434 = vsub.f32 %v1223, %v1433
    %1435 = vmatpush1.msra.mxu0 %v1434
    %1436 = vmatprep.subr.mxu0 0.0
    %v1437 = vand.u32 %v1224, 4294901760
    %v1438 = vsub.f32 %v1224, %v1437
    %1439 = vmatpush1.msra.mxu0 %v1438
    %1440 = vmatprep.subr.mxu0 0.0
    %1441 = vmatpush1.msra.mxu0 0.0
    %1442 = vmatprep.subr.mxu0 0.0
    %1443 = vmatpush1.msra.mxu0 0.0
    %1444 = vmatprep.subr.mxu0 0.0
    %1445 = vmatpush1.msra.mxu0 0.0
    %1446 = vmatprep.subr.mxu0 0.0
    %1447 = vmatpush1.msra.mxu0 0.0
    %1448 = vmatprep.subr.mxu0 0.0
    %1449 = vmatpush1.msra.mxu0 0.0
    %1450 = vmatprep.subr.mxu0 0.0
    %1451 = vmatpush1.msra.mxu0 0.0
    %1452 = vmatprep.subr.mxu0 0.0
    %1453 = vmatpush1.msra.mxu0 0.0
    %1454 = vmatprep.subr.mxu0 0.0
    %1455 = vmatpush1.msra.mxu0 0.0
    %1456 = vmatprep.subr.mxu0 0.0
    %1457 = vmatpush1.msra.mxu0 0.0
    %1458 = vmatprep.subr.mxu0 0.0
    %1459 = vmatpush1.msra.mxu0 0.0
    %1460 = vmatprep.subr.mxu0 0.0
    %1461 = vmatpush1.msra.mxu0 0.0
    %1462 = vmatprep.subr.mxu0 0.0
    %1463 = vmatpush1.msra.mxu0 0.0
    %1464 = vmatprep.subr.mxu0 0.0
    %1465 = vmatpush1.msra.mxu0 0.0
    %1466 = vmatprep.subr.mxu0 0.0
    %1467 = vmatpush1.msra.mxu0 0.0
    %1468 = vmatprep.subr.mxu0 0.0
    %1469 = vmatpush1.msra.mxu0 0.0
    %1470 = vmatprep.subr.mxu0 0.0
    %1471 = vmatpush1.msra.mxu0 0.0
    %1472 = vmatprep.subr.mxu0 0.0
    %1473 = vmatpush1.msra.mxu0 0.0
    %1474 = vmatprep.subr.mxu0 0.0
    %1475 = vmatpush1.msra.mxu0 0.0
    %1476 = vmatprep.subr.mxu0 0.0
    %1477 = vmatpush1.msra.mxu0 0.0
    %1478 = vmatprep.subr.mxu0 0.0
    %1479 = vmatpush1.msra.mxu0 0.0
    %1480 = vmatprep.subr.mxu0 0.0
    %1481 = vmatpush1.msra.mxu0 0.0
    %1482 = vmatprep.subr.mxu0 0.0
    %1483 = vmatpush1.msra.mxu0 0.0
    %1484 = vmatprep.subr.mxu0 0.0
    %1485 = vmatpush1.msra.mxu0 0.0
    %1486 = vmatprep.subr.mxu0 0.0
    %1487 = vmatpush1.msra.mxu0 0.0
    %1488 = vmatprep.subr.mxu0 0.0
    %1489 = vmatpush1.msra.mxu0 0.0
    %1490 = vmatprep.subr.mxu0 0.0
    %1491 = vmatpush1.msra.mxu0 0.0
    %1492 = vmatprep.subr.mxu0 0.0
    %1493 = vmatpush1.msra.mxu0 0.0
    %1494 = vmatprep.subr.mxu0 0.0
    %1495 = vmatpush1.msra.mxu0 0.0
    %1496 = vmatprep.mubr.f32.mxu0 0.0
    %v1497 = vand.u32 %v1233, 4294901760
    %v1498 = vsub.f32 %v1233, %v1497
    %1499 = vmatmul.mubr.f32.gmra.mrb[0].mxu0 %v1498
    %v1500 = vpop.f32.mrb[0].mxu0
    %v1501 = vadd.f32 %v1415, %v1500
    %v1502 = vpop.f32.mrb[0].mxu0
    %1503 = vmatprep.mubr.f32.mxu0 0.0
    %v1504 = vand.u32 %v1236, 4294901760
    %v1505 = vsub.f32 %v1236, %v1504
    %1506 = vmatmul.mubr.f32.gmra.mrb[0].mxu0 %v1505
    %v1507 = vpop.f32.mrb[0].mxu0
    %v1508 = vadd.f32 %v1421, %v1507
    %v1509 = vpop.f32.mrb[0].mxu0
    %1510 = vdwg.mxu0
    %1511 = vmatprep.subr.mxu0 0.0
    %v1512 = vand.u32 %v1221, 4294901760
    %1513 = vmatpush1.msra.mxu0 %v1512
    %1514 = vmatprep.subr.mxu0 0.0
    %v1515 = vand.u32 %v1222, 4294901760
    %1516 = vmatpush1.msra.mxu0 %v1515
    %1517 = vmatprep.subr.mxu0 0.0
    %v1518 = vand.u32 %v1223, 4294901760
    %1519 = vmatpush1.msra.mxu0 %v1518
    %1520 = vmatprep.subr.mxu0 0.0
    %v1521 = vand.u32 %v1224, 4294901760
    %1522 = vmatpush1.msra.mxu0 %v1521
    %1523 = vmatprep.subr.mxu0 0.0
    %1524 = vmatpush1.msra.mxu0 0.0
    %1525 = vmatprep.subr.mxu0 0.0
    %1526 = vmatpush1.msra.mxu0 0.0
    %1527 = vmatprep.subr.mxu0 0.0
    %1528 = vmatpush1.msra.mxu0 0.0
    %1529 = vmatprep.subr.mxu0 0.0
    %1530 = vmatpush1.msra.mxu0 0.0
    %1531 = vmatprep.subr.mxu0 0.0
    %1532 = vmatpush1.msra.mxu0 0.0
    %1533 = vmatprep.subr.mxu0 0.0
    %1534 = vmatpush1.msra.mxu0 0.0
    %1535 = vmatprep.subr.mxu0 0.0
    %1536 = vmatpush1.msra.mxu0 0.0
    %1537 = vmatprep.subr.mxu0 0.0
    %1538 = vmatpush1.msra.mxu0 0.0
    %1539 = vmatprep.subr.mxu0 0.0
    %1540 = vmatpush1.msra.mxu0 0.0
    %1541 = vmatprep.subr.mxu0 0.0
    %1542 = vmatpush1.msra.mxu0 0.0
    %1543 = vmatprep.subr.mxu0 0.0
    %1544 = vmatpush1.msra.mxu0 0.0
    %1545 = vmatprep.subr.mxu0 0.0
    %1546 = vmatpush1.msra.mxu0 0.0
    %1547 = vmatprep.subr.mxu0 0.0
    %1548 = vmatpush1.msra.mxu0 0.0
    %1549 = vmatprep.subr.mxu0 0.0
    %1550 = vmatpush1.msra.mxu0 0.0
    %1551 = vmatprep.subr.mxu0 0.0
    %1552 = vmatpush1.msra.mxu0 0.0
    %1553 = vmatprep.subr.mxu0 0.0
    %1554 = vmatpush1.msra.mxu0 0.0
    %1555 = vmatprep.subr.mxu0 0.0
    %1556 = vmatpush1.msra.mxu0 0.0
    %1557 = vmatprep.subr.mxu0 0.0
    %1558 = vmatpush1.msra.mxu0 0.0
    %1559 = vmatprep.subr.mxu0 0.0
    %1560 = vmatpush1.msra.mxu0 0.0
    %1561 = vmatprep.subr.mxu0 0.0
    %1562 = vmatpush1.msra.mxu0 0.0
    %1563 = vmatprep.subr.mxu0 0.0
    %1564 = vmatpush1.msra.mxu0 0.0
    %1565 = vmatprep.subr.mxu0 0.0
    %1566 = vmatpush1.msra.mxu0 0.0
    %1567 = vmatprep.subr.mxu0 0.0
    %1568 = vmatpush1.msra.mxu0 0.0
    %1569 = vmatprep.subr.mxu0 0.0
    %1570 = vmatpush1.msra.mxu0 0.0
    %1571 = vmatprep.subr.mxu0 0.0
    %1572 = vmatpush1.msra.mxu0 0.0
    %1573 = vmatprep.subr.mxu0 0.0
    %1574 = vmatpush1.msra.mxu0 0.0
    %1575 = vmatprep.subr.mxu0 0.0
    %1576 = vmatpush1.msra.mxu0 0.0
    %1577 = vmatprep.subr.mxu0 0.0
    %1578 = vmatpush1.msra.mxu0 0.0
    %1579 = vmatprep.mubr.f32.mxu0 0.0
    %v1580 = vand.u32 %v1233, 4294901760
    %v1581 = vsub.f32 %v1233, %v1580
    %v1582 = vand.u32 %v1581, 4294901760
    %1583 = vmatmul.mubr.f32.gmra.mrb[0].mxu0 %v1582
    %v1584 = vpop.f32.mrb[0].mxu0
    %v1585 = vadd.f32 %v1501, %v1584
    %v1586 = vpop.f32.mrb[0].mxu0
    %1587 = vmatprep.mubr.f32.mxu0 0.0
    %v1588 = vand.u32 %v1236, 4294901760
    %v1589 = vsub.f32 %v1236, %v1588
    %v1590 = vand.u32 %v1589, 4294901760
    %1591 = vmatmul.mubr.f32.gmra.mrb[0].mxu0 %v1590
    %v1592 = vpop.f32.mrb[0].mxu0
    %v1593 = vadd.f32 %v1508, %v1592
    %v1594 = vpop.f32.mrb[0].mxu0
    %1595 = vdwg.mxu0
    %1596 = vmatprep.subr.mxu0 0.0
    %v1597 = vand.u32 %v1221, 4294901760
    %v1598 = vsub.f32 %v1221, %v1597
    %v1599 = vand.u32 %v1598, 4294901760
    %1600 = vmatpush1.msra.mxu0 %v1599
    %1601 = vmatprep.subr.mxu0 0.0
    %v1602 = vand.u32 %v1222, 4294901760
    %v1603 = vsub.f32 %v1222, %v1602
    %v1604 = vand.u32 %v1603, 4294901760
    %1605 = vmatpush1.msra.mxu0 %v1604
    %1606 = vmatprep.subr.mxu0 0.0
    %v1607 = vand.u32 %v1223, 4294901760
    %v1608 = vsub.f32 %v1223, %v1607
    %v1609 = vand.u32 %v1608, 4294901760
    %1610 = vmatpush1.msra.mxu0 %v1609
    %1611 = vmatprep.subr.mxu0 0.0
    %v1612 = vand.u32 %v1224, 4294901760
    %v1613 = vsub.f32 %v1224, %v1612
    %v1614 = vand.u32 %v1613, 4294901760
    %1615 = vmatpush1.msra.mxu0 %v1614
    %1616 = vmatprep.subr.mxu0 0.0
    %1617 = vmatpush1.msra.mxu0 0.0
    %1618 = vmatprep.subr.mxu0 0.0
    %1619 = vmatpush1.msra.mxu0 0.0
    %1620 = vmatprep.subr.mxu0 0.0
    %1621 = vmatpush1.msra.mxu0 0.0
    %1622 = vmatprep.subr.mxu0 0.0
    %1623 = vmatpush1.msra.mxu0 0.0
    %1624 = vmatprep.subr.mxu0 0.0
    %1625 = vmatpush1.msra.mxu0 0.0
    %1626 = vmatprep.subr.mxu0 0.0
    %1627 = vmatpush1.msra.mxu0 0.0
    %1628 = vmatprep.subr.mxu0 0.0
    %1629 = vmatpush1.msra.mxu0 0.0
    %1630 = vmatprep.subr.mxu0 0.0
    %1631 = vmatpush1.msra.mxu0 0.0
    %1632 = vmatprep.subr.mxu0 0.0
    %1633 = vmatpush1.msra.mxu0 0.0
    %1634 = vmatprep.subr.mxu0 0.0
    %1635 = vmatpush1.msra.mxu0 0.0
    %1636 = vmatprep.subr.mxu0 0.0
    %1637 = vmatpush1.msra.mxu0 0.0
    %1638 = vmatprep.subr.mxu0 0.0
    %1639 = vmatpush1.msra.mxu0 0.0
    %1640 = vmatprep.subr.mxu0 0.0
    %1641 = vmatpush1.msra.mxu0 0.0
    %1642 = vmatprep.subr.mxu0 0.0
    %1643 = vmatpush1.msra.mxu0 0.0
    %1644 = vmatprep.subr.mxu0 0.0
    %1645 = vmatpush1.msra.mxu0 0.0
    %1646 = vmatprep.subr.mxu0 0.0
    %1647 = vmatpush1.msra.mxu0 0.0
    %1648 = vmatprep.subr.mxu0 0.0
    %1649 = vmatpush1.msra.mxu0 0.0
    %1650 = vmatprep.subr.mxu0 0.0
    %1651 = vmatpush1.msra.mxu0 0.0
    %1652 = vmatprep.subr.mxu0 0.0
    %1653 = vmatpush1.msra.mxu0 0.0
    %1654 = vmatprep.subr.mxu0 0.0
    %1655 = vmatpush1.msra.mxu0 0.0
    %1656 = vmatprep.subr.mxu0 0.0
    %1657 = vmatpush1.msra.mxu0 0.0
    %1658 = vmatprep.subr.mxu0 0.0
    %1659 = vmatpush1.msra.mxu0 0.0
    %1660 = vmatprep.subr.mxu0 0.0
    %1661 = vmatpush1.msra.mxu0 0.0
    %1662 = vmatprep.subr.mxu0 0.0
    %1663 = vmatpush1.msra.mxu0 0.0
    %1664 = vmatprep.subr.mxu0 0.0
    %1665 = vmatpush1.msra.mxu0 0.0
    %1666 = vmatprep.subr.mxu0 0.0
    %1667 = vmatpush1.msra.mxu0 0.0
    %1668 = vmatprep.subr.mxu0 0.0
    %1669 = vmatpush1.msra.mxu0 0.0
    %1670 = vmatprep.subr.mxu0 0.0
    %1671 = vmatpush1.msra.mxu0 0.0
    %1672 = vmatprep.mubr.f32.mxu0 0.0
    %v1673 = vand.u32 %v1233, 4294901760
    %1674 = vmatmul.mubr.f32.gmra.mrb[0].mxu0 %v1673
    %v1675 = vpop.f32.mrb[0].mxu0
    %v1676 = vadd.f32 %v1585, %v1675
    %v1677 = vpop.f32.mrb[0].mxu0
    %1678 = vmatprep.mubr.f32.mxu0 0.0
    %v1679 = vand.u32 %v1236, 4294901760
    %1680 = vmatmul.mubr.f32.gmra.mrb[0].mxu0 %v1679
    %v1681 = vpop.f32.mrb[0].mxu0
    %v1682 = vadd.f32 %v1593, %v1681
    %v1683 = vpop.f32.mrb[0].mxu0
    %1684 = vdwg.mxu0
    %1685 = vmatprep.subr.mxu0 0.0
    %v1686 = vand.u32 %v1221, 4294901760
    %1687 = vmatpush1.msra.mxu0 %v1686
    %1688 = vmatprep.subr.mxu0 0.0
    %v1689 = vand.u32 %v1222, 4294901760
    %1690 = vmatpush1.msra.mxu0 %v1689
    %1691 = vmatprep.subr.mxu0 0.0
    %v1692 = vand.u32 %v1223, 4294901760
    %1693 = vmatpush1.msra.mxu0 %v1692
    %1694 = vmatprep.subr.mxu0 0.0
    %v1695 = vand.u32 %v1224, 4294901760
    %1696 = vmatpush1.msra.mxu0 %v1695
    %1697 = vmatprep.subr.mxu0 0.0
    %1698 = vmatpush1.msra.mxu0 0.0
    %1699 = vmatprep.subr.mxu0 0.0
    %1700 = vmatpush1.msra.mxu0 0.0
    %1701 = vmatprep.subr.mxu0 0.0
    %1702 = vmatpush1.msra.mxu0 0.0
    %1703 = vmatprep.subr.mxu0 0.0
    %1704 = vmatpush1.msra.mxu0 0.0
    %1705 = vmatprep.subr.mxu0 0.0
    %1706 = vmatpush1.msra.mxu0 0.0
    %1707 = vmatprep.subr.mxu0 0.0
    %1708 = vmatpush1.msra.mxu0 0.0
    %1709 = vmatprep.subr.mxu0 0.0
    %1710 = vmatpush1.msra.mxu0 0.0
    %1711 = vmatprep.subr.mxu0 0.0
    %1712 = vmatpush1.msra.mxu0 0.0
    %1713 = vmatprep.subr.mxu0 0.0
    %1714 = vmatpush1.msra.mxu0 0.0
    %1715 = vmatprep.subr.mxu0 0.0
    %1716 = vmatpush1.msra.mxu0 0.0
    %1717 = vmatprep.subr.mxu0 0.0
    %1718 = vmatpush1.msra.mxu0 0.0
    %1719 = vmatprep.subr.mxu0 0.0
    %1720 = vmatpush1.msra.mxu0 0.0
    %1721 = vmatprep.subr.mxu0 0.0
    %1722 = vmatpush1.msra.mxu0 0.0
    %1723 = vmatprep.subr.mxu0 0.0
    %1724 = vmatpush1.msra.mxu0 0.0
    %1725 = vmatprep.subr.mxu0 0.0
    %1726 = vmatpush1.msra.mxu0 0.0
    %1727 = vmatprep.subr.mxu0 0.0
    %1728 = vmatpush1.msra.mxu0 0.0
    %1729 = vmatprep.subr.mxu0 0.0
    %1730 = vmatpush1.msra.mxu0 0.0
    %1731 = vmatprep.subr.mxu0 0.0
    %1732 = vmatpush1.msra.mxu0 0.0
    %1733 = vmatprep.subr.mxu0 0.0
    %1734 = vmatpush1.msra.mxu0 0.0
    %1735 = vmatprep.subr.mxu0 0.0
    %1736 = vmatpush1.msra.mxu0 0.0
    %1737 = vmatprep.subr.mxu0 0.0
    %1738 = vmatpush1.msra.mxu0 0.0
    %1739 = vmatprep.subr.mxu0 0.0
    %1740 = vmatpush1.msra.mxu0 0.0
    %1741 = vmatprep.subr.mxu0 0.0
    %1742 = vmatpush1.msra.mxu0 0.0
    %1743 = vmatprep.subr.mxu0 0.0
    %1744 = vmatpush1.msra.mxu0 0.0
    %1745 = vmatprep.subr.mxu0 0.0
    %1746 = vmatpush1.msra.mxu0 0.0
    %1747 = vmatprep.subr.mxu0 0.0
    %1748 = vmatpush1.msra.mxu0 0.0
    %1749 = vmatprep.subr.mxu0 0.0
    %1750 = vmatpush1.msra.mxu0 0.0
    %1751 = vmatprep.subr.mxu0 0.0
    %1752 = vmatpush1.msra.mxu0 0.0
    %1753 = vmatprep.mubr.f32.mxu0 0.0
    %v1754 = vand.u32 %v1233, 4294901760
    %1755 = vmatmul.mubr.f32.gmra.mrb[0].mxu0 %v1754
    %v1756 = vpop.f32.mrb[0].mxu0
    %v1757 = vadd.f32 %v1676, %v1756
    %v1758 = vpop.f32.mrb[0].mxu0
    %1759 = vmatprep.mubr.f32.mxu0 0.0
    %v1760 = vand.u32 %v1236, 4294901760
    %1761 = vmatmul.mubr.f32.gmra.mrb[0].mxu0 %v1760
    %v1762 = vpop.f32.mrb[0].mxu0
    %v1763 = vadd.f32 %v1682, %v1762
    %v1764 = vpop.f32.mrb[0].mxu0
    %1765 = vdwg.mxu0
    %v1766 = vld [vmem:[%s3] sm:$0x1]
    %v1767 = vld [vmem:[%s3 + $0x1] sm:$0x1]
    %v1770 = vlaneseq
    %v1771 = vshrl.u32 %v1770, 7
    %v1772 = vsub.s32 0, %v1771
    %v1773 = vrot.slane %v1766, %v1772
    %v1774 = vlaneseq
    %v1775 = vshrl.u32 %v1774, 7
    %v1776 = vsub.s32 0, %v1775
    %v1777 = vrot.slane %v1767, %v1776
    %v1780 = vld [vmem:[%s10] sm:$0xff]
    %v1781 = vld [vmem:[%s10 + $0x8] sm:$0xff]
    %v1782 = vld [vmem:[%s10 + $0x10] sm:$0xff]
    %v1783 = vld [vmem:[%s10 + $0x18] sm:$0xff]
    %vm1784 = vcmask 64512
    %v1786 = vsel %vm1784, %v663, 0
    %v1789 = vsel %vm1784, %v1210, 0
    %1791 = vmatprep.subr.mxu0 0.0
    %v1792 = vand.u32 %v1789, 4294901760
    %1793 = vmatpush1.xpose.msra.mxu0 %v1792
    %1794 = vmatprep.subr.mxu0 0.0
    %1795 = vmatpush1.xpose.msra.mxu0 0.0
    %1796 = vmatprep.subr.mxu0 0.0
    %1797 = vmatpush1.xpose.msra.mxu0 0.0
    %1798 = vmatprep.subr.mxu0 0.0
    %1799 = vmatpush1.xpose.msra.mxu0 0.0
    %1800 = vmatprep.subr.mxu0 0.0
    %1801 = vmatpush1.xpose.msra.mxu0 0.0
    %1802 = vmatprep.subr.mxu0 0.0
    %1803 = vmatpush1.xpose.msra.mxu0 0.0
    %1804 = vmatprep.subr.mxu0 0.0
    %1805 = vmatpush1.xpose.msra.mxu0 0.0
    %1806 = vmatprep.subr.mxu0 0.0
    %1807 = vmatpush1.xpose.msra.mxu0 0.0
    %1808 = vmatprep.subr.mxu0 0.0
    %1809 = vmatpush1.xpose.msra.mxu0 0.0
    %1810 = vmatprep.subr.mxu0 0.0
    %1811 = vmatpush1.xpose.msra.mxu0 0.0
    %1812 = vmatprep.subr.mxu0 0.0
    %1813 = vmatpush1.xpose.msra.mxu0 0.0
    %1814 = vmatprep.subr.mxu0 0.0
    %1815 = vmatpush1.xpose.msra.mxu0 0.0
    %1816 = vmatprep.subr.mxu0 0.0
    %1817 = vmatpush1.xpose.msra.mxu0 0.0
    %1818 = vmatprep.subr.mxu0 0.0
    %1819 = vmatpush1.xpose.msra.mxu0 0.0
    %1820 = vmatprep.subr.mxu0 0.0
    %1821 = vmatpush1.xpose.msra.mxu0 0.0
    %1822 = vmatprep.subr.mxu0 0.0
    %1823 = vmatpush1.xpose.msra.mxu0 0.0
    %1824 = vmatprep.subr.mxu0 0.0
    %1825 = vmatpush1.xpose.msra.mxu0 0.0
    %1826 = vmatprep.subr.mxu0 0.0
    %1827 = vmatpush1.xpose.msra.mxu0 0.0
    %1828 = vmatprep.subr.mxu0 0.0
    %1829 = vmatpush1.xpose.msra.mxu0 0.0
    %1830 = vmatprep.subr.mxu0 0.0
    %1831 = vmatpush1.xpose.msra.mxu0 0.0
    %1832 = vmatprep.subr.mxu0 0.0
    %1833 = vmatpush1.xpose.msra.mxu0 0.0
    %1834 = vmatprep.subr.mxu0 0.0
    %1835 = vmatpush1.xpose.msra.mxu0 0.0
    %1836 = vmatprep.subr.mxu0 0.0
    %1837 = vmatpush1.xpose.msra.mxu0 0.0
    %1838 = vmatprep.subr.mxu0 0.0
    %1839 = vmatpush1.xpose.msra.mxu0 0.0
    %1840 = vmatprep.subr.mxu0 0.0
    %1841 = vmatpush1.xpose.msra.mxu0 0.0
    %1842 = vmatprep.subr.mxu0 0.0
    %1843 = vmatpush1.xpose.msra.mxu0 0.0
    %1844 = vmatprep.subr.mxu0 0.0
    %1845 = vmatpush1.xpose.msra.mxu0 0.0
    %1846 = vmatprep.subr.mxu0 0.0
    %1847 = vmatpush1.xpose.msra.mxu0 0.0
    %1848 = vmatprep.subr.mxu0 0.0
    %1849 = vmatpush1.xpose.msra.mxu0 0.0
    %1850 = vmatprep.subr.mxu0 0.0
    %1851 = vmatpush1.xpose.msra.mxu0 0.0
    %1852 = vmatprep.subr.mxu0 0.0
    %1853 = vmatpush1.xpose.msra.mxu0 0.0
    %1854 = vmatprep.subr.mxu0 0.0
    %1855 = vmatpush1.xpose.msra.mxu0 0.0
    %1856 = vmatprep.mubr.f32.mxu0 0.0
    %v1857 = vand.u32 %v1786, 4294901760
    %v1858 = vsub.f32 %v1786, %v1857
    %v1859 = vand.u32 %v1858, 4294901760
    %v1860 = vsub.f32 %v1858, %v1859
    %v1861 = vand.u32 %v1860, 4294901760
    %1862 = vmatmul.mubr.f32.gmra.mrb[0].mxu0 %v1861
    %v1863 = vpop.f32.mrb[0].mxu0
    %v1864 = vadd.f32 %v1773, %v1863
    %v1865 = vpop.f32.mrb[0].mxu0
    %1866 = vdwg.mxu0
    %1867 = vmatprep.subr.mxu0 0.0
    %v1868 = vand.u32 %v1789, 4294901760
    %v1869 = vsub.f32 %v1789, %v1868
    %v1870 = vand.u32 %v1869, 4294901760
    %v1871 = vsub.f32 %v1869, %v1870
    %v1872 = vand.u32 %v1871, 4294901760
    %1873 = vmatpush1.xpose.msra.mxu0 %v1872
    %1874 = vmatprep.subr.mxu0 0.0
    %1875 = vmatpush1.xpose.msra.mxu0 0.0
    %1876 = vmatprep.subr.mxu0 0.0
    %1877 = vmatpush1.xpose.msra.mxu0 0.0
    %1878 = vmatprep.subr.mxu0 0.0
    %1879 = vmatpush1.xpose.msra.mxu0 0.0
    %1880 = vmatprep.subr.mxu0 0.0
    %1881 = vmatpush1.xpose.msra.mxu0 0.0
    %1882 = vmatprep.subr.mxu0 0.0
    %1883 = vmatpush1.xpose.msra.mxu0 0.0
    %1884 = vmatprep.subr.mxu0 0.0
    %1885 = vmatpush1.xpose.msra.mxu0 0.0
    %1886 = vmatprep.subr.mxu0 0.0
    %1887 = vmatpush1.xpose.msra.mxu0 0.0
    %1888 = vmatprep.subr.mxu0 0.0
    %1889 = vmatpush1.xpose.msra.mxu0 0.0
    %1890 = vmatprep.subr.mxu0 0.0
    %1891 = vmatpush1.xpose.msra.mxu0 0.0
    %1892 = vmatprep.subr.mxu0 0.0
    %1893 = vmatpush1.xpose.msra.mxu0 0.0
    %1894 = vmatprep.subr.mxu0 0.0
    %1895 = vmatpush1.xpose.msra.mxu0 0.0
    %1896 = vmatprep.subr.mxu0 0.0
    %1897 = vmatpush1.xpose.msra.mxu0 0.0
    %1898 = vmatprep.subr.mxu0 0.0
    %1899 = vmatpush1.xpose.msra.mxu0 0.0
    %1900 = vmatprep.subr.mxu0 0.0
    %1901 = vmatpush1.xpose.msra.mxu0 0.0
    %1902 = vmatprep.subr.mxu0 0.0
    %1903 = vmatpush1.xpose.msra.mxu0 0.0
    %1904 = vmatprep.subr.mxu0 0.0
    %1905 = vmatpush1.xpose.msra.mxu0 0.0
    %1906 = vmatprep.subr.mxu0 0.0
    %1907 = vmatpush1.xpose.msra.mxu0 0.0
    %1908 = vmatprep.subr.mxu0 0.0
    %1909 = vmatpush1.xpose.msra.mxu0 0.0
    %1910 = vmatprep.subr.mxu0 0.0
    %1911 = vmatpush1.xpose.msra.mxu0 0.0
    %1912 = vmatprep.subr.mxu0 0.0
    %1913 = vmatpush1.xpose.msra.mxu0 0.0
    %1914 = vmatprep.subr.mxu0 0.0
    %1915 = vmatpush1.xpose.msra.mxu0 0.0
    %1916 = vmatprep.subr.mxu0 0.0
    %1917 = vmatpush1.xpose.msra.mxu0 0.0
    %1918 = vmatprep.subr.mxu0 0.0
    %1919 = vmatpush1.xpose.msra.mxu0 0.0
    %1920 = vmatprep.subr.mxu0 0.0
    %1921 = vmatpush1.xpose.msra.mxu0 0.0
    %1922 = vmatprep.subr.mxu0 0.0
    %1923 = vmatpush1.xpose.msra.mxu0 0.0
    %1924 = vmatprep.subr.mxu0 0.0
    %1925 = vmatpush1.xpose.msra.mxu0 0.0
    %1926 = vmatprep.subr.mxu0 0.0
    %1927 = vmatpush1.xpose.msra.mxu0 0.0
    %1928 = vmatprep.subr.mxu0 0.0
    %1929 = vmatpush1.xpose.msra.mxu0 0.0
    %1930 = vmatprep.subr.mxu0 0.0
    %1931 = vmatpush1.xpose.msra.mxu0 0.0
    %1932 = vmatprep.subr.mxu0 0.0
    %1933 = vmatpush1.xpose.msra.mxu0 0.0
    %1934 = vmatprep.subr.mxu0 0.0
    %1935 = vmatpush1.xpose.msra.mxu0 0.0
    %1936 = vmatprep.mubr.f32.mxu0 0.0
    %v1937 = vand.u32 %v1786, 4294901760
    %1938 = vmatmul.mubr.f32.gmra.mrb[0].mxu0 %v1937
    %v1939 = vpop.f32.mrb[0].mxu0
    %v1940 = vadd.f32 %v1864, %v1939
    %v1941 = vpop.f32.mrb[0].mxu0
    %1942 = vdwg.mxu0
    %1943 = vmatprep.subr.mxu0 0.0
    %v1944 = vand.u32 %v1789, 4294901760
    %v1945 = vsub.f32 %v1789, %v1944
    %1946 = vmatpush1.xpose.msra.mxu0 %v1945
    %1947 = vmatprep.subr.mxu0 0.0
    %1948 = vmatpush1.xpose.msra.mxu0 0.0
    %1949 = vmatprep.subr.mxu0 0.0
    %1950 = vmatpush1.xpose.msra.mxu0 0.0
    %1951 = vmatprep.subr.mxu0 0.0
    %1952 = vmatpush1.xpose.msra.mxu0 0.0
    %1953 = vmatprep.subr.mxu0 0.0
    %1954 = vmatpush1.xpose.msra.mxu0 0.0
    %1955 = vmatprep.subr.mxu0 0.0
    %1956 = vmatpush1.xpose.msra.mxu0 0.0
    %1957 = vmatprep.subr.mxu0 0.0
    %1958 = vmatpush1.xpose.msra.mxu0 0.0
    %1959 = vmatprep.subr.mxu0 0.0
    %1960 = vmatpush1.xpose.msra.mxu0 0.0
    %1961 = vmatprep.subr.mxu0 0.0
    %1962 = vmatpush1.xpose.msra.mxu0 0.0
    %1963 = vmatprep.subr.mxu0 0.0
    %1964 = vmatpush1.xpose.msra.mxu0 0.0
    %1965 = vmatprep.subr.mxu0 0.0
    %1966 = vmatpush1.xpose.msra.mxu0 0.0
    %1967 = vmatprep.subr.mxu0 0.0
    %1968 = vmatpush1.xpose.msra.mxu0 0.0
    %1969 = vmatprep.subr.mxu0 0.0
    %1970 = vmatpush1.xpose.msra.mxu0 0.0
    %1971 = vmatprep.subr.mxu0 0.0
    %1972 = vmatpush1.xpose.msra.mxu0 0.0
    %1973 = vmatprep.subr.mxu0 0.0
    %1974 = vmatpush1.xpose.msra.mxu0 0.0
    %1975 = vmatprep.subr.mxu0 0.0
    %1976 = vmatpush1.xpose.msra.mxu0 0.0
    %1977 = vmatprep.subr.mxu0 0.0
    %1978 = vmatpush1.xpose.msra.mxu0 0.0
    %1979 = vmatprep.subr.mxu0 0.0
    %1980 = vmatpush1.xpose.msra.mxu0 0.0
    %1981 = vmatprep.subr.mxu0 0.0
    %1982 = vmatpush1.xpose.msra.mxu0 0.0
    %1983 = vmatprep.subr.mxu0 0.0
    %1984 = vmatpush1.xpose.msra.mxu0 0.0
    %1985 = vmatprep.subr.mxu0 0.0
    %1986 = vmatpush1.xpose.msra.mxu0 0.0
    %1987 = vmatprep.subr.mxu0 0.0
    %1988 = vmatpush1.xpose.msra.mxu0 0.0
    %1989 = vmatprep.subr.mxu0 0.0
    %1990 = vmatpush1.xpose.msra.mxu0 0.0
    %1991 = vmatprep.subr.mxu0 0.0
    %1992 = vmatpush1.xpose.msra.mxu0 0.0
    %1993 = vmatprep.subr.mxu0 0.0
    %1994 = vmatpush1.xpose.msra.mxu0 0.0
    %1995 = vmatprep.subr.mxu0 0.0
    %1996 = vmatpush1.xpose.msra.mxu0 0.0
    %1997 = vmatprep.subr.mxu0 0.0
    %1998 = vmatpush1.xpose.msra.mxu0 0.0
    %1999 = vmatprep.subr.mxu0 0.0
    %2000 = vmatpush1.xpose.msra.mxu0 0.0
    %2001 = vmatprep.subr.mxu0 0.0
    %2002 = vmatpush1.xpose.msra.mxu0 0.0
    %2003 = vmatprep.subr.mxu0 0.0
    %2004 = vmatpush1.xpose.msra.mxu0 0.0
    %2005 = vmatprep.subr.mxu0 0.0
    %2006 = vmatpush1.xpose.msra.mxu0 0.0
    %2007 = vmatprep.subr.mxu0 0.0
    %2008 = vmatpush1.xpose.msra.mxu0 0.0
    %2009 = vmatprep.mubr.f32.mxu0 0.0
    %v2010 = vand.u32 %v1786, 4294901760
    %v2011 = vsub.f32 %v1786, %v2010
    %2012 = vmatmul.mubr.f32.gmra.mrb[0].mxu0 %v2011
    %v2013 = vpop.f32.mrb[0].mxu0
    %v2014 = vadd.f32 %v1940, %v2013
    %v2015 = vpop.f32.mrb[0].mxu0
    %2016 = vdwg.mxu0
    %2017 = vmatprep.subr.mxu0 0.0
    %v2018 = vand.u32 %v1789, 4294901760
    %2019 = vmatpush1.xpose.msra.mxu0 %v2018
    %2020 = vmatprep.subr.mxu0 0.0
    %2021 = vmatpush1.xpose.msra.mxu0 0.0
    %2022 = vmatprep.subr.mxu0 0.0
    %2023 = vmatpush1.xpose.msra.mxu0 0.0
    %2024 = vmatprep.subr.mxu0 0.0
    %2025 = vmatpush1.xpose.msra.mxu0 0.0
    %2026 = vmatprep.subr.mxu0 0.0
    %2027 = vmatpush1.xpose.msra.mxu0 0.0
    %2028 = vmatprep.subr.mxu0 0.0
    %2029 = vmatpush1.xpose.msra.mxu0 0.0
    %2030 = vmatprep.subr.mxu0 0.0
    %2031 = vmatpush1.xpose.msra.mxu0 0.0
    %2032 = vmatprep.subr.mxu0 0.0
    %2033 = vmatpush1.xpose.msra.mxu0 0.0
    %2034 = vmatprep.subr.mxu0 0.0
    %2035 = vmatpush1.xpose.msra.mxu0 0.0
    %2036 = vmatprep.subr.mxu0 0.0
    %2037 = vmatpush1.xpose.msra.mxu0 0.0
    %2038 = vmatprep.subr.mxu0 0.0
    %2039 = vmatpush1.xpose.msra.mxu0 0.0
    %2040 = vmatprep.subr.mxu0 0.0
    %2041 = vmatpush1.xpose.msra.mxu0 0.0
    %2042 = vmatprep.subr.mxu0 0.0
    %2043 = vmatpush1.xpose.msra.mxu0 0.0
    %2044 = vmatprep.subr.mxu0 0.0
    %2045 = vmatpush1.xpose.msra.mxu0 0.0
    %2046 = vmatprep.subr.mxu0 0.0
    %2047 = vmatpush1.xpose.msra.mxu0 0.0
    %2048 = vmatprep.subr.mxu0 0.0
    %2049 = vmatpush1.xpose.msra.mxu0 0.0
    %2050 = vmatprep.subr.mxu0 0.0
    %2051 = vmatpush1.xpose.msra.mxu0 0.0
    %2052 = vmatprep.subr.mxu0 0.0
    %2053 = vmatpush1.xpose.msra.mxu0 0.0
    %2054 = vmatprep.subr.mxu0 0.0
    %2055 = vmatpush1.xpose.msra.mxu0 0.0
    %2056 = vmatprep.subr.mxu0 0.0
    %2057 = vmatpush1.xpose.msra.mxu0 0.0
    %2058 = vmatprep.subr.mxu0 0.0
    %2059 = vmatpush1.xpose.msra.mxu0 0.0
    %2060 = vmatprep.subr.mxu0 0.0
    %2061 = vmatpush1.xpose.msra.mxu0 0.0
    %2062 = vmatprep.subr.mxu0 0.0
    %2063 = vmatpush1.xpose.msra.mxu0 0.0
    %2064 = vmatprep.subr.mxu0 0.0
    %2065 = vmatpush1.xpose.msra.mxu0 0.0
    %2066 = vmatprep.subr.mxu0 0.0
    %2067 = vmatpush1.xpose.msra.mxu0 0.0
    %2068 = vmatprep.subr.mxu0 0.0
    %2069 = vmatpush1.xpose.msra.mxu0 0.0
    %2070 = vmatprep.subr.mxu0 0.0
    %2071 = vmatpush1.xpose.msra.mxu0 0.0
    %2072 = vmatprep.subr.mxu0 0.0
    %2073 = vmatpush1.xpose.msra.mxu0 0.0
    %2074 = vmatprep.subr.mxu0 0.0
    %2075 = vmatpush1.xpose.msra.mxu0 0.0
    %2076 = vmatprep.subr.mxu0 0.0
    %2077 = vmatpush1.xpose.msra.mxu0 0.0
    %2078 = vmatprep.subr.mxu0 0.0
    %2079 = vmatpush1.xpose.msra.mxu0 0.0
    %2080 = vmatprep.subr.mxu0 0.0
    %2081 = vmatpush1.xpose.msra.mxu0 0.0
    %2082 = vmatprep.mubr.f32.mxu0 0.0
    %v2083 = vand.u32 %v1786, 4294901760
    %v2084 = vsub.f32 %v1786, %v2083
    %v2085 = vand.u32 %v2084, 4294901760
    %2086 = vmatmul.mubr.f32.gmra.mrb[0].mxu0 %v2085
    %v2087 = vpop.f32.mrb[0].mxu0
    %v2088 = vadd.f32 %v2014, %v2087
    %v2089 = vpop.f32.mrb[0].mxu0
    %2090 = vdwg.mxu0
    %2091 = vmatprep.subr.mxu0 0.0
    %v2092 = vand.u32 %v1789, 4294901760
    %v2093 = vsub.f32 %v1789, %v2092
    %v2094 = vand.u32 %v2093, 4294901760
    %2095 = vmatpush1.xpose.msra.mxu0 %v2094
    %2096 = vmatprep.subr.mxu0 0.0
    %2097 = vmatpush1.xpose.msra.mxu0 0.0
    %2098 = vmatprep.subr.mxu0 0.0
    %2099 = vmatpush1.xpose.msra.mxu0 0.0
    %2100 = vmatprep.subr.mxu0 0.0
    %2101 = vmatpush1.xpose.msra.mxu0 0.0
    %2102 = vmatprep.subr.mxu0 0.0
    %2103 = vmatpush1.xpose.msra.mxu0 0.0
    %2104 = vmatprep.subr.mxu0 0.0
    %2105 = vmatpush1.xpose.msra.mxu0 0.0
    %2106 = vmatprep.subr.mxu0 0.0
    %2107 = vmatpush1.xpose.msra.mxu0 0.0
    %2108 = vmatprep.subr.mxu0 0.0
    %2109 = vmatpush1.xpose.msra.mxu0 0.0
    %2110 = vmatprep.subr.mxu0 0.0
    %2111 = vmatpush1.xpose.msra.mxu0 0.0
    %2112 = vmatprep.subr.mxu0 0.0
    %2113 = vmatpush1.xpose.msra.mxu0 0.0
    %2114 = vmatprep.subr.mxu0 0.0
    %2115 = vmatpush1.xpose.msra.mxu0 0.0
    %2116 = vmatprep.subr.mxu0 0.0
    %2117 = vmatpush1.xpose.msra.mxu0 0.0
    %2118 = vmatprep.subr.mxu0 0.0
    %2119 = vmatpush1.xpose.msra.mxu0 0.0
    %2120 = vmatprep.subr.mxu0 0.0
    %2121 = vmatpush1.xpose.msra.mxu0 0.0
    %2122 = vmatprep.subr.mxu0 0.0
    %2123 = vmatpush1.xpose.msra.mxu0 0.0
    %2124 = vmatprep.subr.mxu0 0.0
    %2125 = vmatpush1.xpose.msra.mxu0 0.0
    %2126 = vmatprep.subr.mxu0 0.0
    %2127 = vmatpush1.xpose.msra.mxu0 0.0
    %2128 = vmatprep.subr.mxu0 0.0
    %2129 = vmatpush1.xpose.msra.mxu0 0.0
    %2130 = vmatprep.subr.mxu0 0.0
    %2131 = vmatpush1.xpose.msra.mxu0 0.0
    %2132 = vmatprep.subr.mxu0 0.0
    %2133 = vmatpush1.xpose.msra.mxu0 0.0
    %2134 = vmatprep.subr.mxu0 0.0
    %2135 = vmatpush1.xpose.msra.mxu0 0.0
    %2136 = vmatprep.subr.mxu0 0.0
    %2137 = vmatpush1.xpose.msra.mxu0 0.0
    %2138 = vmatprep.subr.mxu0 0.0
    %2139 = vmatpush1.xpose.msra.mxu0 0.0
    %2140 = vmatprep.subr.mxu0 0.0
    %2141 = vmatpush1.xpose.msra.mxu0 0.0
    %2142 = vmatprep.subr.mxu0 0.0
    %2143 = vmatpush1.xpose.msra.mxu0 0.0
    %2144 = vmatprep.subr.mxu0 0.0
    %2145 = vmatpush1.xpose.msra.mxu0 0.0
    %2146 = vmatprep.subr.mxu0 0.0
    %2147 = vmatpush1.xpose.msra.mxu0 0.0
    %2148 = vmatprep.subr.mxu0 0.0
    %2149 = vmatpush1.xpose.msra.mxu0 0.0
    %2150 = vmatprep.subr.mxu0 0.0
    %2151 = vmatpush1.xpose.msra.mxu0 0.0
    %2152 = vmatprep.subr.mxu0 0.0
    %2153 = vmatpush1.xpose.msra.mxu0 0.0
    %2154 = vmatprep.subr.mxu0 0.0
    %2155 = vmatpush1.xpose.msra.mxu0 0.0
    %2156 = vmatprep.subr.mxu0 0.0
    %2157 = vmatpush1.xpose.msra.mxu0 0.0
    %2158 = vmatprep.mubr.f32.mxu0 0.0
    %v2159 = vand.u32 %v1786, 4294901760
    %2160 = vmatmul.mubr.f32.gmra.mrb[0].mxu0 %v2159
    %v2161 = vpop.f32.mrb[0].mxu0
    %v2162 = vadd.f32 %v2088, %v2161
    %v2163 = vpop.f32.mrb[0].mxu0
    %2164 = vdwg.mxu0
    %2165 = vmatprep.subr.mxu0 0.0
    %v2166 = vand.u32 %v1789, 4294901760
    %2167 = vmatpush1.xpose.msra.mxu0 %v2166
    %2168 = vmatprep.subr.mxu0 0.0
    %2169 = vmatpush1.xpose.msra.mxu0 0.0
    %2170 = vmatprep.subr.mxu0 0.0
    %2171 = vmatpush1.xpose.msra.mxu0 0.0
    %2172 = vmatprep.subr.mxu0 0.0
    %2173 = vmatpush1.xpose.msra.mxu0 0.0
    %2174 = vmatprep.subr.mxu0 0.0
    %2175 = vmatpush1.xpose.msra.mxu0 0.0
    %2176 = vmatprep.subr.mxu0 0.0
    %2177 = vmatpush1.xpose.msra.mxu0 0.0
    %2178 = vmatprep.subr.mxu0 0.0
    %2179 = vmatpush1.xpose.msra.mxu0 0.0
    %2180 = vmatprep.subr.mxu0 0.0
    %2181 = vmatpush1.xpose.msra.mxu0 0.0
    %2182 = vmatprep.subr.mxu0 0.0
    %2183 = vmatpush1.xpose.msra.mxu0 0.0
    %2184 = vmatprep.subr.mxu0 0.0
    %2185 = vmatpush1.xpose.msra.mxu0 0.0
    %2186 = vmatprep.subr.mxu0 0.0
    %2187 = vmatpush1.xpose.msra.mxu0 0.0
    %2188 = vmatprep.subr.mxu0 0.0
    %2189 = vmatpush1.xpose.msra.mxu0 0.0
    %2190 = vmatprep.subr.mxu0 0.0
    %2191 = vmatpush1.xpose.msra.mxu0 0.0
    %2192 = vmatprep.subr.mxu0 0.0
    %2193 = vmatpush1.xpose.msra.mxu0 0.0
    %2194 = vmatprep.subr.mxu0 0.0
    %2195 = vmatpush1.xpose.msra.mxu0 0.0
    %2196 = vmatprep.subr.mxu0 0.0
    %2197 = vmatpush1.xpose.msra.mxu0 0.0
    %2198 = vmatprep.subr.mxu0 0.0
    %2199 = vmatpush1.xpose.msra.mxu0 0.0
    %2200 = vmatprep.subr.mxu0 0.0
    %2201 = vmatpush1.xpose.msra.mxu0 0.0
    %2202 = vmatprep.subr.mxu0 0.0
    %2203 = vmatpush1.xpose.msra.mxu0 0.0
    %2204 = vmatprep.subr.mxu0 0.0
    %2205 = vmatpush1.xpose.msra.mxu0 0.0
    %2206 = vmatprep.subr.mxu0 0.0
    %2207 = vmatpush1.xpose.msra.mxu0 0.0
    %2208 = vmatprep.subr.mxu0 0.0
    %2209 = vmatpush1.xpose.msra.mxu0 0.0
    %2210 = vmatprep.subr.mxu0 0.0
    %2211 = vmatpush1.xpose.msra.mxu0 0.0
    %2212 = vmatprep.subr.mxu0 0.0
    %2213 = vmatpush1.xpose.msra.mxu0 0.0
    %2214 = vmatprep.subr.mxu0 0.0
    %2215 = vmatpush1.xpose.msra.mxu0 0.0
    %2216 = vmatprep.subr.mxu0 0.0
    %2217 = vmatpush1.xpose.msra.mxu0 0.0
    %2218 = vmatprep.subr.mxu0 0.0
    %2219 = vmatpush1.xpose.msra.mxu0 0.0
    %2220 = vmatprep.subr.mxu0 0.0
    %2221 = vmatpush1.xpose.msra.mxu0 0.0
    %2222 = vmatprep.subr.mxu0 0.0
    %2223 = vmatpush1.xpose.msra.mxu0 0.0
    %2224 = vmatprep.subr.mxu0 0.0
    %2225 = vmatpush1.xpose.msra.mxu0 0.0
    %2226 = vmatprep.subr.mxu0 0.0
    %2227 = vmatpush1.xpose.msra.mxu0 0.0
    %2228 = vmatprep.subr.mxu0 0.0
    %2229 = vmatpush1.xpose.msra.mxu0 0.0
    %2230 = vmatprep.mubr.f32.mxu0 0.0
    %v2231 = vand.u32 %v1786, 4294901760
    %2232 = vmatmul.mubr.f32.gmra.mrb[0].mxu0 %v2231
    %v2233 = vpop.f32.mrb[0].mxu0
    %v2234 = vadd.f32 %v2162, %v2233
    %v2235 = vpop.f32.mrb[0].mxu0
    %2236 = vdwg.mxu0
    %v2238 = vsel %vm1784, %v669, 0
    %v2241 = vsel %vm1784, %v1216, 0
    %2243 = vmatprep.subr.mxu0 0.0
    %v2244 = vand.u32 %v2241, 4294901760
    %2245 = vmatpush1.xpose.msra.mxu0 %v2244
    %2246 = vmatprep.subr.mxu0 0.0
    %2247 = vmatpush1.xpose.msra.mxu0 0.0
    %2248 = vmatprep.subr.mxu0 0.0
    %2249 = vmatpush1.xpose.msra.mxu0 0.0
    %2250 = vmatprep.subr.mxu0 0.0
    %2251 = vmatpush1.xpose.msra.mxu0 0.0
    %2252 = vmatprep.subr.mxu0 0.0
    %2253 = vmatpush1.xpose.msra.mxu0 0.0
    %2254 = vmatprep.subr.mxu0 0.0
    %2255 = vmatpush1.xpose.msra.mxu0 0.0
    %2256 = vmatprep.subr.mxu0 0.0
    %2257 = vmatpush1.xpose.msra.mxu0 0.0
    %2258 = vmatprep.subr.mxu0 0.0
    %2259 = vmatpush1.xpose.msra.mxu0 0.0
    %2260 = vmatprep.subr.mxu0 0.0
    %2261 = vmatpush1.xpose.msra.mxu0 0.0
    %2262 = vmatprep.subr.mxu0 0.0
    %2263 = vmatpush1.xpose.msra.mxu0 0.0
    %2264 = vmatprep.subr.mxu0 0.0
    %2265 = vmatpush1.xpose.msra.mxu0 0.0
    %2266 = vmatprep.subr.mxu0 0.0
    %2267 = vmatpush1.xpose.msra.mxu0 0.0
    %2268 = vmatprep.subr.mxu0 0.0
    %2269 = vmatpush1.xpose.msra.mxu0 0.0
    %2270 = vmatprep.subr.mxu0 0.0
    %2271 = vmatpush1.xpose.msra.mxu0 0.0
    %2272 = vmatprep.subr.mxu0 0.0
    %2273 = vmatpush1.xpose.msra.mxu0 0.0
    %2274 = vmatprep.subr.mxu0 0.0
    %2275 = vmatpush1.xpose.msra.mxu0 0.0
    %2276 = vmatprep.subr.mxu0 0.0
    %2277 = vmatpush1.xpose.msra.mxu0 0.0
    %2278 = vmatprep.subr.mxu0 0.0
    %2279 = vmatpush1.xpose.msra.mxu0 0.0
    %2280 = vmatprep.subr.mxu0 0.0
    %2281 = vmatpush1.xpose.msra.mxu0 0.0
    %2282 = vmatprep.subr.mxu0 0.0
    %2283 = vmatpush1.xpose.msra.mxu0 0.0
    %2284 = vmatprep.subr.mxu0 0.0
    %2285 = vmatpush1.xpose.msra.mxu0 0.0
    %2286 = vmatprep.subr.mxu0 0.0
    %2287 = vmatpush1.xpose.msra.mxu0 0.0
    %2288 = vmatprep.subr.mxu0 0.0
    %2289 = vmatpush1.xpose.msra.mxu0 0.0
    %2290 = vmatprep.subr.mxu0 0.0
    %2291 = vmatpush1.xpose.msra.mxu0 0.0
    %2292 = vmatprep.subr.mxu0 0.0
    %2293 = vmatpush1.xpose.msra.mxu0 0.0
    %2294 = vmatprep.subr.mxu0 0.0
    %2295 = vmatpush1.xpose.msra.mxu0 0.0
    %2296 = vmatprep.subr.mxu0 0.0
    %2297 = vmatpush1.xpose.msra.mxu0 0.0
    %2298 = vmatprep.subr.mxu0 0.0
    %2299 = vmatpush1.xpose.msra.mxu0 0.0
    %2300 = vmatprep.subr.mxu0 0.0
    %2301 = vmatpush1.xpose.msra.mxu0 0.0
    %2302 = vmatprep.subr.mxu0 0.0
    %2303 = vmatpush1.xpose.msra.mxu0 0.0
    %2304 = vmatprep.subr.mxu0 0.0
    %2305 = vmatpush1.xpose.msra.mxu0 0.0
    %2306 = vmatprep.subr.mxu0 0.0
    %2307 = vmatpush1.xpose.msra.mxu0 0.0
    %2308 = vmatprep.mubr.f32.mxu0 0.0
    %v2309 = vand.u32 %v2238, 4294901760
    %v2310 = vsub.f32 %v2238, %v2309
    %v2311 = vand.u32 %v2310, 4294901760
    %v2312 = vsub.f32 %v2310, %v2311
    %v2313 = vand.u32 %v2312, 4294901760
    %2314 = vmatmul.mubr.f32.gmra.mrb[0].mxu0 %v2313
    %v2315 = vpop.f32.mrb[0].mxu0
    %v2316 = vadd.f32 %v1777, %v2315
    %v2317 = vpop.f32.mrb[0].mxu0
    %2318 = vdwg.mxu0
    %2319 = vmatprep.subr.mxu0 0.0
    %v2320 = vand.u32 %v2241, 4294901760
    %v2321 = vsub.f32 %v2241, %v2320
    %v2322 = vand.u32 %v2321, 4294901760
    %v2323 = vsub.f32 %v2321, %v2322
    %v2324 = vand.u32 %v2323, 4294901760
    %2325 = vmatpush1.xpose.msra.mxu0 %v2324
    %2326 = vmatprep.subr.mxu0 0.0
    %2327 = vmatpush1.xpose.msra.mxu0 0.0
    %2328 = vmatprep.subr.mxu0 0.0
    %2329 = vmatpush1.xpose.msra.mxu0 0.0
    %2330 = vmatprep.subr.mxu0 0.0
    %2331 = vmatpush1.xpose.msra.mxu0 0.0
    %2332 = vmatprep.subr.mxu0 0.0
    %2333 = vmatpush1.xpose.msra.mxu0 0.0
    %2334 = vmatprep.subr.mxu0 0.0
    %2335 = vmatpush1.xpose.msra.mxu0 0.0
    %2336 = vmatprep.subr.mxu0 0.0
    %2337 = vmatpush1.xpose.msra.mxu0 0.0
    %2338 = vmatprep.subr.mxu0 0.0
    %2339 = vmatpush1.xpose.msra.mxu0 0.0
    %2340 = vmatprep.subr.mxu0 0.0
    %2341 = vmatpush1.xpose.msra.mxu0 0.0
    %2342 = vmatprep.subr.mxu0 0.0
    %2343 = vmatpush1.xpose.msra.mxu0 0.0
    %2344 = vmatprep.subr.mxu0 0.0
    %2345 = vmatpush1.xpose.msra.mxu0 0.0
    %2346 = vmatprep.subr.mxu0 0.0
    %2347 = vmatpush1.xpose.msra.mxu0 0.0
    %2348 = vmatprep.subr.mxu0 0.0
    %2349 = vmatpush1.xpose.msra.mxu0 0.0
    %2350 = vmatprep.subr.mxu0 0.0
    %2351 = vmatpush1.xpose.msra.mxu0 0.0
    %2352 = vmatprep.subr.mxu0 0.0
    %2353 = vmatpush1.xpose.msra.mxu0 0.0
    %2354 = vmatprep.subr.mxu0 0.0
    %2355 = vmatpush1.xpose.msra.mxu0 0.0
    %2356 = vmatprep.subr.mxu0 0.0
    %2357 = vmatpush1.xpose.msra.mxu0 0.0
    %2358 = vmatprep.subr.mxu0 0.0
    %2359 = vmatpush1.xpose.msra.mxu0 0.0
    %2360 = vmatprep.subr.mxu0 0.0
    %2361 = vmatpush1.xpose.msra.mxu0 0.0
    %2362 = vmatprep.subr.mxu0 0.0
    %2363 = vmatpush1.xpose.msra.mxu0 0.0
    %2364 = vmatprep.subr.mxu0 0.0
    %2365 = vmatpush1.xpose.msra.mxu0 0.0
    %2366 = vmatprep.subr.mxu0 0.0
    %2367 = vmatpush1.xpose.msra.mxu0 0.0
    %2368 = vmatprep.subr.mxu0 0.0
    %2369 = vmatpush1.xpose.msra.mxu0 0.0
    %2370 = vmatprep.subr.mxu0 0.0
    %2371 = vmatpush1.xpose.msra.mxu0 0.0
    %2372 = vmatprep.subr.mxu0 0.0
    %2373 = vmatpush1.xpose.msra.mxu0 0.0
    %2374 = vmatprep.subr.mxu0 0.0
    %2375 = vmatpush1.xpose.msra.mxu0 0.0
    %2376 = vmatprep.subr.mxu0 0.0
    %2377 = vmatpush1.xpose.msra.mxu0 0.0
    %2378 = vmatprep.subr.mxu0 0.0
    %2379 = vmatpush1.xpose.msra.mxu0 0.0
    %2380 = vmatprep.subr.mxu0 0.0
    %2381 = vmatpush1.xpose.msra.mxu0 0.0
    %2382 = vmatprep.subr.mxu0 0.0
    %2383 = vmatpush1.xpose.msra.mxu0 0.0
    %2384 = vmatprep.subr.mxu0 0.0
    %2385 = vmatpush1.xpose.msra.mxu0 0.0
    %2386 = vmatprep.subr.mxu0 0.0
    %2387 = vmatpush1.xpose.msra.mxu0 0.0
    %2388 = vmatprep.mubr.f32.mxu0 0.0
    %v2389 = vand.u32 %v2238, 4294901760
    %2390 = vmatmul.mubr.f32.gmra.mrb[0].mxu0 %v2389
    %v2391 = vpop.f32.mrb[0].mxu0
    %v2392 = vadd.f32 %v2316, %v2391
    %v2393 = vpop.f32.mrb[0].mxu0
    %2394 = vdwg.mxu0
    %2395 = vmatprep.subr.mxu0 0.0
    %v2396 = vand.u32 %v2241, 4294901760
    %v2397 = vsub.f32 %v2241, %v2396
    %2398 = vmatpush1.xpose.msra.mxu0 %v2397
    %2399 = vmatprep.subr.mxu0 0.0
    %2400 = vmatpush1.xpose.msra.mxu0 0.0
    %2401 = vmatprep.subr.mxu0 0.0
    %2402 = vmatpush1.xpose.msra.mxu0 0.0
    %2403 = vmatprep.subr.mxu0 0.0
    %2404 = vmatpush1.xpose.msra.mxu0 0.0
    %2405 = vmatprep.subr.mxu0 0.0
    %2406 = vmatpush1.xpose.msra.mxu0 0.0
    %2407 = vmatprep.subr.mxu0 0.0
    %2408 = vmatpush1.xpose.msra.mxu0 0.0
    %2409 = vmatprep.subr.mxu0 0.0
    %2410 = vmatpush1.xpose.msra.mxu0 0.0
    %2411 = vmatprep.subr.mxu0 0.0
    %2412 = vmatpush1.xpose.msra.mxu0 0.0
    %2413 = vmatprep.subr.mxu0 0.0
    %2414 = vmatpush1.xpose.msra.mxu0 0.0
    %2415 = vmatprep.subr.mxu0 0.0
    %2416 = vmatpush1.xpose.msra.mxu0 0.0
    %2417 = vmatprep.subr.mxu0 0.0
    %2418 = vmatpush1.xpose.msra.mxu0 0.0
    %2419 = vmatprep.subr.mxu0 0.0
    %2420 = vmatpush1.xpose.msra.mxu0 0.0
    %2421 = vmatprep.subr.mxu0 0.0
    %2422 = vmatpush1.xpose.msra.mxu0 0.0
    %2423 = vmatprep.subr.mxu0 0.0
    %2424 = vmatpush1.xpose.msra.mxu0 0.0
    %2425 = vmatprep.subr.mxu0 0.0
    %2426 = vmatpush1.xpose.msra.mxu0 0.0
    %2427 = vmatprep.subr.mxu0 0.0
    %2428 = vmatpush1.xpose.msra.mxu0 0.0
    %2429 = vmatprep.subr.mxu0 0.0
    %2430 = vmatpush1.xpose.msra.mxu0 0.0
    %2431 = vmatprep.subr.mxu0 0.0
    %2432 = vmatpush1.xpose.msra.mxu0 0.0
    %2433 = vmatprep.subr.mxu0 0.0
    %2434 = vmatpush1.xpose.msra.mxu0 0.0
    %2435 = vmatprep.subr.mxu0 0.0
    %2436 = vmatpush1.xpose.msra.mxu0 0.0
    %2437 = vmatprep.subr.mxu0 0.0
    %2438 = vmatpush1.xpose.msra.mxu0 0.0
    %2439 = vmatprep.subr.mxu0 0.0
    %2440 = vmatpush1.xpose.msra.mxu0 0.0
    %2441 = vmatprep.subr.mxu0 0.0
    %2442 = vmatpush1.xpose.msra.mxu0 0.0
    %2443 = vmatprep.subr.mxu0 0.0
    %2444 = vmatpush1.xpose.msra.mxu0 0.0
    %2445 = vmatprep.subr.mxu0 0.0
    %2446 = vmatpush1.xpose.msra.mxu0 0.0
    %2447 = vmatprep.subr.mxu0 0.0
    %2448 = vmatpush1.xpose.msra.mxu0 0.0
    %2449 = vmatprep.subr.mxu0 0.0
    %2450 = vmatpush1.xpose.msra.mxu0 0.0
    %2451 = vmatprep.subr.mxu0 0.0
    %2452 = vmatpush1.xpose.msra.mxu0 0.0
    %2453 = vmatprep.subr.mxu0 0.0
    %2454 = vmatpush1.xpose.msra.mxu0 0.0
    %2455 = vmatprep.subr.mxu0 0.0
    %2456 = vmatpush1.xpose.msra.mxu0 0.0
    %2457 = vmatprep.subr.mxu0 0.0
    %2458 = vmatpush1.xpose.msra.mxu0 0.0
    %2459 = vmatprep.subr.mxu0 0.0
    %2460 = vmatpush1.xpose.msra.mxu0 0.0
    %2461 = vmatprep.mubr.f32.mxu0 0.0
    %v2462 = vand.u32 %v2238, 4294901760
    %v2463 = vsub.f32 %v2238, %v2462
    %2464 = vmatmul.mubr.f32.gmra.mrb[0].mxu0 %v2463
    %v2465 = vpop.f32.mrb[0].mxu0
    %v2466 = vadd.f32 %v2392, %v2465
    %v2467 = vpop.f32.mrb[0].mxu0
    %2468 = vdwg.mxu0
    %2469 = vmatprep.subr.mxu0 0.0
    %v2470 = vand.u32 %v2241, 4294901760
    %2471 = vmatpush1.xpose.msra.mxu0 %v2470
    %2472 = vmatprep.subr.mxu0 0.0
    %2473 = vmatpush1.xpose.msra.mxu0 0.0
    %2474 = vmatprep.subr.mxu0 0.0
    %2475 = vmatpush1.xpose.msra.mxu0 0.0
    %2476 = vmatprep.subr.mxu0 0.0
    %2477 = vmatpush1.xpose.msra.mxu0 0.0
    %2478 = vmatprep.subr.mxu0 0.0
    %2479 = vmatpush1.xpose.msra.mxu0 0.0
    %2480 = vmatprep.subr.mxu0 0.0
    %2481 = vmatpush1.xpose.msra.mxu0 0.0
    %2482 = vmatprep.subr.mxu0 0.0
    %2483 = vmatpush1.xpose.msra.mxu0 0.0
    %2484 = vmatprep.subr.mxu0 0.0
    %2485 = vmatpush1.xpose.msra.mxu0 0.0
    %2486 = vmatprep.subr.mxu0 0.0
    %2487 = vmatpush1.xpose.msra.mxu0 0.0
    %2488 = vmatprep.subr.mxu0 0.0
    %2489 = vmatpush1.xpose.msra.mxu0 0.0
    %2490 = vmatprep.subr.mxu0 0.0
    %2491 = vmatpush1.xpose.msra.mxu0 0.0
    %2492 = vmatprep.subr.mxu0 0.0
    %2493 = vmatpush1.xpose.msra.mxu0 0.0
    %2494 = vmatprep.subr.mxu0 0.0
    %2495 = vmatpush1.xpose.msra.mxu0 0.0
    %2496 = vmatprep.subr.mxu0 0.0
    %2497 = vmatpush1.xpose.msra.mxu0 0.0
    %2498 = vmatprep.subr.mxu0 0.0
    %2499 = vmatpush1.xpose.msra.mxu0 0.0
    %2500 = vmatprep.subr.mxu0 0.0
    %2501 = vmatpush1.xpose.msra.mxu0 0.0
    %2502 = vmatprep.subr.mxu0 0.0
    %2503 = vmatpush1.xpose.msra.mxu0 0.0
    %2504 = vmatprep.subr.mxu0 0.0
    %2505 = vmatpush1.xpose.msra.mxu0 0.0
    %2506 = vmatprep.subr.mxu0 0.0
    %2507 = vmatpush1.xpose.msra.mxu0 0.0
    %2508 = vmatprep.subr.mxu0 0.0
    %2509 = vmatpush1.xpose.msra.mxu0 0.0
    %2510 = vmatprep.subr.mxu0 0.0
    %2511 = vmatpush1.xpose.msra.mxu0 0.0
    %2512 = vmatprep.subr.mxu0 0.0
    %2513 = vmatpush1.xpose.msra.mxu0 0.0
    %2514 = vmatprep.subr.mxu0 0.0
    %2515 = vmatpush1.xpose.msra.mxu0 0.0
    %2516 = vmatprep.subr.mxu0 0.0
    %2517 = vmatpush1.xpose.msra.mxu0 0.0
    %2518 = vmatprep.subr.mxu0 0.0
    %2519 = vmatpush1.xpose.msra.mxu0 0.0
    %2520 = vmatprep.subr.mxu0 0.0
    %2521 = vmatpush1.xpose.msra.mxu0 0.0
    %2522 = vmatprep.subr.mxu0 0.0
    %2523 = vmatpush1.xpose.msra.mxu0 0.0
    %2524 = vmatprep.subr.mxu0 0.0
    %2525 = vmatpush1.xpose.msra.mxu0 0.0
    %2526 = vmatprep.subr.mxu0 0.0
    %2527 = vmatpush1.xpose.msra.mxu0 0.0
    %2528 = vmatprep.subr.mxu0 0.0
    %2529 = vmatpush1.xpose.msra.mxu0 0.0
    %2530 = vmatprep.subr.mxu0 0.0
    %2531 = vmatpush1.xpose.msra.mxu0 0.0
    %2532 = vmatprep.subr.mxu0 0.0
    %2533 = vmatpush1.xpose.msra.mxu0 0.0
    %2534 = vmatprep.mubr.f32.mxu0 0.0
    %v2535 = vand.u32 %v2238, 4294901760
    %v2536 = vsub.f32 %v2238, %v2535
    %v2537 = vand.u32 %v2536, 4294901760
    %2538 = vmatmul.mubr.f32.gmra.mrb[0].mxu0 %v2537
    %v2539 = vpop.f32.mrb[0].mxu0
    %v2540 = vadd.f32 %v2466, %v2539
    %v2541 = vpop.f32.mrb[0].mxu0
    %2542 = vdwg.mxu0
    %2543 = vmatprep.subr.mxu0 0.0
    %v2544 = vand.u32 %v2241, 4294901760
    %v2545 = vsub.f32 %v2241, %v2544
    %v2546 = vand.u32 %v2545, 4294901760
    %2547 = vmatpush1.xpose.msra.mxu0 %v2546
    %2548 = vmatprep.subr.mxu0 0.0
    %2549 = vmatpush1.xpose.msra.mxu0 0.0
    %2550 = vmatprep.subr.mxu0 0.0
    %2551 = vmatpush1.xpose.msra.mxu0 0.0
    %2552 = vmatprep.subr.mxu0 0.0
    %2553 = vmatpush1.xpose.msra.mxu0 0.0
    %2554 = vmatprep.subr.mxu0 0.0
    %2555 = vmatpush1.xpose.msra.mxu0 0.0
    %2556 = vmatprep.subr.mxu0 0.0
    %2557 = vmatpush1.xpose.msra.mxu0 0.0
    %2558 = vmatprep.subr.mxu0 0.0
    %2559 = vmatpush1.xpose.msra.mxu0 0.0
    %2560 = vmatprep.subr.mxu0 0.0
    %2561 = vmatpush1.xpose.msra.mxu0 0.0
    %2562 = vmatprep.subr.mxu0 0.0
    %2563 = vmatpush1.xpose.msra.mxu0 0.0
    %2564 = vmatprep.subr.mxu0 0.0
    %2565 = vmatpush1.xpose.msra.mxu0 0.0
    %2566 = vmatprep.subr.mxu0 0.0
    %2567 = vmatpush1.xpose.msra.mxu0 0.0
    %2568 = vmatprep.subr.mxu0 0.0
    %2569 = vmatpush1.xpose.msra.mxu0 0.0
    %2570 = vmatprep.subr.mxu0 0.0
    %2571 = vmatpush1.xpose.msra.mxu0 0.0
    %2572 = vmatprep.subr.mxu0 0.0
    %2573 = vmatpush1.xpose.msra.mxu0 0.0
    %2574 = vmatprep.subr.mxu0 0.0
    %2575 = vmatpush1.xpose.msra.mxu0 0.0
    %2576 = vmatprep.subr.mxu0 0.0
    %2577 = vmatpush1.xpose.msra.mxu0 0.0
    %2578 = vmatprep.subr.mxu0 0.0
    %2579 = vmatpush1.xpose.msra.mxu0 0.0
    %2580 = vmatprep.subr.mxu0 0.0
    %2581 = vmatpush1.xpose.msra.mxu0 0.0
    %2582 = vmatprep.subr.mxu0 0.0
    %2583 = vmatpush1.xpose.msra.mxu0 0.0
    %2584 = vmatprep.subr.mxu0 0.0
    %2585 = vmatpush1.xpose.msra.mxu0 0.0
    %2586 = vmatprep.subr.mxu0 0.0
    %2587 = vmatpush1.xpose.msra.mxu0 0.0
    %2588 = vmatprep.subr.mxu0 0.0
    %2589 = vmatpush1.xpose.msra.mxu0 0.0
    %2590 = vmatprep.subr.mxu0 0.0
    %2591 = vmatpush1.xpose.msra.mxu0 0.0
    %2592 = vmatprep.subr.mxu0 0.0
    %2593 = vmatpush1.xpose.msra.mxu0 0.0
    %2594 = vmatprep.subr.mxu0 0.0
    %2595 = vmatpush1.xpose.msra.mxu0 0.0
    %2596 = vmatprep.subr.mxu0 0.0
    %2597 = vmatpush1.xpose.msra.mxu0 0.0
    %2598 = vmatprep.subr.mxu0 0.0
    %2599 = vmatpush1.xpose.msra.mxu0 0.0
    %2600 = vmatprep.subr.mxu0 0.0
    %2601 = vmatpush1.xpose.msra.mxu0 0.0
    %2602 = vmatprep.subr.mxu0 0.0
    %2603 = vmatpush1.xpose.msra.mxu0 0.0
    %2604 = vmatprep.subr.mxu0 0.0
    %2605 = vmatpush1.xpose.msra.mxu0 0.0
    %2606 = vmatprep.subr.mxu0 0.0
    %2607 = vmatpush1.xpose.msra.mxu0 0.0
    %2608 = vmatprep.subr.mxu0 0.0
    %2609 = vmatpush1.xpose.msra.mxu0 0.0
    %2610 = vmatprep.mubr.f32.mxu0 0.0
    %v2611 = vand.u32 %v2238, 4294901760
    %2612 = vmatmul.mubr.f32.gmra.mrb[0].mxu0 %v2611
    %v2613 = vpop.f32.mrb[0].mxu0
    %v2614 = vadd.f32 %v2540, %v2613
    %v2615 = vpop.f32.mrb[0].mxu0
    %2616 = vdwg.mxu0
    %2617 = vmatprep.subr.mxu0 0.0
    %v2618 = vand.u32 %v2241, 4294901760
    %2619 = vmatpush1.xpose.msra.mxu0 %v2618
    %2620 = vmatprep.subr.mxu0 0.0
    %2621 = vmatpush1.xpose.msra.mxu0 0.0
    %2622 = vmatprep.subr.mxu0 0.0
    %2623 = vmatpush1.xpose.msra.mxu0 0.0
    %2624 = vmatprep.subr.mxu0 0.0
    %2625 = vmatpush1.xpose.msra.mxu0 0.0
    %2626 = vmatprep.subr.mxu0 0.0
    %2627 = vmatpush1.xpose.msra.mxu0 0.0
    %2628 = vmatprep.subr.mxu0 0.0
    %2629 = vmatpush1.xpose.msra.mxu0 0.0
    %2630 = vmatprep.subr.mxu0 0.0
    %2631 = vmatpush1.xpose.msra.mxu0 0.0
    %2632 = vmatprep.subr.mxu0 0.0
    %2633 = vmatpush1.xpose.msra.mxu0 0.0
    %2634 = vmatprep.subr.mxu0 0.0
    %2635 = vmatpush1.xpose.msra.mxu0 0.0
    %2636 = vmatprep.subr.mxu0 0.0
    %2637 = vmatpush1.xpose.msra.mxu0 0.0
    %2638 = vmatprep.subr.mxu0 0.0
    %2639 = vmatpush1.xpose.msra.mxu0 0.0
    %2640 = vmatprep.subr.mxu0 0.0
    %2641 = vmatpush1.xpose.msra.mxu0 0.0
    %2642 = vmatprep.subr.mxu0 0.0
    %2643 = vmatpush1.xpose.msra.mxu0 0.0
    %2644 = vmatprep.subr.mxu0 0.0
    %2645 = vmatpush1.xpose.msra.mxu0 0.0
    %2646 = vmatprep.subr.mxu0 0.0
    %2647 = vmatpush1.xpose.msra.mxu0 0.0
    %2648 = vmatprep.subr.mxu0 0.0
    %2649 = vmatpush1.xpose.msra.mxu0 0.0
    %2650 = vmatprep.subr.mxu0 0.0
    %2651 = vmatpush1.xpose.msra.mxu0 0.0
    %2652 = vmatprep.subr.mxu0 0.0
    %2653 = vmatpush1.xpose.msra.mxu0 0.0
    %2654 = vmatprep.subr.mxu0 0.0
    %2655 = vmatpush1.xpose.msra.mxu0 0.0
    %2656 = vmatprep.subr.mxu0 0.0
    %2657 = vmatpush1.xpose.msra.mxu0 0.0
    %2658 = vmatprep.subr.mxu0 0.0
    %2659 = vmatpush1.xpose.msra.mxu0 0.0
    %2660 = vmatprep.subr.mxu0 0.0
    %2661 = vmatpush1.xpose.msra.mxu0 0.0
    %2662 = vmatprep.subr.mxu0 0.0
    %2663 = vmatpush1.xpose.msra.mxu0 0.0
    %2664 = vmatprep.subr.mxu0 0.0
    %2665 = vmatpush1.xpose.msra.mxu0 0.0
    %2666 = vmatprep.subr.mxu0 0.0
    %2667 = vmatpush1.xpose.msra.mxu0 0.0
    %2668 = vmatprep.subr.mxu0 0.0
    %2669 = vmatpush1.xpose.msra.mxu0 0.0
    %2670 = vmatprep.subr.mxu0 0.0
    %2671 = vmatpush1.xpose.msra.mxu0 0.0
    %2672 = vmatprep.subr.mxu0 0.0
    %2673 = vmatpush1.xpose.msra.mxu0 0.0
    %2674 = vmatprep.subr.mxu0 0.0
    %2675 = vmatpush1.xpose.msra.mxu0 0.0
    %2676 = vmatprep.subr.mxu0 0.0
    %2677 = vmatpush1.xpose.msra.mxu0 0.0
    %2678 = vmatprep.subr.mxu0 0.0
    %2679 = vmatpush1.xpose.msra.mxu0 0.0
    %2680 = vmatprep.subr.mxu0 0.0
    %2681 = vmatpush1.xpose.msra.mxu0 0.0
    %2682 = vmatprep.mubr.f32.mxu0 0.0
    %v2683 = vand.u32 %v2238, 4294901760
    %2684 = vmatmul.mubr.f32.gmra.mrb[0].mxu0 %v2683
    %v2685 = vpop.f32.mrb[0].mxu0
    %v2686 = vadd.f32 %v2614, %v2685
    %v2687 = vpop.f32.mrb[0].mxu0
    %2688 = vdwg.mxu0
    %v2689 = vsel %vm1784, %v2234, -inf
    %2690 = vmax.xlane.f32.xlu0 %v2689
    %v2691 = vpop.xlane.xlu0 %2690
    %v2692 = vsel %vm1784, %v2686, -inf
    %2693 = vmax.xlane.f32.xlu0 %v2692
    %v2694 = vpop.xlane.xlu0 %2693
    %v2695 = vsub.f32 %v2234, %v2691
    %v2696 = vsub.f32 %v2686, %v2694
    %v2697 = vmul.f32 %v2695, 1.442695
    %v2698 = vpow.pop %v2697
    %v2699 = vmul.f32 %v2696, 1.442695
    %v2700 = vpow.pop %v2699
    %v2701 = vsel %vm1784, %v2698, 0.0
    %2702 = vadd.xlane.f32.xlu0 %v2701
    %v2703 = vpop.xlane.xlu0 %2702
    %v2704 = vsel %vm1784, %v2700, 0.0
    %2705 = vadd.xlane.f32.xlu0 %v2704
    %v2706 = vpop.xlane.xlu0 %2705
    %v2707 = vrcp.pop %v2703
    %v2708 = vrcp.pop %v2706
    %v2709 = vmul.f32 %v2698, %v2707
    %v2710 = vmul.f32 %v2700, %v2708
    %v2712 = vsel %vm1784, %v2709, 0
    %2714 = vmatprep.subr.mxu0 0.0
    %v2715 = vand.u32 %v1757, 4294901760
    %2716 = vmatpush1.msra.mxu0 %v2715
    %2717 = vmatprep.subr.mxu0 0.0
    %2718 = vmatpush1.msra.mxu0 0.0
    %2719 = vmatprep.subr.mxu0 0.0
    %2720 = vmatpush1.msra.mxu0 0.0
    %2721 = vmatprep.subr.mxu0 0.0
    %2722 = vmatpush1.msra.mxu0 0.0
    %2723 = vmatprep.subr.mxu0 0.0
    %2724 = vmatpush1.msra.mxu0 0.0
    %2725 = vmatprep.subr.mxu0 0.0
    %2726 = vmatpush1.msra.mxu0 0.0
    %2727 = vmatprep.subr.mxu0 0.0
    %2728 = vmatpush1.msra.mxu0 0.0
    %2729 = vmatprep.subr.mxu0 0.0
    %2730 = vmatpush1.msra.mxu0 0.0
    %2731 = vmatprep.subr.mxu0 0.0
    %2732 = vmatpush1.msra.mxu0 0.0
    %2733 = vmatprep.subr.mxu0 0.0
    %2734 = vmatpush1.msra.mxu0 0.0
    %2735 = vmatprep.subr.mxu0 0.0
    %2736 = vmatpush1.msra.mxu0 0.0
    %2737 = vmatprep.subr.mxu0 0.0
    %2738 = vmatpush1.msra.mxu0 0.0
    %2739 = vmatprep.subr.mxu0 0.0
    %2740 = vmatpush1.msra.mxu0 0.0
    %2741 = vmatprep.subr.mxu0 0.0
    %2742 = vmatpush1.msra.mxu0 0.0
    %2743 = vmatprep.subr.mxu0 0.0
    %2744 = vmatpush1.msra.mxu0 0.0
    %2745 = vmatprep.subr.mxu0 0.0
    %2746 = vmatpush1.msra.mxu0 0.0
    %2747 = vmatprep.subr.mxu0 0.0
    %2748 = vmatpush1.msra.mxu0 0.0
    %2749 = vmatprep.subr.mxu0 0.0
    %2750 = vmatpush1.msra.mxu0 0.0
    %2751 = vmatprep.subr.mxu0 0.0
    %2752 = vmatpush1.msra.mxu0 0.0
    %2753 = vmatprep.subr.mxu0 0.0
    %2754 = vmatpush1.msra.mxu0 0.0
    %2755 = vmatprep.subr.mxu0 0.0
    %2756 = vmatpush1.msra.mxu0 0.0
    %2757 = vmatprep.subr.mxu0 0.0
    %2758 = vmatpush1.msra.mxu0 0.0
    %2759 = vmatprep.subr.mxu0 0.0
    %2760 = vmatpush1.msra.mxu0 0.0
    %2761 = vmatprep.subr.mxu0 0.0
    %2762 = vmatpush1.msra.mxu0 0.0
    %2763 = vmatprep.subr.mxu0 0.0
    %2764 = vmatpush1.msra.mxu0 0.0
    %2765 = vmatprep.subr.mxu0 0.0
    %2766 = vmatpush1.msra.mxu0 0.0
    %2767 = vmatprep.subr.mxu0 0.0
    %2768 = vmatpush1.msra.mxu0 0.0
    %2769 = vmatprep.subr.mxu0 0.0
    %2770 = vmatpush1.msra.mxu0 0.0
    %2771 = vmatprep.subr.mxu0 0.0
    %2772 = vmatpush1.msra.mxu0 0.0
    %2773 = vmatprep.subr.mxu0 0.0
    %2774 = vmatpush1.msra.mxu0 0.0
    %2775 = vmatprep.subr.mxu0 0.0
    %2776 = vmatpush1.msra.mxu0 0.0
    %2777 = vmatprep.subr.mxu0 0.0
    %2778 = vmatpush1.msra.mxu0 0.0
    %2779 = vmatprep.mubr.f32.mxu0 0.0
    %v2780 = vand.u32 %v2712, 4294901760
    %v2781 = vsub.f32 %v2712, %v2780
    %v2782 = vand.u32 %v2781, 4294901760
    %v2783 = vsub.f32 %v2781, %v2782
    %v2784 = vand.u32 %v2783, 4294901760
    %2785 = vmatmul.mubr.f32.gmra.mrb[0].mxu0 %v2784
    %v2786 = vpop.f32.mrb[0].mxu0
    %v2787 = vadd.f32 0.0, %v2786
    %v2788 = vpop.f32.mrb[0].mxu0
    %2789 = vdwg.mxu0
    %2790 = vmatprep.subr.mxu0 0.0
    %v2791 = vand.u32 %v1757, 4294901760
    %v2792 = vsub.f32 %v1757, %v2791
    %v2793 = vand.u32 %v2792, 4294901760
    %v2794 = vsub.f32 %v2792, %v2793
    %v2795 = vand.u32 %v2794, 4294901760
    %2796 = vmatpush1.msra.mxu0 %v2795
    %2797 = vmatprep.subr.mxu0 0.0
    %2798 = vmatpush1.msra.mxu0 0.0
    %2799 = vmatprep.subr.mxu0 0.0
    %2800 = vmatpush1.msra.mxu0 0.0
    %2801 = vmatprep.subr.mxu0 0.0
    %2802 = vmatpush1.msra.mxu0 0.0
    %2803 = vmatprep.subr.mxu0 0.0
    %2804 = vmatpush1.msra.mxu0 0.0
    %2805 = vmatprep.subr.mxu0 0.0
    %2806 = vmatpush1.msra.mxu0 0.0
    %2807 = vmatprep.subr.mxu0 0.0
    %2808 = vmatpush1.msra.mxu0 0.0
    %2809 = vmatprep.subr.mxu0 0.0
    %2810 = vmatpush1.msra.mxu0 0.0
    %2811 = vmatprep.subr.mxu0 0.0
    %2812 = vmatpush1.msra.mxu0 0.0
    %2813 = vmatprep.subr.mxu0 0.0
    %2814 = vmatpush1.msra.mxu0 0.0
    %2815 = vmatprep.subr.mxu0 0.0
    %2816 = vmatpush1.msra.mxu0 0.0
    %2817 = vmatprep.subr.mxu0 0.0
    %2818 = vmatpush1.msra.mxu0 0.0
    %2819 = vmatprep.subr.mxu0 0.0
    %2820 = vmatpush1.msra.mxu0 0.0
    %2821 = vmatprep.subr.mxu0 0.0
    %2822 = vmatpush1.msra.mxu0 0.0
    %2823 = vmatprep.subr.mxu0 0.0
    %2824 = vmatpush1.msra.mxu0 0.0
    %2825 = vmatprep.subr.mxu0 0.0
    %2826 = vmatpush1.msra.mxu0 0.0
    %2827 = vmatprep.subr.mxu0 0.0
    %2828 = vmatpush1.msra.mxu0 0.0
    %2829 = vmatprep.subr.mxu0 0.0
    %2830 = vmatpush1.msra.mxu0 0.0
    %2831 = vmatprep.subr.mxu0 0.0
    %2832 = vmatpush1.msra.mxu0 0.0
    %2833 = vmatprep.subr.mxu0 0.0
    %2834 = vmatpush1.msra.mxu0 0.0
    %2835 = vmatprep.subr.mxu0 0.0
    %2836 = vmatpush1.msra.mxu0 0.0
    %2837 = vmatprep.subr.mxu0 0.0
    %2838 = vmatpush1.msra.mxu0 0.0
    %2839 = vmatprep.subr.mxu0 0.0
    %2840 = vmatpush1.msra.mxu0 0.0
    %2841 = vmatprep.subr.mxu0 0.0
    %2842 = vmatpush1.msra.mxu0 0.0
    %2843 = vmatprep.subr.mxu0 0.0
    %2844 = vmatpush1.msra.mxu0 0.0
    %2845 = vmatprep.subr.mxu0 0.0
    %2846 = vmatpush1.msra.mxu0 0.0
    %2847 = vmatprep.subr.mxu0 0.0
    %2848 = vmatpush1.msra.mxu0 0.0
    %2849 = vmatprep.subr.mxu0 0.0
    %2850 = vmatpush1.msra.mxu0 0.0
    %2851 = vmatprep.subr.mxu0 0.0
    %2852 = vmatpush1.msra.mxu0 0.0
    %2853 = vmatprep.subr.mxu0 0.0
    %2854 = vmatpush1.msra.mxu0 0.0
    %2855 = vmatprep.subr.mxu0 0.0
    %2856 = vmatpush1.msra.mxu0 0.0
    %2857 = vmatprep.subr.mxu0 0.0
    %2858 = vmatpush1.msra.mxu0 0.0
    %2859 = vmatprep.mubr.f32.mxu0 0.0
    %v2860 = vand.u32 %v2712, 4294901760
    %2861 = vmatmul.mubr.f32.gmra.mrb[0].mxu0 %v2860
    %v2862 = vpop.f32.mrb[0].mxu0
    %v2863 = vadd.f32 %v2787, %v2862
    %v2864 = vpop.f32.mrb[0].mxu0
    %2865 = vdwg.mxu0
    %2866 = vmatprep.subr.mxu0 0.0
    %v2867 = vand.u32 %v1757, 4294901760
    %v2868 = vsub.f32 %v1757, %v2867
    %2869 = vmatpush1.msra.mxu0 %v2868
    %2870 = vmatprep.subr.mxu0 0.0
    %2871 = vmatpush1.msra.mxu0 0.0
    %2872 = vmatprep.subr.mxu0 0.0
    %2873 = vmatpush1.msra.mxu0 0.0
    %2874 = vmatprep.subr.mxu0 0.0
    %2875 = vmatpush1.msra.mxu0 0.0
    %2876 = vmatprep.subr.mxu0 0.0
    %2877 = vmatpush1.msra.mxu0 0.0
    %2878 = vmatprep.subr.mxu0 0.0
    %2879 = vmatpush1.msra.mxu0 0.0
    %2880 = vmatprep.subr.mxu0 0.0
    %2881 = vmatpush1.msra.mxu0 0.0
    %2882 = vmatprep.subr.mxu0 0.0
    %2883 = vmatpush1.msra.mxu0 0.0
    %2884 = vmatprep.subr.mxu0 0.0
    %2885 = vmatpush1.msra.mxu0 0.0
    %2886 = vmatprep.subr.mxu0 0.0
    %2887 = vmatpush1.msra.mxu0 0.0
    %2888 = vmatprep.subr.mxu0 0.0
    %2889 = vmatpush1.msra.mxu0 0.0
    %2890 = vmatprep.subr.mxu0 0.0
    %2891 = vmatpush1.msra.mxu0 0.0
    %2892 = vmatprep.subr.mxu0 0.0
    %2893 = vmatpush1.msra.mxu0 0.0
    %2894 = vmatprep.subr.mxu0 0.0
    %2895 = vmatpush1.msra.mxu0 0.0
    %2896 = vmatprep.subr.mxu0 0.0
    %2897 = vmatpush1.msra.mxu0 0.0
    %2898 = vmatprep.subr.mxu0 0.0
    %2899 = vmatpush1.msra.mxu0 0.0
    %2900 = vmatprep.subr.mxu0 0.0
    %2901 = vmatpush1.msra.mxu0 0.0
    %2902 = vmatprep.subr.mxu0 0.0
    %2903 = vmatpush1.msra.mxu0 0.0
    %2904 = vmatprep.subr.mxu0 0.0
    %2905 = vmatpush1.msra.mxu0 0.0
    %2906 = vmatprep.subr.mxu0 0.0
    %2907 = vmatpush1.msra.mxu0 0.0
    %2908 = vmatprep.subr.mxu0 0.0
    %2909 = vmatpush1.msra.mxu0 0.0
    %2910 = vmatprep.subr.mxu0 0.0
    %2911 = vmatpush1.msra.mxu0 0.0
    %2912 = vmatprep.subr.mxu0 0.0
    %2913 = vmatpush1.msra.mxu0 0.0
    %2914 = vmatprep.subr.mxu0 0.0
    %2915 = vmatpush1.msra.mxu0 0.0
    %2916 = vmatprep.subr.mxu0 0.0
    %2917 = vmatpush1.msra.mxu0 0.0
    %2918 = vmatprep.subr.mxu0 0.0
    %2919 = vmatpush1.msra.mxu0 0.0
    %2920 = vmatprep.subr.mxu0 0.0
    %2921 = vmatpush1.msra.mxu0 0.0
    %2922 = vmatprep.subr.mxu0 0.0
    %2923 = vmatpush1.msra.mxu0 0.0
    %2924 = vmatprep.subr.mxu0 0.0
    %2925 = vmatpush1.msra.mxu0 0.0
    %2926 = vmatprep.subr.mxu0 0.0
    %2927 = vmatpush1.msra.mxu0 0.0
    %2928 = vmatprep.subr.mxu0 0.0
    %2929 = vmatpush1.msra.mxu0 0.0
    %2930 = vmatprep.subr.mxu0 0.0
    %2931 = vmatpush1.msra.mxu0 0.0
    %2932 = vmatprep.mubr.f32.mxu0 0.0
    %v2933 = vand.u32 %v2712, 4294901760
    %v2934 = vsub.f32 %v2712, %v2933
    %2935 = vmatmul.mubr.f32.gmra.mrb[0].mxu0 %v2934
    %v2936 = vpop.f32.mrb[0].mxu0
    %v2937 = vadd.f32 %v2863, %v2936
    %v2938 = vpop.f32.mrb[0].mxu0
    %2939 = vdwg.mxu0
    %2940 = vmatprep.subr.mxu0 0.0
    %v2941 = vand.u32 %v1757, 4294901760
    %2942 = vmatpush1.msra.mxu0 %v2941
    %2943 = vmatprep.subr.mxu0 0.0
    %2944 = vmatpush1.msra.mxu0 0.0
    %2945 = vmatprep.subr.mxu0 0.0
    %2946 = vmatpush1.msra.mxu0 0.0
    %2947 = vmatprep.subr.mxu0 0.0
    %2948 = vmatpush1.msra.mxu0 0.0
    %2949 = vmatprep.subr.mxu0 0.0
    %2950 = vmatpush1.msra.mxu0 0.0
    %2951 = vmatprep.subr.mxu0 0.0
    %2952 = vmatpush1.msra.mxu0 0.0
    %2953 = vmatprep.subr.mxu0 0.0
    %2954 = vmatpush1.msra.mxu0 0.0
    %2955 = vmatprep.subr.mxu0 0.0
    %2956 = vmatpush1.msra.mxu0 0.0
    %2957 = vmatprep.subr.mxu0 0.0
    %2958 = vmatpush1.msra.mxu0 0.0
    %2959 = vmatprep.subr.mxu0 0.0
    %2960 = vmatpush1.msra.mxu0 0.0
    %2961 = vmatprep.subr.mxu0 0.0
    %2962 = vmatpush1.msra.mxu0 0.0
    %2963 = vmatprep.subr.mxu0 0.0
    %2964 = vmatpush1.msra.mxu0 0.0
    %2965 = vmatprep.subr.mxu0 0.0
    %2966 = vmatpush1.msra.mxu0 0.0
    %2967 = vmatprep.subr.mxu0 0.0
    %2968 = vmatpush1.msra.mxu0 0.0
    %2969 = vmatprep.subr.mxu0 0.0
    %2970 = vmatpush1.msra.mxu0 0.0
    %2971 = vmatprep.subr.mxu0 0.0
    %2972 = vmatpush1.msra.mxu0 0.0
    %2973 = vmatprep.subr.mxu0 0.0
    %2974 = vmatpush1.msra.mxu0 0.0
    %2975 = vmatprep.subr.mxu0 0.0
    %2976 = vmatpush1.msra.mxu0 0.0
    %2977 = vmatprep.subr.mxu0 0.0
    %2978 = vmatpush1.msra.mxu0 0.0
    %2979 = vmatprep.subr.mxu0 0.0
    %2980 = vmatpush1.msra.mxu0 0.0
    %2981 = vmatprep.subr.mxu0 0.0
    %2982 = vmatpush1.msra.mxu0 0.0
    %2983 = vmatprep.subr.mxu0 0.0
    %2984 = vmatpush1.msra.mxu0 0.0
    %2985 = vmatprep.subr.mxu0 0.0
    %2986 = vmatpush1.msra.mxu0 0.0
    %2987 = vmatprep.subr.mxu0 0.0
    %2988 = vmatpush1.msra.mxu0 0.0
    %2989 = vmatprep.subr.mxu0 0.0
    %2990 = vmatpush1.msra.mxu0 0.0
    %2991 = vmatprep.subr.mxu0 0.0
    %2992 = vmatpush1.msra.mxu0 0.0
    %2993 = vmatprep.subr.mxu0 0.0
    %2994 = vmatpush1.msra.mxu0 0.0
    %2995 = vmatprep.subr.mxu0 0.0
    %2996 = vmatpush1.msra.mxu0 0.0
    %2997 = vmatprep.subr.mxu0 0.0
    %2998 = vmatpush1.msra.mxu0 0.0
    %2999 = vmatprep.subr.mxu0 0.0
    %3000 = vmatpush1.msra.mxu0 0.0
    %3001 = vmatprep.subr.mxu0 0.0
    %3002 = vmatpush1.msra.mxu0 0.0
    %3003 = vmatprep.subr.mxu0 0.0
    %3004 = vmatpush1.msra.mxu0 0.0
    %3005 = vmatprep.mubr.f32.mxu0 0.0
    %v3006 = vand.u32 %v2712, 4294901760
    %v3007 = vsub.f32 %v2712, %v3006
    %v3008 = vand.u32 %v3007, 4294901760
    %3009 = vmatmul.mubr.f32.gmra.mrb[0].mxu0 %v3008
    %v3010 = vpop.f32.mrb[0].mxu0
    %v3011 = vadd.f32 %v2937, %v3010
    %v3012 = vpop.f32.mrb[0].mxu0
    %3013 = vdwg.mxu0
    %3014 = vmatprep.subr.mxu0 0.0
    %v3015 = vand.u32 %v1757, 4294901760
    %v3016 = vsub.f32 %v1757, %v3015
    %v3017 = vand.u32 %v3016, 4294901760
    %3018 = vmatpush1.msra.mxu0 %v3017
    %3019 = vmatprep.subr.mxu0 0.0
    %3020 = vmatpush1.msra.mxu0 0.0
    %3021 = vmatprep.subr.mxu0 0.0
    %3022 = vmatpush1.msra.mxu0 0.0
    %3023 = vmatprep.subr.mxu0 0.0
    %3024 = vmatpush1.msra.mxu0 0.0
    %3025 = vmatprep.subr.mxu0 0.0
    %3026 = vmatpush1.msra.mxu0 0.0
    %3027 = vmatprep.subr.mxu0 0.0
    %3028 = vmatpush1.msra.mxu0 0.0
    %3029 = vmatprep.subr.mxu0 0.0
    %3030 = vmatpush1.msra.mxu0 0.0
    %3031 = vmatprep.subr.mxu0 0.0
    %3032 = vmatpush1.msra.mxu0 0.0
    %3033 = vmatprep.subr.mxu0 0.0
    %3034 = vmatpush1.msra.mxu0 0.0
    %3035 = vmatprep.subr.mxu0 0.0
    %3036 = vmatpush1.msra.mxu0 0.0
    %3037 = vmatprep.subr.mxu0 0.0
    %3038 = vmatpush1.msra.mxu0 0.0
    %3039 = vmatprep.subr.mxu0 0.0
    %3040 = vmatpush1.msra.mxu0 0.0
    %3041 = vmatprep.subr.mxu0 0.0
    %3042 = vmatpush1.msra.mxu0 0.0
    %3043 = vmatprep.subr.mxu0 0.0
    %3044 = vmatpush1.msra.mxu0 0.0
    %3045 = vmatprep.subr.mxu0 0.0
    %3046 = vmatpush1.msra.mxu0 0.0
    %3047 = vmatprep.subr.mxu0 0.0
    %3048 = vmatpush1.msra.mxu0 0.0
    %3049 = vmatprep.subr.mxu0 0.0
    %3050 = vmatpush1.msra.mxu0 0.0
    %3051 = vmatprep.subr.mxu0 0.0
    %3052 = vmatpush1.msra.mxu0 0.0
    %3053 = vmatprep.subr.mxu0 0.0
    %3054 = vmatpush1.msra.mxu0 0.0
    %3055 = vmatprep.subr.mxu0 0.0
    %3056 = vmatpush1.msra.mxu0 0.0
    %3057 = vmatprep.subr.mxu0 0.0
    %3058 = vmatpush1.msra.mxu0 0.0
    %3059 = vmatprep.subr.mxu0 0.0
    %3060 = vmatpush1.msra.mxu0 0.0
    %3061 = vmatprep.subr.mxu0 0.0
    %3062 = vmatpush1.msra.mxu0 0.0
    %3063 = vmatprep.subr.mxu0 0.0
    %3064 = vmatpush1.msra.mxu0 0.0
    %3065 = vmatprep.subr.mxu0 0.0
    %3066 = vmatpush1.msra.mxu0 0.0
    %3067 = vmatprep.subr.mxu0 0.0
    %3068 = vmatpush1.msra.mxu0 0.0
    %3069 = vmatprep.subr.mxu0 0.0
    %3070 = vmatpush1.msra.mxu0 0.0
    %3071 = vmatprep.subr.mxu0 0.0
    %3072 = vmatpush1.msra.mxu0 0.0
    %3073 = vmatprep.subr.mxu0 0.0
    %3074 = vmatpush1.msra.mxu0 0.0
    %3075 = vmatprep.subr.mxu0 0.0
    %3076 = vmatpush1.msra.mxu0 0.0
    %3077 = vmatprep.subr.mxu0 0.0
    %3078 = vmatpush1.msra.mxu0 0.0
    %3079 = vmatprep.subr.mxu0 0.0
    %3080 = vmatpush1.msra.mxu0 0.0
    %3081 = vmatprep.mubr.f32.mxu0 0.0
    %v3082 = vand.u32 %v2712, 4294901760
    %3083 = vmatmul.mubr.f32.gmra.mrb[0].mxu0 %v3082
    %v3084 = vpop.f32.mrb[0].mxu0
    %v3085 = vadd.f32 %v3011, %v3084
    %v3086 = vpop.f32.mrb[0].mxu0
    %3087 = vdwg.mxu0
    %3088 = vmatprep.subr.mxu0 0.0
    %v3089 = vand.u32 %v1757, 4294901760
    %3090 = vmatpush1.msra.mxu0 %v3089
    %3091 = vmatprep.subr.mxu0 0.0
    %3092 = vmatpush1.msra.mxu0 0.0
    %3093 = vmatprep.subr.mxu0 0.0
    %3094 = vmatpush1.msra.mxu0 0.0
    %3095 = vmatprep.subr.mxu0 0.0
    %3096 = vmatpush1.msra.mxu0 0.0
    %3097 = vmatprep.subr.mxu0 0.0
    %3098 = vmatpush1.msra.mxu0 0.0
    %3099 = vmatprep.subr.mxu0 0.0
    %3100 = vmatpush1.msra.mxu0 0.0
    %3101 = vmatprep.subr.mxu0 0.0
    %3102 = vmatpush1.msra.mxu0 0.0
    %3103 = vmatprep.subr.mxu0 0.0
    %3104 = vmatpush1.msra.mxu0 0.0
    %3105 = vmatprep.subr.mxu0 0.0
    %3106 = vmatpush1.msra.mxu0 0.0
    %3107 = vmatprep.subr.mxu0 0.0
    %3108 = vmatpush1.msra.mxu0 0.0
    %3109 = vmatprep.subr.mxu0 0.0
    %3110 = vmatpush1.msra.mxu0 0.0
    %3111 = vmatprep.subr.mxu0 0.0
    %3112 = vmatpush1.msra.mxu0 0.0
    %3113 = vmatprep.subr.mxu0 0.0
    %3114 = vmatpush1.msra.mxu0 0.0
    %3115 = vmatprep.subr.mxu0 0.0
    %3116 = vmatpush1.msra.mxu0 0.0
    %3117 = vmatprep.subr.mxu0 0.0
    %3118 = vmatpush1.msra.mxu0 0.0
    %3119 = vmatprep.subr.mxu0 0.0
    %3120 = vmatpush1.msra.mxu0 0.0
    %3121 = vmatprep.subr.mxu0 0.0
    %3122 = vmatpush1.msra.mxu0 0.0
    %3123 = vmatprep.subr.mxu0 0.0
    %3124 = vmatpush1.msra.mxu0 0.0
    %3125 = vmatprep.subr.mxu0 0.0
    %3126 = vmatpush1.msra.mxu0 0.0
    %3127 = vmatprep.subr.mxu0 0.0
    %3128 = vmatpush1.msra.mxu0 0.0
    %3129 = vmatprep.subr.mxu0 0.0
    %3130 = vmatpush1.msra.mxu0 0.0
    %3131 = vmatprep.subr.mxu0 0.0
    %3132 = vmatpush1.msra.mxu0 0.0
    %3133 = vmatprep.subr.mxu0 0.0
    %3134 = vmatpush1.msra.mxu0 0.0
    %3135 = vmatprep.subr.mxu0 0.0
    %3136 = vmatpush1.msra.mxu0 0.0
    %3137 = vmatprep.subr.mxu0 0.0
    %3138 = vmatpush1.msra.mxu0 0.0
    %3139 = vmatprep.subr.mxu0 0.0
    %3140 = vmatpush1.msra.mxu0 0.0
    %3141 = vmatprep.subr.mxu0 0.0
    %3142 = vmatpush1.msra.mxu0 0.0
    %3143 = vmatprep.subr.mxu0 0.0
    %3144 = vmatpush1.msra.mxu0 0.0
    %3145 = vmatprep.subr.mxu0 0.0
    %3146 = vmatpush1.msra.mxu0 0.0
    %3147 = vmatprep.subr.mxu0 0.0
    %3148 = vmatpush1.msra.mxu0 0.0
    %3149 = vmatprep.subr.mxu0 0.0
    %3150 = vmatpush1.msra.mxu0 0.0
    %3151 = vmatprep.subr.mxu0 0.0
    %3152 = vmatpush1.msra.mxu0 0.0
    %3153 = vmatprep.mubr.f32.mxu0 0.0
    %v3154 = vand.u32 %v2712, 4294901760
    %3155 = vmatmul.mubr.f32.gmra.mrb[0].mxu0 %v3154
    %v3156 = vpop.f32.mrb[0].mxu0
    %v3157 = vadd.f32 %v3085, %v3156
    %v3158 = vpop.f32.mrb[0].mxu0
    %3159 = vdwg.mxu0
    %v3161 = vsel %vm1784, %v2710, 0
    %3163 = vmatprep.subr.mxu0 0.0
    %v3164 = vand.u32 %v1763, 4294901760
    %3165 = vmatpush1.msra.mxu0 %v3164
    %3166 = vmatprep.subr.mxu0 0.0
    %3167 = vmatpush1.msra.mxu0 0.0
    %3168 = vmatprep.subr.mxu0 0.0
    %3169 = vmatpush1.msra.mxu0 0.0
    %3170 = vmatprep.subr.mxu0 0.0
    %3171 = vmatpush1.msra.mxu0 0.0
    %3172 = vmatprep.subr.mxu0 0.0
    %3173 = vmatpush1.msra.mxu0 0.0
    %3174 = vmatprep.subr.mxu0 0.0
    %3175 = vmatpush1.msra.mxu0 0.0
    %3176 = vmatprep.subr.mxu0 0.0
    %3177 = vmatpush1.msra.mxu0 0.0
    %3178 = vmatprep.subr.mxu0 0.0
    %3179 = vmatpush1.msra.mxu0 0.0
    %3180 = vmatprep.subr.mxu0 0.0
    %3181 = vmatpush1.msra.mxu0 0.0
    %3182 = vmatprep.subr.mxu0 0.0
    %3183 = vmatpush1.msra.mxu0 0.0
    %3184 = vmatprep.subr.mxu0 0.0
    %3185 = vmatpush1.msra.mxu0 0.0
    %3186 = vmatprep.subr.mxu0 0.0
    %3187 = vmatpush1.msra.mxu0 0.0
    %3188 = vmatprep.subr.mxu0 0.0
    %3189 = vmatpush1.msra.mxu0 0.0
    %3190 = vmatprep.subr.mxu0 0.0
    %3191 = vmatpush1.msra.mxu0 0.0
    %3192 = vmatprep.subr.mxu0 0.0
    %3193 = vmatpush1.msra.mxu0 0.0
    %3194 = vmatprep.subr.mxu0 0.0
    %3195 = vmatpush1.msra.mxu0 0.0
    %3196 = vmatprep.subr.mxu0 0.0
    %3197 = vmatpush1.msra.mxu0 0.0
    %3198 = vmatprep.subr.mxu0 0.0
    %3199 = vmatpush1.msra.mxu0 0.0
    %3200 = vmatprep.subr.mxu0 0.0
    %3201 = vmatpush1.msra.mxu0 0.0
    %3202 = vmatprep.subr.mxu0 0.0
    %3203 = vmatpush1.msra.mxu0 0.0
    %3204 = vmatprep.subr.mxu0 0.0
    %3205 = vmatpush1.msra.mxu0 0.0
    %3206 = vmatprep.subr.mxu0 0.0
    %3207 = vmatpush1.msra.mxu0 0.0
    %3208 = vmatprep.subr.mxu0 0.0
    %3209 = vmatpush1.msra.mxu0 0.0
    %3210 = vmatprep.subr.mxu0 0.0
    %3211 = vmatpush1.msra.mxu0 0.0
    %3212 = vmatprep.subr.mxu0 0.0
    %3213 = vmatpush1.msra.mxu0 0.0
    %3214 = vmatprep.subr.mxu0 0.0
    %3215 = vmatpush1.msra.mxu0 0.0
    %3216 = vmatprep.subr.mxu0 0.0
    %3217 = vmatpush1.msra.mxu0 0.0
    %3218 = vmatprep.subr.mxu0 0.0
    %3219 = vmatpush1.msra.mxu0 0.0
    %3220 = vmatprep.subr.mxu0 0.0
    %3221 = vmatpush1.msra.mxu0 0.0
    %3222 = vmatprep.subr.mxu0 0.0
    %3223 = vmatpush1.msra.mxu0 0.0
    %3224 = vmatprep.subr.mxu0 0.0
    %3225 = vmatpush1.msra.mxu0 0.0
    %3226 = vmatprep.subr.mxu0 0.0
    %3227 = vmatpush1.msra.mxu0 0.0
    %3228 = vmatprep.mubr.f32.mxu0 0.0
    %v3229 = vand.u32 %v3161, 4294901760
    %v3230 = vsub.f32 %v3161, %v3229
    %v3231 = vand.u32 %v3230, 4294901760
    %v3232 = vsub.f32 %v3230, %v3231
    %v3233 = vand.u32 %v3232, 4294901760
    %3234 = vmatmul.mubr.f32.gmra.mrb[0].mxu0 %v3233
    %v3235 = vpop.f32.mrb[0].mxu0
    %v3236 = vadd.f32 0.0, %v3235
    %v3237 = vpop.f32.mrb[0].mxu0
    %3238 = vdwg.mxu0
    %3239 = vmatprep.subr.mxu0 0.0
    %v3240 = vand.u32 %v1763, 4294901760
    %v3241 = vsub.f32 %v1763, %v3240
    %v3242 = vand.u32 %v3241, 4294901760
    %v3243 = vsub.f32 %v3241, %v3242
    %v3244 = vand.u32 %v3243, 4294901760
    %3245 = vmatpush1.msra.mxu0 %v3244
    %3246 = vmatprep.subr.mxu0 0.0
    %3247 = vmatpush1.msra.mxu0 0.0
    %3248 = vmatprep.subr.mxu0 0.0
    %3249 = vmatpush1.msra.mxu0 0.0
    %3250 = vmatprep.subr.mxu0 0.0
    %3251 = vmatpush1.msra.mxu0 0.0
    %3252 = vmatprep.subr.mxu0 0.0
    %3253 = vmatpush1.msra.mxu0 0.0
    %3254 = vmatprep.subr.mxu0 0.0
    %3255 = vmatpush1.msra.mxu0 0.0
    %3256 = vmatprep.subr.mxu0 0.0
    %3257 = vmatpush1.msra.mxu0 0.0
    %3258 = vmatprep.subr.mxu0 0.0
    %3259 = vmatpush1.msra.mxu0 0.0
    %3260 = vmatprep.subr.mxu0 0.0
    %3261 = vmatpush1.msra.mxu0 0.0
    %3262 = vmatprep.subr.mxu0 0.0
    %3263 = vmatpush1.msra.mxu0 0.0
    %3264 = vmatprep.subr.mxu0 0.0
    %3265 = vmatpush1.msra.mxu0 0.0
    %3266 = vmatprep.subr.mxu0 0.0
    %3267 = vmatpush1.msra.mxu0 0.0
    %3268 = vmatprep.subr.mxu0 0.0
    %3269 = vmatpush1.msra.mxu0 0.0
    %3270 = vmatprep.subr.mxu0 0.0
    %3271 = vmatpush1.msra.mxu0 0.0
    %3272 = vmatprep.subr.mxu0 0.0
    %3273 = vmatpush1.msra.mxu0 0.0
    %3274 = vmatprep.subr.mxu0 0.0
    %3275 = vmatpush1.msra.mxu0 0.0
    %3276 = vmatprep.subr.mxu0 0.0
    %3277 = vmatpush1.msra.mxu0 0.0
    %3278 = vmatprep.subr.mxu0 0.0
    %3279 = vmatpush1.msra.mxu0 0.0
    %3280 = vmatprep.subr.mxu0 0.0
    %3281 = vmatpush1.msra.mxu0 0.0
    %3282 = vmatprep.subr.mxu0 0.0
    %3283 = vmatpush1.msra.mxu0 0.0
    %3284 = vmatprep.subr.mxu0 0.0
    %3285 = vmatpush1.msra.mxu0 0.0
    %3286 = vmatprep.subr.mxu0 0.0
    %3287 = vmatpush1.msra.mxu0 0.0
    %3288 = vmatprep.subr.mxu0 0.0
    %3289 = vmatpush1.msra.mxu0 0.0
    %3290 = vmatprep.subr.mxu0 0.0
    %3291 = vmatpush1.msra.mxu0 0.0
    %3292 = vmatprep.subr.mxu0 0.0
    %3293 = vmatpush1.msra.mxu0 0.0
    %3294 = vmatprep.subr.mxu0 0.0
    %3295 = vmatpush1.msra.mxu0 0.0
    %3296 = vmatprep.subr.mxu0 0.0
    %3297 = vmatpush1.msra.mxu0 0.0
    %3298 = vmatprep.subr.mxu0 0.0
    %3299 = vmatpush1.msra.mxu0 0.0
    %3300 = vmatprep.subr.mxu0 0.0
    %3301 = vmatpush1.msra.mxu0 0.0
    %3302 = vmatprep.subr.mxu0 0.0
    %3303 = vmatpush1.msra.mxu0 0.0
    %3304 = vmatprep.subr.mxu0 0.0
    %3305 = vmatpush1.msra.mxu0 0.0
    %3306 = vmatprep.subr.mxu0 0.0
    %3307 = vmatpush1.msra.mxu0 0.0
    %3308 = vmatprep.mubr.f32.mxu0 0.0
    %v3309 = vand.u32 %v3161, 4294901760
    %3310 = vmatmul.mubr.f32.gmra.mrb[0].mxu0 %v3309
    %v3311 = vpop.f32.mrb[0].mxu0
    %v3312 = vadd.f32 %v3236, %v3311
    %v3313 = vpop.f32.mrb[0].mxu0
    %3314 = vdwg.mxu0
    %3315 = vmatprep.subr.mxu0 0.0
    %v3316 = vand.u32 %v1763, 4294901760
    %v3317 = vsub.f32 %v1763, %v3316
    %3318 = vmatpush1.msra.mxu0 %v3317
    %3319 = vmatprep.subr.mxu0 0.0
    %3320 = vmatpush1.msra.mxu0 0.0
    %3321 = vmatprep.subr.mxu0 0.0
    %3322 = vmatpush1.msra.mxu0 0.0
    %3323 = vmatprep.subr.mxu0 0.0
    %3324 = vmatpush1.msra.mxu0 0.0
    %3325 = vmatprep.subr.mxu0 0.0
    %3326 = vmatpush1.msra.mxu0 0.0
    %3327 = vmatprep.subr.mxu0 0.0
    %3328 = vmatpush1.msra.mxu0 0.0
    %3329 = vmatprep.subr.mxu0 0.0
    %3330 = vmatpush1.msra.mxu0 0.0
    %3331 = vmatprep.subr.mxu0 0.0
    %3332 = vmatpush1.msra.mxu0 0.0
    %3333 = vmatprep.subr.mxu0 0.0
    %3334 = vmatpush1.msra.mxu0 0.0
    %3335 = vmatprep.subr.mxu0 0.0
    %3336 = vmatpush1.msra.mxu0 0.0
    %3337 = vmatprep.subr.mxu0 0.0
    %3338 = vmatpush1.msra.mxu0 0.0
    %3339 = vmatprep.subr.mxu0 0.0
    %3340 = vmatpush1.msra.mxu0 0.0
    %3341 = vmatprep.subr.mxu0 0.0
    %3342 = vmatpush1.msra.mxu0 0.0
    %3343 = vmatprep.subr.mxu0 0.0
    %3344 = vmatpush1.msra.mxu0 0.0
    %3345 = vmatprep.subr.mxu0 0.0
    %3346 = vmatpush1.msra.mxu0 0.0
    %3347 = vmatprep.subr.mxu0 0.0
    %3348 = vmatpush1.msra.mxu0 0.0
    %3349 = vmatprep.subr.mxu0 0.0
    %3350 = vmatpush1.msra.mxu0 0.0
    %3351 = vmatprep.subr.mxu0 0.0
    %3352 = vmatpush1.msra.mxu0 0.0
    %3353 = vmatprep.subr.mxu0 0.0
    %3354 = vmatpush1.msra.mxu0 0.0
    %3355 = vmatprep.subr.mxu0 0.0
    %3356 = vmatpush1.msra.mxu0 0.0
    %3357 = vmatprep.subr.mxu0 0.0
    %3358 = vmatpush1.msra.mxu0 0.0
    %3359 = vmatprep.subr.mxu0 0.0
    %3360 = vmatpush1.msra.mxu0 0.0
    %3361 = vmatprep.subr.mxu0 0.0
    %3362 = vmatpush1.msra.mxu0 0.0
    %3363 = vmatprep.subr.mxu0 0.0
    %3364 = vmatpush1.msra.mxu0 0.0
    %3365 = vmatprep.subr.mxu0 0.0
    %3366 = vmatpush1.msra.mxu0 0.0
    %3367 = vmatprep.subr.mxu0 0.0
    %3368 = vmatpush1.msra.mxu0 0.0
    %3369 = vmatprep.subr.mxu0 0.0
    %3370 = vmatpush1.msra.mxu0 0.0
    %3371 = vmatprep.subr.mxu0 0.0
    %3372 = vmatpush1.msra.mxu0 0.0
    %3373 = vmatprep.subr.mxu0 0.0
    %3374 = vmatpush1.msra.mxu0 0.0
    %3375 = vmatprep.subr.mxu0 0.0
    %3376 = vmatpush1.msra.mxu0 0.0
    %3377 = vmatprep.subr.mxu0 0.0
    %3378 = vmatpush1.msra.mxu0 0.0
    %3379 = vmatprep.subr.mxu0 0.0
    %3380 = vmatpush1.msra.mxu0 0.0
    %3381 = vmatprep.mubr.f32.mxu0 0.0
    %v3382 = vand.u32 %v3161, 4294901760
    %v3383 = vsub.f32 %v3161, %v3382
    %3384 = vmatmul.mubr.f32.gmra.mrb[0].mxu0 %v3383
    %v3385 = vpop.f32.mrb[0].mxu0
    %v3386 = vadd.f32 %v3312, %v3385
    %v3387 = vpop.f32.mrb[0].mxu0
    %3388 = vdwg.mxu0
    %3389 = vmatprep.subr.mxu0 0.0
    %v3390 = vand.u32 %v1763, 4294901760
    %3391 = vmatpush1.msra.mxu0 %v3390
    %3392 = vmatprep.subr.mxu0 0.0
    %3393 = vmatpush1.msra.mxu0 0.0
    %3394 = vmatprep.subr.mxu0 0.0
    %3395 = vmatpush1.msra.mxu0 0.0
    %3396 = vmatprep.subr.mxu0 0.0
    %3397 = vmatpush1.msra.mxu0 0.0
    %3398 = vmatprep.subr.mxu0 0.0
    %3399 = vmatpush1.msra.mxu0 0.0
    %3400 = vmatprep.subr.mxu0 0.0
    %3401 = vmatpush1.msra.mxu0 0.0
    %3402 = vmatprep.subr.mxu0 0.0
    %3403 = vmatpush1.msra.mxu0 0.0
    %3404 = vmatprep.subr.mxu0 0.0
    %3405 = vmatpush1.msra.mxu0 0.0
    %3406 = vmatprep.subr.mxu0 0.0
    %3407 = vmatpush1.msra.mxu0 0.0
    %3408 = vmatprep.subr.mxu0 0.0
    %3409 = vmatpush1.msra.mxu0 0.0
    %3410 = vmatprep.subr.mxu0 0.0
    %3411 = vmatpush1.msra.mxu0 0.0
    %3412 = vmatprep.subr.mxu0 0.0
    %3413 = vmatpush1.msra.mxu0 0.0
    %3414 = vmatprep.subr.mxu0 0.0
    %3415 = vmatpush1.msra.mxu0 0.0
    %3416 = vmatprep.subr.mxu0 0.0
    %3417 = vmatpush1.msra.mxu0 0.0
    %3418 = vmatprep.subr.mxu0 0.0
    %3419 = vmatpush1.msra.mxu0 0.0
    %3420 = vmatprep.subr.mxu0 0.0
    %3421 = vmatpush1.msra.mxu0 0.0
    %3422 = vmatprep.subr.mxu0 0.0
    %3423 = vmatpush1.msra.mxu0 0.0
    %3424 = vmatprep.subr.mxu0 0.0
    %3425 = vmatpush1.msra.mxu0 0.0
    %3426 = vmatprep.subr.mxu0 0.0
    %3427 = vmatpush1.msra.mxu0 0.0
    %3428 = vmatprep.subr.mxu0 0.0
    %3429 = vmatpush1.msra.mxu0 0.0
    %3430 = vmatprep.subr.mxu0 0.0
    %3431 = vmatpush1.msra.mxu0 0.0
    %3432 = vmatprep.subr.mxu0 0.0
    %3433 = vmatpush1.msra.mxu0 0.0
    %3434 = vmatprep.subr.mxu0 0.0
    %3435 = vmatpush1.msra.mxu0 0.0
    %3436 = vmatprep.subr.mxu0 0.0
    %3437 = vmatpush1.msra.mxu0 0.0
    %3438 = vmatprep.subr.mxu0 0.0
    %3439 = vmatpush1.msra.mxu0 0.0
    %3440 = vmatprep.subr.mxu0 0.0
    %3441 = vmatpush1.msra.mxu0 0.0
    %3442 = vmatprep.subr.mxu0 0.0
    %3443 = vmatpush1.msra.mxu0 0.0
    %3444 = vmatprep.subr.mxu0 0.0
    %3445 = vmatpush1.msra.mxu0 0.0
    %3446 = vmatprep.subr.mxu0 0.0
    %3447 = vmatpush1.msra.mxu0 0.0
    %3448 = vmatprep.subr.mxu0 0.0
    %3449 = vmatpush1.msra.mxu0 0.0
    %3450 = vmatprep.subr.mxu0 0.0
    %3451 = vmatpush1.msra.mxu0 0.0
    %3452 = vmatprep.subr.mxu0 0.0
    %3453 = vmatpush1.msra.mxu0 0.0
    %3454 = vmatprep.mubr.f32.mxu0 0.0
    %v3455 = vand.u32 %v3161, 4294901760
    %v3456 = vsub.f32 %v3161, %v3455
    %v3457 = vand.u32 %v3456, 4294901760
    %3458 = vmatmul.mubr.f32.gmra.mrb[0].mxu0 %v3457
    %v3459 = vpop.f32.mrb[0].mxu0
    %v3460 = vadd.f32 %v3386, %v3459
    %v3461 = vpop.f32.mrb[0].mxu0
    %3462 = vdwg.mxu0
    %3463 = vmatprep.subr.mxu0 0.0
    %v3464 = vand.u32 %v1763, 4294901760
    %v3465 = vsub.f32 %v1763, %v3464
    %v3466 = vand.u32 %v3465, 4294901760
    %3467 = vmatpush1.msra.mxu0 %v3466
    %3468 = vmatprep.subr.mxu0 0.0
    %3469 = vmatpush1.msra.mxu0 0.0
    %3470 = vmatprep.subr.mxu0 0.0
    %3471 = vmatpush1.msra.mxu0 0.0
    %3472 = vmatprep.subr.mxu0 0.0
    %3473 = vmatpush1.msra.mxu0 0.0
    %3474 = vmatprep.subr.mxu0 0.0
    %3475 = vmatpush1.msra.mxu0 0.0
    %3476 = vmatprep.subr.mxu0 0.0
    %3477 = vmatpush1.msra.mxu0 0.0
    %3478 = vmatprep.subr.mxu0 0.0
    %3479 = vmatpush1.msra.mxu0 0.0
    %3480 = vmatprep.subr.mxu0 0.0
    %3481 = vmatpush1.msra.mxu0 0.0
    %3482 = vmatprep.subr.mxu0 0.0
    %3483 = vmatpush1.msra.mxu0 0.0
    %3484 = vmatprep.subr.mxu0 0.0
    %3485 = vmatpush1.msra.mxu0 0.0
    %3486 = vmatprep.subr.mxu0 0.0
    %3487 = vmatpush1.msra.mxu0 0.0
    %3488 = vmatprep.subr.mxu0 0.0
    %3489 = vmatpush1.msra.mxu0 0.0
    %3490 = vmatprep.subr.mxu0 0.0
    %3491 = vmatpush1.msra.mxu0 0.0
    %3492 = vmatprep.subr.mxu0 0.0
    %3493 = vmatpush1.msra.mxu0 0.0
    %3494 = vmatprep.subr.mxu0 0.0
    %3495 = vmatpush1.msra.mxu0 0.0
    %3496 = vmatprep.subr.mxu0 0.0
    %3497 = vmatpush1.msra.mxu0 0.0
    %3498 = vmatprep.subr.mxu0 0.0
    %3499 = vmatpush1.msra.mxu0 0.0
    %3500 = vmatprep.subr.mxu0 0.0
    %3501 = vmatpush1.msra.mxu0 0.0
    %3502 = vmatprep.subr.mxu0 0.0
    %3503 = vmatpush1.msra.mxu0 0.0
    %3504 = vmatprep.subr.mxu0 0.0
    %3505 = vmatpush1.msra.mxu0 0.0
    %3506 = vmatprep.subr.mxu0 0.0
    %3507 = vmatpush1.msra.mxu0 0.0
    %3508 = vmatprep.subr.mxu0 0.0
    %3509 = vmatpush1.msra.mxu0 0.0
    %3510 = vmatprep.subr.mxu0 0.0
    %3511 = vmatpush1.msra.mxu0 0.0
    %3512 = vmatprep.subr.mxu0 0.0
    %3513 = vmatpush1.msra.mxu0 0.0
    %3514 = vmatprep.subr.mxu0 0.0
    %3515 = vmatpush1.msra.mxu0 0.0
    %3516 = vmatprep.subr.mxu0 0.0
    %3517 = vmatpush1.msra.mxu0 0.0
    %3518 = vmatprep.subr.mxu0 0.0
    %3519 = vmatpush1.msra.mxu0 0.0
    %3520 = vmatprep.subr.mxu0 0.0
    %3521 = vmatpush1.msra.mxu0 0.0
    %3522 = vmatprep.subr.mxu0 0.0
    %3523 = vmatpush1.msra.mxu0 0.0
    %3524 = vmatprep.subr.mxu0 0.0
    %3525 = vmatpush1.msra.mxu0 0.0
    %3526 = vmatprep.subr.mxu0 0.0
    %3527 = vmatpush1.msra.mxu0 0.0
    %3528 = vmatprep.subr.mxu0 0.0
    %3529 = vmatpush1.msra.mxu0 0.0
    %3530 = vmatprep.mubr.f32.mxu0 0.0
    %v3531 = vand.u32 %v3161, 4294901760
    %3532 = vmatmul.mubr.f32.gmra.mrb[0].mxu0 %v3531
    %v3533 = vpop.f32.mrb[0].mxu0
    %v3534 = vadd.f32 %v3460, %v3533
    %v3535 = vpop.f32.mrb[0].mxu0
    %3536 = vdwg.mxu0
    %3537 = vmatprep.subr.mxu0 0.0
    %v3538 = vand.u32 %v1763, 4294901760
    %3539 = vmatpush1.msra.mxu0 %v3538
    %3540 = vmatprep.subr.mxu0 0.0
    %3541 = vmatpush1.msra.mxu0 0.0
    %3542 = vmatprep.subr.mxu0 0.0
    %3543 = vmatpush1.msra.mxu0 0.0
    %3544 = vmatprep.subr.mxu0 0.0
    %3545 = vmatpush1.msra.mxu0 0.0
    %3546 = vmatprep.subr.mxu0 0.0
    %3547 = vmatpush1.msra.mxu0 0.0
    %3548 = vmatprep.subr.mxu0 0.0
    %3549 = vmatpush1.msra.mxu0 0.0
    %3550 = vmatprep.subr.mxu0 0.0
    %3551 = vmatpush1.msra.mxu0 0.0
    %3552 = vmatprep.subr.mxu0 0.0
    %3553 = vmatpush1.msra.mxu0 0.0
    %3554 = vmatprep.subr.mxu0 0.0
    %3555 = vmatpush1.msra.mxu0 0.0
    %3556 = vmatprep.subr.mxu0 0.0
    %3557 = vmatpush1.msra.mxu0 0.0
    %3558 = vmatprep.subr.mxu0 0.0
    %3559 = vmatpush1.msra.mxu0 0.0
    %3560 = vmatprep.subr.mxu0 0.0
    %3561 = vmatpush1.msra.mxu0 0.0
    %3562 = vmatprep.subr.mxu0 0.0
    %3563 = vmatpush1.msra.mxu0 0.0
    %3564 = vmatprep.subr.mxu0 0.0
    %3565 = vmatpush1.msra.mxu0 0.0
    %3566 = vmatprep.subr.mxu0 0.0
    %3567 = vmatpush1.msra.mxu0 0.0
    %3568 = vmatprep.subr.mxu0 0.0
    %3569 = vmatpush1.msra.mxu0 0.0
    %3570 = vmatprep.subr.mxu0 0.0
    %3571 = vmatpush1.msra.mxu0 0.0
    %3572 = vmatprep.subr.mxu0 0.0
    %3573 = vmatpush1.msra.mxu0 0.0
    %3574 = vmatprep.subr.mxu0 0.0
    %3575 = vmatpush1.msra.mxu0 0.0
    %3576 = vmatprep.subr.mxu0 0.0
    %3577 = vmatpush1.msra.mxu0 0.0
    %3578 = vmatprep.subr.mxu0 0.0
    %3579 = vmatpush1.msra.mxu0 0.0
    %3580 = vmatprep.subr.mxu0 0.0
    %3581 = vmatpush1.msra.mxu0 0.0
    %3582 = vmatprep.subr.mxu0 0.0
    %3583 = vmatpush1.msra.mxu0 0.0
    %3584 = vmatprep.subr.mxu0 0.0
    %3585 = vmatpush1.msra.mxu0 0.0
    %3586 = vmatprep.subr.mxu0 0.0
    %3587 = vmatpush1.msra.mxu0 0.0
    %3588 = vmatprep.subr.mxu0 0.0
    %3589 = vmatpush1.msra.mxu0 0.0
    %3590 = vmatprep.subr.mxu0 0.0
    %3591 = vmatpush1.msra.mxu0 0.0
    %3592 = vmatprep.subr.mxu0 0.0
    %3593 = vmatpush1.msra.mxu0 0.0
    %3594 = vmatprep.subr.mxu0 0.0
    %3595 = vmatpush1.msra.mxu0 0.0
    %3596 = vmatprep.subr.mxu0 0.0
    %3597 = vmatpush1.msra.mxu0 0.0
    %3598 = vmatprep.subr.mxu0 0.0
    %3599 = vmatpush1.msra.mxu0 0.0
    %3600 = vmatprep.subr.mxu0 0.0
    %3601 = vmatpush1.msra.mxu0 0.0
    %3602 = vmatprep.mubr.f32.mxu0 0.0
    %v3603 = vand.u32 %v3161, 4294901760
    %3604 = vmatmul.mubr.f32.gmra.mrb[0].mxu0 %v3603
    %v3605 = vpop.f32.mrb[0].mxu0
    %v3606 = vadd.f32 %v3534, %v3605
    %v3607 = vpop.f32.mrb[0].mxu0
    %3608 = vdwg.mxu0
    %3609 = vrot.lane.b32.xlu0 %v663, 120
    %v3610 = vpop.permute.xlu0 %3609
    %3611 = vrot.lane.b32.xlu0 %v1210, 120
    %v3612 = vpop.permute.xlu0 %3611
    %v3613 = vsel %vm1784, %v3610, 0
    %v3615 = vsel %vm1784, %v3612, 0
    %3617 = vmatprep.subr.mxu0 0.0
    %v3618 = vand.u32 %v3615, 4294901760
    %3619 = vmatpush1.xpose.msra.mxu0 %v3618
    %3620 = vmatprep.subr.mxu0 0.0
    %3621 = vmatpush1.xpose.msra.mxu0 0.0
    %3622 = vmatprep.subr.mxu0 0.0
    %3623 = vmatpush1.xpose.msra.mxu0 0.0
    %3624 = vmatprep.subr.mxu0 0.0
    %3625 = vmatpush1.xpose.msra.mxu0 0.0
    %3626 = vmatprep.subr.mxu0 0.0
    %3627 = vmatpush1.xpose.msra.mxu0 0.0
    %3628 = vmatprep.subr.mxu0 0.0
    %3629 = vmatpush1.xpose.msra.mxu0 0.0
    %3630 = vmatprep.subr.mxu0 0.0
    %3631 = vmatpush1.xpose.msra.mxu0 0.0
    %3632 = vmatprep.subr.mxu0 0.0
    %3633 = vmatpush1.xpose.msra.mxu0 0.0
    %3634 = vmatprep.subr.mxu0 0.0
    %3635 = vmatpush1.xpose.msra.mxu0 0.0
    %3636 = vmatprep.subr.mxu0 0.0
    %3637 = vmatpush1.xpose.msra.mxu0 0.0
    %3638 = vmatprep.subr.mxu0 0.0
    %3639 = vmatpush1.xpose.msra.mxu0 0.0
    %3640 = vmatprep.subr.mxu0 0.0
    %3641 = vmatpush1.xpose.msra.mxu0 0.0
    %3642 = vmatprep.subr.mxu0 0.0
    %3643 = vmatpush1.xpose.msra.mxu0 0.0
    %3644 = vmatprep.subr.mxu0 0.0
    %3645 = vmatpush1.xpose.msra.mxu0 0.0
    %3646 = vmatprep.subr.mxu0 0.0
    %3647 = vmatpush1.xpose.msra.mxu0 0.0
    %3648 = vmatprep.subr.mxu0 0.0
    %3649 = vmatpush1.xpose.msra.mxu0 0.0
    %3650 = vmatprep.subr.mxu0 0.0
    %3651 = vmatpush1.xpose.msra.mxu0 0.0
    %3652 = vmatprep.subr.mxu0 0.0
    %3653 = vmatpush1.xpose.msra.mxu0 0.0
    %3654 = vmatprep.subr.mxu0 0.0
    %3655 = vmatpush1.xpose.msra.mxu0 0.0
    %3656 = vmatprep.subr.mxu0 0.0
    %3657 = vmatpush1.xpose.msra.mxu0 0.0
    %3658 = vmatprep.subr.mxu0 0.0
    %3659 = vmatpush1.xpose.msra.mxu0 0.0
    %3660 = vmatprep.subr.mxu0 0.0
    %3661 = vmatpush1.xpose.msra.mxu0 0.0
    %3662 = vmatprep.subr.mxu0 0.0
    %3663 = vmatpush1.xpose.msra.mxu0 0.0
    %3664 = vmatprep.subr.mxu0 0.0
    %3665 = vmatpush1.xpose.msra.mxu0 0.0
    %3666 = vmatprep.subr.mxu0 0.0
    %3667 = vmatpush1.xpose.msra.mxu0 0.0
    %3668 = vmatprep.subr.mxu0 0.0
    %3669 = vmatpush1.xpose.msra.mxu0 0.0
    %3670 = vmatprep.subr.mxu0 0.0
    %3671 = vmatpush1.xpose.msra.mxu0 0.0
    %3672 = vmatprep.subr.mxu0 0.0
    %3673 = vmatpush1.xpose.msra.mxu0 0.0
    %3674 = vmatprep.subr.mxu0 0.0
    %3675 = vmatpush1.xpose.msra.mxu0 0.0
    %3676 = vmatprep.subr.mxu0 0.0
    %3677 = vmatpush1.xpose.msra.mxu0 0.0
    %3678 = vmatprep.subr.mxu0 0.0
    %3679 = vmatpush1.xpose.msra.mxu0 0.0
    %3680 = vmatprep.subr.mxu0 0.0
    %3681 = vmatpush1.xpose.msra.mxu0 0.0
    %3682 = vmatprep.mubr.f32.mxu0 0.0
    %v3683 = vand.u32 %v3613, 4294901760
    %v3684 = vsub.f32 %v3613, %v3683
    %v3685 = vand.u32 %v3684, 4294901760
    %v3686 = vsub.f32 %v3684, %v3685
    %v3687 = vand.u32 %v3686, 4294901760
    %3688 = vmatmul.mubr.f32.gmra.mrb[0].mxu0 %v3687
    %v3689 = vpop.f32.mrb[0].mxu0
    %v3690 = vadd.f32 %v1773, %v3689
    %v3691 = vpop.f32.mrb[0].mxu0
    %3692 = vdwg.mxu0
    %3693 = vmatprep.subr.mxu0 0.0
    %v3694 = vand.u32 %v3615, 4294901760
    %v3695 = vsub.f32 %v3615, %v3694
    %v3696 = vand.u32 %v3695, 4294901760
    %v3697 = vsub.f32 %v3695, %v3696
    %v3698 = vand.u32 %v3697, 4294901760
    %3699 = vmatpush1.xpose.msra.mxu0 %v3698
    %3700 = vmatprep.subr.mxu0 0.0
    %3701 = vmatpush1.xpose.msra.mxu0 0.0
    %3702 = vmatprep.subr.mxu0 0.0
    %3703 = vmatpush1.xpose.msra.mxu0 0.0
    %3704 = vmatprep.subr.mxu0 0.0
    %3705 = vmatpush1.xpose.msra.mxu0 0.0
    %3706 = vmatprep.subr.mxu0 0.0
    %3707 = vmatpush1.xpose.msra.mxu0 0.0
    %3708 = vmatprep.subr.mxu0 0.0
    %3709 = vmatpush1.xpose.msra.mxu0 0.0
    %3710 = vmatprep.subr.mxu0 0.0
    %3711 = vmatpush1.xpose.msra.mxu0 0.0
    %3712 = vmatprep.subr.mxu0 0.0
    %3713 = vmatpush1.xpose.msra.mxu0 0.0
    %3714 = vmatprep.subr.mxu0 0.0
    %3715 = vmatpush1.xpose.msra.mxu0 0.0
    %3716 = vmatprep.subr.mxu0 0.0
    %3717 = vmatpush1.xpose.msra.mxu0 0.0
    %3718 = vmatprep.subr.mxu0 0.0
    %3719 = vmatpush1.xpose.msra.mxu0 0.0
    %3720 = vmatprep.subr.mxu0 0.0
    %3721 = vmatpush1.xpose.msra.mxu0 0.0
    %3722 = vmatprep.subr.mxu0 0.0
    %3723 = vmatpush1.xpose.msra.mxu0 0.0
    %3724 = vmatprep.subr.mxu0 0.0
    %3725 = vmatpush1.xpose.msra.mxu0 0.0
    %3726 = vmatprep.subr.mxu0 0.0
    %3727 = vmatpush1.xpose.msra.mxu0 0.0
    %3728 = vmatprep.subr.mxu0 0.0
    %3729 = vmatpush1.xpose.msra.mxu0 0.0
    %3730 = vmatprep.subr.mxu0 0.0
    %3731 = vmatpush1.xpose.msra.mxu0 0.0
    %3732 = vmatprep.subr.mxu0 0.0
    %3733 = vmatpush1.xpose.msra.mxu0 0.0
    %3734 = vmatprep.subr.mxu0 0.0
    %3735 = vmatpush1.xpose.msra.mxu0 0.0
    %3736 = vmatprep.subr.mxu0 0.0
    %3737 = vmatpush1.xpose.msra.mxu0 0.0
    %3738 = vmatprep.subr.mxu0 0.0
    %3739 = vmatpush1.xpose.msra.mxu0 0.0
    %3740 = vmatprep.subr.mxu0 0.0
    %3741 = vmatpush1.xpose.msra.mxu0 0.0
    %3742 = vmatprep.subr.mxu0 0.0
    %3743 = vmatpush1.xpose.msra.mxu0 0.0
    %3744 = vmatprep.subr.mxu0 0.0
    %3745 = vmatpush1.xpose.msra.mxu0 0.0
    %3746 = vmatprep.subr.mxu0 0.0
    %3747 = vmatpush1.xpose.msra.mxu0 0.0
    %3748 = vmatprep.subr.mxu0 0.0
    %3749 = vmatpush1.xpose.msra.mxu0 0.0
    %3750 = vmatprep.subr.mxu0 0.0
    %3751 = vmatpush1.xpose.msra.mxu0 0.0
    %3752 = vmatprep.subr.mxu0 0.0
    %3753 = vmatpush1.xpose.msra.mxu0 0.0
    %3754 = vmatprep.subr.mxu0 0.0
    %3755 = vmatpush1.xpose.msra.mxu0 0.0
    %3756 = vmatprep.subr.mxu0 0.0
    %3757 = vmatpush1.xpose.msra.mxu0 0.0
    %3758 = vmatprep.subr.mxu0 0.0
    %3759 = vmatpush1.xpose.msra.mxu0 0.0
    %3760 = vmatprep.subr.mxu0 0.0
    %3761 = vmatpush1.xpose.msra.mxu0 0.0
    %3762 = vmatprep.mubr.f32.mxu0 0.0
    %v3763 = vand.u32 %v3613, 4294901760
    %3764 = vmatmul.mubr.f32.gmra.mrb[0].mxu0 %v3763
    %v3765 = vpop.f32.mrb[0].mxu0
    %v3766 = vadd.f32 %v3690, %v3765
    %v3767 = vpop.f32.mrb[0].mxu0
    %3768 = vdwg.mxu0
    %3769 = vmatprep.subr.mxu0 0.0
    %v3770 = vand.u32 %v3615, 4294901760
    %v3771 = vsub.f32 %v3615, %v3770
    %3772 = vmatpush1.xpose.msra.mxu0 %v3771
    %3773 = vmatprep.subr.mxu0 0.0
    %3774 = vmatpush1.xpose.msra.mxu0 0.0
    %3775 = vmatprep.subr.mxu0 0.0
    %3776 = vmatpush1.xpose.msra.mxu0 0.0
    %3777 = vmatprep.subr.mxu0 0.0
    %3778 = vmatpush1.xpose.msra.mxu0 0.0
    %3779 = vmatprep.subr.mxu0 0.0
    %3780 = vmatpush1.xpose.msra.mxu0 0.0
    %3781 = vmatprep.subr.mxu0 0.0
    %3782 = vmatpush1.xpose.msra.mxu0 0.0
    %3783 = vmatprep.subr.mxu0 0.0
    %3784 = vmatpush1.xpose.msra.mxu0 0.0
    %3785 = vmatprep.subr.mxu0 0.0
    %3786 = vmatpush1.xpose.msra.mxu0 0.0
    %3787 = vmatprep.subr.mxu0 0.0
    %3788 = vmatpush1.xpose.msra.mxu0 0.0
    %3789 = vmatprep.subr.mxu0 0.0
    %3790 = vmatpush1.xpose.msra.mxu0 0.0
    %3791 = vmatprep.subr.mxu0 0.0
    %3792 = vmatpush1.xpose.msra.mxu0 0.0
    %3793 = vmatprep.subr.mxu0 0.0
    %3794 = vmatpush1.xpose.msra.mxu0 0.0
    %3795 = vmatprep.subr.mxu0 0.0
    %3796 = vmatpush1.xpose.msra.mxu0 0.0
    %3797 = vmatprep.subr.mxu0 0.0
    %3798 = vmatpush1.xpose.msra.mxu0 0.0
    %3799 = vmatprep.subr.mxu0 0.0
    %3800 = vmatpush1.xpose.msra.mxu0 0.0
    %3801 = vmatprep.subr.mxu0 0.0
    %3802 = vmatpush1.xpose.msra.mxu0 0.0
    %3803 = vmatprep.subr.mxu0 0.0
    %3804 = vmatpush1.xpose.msra.mxu0 0.0
    %3805 = vmatprep.subr.mxu0 0.0
    %3806 = vmatpush1.xpose.msra.mxu0 0.0
    %3807 = vmatprep.subr.mxu0 0.0
    %3808 = vmatpush1.xpose.msra.mxu0 0.0
    %3809 = vmatprep.subr.mxu0 0.0
    %3810 = vmatpush1.xpose.msra.mxu0 0.0
    %3811 = vmatprep.subr.mxu0 0.0
    %3812 = vmatpush1.xpose.msra.mxu0 0.0
    %3813 = vmatprep.subr.mxu0 0.0
    %3814 = vmatpush1.xpose.msra.mxu0 0.0
    %3815 = vmatprep.subr.mxu0 0.0
    %3816 = vmatpush1.xpose.msra.mxu0 0.0
    %3817 = vmatprep.subr.mxu0 0.0
    %3818 = vmatpush1.xpose.msra.mxu0 0.0
    %3819 = vmatprep.subr.mxu0 0.0
    %3820 = vmatpush1.xpose.msra.mxu0 0.0
    %3821 = vmatprep.subr.mxu0 0.0
    %3822 = vmatpush1.xpose.msra.mxu0 0.0
    %3823 = vmatprep.subr.mxu0 0.0
    %3824 = vmatpush1.xpose.msra.mxu0 0.0
    %3825 = vmatprep.subr.mxu0 0.0
    %3826 = vmatpush1.xpose.msra.mxu0 0.0
    %3827 = vmatprep.subr.mxu0 0.0
    %3828 = vmatpush1.xpose.msra.mxu0 0.0
    %3829 = vmatprep.subr.mxu0 0.0
    %3830 = vmatpush1.xpose.msra.mxu0 0.0
    %3831 = vmatprep.subr.mxu0 0.0
    %3832 = vmatpush1.xpose.msra.mxu0 0.0
    %3833 = vmatprep.subr.mxu0 0.0
    %3834 = vmatpush1.xpose.msra.mxu0 0.0
    %3835 = vmatprep.mubr.f32.mxu0 0.0
    %v3836 = vand.u32 %v3613, 4294901760
    %v3837 = vsub.f32 %v3613, %v3836
    %3838 = vmatmul.mubr.f32.gmra.mrb[0].mxu0 %v3837
    %v3839 = vpop.f32.mrb[0].mxu0
    %v3840 = vadd.f32 %v3766, %v3839
    %v3841 = vpop.f32.mrb[0].mxu0
    %3842 = vdwg.mxu0
    %3843 = vmatprep.subr.mxu0 0.0
    %v3844 = vand.u32 %v3615, 4294901760
    %3845 = vmatpush1.xpose.msra.mxu0 %v3844
    %3846 = vmatprep.subr.mxu0 0.0
    %3847 = vmatpush1.xpose.msra.mxu0 0.0
    %3848 = vmatprep.subr.mxu0 0.0
    %3849 = vmatpush1.xpose.msra.mxu0 0.0
    %3850 = vmatprep.subr.mxu0 0.0
    %3851 = vmatpush1.xpose.msra.mxu0 0.0
    %3852 = vmatprep.subr.mxu0 0.0
    %3853 = vmatpush1.xpose.msra.mxu0 0.0
    %3854 = vmatprep.subr.mxu0 0.0
    %3855 = vmatpush1.xpose.msra.mxu0 0.0
    %3856 = vmatprep.subr.mxu0 0.0
    %3857 = vmatpush1.xpose.msra.mxu0 0.0
    %3858 = vmatprep.subr.mxu0 0.0
    %3859 = vmatpush1.xpose.msra.mxu0 0.0
    %3860 = vmatprep.subr.mxu0 0.0
    %3861 = vmatpush1.xpose.msra.mxu0 0.0
    %3862 = vmatprep.subr.mxu0 0.0
    %3863 = vmatpush1.xpose.msra.mxu0 0.0
    %3864 = vmatprep.subr.mxu0 0.0
    %3865 = vmatpush1.xpose.msra.mxu0 0.0
    %3866 = vmatprep.subr.mxu0 0.0
    %3867 = vmatpush1.xpose.msra.mxu0 0.0
    %3868 = vmatprep.subr.mxu0 0.0
    %3869 = vmatpush1.xpose.msra.mxu0 0.0
    %3870 = vmatprep.subr.mxu0 0.0
    %3871 = vmatpush1.xpose.msra.mxu0 0.0
    %3872 = vmatprep.subr.mxu0 0.0
    %3873 = vmatpush1.xpose.msra.mxu0 0.0
    %3874 = vmatprep.subr.mxu0 0.0
    %3875 = vmatpush1.xpose.msra.mxu0 0.0
    %3876 = vmatprep.subr.mxu0 0.0
    %3877 = vmatpush1.xpose.msra.mxu0 0.0
    %3878 = vmatprep.subr.mxu0 0.0
    %3879 = vmatpush1.xpose.msra.mxu0 0.0
    %3880 = vmatprep.subr.mxu0 0.0
    %3881 = vmatpush1.xpose.msra.mxu0 0.0
    %3882 = vmatprep.subr.mxu0 0.0
    %3883 = vmatpush1.xpose.msra.mxu0 0.0
    %3884 = vmatprep.subr.mxu0 0.0
    %3885 = vmatpush1.xpose.msra.mxu0 0.0
    %3886 = vmatprep.subr.mxu0 0.0
    %3887 = vmatpush1.xpose.msra.mxu0 0.0
    %3888 = vmatprep.subr.mxu0 0.0
    %3889 = vmatpush1.xpose.msra.mxu0 0.0
    %3890 = vmatprep.subr.mxu0 0.0
    %3891 = vmatpush1.xpose.msra.mxu0 0.0
    %3892 = vmatprep.subr.mxu0 0.0
    %3893 = vmatpush1.xpose.msra.mxu0 0.0
    %3894 = vmatprep.subr.mxu0 0.0
    %3895 = vmatpush1.xpose.msra.mxu0 0.0
    %3896 = vmatprep.subr.mxu0 0.0
    %3897 = vmatpush1.xpose.msra.mxu0 0.0
    %3898 = vmatprep.subr.mxu0 0.0
    %3899 = vmatpush1.xpose.msra.mxu0 0.0
    %3900 = vmatprep.subr.mxu0 0.0
    %3901 = vmatpush1.xpose.msra.mxu0 0.0
    %3902 = vmatprep.subr.mxu0 0.0
    %3903 = vmatpush1.xpose.msra.mxu0 0.0
    %3904 = vmatprep.subr.mxu0 0.0
    %3905 = vmatpush1.xpose.msra.mxu0 0.0
    %3906 = vmatprep.subr.mxu0 0.0
    %3907 = vmatpush1.xpose.msra.mxu0 0.0
    %3908 = vmatprep.mubr.f32.mxu0 0.0
    %v3909 = vand.u32 %v3613, 4294901760
    %v3910 = vsub.f32 %v3613, %v3909
    %v3911 = vand.u32 %v3910, 4294901760
    %3912 = vmatmul.mubr.f32.gmra.mrb[0].mxu0 %v3911
    %v3913 = vpop.f32.mrb[0].mxu0
    %v3914 = vadd.f32 %v3840, %v3913
    %v3915 = vpop.f32.mrb[0].mxu0
    %3916 = vdwg.mxu0
    %3917 = vmatprep.subr.mxu0 0.0
    %v3918 = vand.u32 %v3615, 4294901760
    %v3919 = vsub.f32 %v3615, %v3918
    %v3920 = vand.u32 %v3919, 4294901760
    %3921 = vmatpush1.xpose.msra.mxu0 %v3920
    %3922 = vmatprep.subr.mxu0 0.0
    %3923 = vmatpush1.xpose.msra.mxu0 0.0
    %3924 = vmatprep.subr.mxu0 0.0
    %3925 = vmatpush1.xpose.msra.mxu0 0.0
    %3926 = vmatprep.subr.mxu0 0.0
    %3927 = vmatpush1.xpose.msra.mxu0 0.0
    %3928 = vmatprep.subr.mxu0 0.0
    %3929 = vmatpush1.xpose.msra.mxu0 0.0
    %3930 = vmatprep.subr.mxu0 0.0
    %3931 = vmatpush1.xpose.msra.mxu0 0.0
    %3932 = vmatprep.subr.mxu0 0.0
    %3933 = vmatpush1.xpose.msra.mxu0 0.0
    %3934 = vmatprep.subr.mxu0 0.0
    %3935 = vmatpush1.xpose.msra.mxu0 0.0
    %3936 = vmatprep.subr.mxu0 0.0
    %3937 = vmatpush1.xpose.msra.mxu0 0.0
    %3938 = vmatprep.subr.mxu0 0.0
    %3939 = vmatpush1.xpose.msra.mxu0 0.0
    %3940 = vmatprep.subr.mxu0 0.0
    %3941 = vmatpush1.xpose.msra.mxu0 0.0
    %3942 = vmatprep.subr.mxu0 0.0
    %3943 = vmatpush1.xpose.msra.mxu0 0.0
    %3944 = vmatprep.subr.mxu0 0.0
    %3945 = vmatpush1.xpose.msra.mxu0 0.0
    %3946 = vmatprep.subr.mxu0 0.0
    %3947 = vmatpush1.xpose.msra.mxu0 0.0
    %3948 = vmatprep.subr.mxu0 0.0
    %3949 = vmatpush1.xpose.msra.mxu0 0.0
    %3950 = vmatprep.subr.mxu0 0.0
    %3951 = vmatpush1.xpose.msra.mxu0 0.0
    %3952 = vmatprep.subr.mxu0 0.0
    %3953 = vmatpush1.xpose.msra.mxu0 0.0
    %3954 = vmatprep.subr.mxu0 0.0
    %3955 = vmatpush1.xpose.msra.mxu0 0.0
    %3956 = vmatprep.subr.mxu0 0.0
    %3957 = vmatpush1.xpose.msra.mxu0 0.0
    %3958 = vmatprep.subr.mxu0 0.0
    %3959 = vmatpush1.xpose.msra.mxu0 0.0
    %3960 = vmatprep.subr.mxu0 0.0
    %3961 = vmatpush1.xpose.msra.mxu0 0.0
    %3962 = vmatprep.subr.mxu0 0.0
    %3963 = vmatpush1.xpose.msra.mxu0 0.0
    %3964 = vmatprep.subr.mxu0 0.0
    %3965 = vmatpush1.xpose.msra.mxu0 0.0
    %3966 = vmatprep.subr.mxu0 0.0
    %3967 = vmatpush1.xpose.msra.mxu0 0.0
    %3968 = vmatprep.subr.mxu0 0.0
    %3969 = vmatpush1.xpose.msra.mxu0 0.0
    %3970 = vmatprep.subr.mxu0 0.0
    %3971 = vmatpush1.xpose.msra.mxu0 0.0
    %3972 = vmatprep.subr.mxu0 0.0
    %3973 = vmatpush1.xpose.msra.mxu0 0.0
    %3974 = vmatprep.subr.mxu0 0.0
    %3975 = vmatpush1.xpose.msra.mxu0 0.0
    %3976 = vmatprep.subr.mxu0 0.0
    %3977 = vmatpush1.xpose.msra.mxu0 0.0
    %3978 = vmatprep.subr.mxu0 0.0
    %3979 = vmatpush1.xpose.msra.mxu0 0.0
    %3980 = vmatprep.subr.mxu0 0.0
    %3981 = vmatpush1.xpose.msra.mxu0 0.0
    %3982 = vmatprep.subr.mxu0 0.0
    %3983 = vmatpush1.xpose.msra.mxu0 0.0
    %3984 = vmatprep.mubr.f32.mxu0 0.0
    %v3985 = vand.u32 %v3613, 4294901760
    %3986 = vmatmul.mubr.f32.gmra.mrb[0].mxu0 %v3985
    %v3987 = vpop.f32.mrb[0].mxu0
    %v3988 = vadd.f32 %v3914, %v3987
    %v3989 = vpop.f32.mrb[0].mxu0
    %3990 = vdwg.mxu0
    %3991 = vmatprep.subr.mxu0 0.0
    %v3992 = vand.u32 %v3615, 4294901760
    %3993 = vmatpush1.xpose.msra.mxu0 %v3992
    %3994 = vmatprep.subr.mxu0 0.0
    %3995 = vmatpush1.xpose.msra.mxu0 0.0
    %3996 = vmatprep.subr.mxu0 0.0
    %3997 = vmatpush1.xpose.msra.mxu0 0.0
    %3998 = vmatprep.subr.mxu0 0.0
    %3999 = vmatpush1.xpose.msra.mxu0 0.0
    %4000 = vmatprep.subr.mxu0 0.0
    %4001 = vmatpush1.xpose.msra.mxu0 0.0
    %4002 = vmatprep.subr.mxu0 0.0
    %4003 = vmatpush1.xpose.msra.mxu0 0.0
    %4004 = vmatprep.subr.mxu0 0.0
    %4005 = vmatpush1.xpose.msra.mxu0 0.0
    %4006 = vmatprep.subr.mxu0 0.0
    %4007 = vmatpush1.xpose.msra.mxu0 0.0
    %4008 = vmatprep.subr.mxu0 0.0
    %4009 = vmatpush1.xpose.msra.mxu0 0.0
    %4010 = vmatprep.subr.mxu0 0.0
    %4011 = vmatpush1.xpose.msra.mxu0 0.0
    %4012 = vmatprep.subr.mxu0 0.0
    %4013 = vmatpush1.xpose.msra.mxu0 0.0
    %4014 = vmatprep.subr.mxu0 0.0
    %4015 = vmatpush1.xpose.msra.mxu0 0.0
    %4016 = vmatprep.subr.mxu0 0.0
    %4017 = vmatpush1.xpose.msra.mxu0 0.0
    %4018 = vmatprep.subr.mxu0 0.0
    %4019 = vmatpush1.xpose.msra.mxu0 0.0
    %4020 = vmatprep.subr.mxu0 0.0
    %4021 = vmatpush1.xpose.msra.mxu0 0.0
    %4022 = vmatprep.subr.mxu0 0.0
    %4023 = vmatpush1.xpose.msra.mxu0 0.0
    %4024 = vmatprep.subr.mxu0 0.0
    %4025 = vmatpush1.xpose.msra.mxu0 0.0
    %4026 = vmatprep.subr.mxu0 0.0
    %4027 = vmatpush1.xpose.msra.mxu0 0.0
    %4028 = vmatprep.subr.mxu0 0.0
    %4029 = vmatpush1.xpose.msra.mxu0 0.0
    %4030 = vmatprep.subr.mxu0 0.0
    %4031 = vmatpush1.xpose.msra.mxu0 0.0
    %4032 = vmatprep.subr.mxu0 0.0
    %4033 = vmatpush1.xpose.msra.mxu0 0.0
    %4034 = vmatprep.subr.mxu0 0.0
    %4035 = vmatpush1.xpose.msra.mxu0 0.0
    %4036 = vmatprep.subr.mxu0 0.0
    %4037 = vmatpush1.xpose.msra.mxu0 0.0
    %4038 = vmatprep.subr.mxu0 0.0
    %4039 = vmatpush1.xpose.msra.mxu0 0.0
    %4040 = vmatprep.subr.mxu0 0.0
    %4041 = vmatpush1.xpose.msra.mxu0 0.0
    %4042 = vmatprep.subr.mxu0 0.0
    %4043 = vmatpush1.xpose.msra.mxu0 0.0
    %4044 = vmatprep.subr.mxu0 0.0
    %4045 = vmatpush1.xpose.msra.mxu0 0.0
    %4046 = vmatprep.subr.mxu0 0.0
    %4047 = vmatpush1.xpose.msra.mxu0 0.0
    %4048 = vmatprep.subr.mxu0 0.0
    %4049 = vmatpush1.xpose.msra.mxu0 0.0
    %4050 = vmatprep.subr.mxu0 0.0
    %4051 = vmatpush1.xpose.msra.mxu0 0.0
    %4052 = vmatprep.subr.mxu0 0.0
    %4053 = vmatpush1.xpose.msra.mxu0 0.0
    %4054 = vmatprep.subr.mxu0 0.0
    %4055 = vmatpush1.xpose.msra.mxu0 0.0
    %4056 = vmatprep.mubr.f32.mxu0 0.0
    %v4057 = vand.u32 %v3613, 4294901760
    %4058 = vmatmul.mubr.f32.gmra.mrb[0].mxu0 %v4057
    %v4059 = vpop.f32.mrb[0].mxu0
    %v4060 = vadd.f32 %v3988, %v4059
    %v4061 = vpop.f32.mrb[0].mxu0
    %4062 = vdwg.mxu0
    %4063 = vrot.lane.b32.xlu0 %v669, 120
    %v4064 = vpop.permute.xlu0 %4063
    %4065 = vrot.lane.b32.xlu0 %v1216, 120
    %v4066 = vpop.permute.xlu0 %4065
    %v4067 = vsel %vm1784, %v4064, 0
    %v4069 = vsel %vm1784, %v4066, 0
    %4071 = vmatprep.subr.mxu0 0.0
    %v4072 = vand.u32 %v4069, 4294901760
    %4073 = vmatpush1.xpose.msra.mxu0 %v4072
    %4074 = vmatprep.subr.mxu0 0.0
    %4075 = vmatpush1.xpose.msra.mxu0 0.0
    %4076 = vmatprep.subr.mxu0 0.0
    %4077 = vmatpush1.xpose.msra.mxu0 0.0
    %4078 = vmatprep.subr.mxu0 0.0
    %4079 = vmatpush1.xpose.msra.mxu0 0.0
    %4080 = vmatprep.subr.mxu0 0.0
    %4081 = vmatpush1.xpose.msra.mxu0 0.0
    %4082 = vmatprep.subr.mxu0 0.0
    %4083 = vmatpush1.xpose.msra.mxu0 0.0
    %4084 = vmatprep.subr.mxu0 0.0
    %4085 = vmatpush1.xpose.msra.mxu0 0.0
    %4086 = vmatprep.subr.mxu0 0.0
    %4087 = vmatpush1.xpose.msra.mxu0 0.0
    %4088 = vmatprep.subr.mxu0 0.0
    %4089 = vmatpush1.xpose.msra.mxu0 0.0
    %4090 = vmatprep.subr.mxu0 0.0
    %4091 = vmatpush1.xpose.msra.mxu0 0.0
    %4092 = vmatprep.subr.mxu0 0.0
    %4093 = vmatpush1.xpose.msra.mxu0 0.0
    %4094 = vmatprep.subr.mxu0 0.0
    %4095 = vmatpush1.xpose.msra.mxu0 0.0
    %4096 = vmatprep.subr.mxu0 0.0
    %4097 = vmatpush1.xpose.msra.mxu0 0.0
    %4098 = vmatprep.subr.mxu0 0.0
    %4099 = vmatpush1.xpose.msra.mxu0 0.0
    %4100 = vmatprep.subr.mxu0 0.0
    %4101 = vmatpush1.xpose.msra.mxu0 0.0
    %4102 = vmatprep.subr.mxu0 0.0
    %4103 = vmatpush1.xpose.msra.mxu0 0.0
    %4104 = vmatprep.subr.mxu0 0.0
    %4105 = vmatpush1.xpose.msra.mxu0 0.0
    %4106 = vmatprep.subr.mxu0 0.0
    %4107 = vmatpush1.xpose.msra.mxu0 0.0
    %4108 = vmatprep.subr.mxu0 0.0
    %4109 = vmatpush1.xpose.msra.mxu0 0.0
    %4110 = vmatprep.subr.mxu0 0.0
    %4111 = vmatpush1.xpose.msra.mxu0 0.0
    %4112 = vmatprep.subr.mxu0 0.0
    %4113 = vmatpush1.xpose.msra.mxu0 0.0
    %4114 = vmatprep.subr.mxu0 0.0
    %4115 = vmatpush1.xpose.msra.mxu0 0.0
    %4116 = vmatprep.subr.mxu0 0.0
    %4117 = vmatpush1.xpose.msra.mxu0 0.0
    %4118 = vmatprep.subr.mxu0 0.0
    %4119 = vmatpush1.xpose.msra.mxu0 0.0
    %4120 = vmatprep.subr.mxu0 0.0
    %4121 = vmatpush1.xpose.msra.mxu0 0.0
    %4122 = vmatprep.subr.mxu0 0.0
    %4123 = vmatpush1.xpose.msra.mxu0 0.0
    %4124 = vmatprep.subr.mxu0 0.0
    %4125 = vmatpush1.xpose.msra.mxu0 0.0
    %4126 = vmatprep.subr.mxu0 0.0
    %4127 = vmatpush1.xpose.msra.mxu0 0.0
    %4128 = vmatprep.subr.mxu0 0.0
    %4129 = vmatpush1.xpose.msra.mxu0 0.0
    %4130 = vmatprep.subr.mxu0 0.0
    %4131 = vmatpush1.xpose.msra.mxu0 0.0
    %4132 = vmatprep.subr.mxu0 0.0
    %4133 = vmatpush1.xpose.msra.mxu0 0.0
    %4134 = vmatprep.subr.mxu0 0.0
    %4135 = vmatpush1.xpose.msra.mxu0 0.0
    %4136 = vmatprep.mubr.f32.mxu0 0.0
    %v4137 = vand.u32 %v4067, 4294901760
    %v4138 = vsub.f32 %v4067, %v4137
    %v4139 = vand.u32 %v4138, 4294901760
    %v4140 = vsub.f32 %v4138, %v4139
    %v4141 = vand.u32 %v4140, 4294901760
    %4142 = vmatmul.mubr.f32.gmra.mrb[0].mxu0 %v4141
    %v4143 = vpop.f32.mrb[0].mxu0
    %v4144 = vadd.f32 %v1777, %v4143
    %v4145 = vpop.f32.mrb[0].mxu0
    %4146 = vdwg.mxu0
    %4147 = vmatprep.subr.mxu0 0.0
    %v4148 = vand.u32 %v4069, 4294901760
    %v4149 = vsub.f32 %v4069, %v4148
    %v4150 = vand.u32 %v4149, 4294901760
    %v4151 = vsub.f32 %v4149, %v4150
    %v4152 = vand.u32 %v4151, 4294901760
    %4153 = vmatpush1.xpose.msra.mxu0 %v4152
    %4154 = vmatprep.subr.mxu0 0.0
    %4155 = vmatpush1.xpose.msra.mxu0 0.0
    %4156 = vmatprep.subr.mxu0 0.0
    %4157 = vmatpush1.xpose.msra.mxu0 0.0
    %4158 = vmatprep.subr.mxu0 0.0
    %4159 = vmatpush1.xpose.msra.mxu0 0.0
    %4160 = vmatprep.subr.mxu0 0.0
    %4161 = vmatpush1.xpose.msra.mxu0 0.0
    %4162 = vmatprep.subr.mxu0 0.0
    %4163 = vmatpush1.xpose.msra.mxu0 0.0
    %4164 = vmatprep.subr.mxu0 0.0
    %4165 = vmatpush1.xpose.msra.mxu0 0.0
    %4166 = vmatprep.subr.mxu0 0.0
    %4167 = vmatpush1.xpose.msra.mxu0 0.0
    %4168 = vmatprep.subr.mxu0 0.0
    %4169 = vmatpush1.xpose.msra.mxu0 0.0
    %4170 = vmatprep.subr.mxu0 0.0
    %4171 = vmatpush1.xpose.msra.mxu0 0.0
    %4172 = vmatprep.subr.mxu0 0.0
    %4173 = vmatpush1.xpose.msra.mxu0 0.0
    %4174 = vmatprep.subr.mxu0 0.0
    %4175 = vmatpush1.xpose.msra.mxu0 0.0
    %4176 = vmatprep.subr.mxu0 0.0
    %4177 = vmatpush1.xpose.msra.mxu0 0.0
    %4178 = vmatprep.subr.mxu0 0.0
    %4179 = vmatpush1.xpose.msra.mxu0 0.0
    %4180 = vmatprep.subr.mxu0 0.0
    %4181 = vmatpush1.xpose.msra.mxu0 0.0
    %4182 = vmatprep.subr.mxu0 0.0
    %4183 = vmatpush1.xpose.msra.mxu0 0.0
    %4184 = vmatprep.subr.mxu0 0.0
    %4185 = vmatpush1.xpose.msra.mxu0 0.0
    %4186 = vmatprep.subr.mxu0 0.0
    %4187 = vmatpush1.xpose.msra.mxu0 0.0
    %4188 = vmatprep.subr.mxu0 0.0
    %4189 = vmatpush1.xpose.msra.mxu0 0.0
    %4190 = vmatprep.subr.mxu0 0.0
    %4191 = vmatpush1.xpose.msra.mxu0 0.0
    %4192 = vmatprep.subr.mxu0 0.0
    %4193 = vmatpush1.xpose.msra.mxu0 0.0
    %4194 = vmatprep.subr.mxu0 0.0
    %4195 = vmatpush1.xpose.msra.mxu0 0.0
    %4196 = vmatprep.subr.mxu0 0.0
    %4197 = vmatpush1.xpose.msra.mxu0 0.0
    %4198 = vmatprep.subr.mxu0 0.0
    %4199 = vmatpush1.xpose.msra.mxu0 0.0
    %4200 = vmatprep.subr.mxu0 0.0
    %4201 = vmatpush1.xpose.msra.mxu0 0.0
    %4202 = vmatprep.subr.mxu0 0.0
    %4203 = vmatpush1.xpose.msra.mxu0 0.0
    %4204 = vmatprep.subr.mxu0 0.0
    %4205 = vmatpush1.xpose.msra.mxu0 0.0
    %4206 = vmatprep.subr.mxu0 0.0
    %4207 = vmatpush1.xpose.msra.mxu0 0.0
    %4208 = vmatprep.subr.mxu0 0.0
    %4209 = vmatpush1.xpose.msra.mxu0 0.0
    %4210 = vmatprep.subr.mxu0 0.0
    %4211 = vmatpush1.xpose.msra.mxu0 0.0
    %4212 = vmatprep.subr.mxu0 0.0
    %4213 = vmatpush1.xpose.msra.mxu0 0.0
    %4214 = vmatprep.subr.mxu0 0.0
    %4215 = vmatpush1.xpose.msra.mxu0 0.0
    %4216 = vmatprep.mubr.f32.mxu0 0.0
    %v4217 = vand.u32 %v4067, 4294901760
    %4218 = vmatmul.mubr.f32.gmra.mrb[0].mxu0 %v4217
    %v4219 = vpop.f32.mrb[0].mxu0
    %v4220 = vadd.f32 %v4144, %v4219
    %v4221 = vpop.f32.mrb[0].mxu0
    %4222 = vdwg.mxu0
    %4223 = vmatprep.subr.mxu0 0.0
    %v4224 = vand.u32 %v4069, 4294901760
    %v4225 = vsub.f32 %v4069, %v4224
    %4226 = vmatpush1.xpose.msra.mxu0 %v4225
    %4227 = vmatprep.subr.mxu0 0.0
    %4228 = vmatpush1.xpose.msra.mxu0 0.0
    %4229 = vmatprep.subr.mxu0 0.0
    %4230 = vmatpush1.xpose.msra.mxu0 0.0
    %4231 = vmatprep.subr.mxu0 0.0
    %4232 = vmatpush1.xpose.msra.mxu0 0.0
    %4233 = vmatprep.subr.mxu0 0.0
    %4234 = vmatpush1.xpose.msra.mxu0 0.0
    %4235 = vmatprep.subr.mxu0 0.0
    %4236 = vmatpush1.xpose.msra.mxu0 0.0
    %4237 = vmatprep.subr.mxu0 0.0
    %4238 = vmatpush1.xpose.msra.mxu0 0.0
    %4239 = vmatprep.subr.mxu0 0.0
    %4240 = vmatpush1.xpose.msra.mxu0 0.0
    %4241 = vmatprep.subr.mxu0 0.0
    %4242 = vmatpush1.xpose.msra.mxu0 0.0
    %4243 = vmatprep.subr.mxu0 0.0
    %4244 = vmatpush1.xpose.msra.mxu0 0.0
    %4245 = vmatprep.subr.mxu0 0.0
    %4246 = vmatpush1.xpose.msra.mxu0 0.0
    %4247 = vmatprep.subr.mxu0 0.0
    %4248 = vmatpush1.xpose.msra.mxu0 0.0
    %4249 = vmatprep.subr.mxu0 0.0
    %4250 = vmatpush1.xpose.msra.mxu0 0.0
    %4251 = vmatprep.subr.mxu0 0.0
    %4252 = vmatpush1.xpose.msra.mxu0 0.0
    %4253 = vmatprep.subr.mxu0 0.0
    %4254 = vmatpush1.xpose.msra.mxu0 0.0
    %4255 = vmatprep.subr.mxu0 0.0
    %4256 = vmatpush1.xpose.msra.mxu0 0.0
    %4257 = vmatprep.subr.mxu0 0.0
    %4258 = vmatpush1.xpose.msra.mxu0 0.0
    %4259 = vmatprep.subr.mxu0 0.0
    %4260 = vmatpush1.xpose.msra.mxu0 0.0
    %4261 = vmatprep.subr.mxu0 0.0
    %4262 = vmatpush1.xpose.msra.mxu0 0.0
    %4263 = vmatprep.subr.mxu0 0.0
    %4264 = vmatpush1.xpose.msra.mxu0 0.0
    %4265 = vmatprep.subr.mxu0 0.0
    %4266 = vmatpush1.xpose.msra.mxu0 0.0
    %4267 = vmatprep.subr.mxu0 0.0
    %4268 = vmatpush1.xpose.msra.mxu0 0.0
    %4269 = vmatprep.subr.mxu0 0.0
    %4270 = vmatpush1.xpose.msra.mxu0 0.0
    %4271 = vmatprep.subr.mxu0 0.0
    %4272 = vmatpush1.xpose.msra.mxu0 0.0
    %4273 = vmatprep.subr.mxu0 0.0
    %4274 = vmatpush1.xpose.msra.mxu0 0.0
    %4275 = vmatprep.subr.mxu0 0.0
    %4276 = vmatpush1.xpose.msra.mxu0 0.0
    %4277 = vmatprep.subr.mxu0 0.0
    %4278 = vmatpush1.xpose.msra.mxu0 0.0
    %4279 = vmatprep.subr.mxu0 0.0
    %4280 = vmatpush1.xpose.msra.mxu0 0.0
    %4281 = vmatprep.subr.mxu0 0.0
    %4282 = vmatpush1.xpose.msra.mxu0 0.0
    %4283 = vmatprep.subr.mxu0 0.0
    %4284 = vmatpush1.xpose.msra.mxu0 0.0
    %4285 = vmatprep.subr.mxu0 0.0
    %4286 = vmatpush1.xpose.msra.mxu0 0.0
    %4287 = vmatprep.subr.mxu0 0.0
    %4288 = vmatpush1.xpose.msra.mxu0 0.0
    %4289 = vmatprep.mubr.f32.mxu0 0.0
    %v4290 = vand.u32 %v4067, 4294901760
    %v4291 = vsub.f32 %v4067, %v4290
    %4292 = vmatmul.mubr.f32.gmra.mrb[0].mxu0 %v4291
    %v4293 = vpop.f32.mrb[0].mxu0
    %v4294 = vadd.f32 %v4220, %v4293
    %v4295 = vpop.f32.mrb[0].mxu0
    %4296 = vdwg.mxu0
    %4297 = vmatprep.subr.mxu0 0.0
    %v4298 = vand.u32 %v4069, 4294901760
    %4299 = vmatpush1.xpose.msra.mxu0 %v4298
    %4300 = vmatprep.subr.mxu0 0.0
    %4301 = vmatpush1.xpose.msra.mxu0 0.0
    %4302 = vmatprep.subr.mxu0 0.0
    %4303 = vmatpush1.xpose.msra.mxu0 0.0
    %4304 = vmatprep.subr.mxu0 0.0
    %4305 = vmatpush1.xpose.msra.mxu0 0.0
    %4306 = vmatprep.subr.mxu0 0.0
    %4307 = vmatpush1.xpose.msra.mxu0 0.0
    %4308 = vmatprep.subr.mxu0 0.0
    %4309 = vmatpush1.xpose.msra.mxu0 0.0
    %4310 = vmatprep.subr.mxu0 0.0
    %4311 = vmatpush1.xpose.msra.mxu0 0.0
    %4312 = vmatprep.subr.mxu0 0.0
    %4313 = vmatpush1.xpose.msra.mxu0 0.0
    %4314 = vmatprep.subr.mxu0 0.0
    %4315 = vmatpush1.xpose.msra.mxu0 0.0
    %4316 = vmatprep.subr.mxu0 0.0
    %4317 = vmatpush1.xpose.msra.mxu0 0.0
    %4318 = vmatprep.subr.mxu0 0.0
    %4319 = vmatpush1.xpose.msra.mxu0 0.0
    %4320 = vmatprep.subr.mxu0 0.0
    %4321 = vmatpush1.xpose.msra.mxu0 0.0
    %4322 = vmatprep.subr.mxu0 0.0
    %4323 = vmatpush1.xpose.msra.mxu0 0.0
    %4324 = vmatprep.subr.mxu0 0.0
    %4325 = vmatpush1.xpose.msra.mxu0 0.0
    %4326 = vmatprep.subr.mxu0 0.0
    %4327 = vmatpush1.xpose.msra.mxu0 0.0
    %4328 = vmatprep.subr.mxu0 0.0
    %4329 = vmatpush1.xpose.msra.mxu0 0.0
    %4330 = vmatprep.subr.mxu0 0.0
    %4331 = vmatpush1.xpose.msra.mxu0 0.0
    %4332 = vmatprep.subr.mxu0 0.0
    %4333 = vmatpush1.xpose.msra.mxu0 0.0
    %4334 = vmatprep.subr.mxu0 0.0
    %4335 = vmatpush1.xpose.msra.mxu0 0.0
    %4336 = vmatprep.subr.mxu0 0.0
    %4337 = vmatpush1.xpose.msra.mxu0 0.0
    %4338 = vmatprep.subr.mxu0 0.0
    %4339 = vmatpush1.xpose.msra.mxu0 0.0
    %4340 = vmatprep.subr.mxu0 0.0
    %4341 = vmatpush1.xpose.msra.mxu0 0.0
    %4342 = vmatprep.subr.mxu0 0.0
    %4343 = vmatpush1.xpose.msra.mxu0 0.0
    %4344 = vmatprep.subr.mxu0 0.0
    %4345 = vmatpush1.xpose.msra.mxu0 0.0
    %4346 = vmatprep.subr.mxu0 0.0
    %4347 = vmatpush1.xpose.msra.mxu0 0.0
    %4348 = vmatprep.subr.mxu0 0.0
    %4349 = vmatpush1.xpose.msra.mxu0 0.0
    %4350 = vmatprep.subr.mxu0 0.0
    %4351 = vmatpush1.xpose.msra.mxu0 0.0
    %4352 = vmatprep.subr.mxu0 0.0
    %4353 = vmatpush1.xpose.msra.mxu0 0.0
    %4354 = vmatprep.subr.mxu0 0.0
    %4355 = vmatpush1.xpose.msra.mxu0 0.0
    %4356 = vmatprep.subr.mxu0 0.0
    %4357 = vmatpush1.xpose.msra.mxu0 0.0
    %4358 = vmatprep.subr.mxu0 0.0
    %4359 = vmatpush1.xpose.msra.mxu0 0.0
    %4360 = vmatprep.subr.mxu0 0.0
    %4361 = vmatpush1.xpose.msra.mxu0 0.0
    %4362 = vmatprep.mubr.f32.mxu0 0.0
    %v4363 = vand.u32 %v4067, 4294901760
    %v4364 = vsub.f32 %v4067, %v4363
    %v4365 = vand.u32 %v4364, 4294901760
    %4366 = vmatmul.mubr.f32.gmra.mrb[0].mxu0 %v4365
    %v4367 = vpop.f32.mrb[0].mxu0
    %v4368 = vadd.f32 %v4294, %v4367
    %v4369 = vpop.f32.mrb[0].mxu0
    %4370 = vdwg.mxu0
    %4371 = vmatprep.subr.mxu0 0.0
    %v4372 = vand.u32 %v4069, 4294901760
    %v4373 = vsub.f32 %v4069, %v4372
    %v4374 = vand.u32 %v4373, 4294901760
    %4375 = vmatpush1.xpose.msra.mxu0 %v4374
    %4376 = vmatprep.subr.mxu0 0.0
    %4377 = vmatpush1.xpose.msra.mxu0 0.0
    %4378 = vmatprep.subr.mxu0 0.0
    %4379 = vmatpush1.xpose.msra.mxu0 0.0
    %4380 = vmatprep.subr.mxu0 0.0
    %4381 = vmatpush1.xpose.msra.mxu0 0.0
    %4382 = vmatprep.subr.mxu0 0.0
    %4383 = vmatpush1.xpose.msra.mxu0 0.0
    %4384 = vmatprep.subr.mxu0 0.0
    %4385 = vmatpush1.xpose.msra.mxu0 0.0
    %4386 = vmatprep.subr.mxu0 0.0
    %4387 = vmatpush1.xpose.msra.mxu0 0.0
    %4388 = vmatprep.subr.mxu0 0.0
    %4389 = vmatpush1.xpose.msra.mxu0 0.0
    %4390 = vmatprep.subr.mxu0 0.0
    %4391 = vmatpush1.xpose.msra.mxu0 0.0
    %4392 = vmatprep.subr.mxu0 0.0
    %4393 = vmatpush1.xpose.msra.mxu0 0.0
    %4394 = vmatprep.subr.mxu0 0.0
    %4395 = vmatpush1.xpose.msra.mxu0 0.0
    %4396 = vmatprep.subr.mxu0 0.0
    %4397 = vmatpush1.xpose.msra.mxu0 0.0
    %4398 = vmatprep.subr.mxu0 0.0
    %4399 = vmatpush1.xpose.msra.mxu0 0.0
    %4400 = vmatprep.subr.mxu0 0.0
    %4401 = vmatpush1.xpose.msra.mxu0 0.0
    %4402 = vmatprep.subr.mxu0 0.0
    %4403 = vmatpush1.xpose.msra.mxu0 0.0
    %4404 = vmatprep.subr.mxu0 0.0
    %4405 = vmatpush1.xpose.msra.mxu0 0.0
    %4406 = vmatprep.subr.mxu0 0.0
    %4407 = vmatpush1.xpose.msra.mxu0 0.0
    %4408 = vmatprep.subr.mxu0 0.0
    %4409 = vmatpush1.xpose.msra.mxu0 0.0
    %4410 = vmatprep.subr.mxu0 0.0
    %4411 = vmatpush1.xpose.msra.mxu0 0.0
    %4412 = vmatprep.subr.mxu0 0.0
    %4413 = vmatpush1.xpose.msra.mxu0 0.0
    %4414 = vmatprep.subr.mxu0 0.0
    %4415 = vmatpush1.xpose.msra.mxu0 0.0
    %4416 = vmatprep.subr.mxu0 0.0
    %4417 = vmatpush1.xpose.msra.mxu0 0.0
    %4418 = vmatprep.subr.mxu0 0.0
    %4419 = vmatpush1.xpose.msra.mxu0 0.0
    %4420 = vmatprep.subr.mxu0 0.0
    %4421 = vmatpush1.xpose.msra.mxu0 0.0
    %4422 = vmatprep.subr.mxu0 0.0
    %4423 = vmatpush1.xpose.msra.mxu0 0.0
    %4424 = vmatprep.subr.mxu0 0.0
    %4425 = vmatpush1.xpose.msra.mxu0 0.0
    %4426 = vmatprep.subr.mxu0 0.0
    %4427 = vmatpush1.xpose.msra.mxu0 0.0
    %4428 = vmatprep.subr.mxu0 0.0
    %4429 = vmatpush1.xpose.msra.mxu0 0.0
    %4430 = vmatprep.subr.mxu0 0.0
    %4431 = vmatpush1.xpose.msra.mxu0 0.0
    %4432 = vmatprep.subr.mxu0 0.0
    %4433 = vmatpush1.xpose.msra.mxu0 0.0
    %4434 = vmatprep.subr.mxu0 0.0
    %4435 = vmatpush1.xpose.msra.mxu0 0.0
    %4436 = vmatprep.subr.mxu0 0.0
    %4437 = vmatpush1.xpose.msra.mxu0 0.0
    %4438 = vmatprep.mubr.f32.mxu0 0.0
    %v4439 = vand.u32 %v4067, 4294901760
    %4440 = vmatmul.mubr.f32.gmra.mrb[0].mxu0 %v4439
    %v4441 = vpop.f32.mrb[0].mxu0
    %v4442 = vadd.f32 %v4368, %v4441
    %v4443 = vpop.f32.mrb[0].mxu0
    %4444 = vdwg.mxu0
    %4445 = vmatprep.subr.mxu0 0.0
    %v4446 = vand.u32 %v4069, 4294901760
    %4447 = vmatpush1.xpose.msra.mxu0 %v4446
    %4448 = vmatprep.subr.mxu0 0.0
    %4449 = vmatpush1.xpose.msra.mxu0 0.0
    %4450 = vmatprep.subr.mxu0 0.0
    %4451 = vmatpush1.xpose.msra.mxu0 0.0
    %4452 = vmatprep.subr.mxu0 0.0
    %4453 = vmatpush1.xpose.msra.mxu0 0.0
    %4454 = vmatprep.subr.mxu0 0.0
    %4455 = vmatpush1.xpose.msra.mxu0 0.0
    %4456 = vmatprep.subr.mxu0 0.0
    %4457 = vmatpush1.xpose.msra.mxu0 0.0
    %4458 = vmatprep.subr.mxu0 0.0
    %4459 = vmatpush1.xpose.msra.mxu0 0.0
    %4460 = vmatprep.subr.mxu0 0.0
    %4461 = vmatpush1.xpose.msra.mxu0 0.0
    %4462 = vmatprep.subr.mxu0 0.0
    %4463 = vmatpush1.xpose.msra.mxu0 0.0
    %4464 = vmatprep.subr.mxu0 0.0
    %4465 = vmatpush1.xpose.msra.mxu0 0.0
    %4466 = vmatprep.subr.mxu0 0.0
    %4467 = vmatpush1.xpose.msra.mxu0 0.0
    %4468 = vmatprep.subr.mxu0 0.0
    %4469 = vmatpush1.xpose.msra.mxu0 0.0
    %4470 = vmatprep.subr.mxu0 0.0
    %4471 = vmatpush1.xpose.msra.mxu0 0.0
    %4472 = vmatprep.subr.mxu0 0.0
    %4473 = vmatpush1.xpose.msra.mxu0 0.0
    %4474 = vmatprep.subr.mxu0 0.0
    %4475 = vmatpush1.xpose.msra.mxu0 0.0
    %4476 = vmatprep.subr.mxu0 0.0
    %4477 = vmatpush1.xpose.msra.mxu0 0.0
    %4478 = vmatprep.subr.mxu0 0.0
    %4479 = vmatpush1.xpose.msra.mxu0 0.0
    %4480 = vmatprep.subr.mxu0 0.0
    %4481 = vmatpush1.xpose.msra.mxu0 0.0
    %4482 = vmatprep.subr.mxu0 0.0
    %4483 = vmatpush1.xpose.msra.mxu0 0.0
    %4484 = vmatprep.subr.mxu0 0.0
    %4485 = vmatpush1.xpose.msra.mxu0 0.0
    %4486 = vmatprep.subr.mxu0 0.0
    %4487 = vmatpush1.xpose.msra.mxu0 0.0
    %4488 = vmatprep.subr.mxu0 0.0
    %4489 = vmatpush1.xpose.msra.mxu0 0.0
    %4490 = vmatprep.subr.mxu0 0.0
    %4491 = vmatpush1.xpose.msra.mxu0 0.0
    %4492 = vmatprep.subr.mxu0 0.0
    %4493 = vmatpush1.xpose.msra.mxu0 0.0
    %4494 = vmatprep.subr.mxu0 0.0
    %4495 = vmatpush1.xpose.msra.mxu0 0.0
    %4496 = vmatprep.subr.mxu0 0.0
    %4497 = vmatpush1.xpose.msra.mxu0 0.0
    %4498 = vmatprep.subr.mxu0 0.0
    %4499 = vmatpush1.xpose.msra.mxu0 0.0
    %4500 = vmatprep.subr.mxu0 0.0
    %4501 = vmatpush1.xpose.msra.mxu0 0.0
    %4502 = vmatprep.subr.mxu0 0.0
    %4503 = vmatpush1.xpose.msra.mxu0 0.0
    %4504 = vmatprep.subr.mxu0 0.0
    %4505 = vmatpush1.xpose.msra.mxu0 0.0
    %4506 = vmatprep.subr.mxu0 0.0
    %4507 = vmatpush1.xpose.msra.mxu0 0.0
    %4508 = vmatprep.subr.mxu0 0.0
    %4509 = vmatpush1.xpose.msra.mxu0 0.0
    %4510 = vmatprep.mubr.f32.mxu0 0.0
    %v4511 = vand.u32 %v4067, 4294901760
    %4512 = vmatmul.mubr.f32.gmra.mrb[0].mxu0 %v4511
    %v4513 = vpop.f32.mrb[0].mxu0
    %v4514 = vadd.f32 %v4442, %v4513
    %v4515 = vpop.f32.mrb[0].mxu0
    %4516 = vdwg.mxu0
    %v4517 = vsel %vm1784, %v4060, -inf
    %4518 = vmax.xlane.f32.xlu0 %v4517
    %v4519 = vpop.xlane.xlu0 %4518
    %v4520 = vsel %vm1784, %v4514, -inf
    %4521 = vmax.xlane.f32.xlu0 %v4520
    %v4522 = vpop.xlane.xlu0 %4521
    %v4523 = vsub.f32 %v4060, %v4519
    %v4524 = vsub.f32 %v4514, %v4522
    %v4525 = vmul.f32 %v4523, 1.442695
    %v4526 = vpow.pop %v4525
    %v4527 = vmul.f32 %v4524, 1.442695
    %v4528 = vpow.pop %v4527
    %v4529 = vsel %vm1784, %v4526, 0.0
    %4530 = vadd.xlane.f32.xlu0 %v4529
    %v4531 = vpop.xlane.xlu0 %4530
    %v4532 = vsel %vm1784, %v4528, 0.0
    %4533 = vadd.xlane.f32.xlu0 %v4532
    %v4534 = vpop.xlane.xlu0 %4533
    %v4535 = vrcp.pop %v4531
    %v4536 = vrcp.pop %v4534
    %v4537 = vmul.f32 %v4526, %v4535
    %v4538 = vmul.f32 %v4528, %v4536
    %4540 = vrot.lane.b32.xlu0 %v1757, 120
    %v4541 = vpop.permute.xlu0 %4540
    %v4544 = vsel %vm1784, %v4537, 0
    %4546 = vmatprep.subr.mxu0 0.0
    %v4547 = vand.u32 %v4541, 4294901760
    %4548 = vmatpush1.msra.mxu0 %v4547
    %4549 = vmatprep.subr.mxu0 0.0
    %4550 = vmatpush1.msra.mxu0 0.0
    %4551 = vmatprep.subr.mxu0 0.0
    %4552 = vmatpush1.msra.mxu0 0.0
    %4553 = vmatprep.subr.mxu0 0.0
    %4554 = vmatpush1.msra.mxu0 0.0
    %4555 = vmatprep.subr.mxu0 0.0
    %4556 = vmatpush1.msra.mxu0 0.0
    %4557 = vmatprep.subr.mxu0 0.0
    %4558 = vmatpush1.msra.mxu0 0.0
    %4559 = vmatprep.subr.mxu0 0.0
    %4560 = vmatpush1.msra.mxu0 0.0
    %4561 = vmatprep.subr.mxu0 0.0
    %4562 = vmatpush1.msra.mxu0 0.0
    %4563 = vmatprep.subr.mxu0 0.0
    %4564 = vmatpush1.msra.mxu0 0.0
    %4565 = vmatprep.subr.mxu0 0.0
    %4566 = vmatpush1.msra.mxu0 0.0
    %4567 = vmatprep.subr.mxu0 0.0
    %4568 = vmatpush1.msra.mxu0 0.0
    %4569 = vmatprep.subr.mxu0 0.0
    %4570 = vmatpush1.msra.mxu0 0.0
    %4571 = vmatprep.subr.mxu0 0.0
    %4572 = vmatpush1.msra.mxu0 0.0
    %4573 = vmatprep.subr.mxu0 0.0
    %4574 = vmatpush1.msra.mxu0 0.0
    %4575 = vmatprep.subr.mxu0 0.0
    %4576 = vmatpush1.msra.mxu0 0.0
    %4577 = vmatprep.subr.mxu0 0.0
    %4578 = vmatpush1.msra.mxu0 0.0
    %4579 = vmatprep.subr.mxu0 0.0
    %4580 = vmatpush1.msra.mxu0 0.0
    %4581 = vmatprep.subr.mxu0 0.0
    %4582 = vmatpush1.msra.mxu0 0.0
    %4583 = vmatprep.subr.mxu0 0.0
    %4584 = vmatpush1.msra.mxu0 0.0
    %4585 = vmatprep.subr.mxu0 0.0
    %4586 = vmatpush1.msra.mxu0 0.0
    %4587 = vmatprep.subr.mxu0 0.0
    %4588 = vmatpush1.msra.mxu0 0.0
    %4589 = vmatprep.subr.mxu0 0.0
    %4590 = vmatpush1.msra.mxu0 0.0
    %4591 = vmatprep.subr.mxu0 0.0
    %4592 = vmatpush1.msra.mxu0 0.0
    %4593 = vmatprep.subr.mxu0 0.0
    %4594 = vmatpush1.msra.mxu0 0.0
    %4595 = vmatprep.subr.mxu0 0.0
    %4596 = vmatpush1.msra.mxu0 0.0
    %4597 = vmatprep.subr.mxu0 0.0
    %4598 = vmatpush1.msra.mxu0 0.0
    %4599 = vmatprep.subr.mxu0 0.0
    %4600 = vmatpush1.msra.mxu0 0.0
    %4601 = vmatprep.subr.mxu0 0.0
    %4602 = vmatpush1.msra.mxu0 0.0
    %4603 = vmatprep.subr.mxu0 0.0
    %4604 = vmatpush1.msra.mxu0 0.0
    %4605 = vmatprep.subr.mxu0 0.0
    %4606 = vmatpush1.msra.mxu0 0.0
    %4607 = vmatprep.subr.mxu0 0.0
    %4608 = vmatpush1.msra.mxu0 0.0
    %4609 = vmatprep.subr.mxu0 0.0
    %4610 = vmatpush1.msra.mxu0 0.0
    %4611 = vmatprep.mubr.f32.mxu0 0.0
    %v4612 = vand.u32 %v4544, 4294901760
    %v4613 = vsub.f32 %v4544, %v4612
    %v4614 = vand.u32 %v4613, 4294901760
    %v4615 = vsub.f32 %v4613, %v4614
    %v4616 = vand.u32 %v4615, 4294901760
    %4617 = vmatmul.mubr.f32.gmra.mrb[0].mxu0 %v4616
    %v4618 = vpop.f32.mrb[0].mxu0
    %v4619 = vadd.f32 0.0, %v4618
    %v4620 = vpop.f32.mrb[0].mxu0
    %4621 = vdwg.mxu0
    %4622 = vmatprep.subr.mxu0 0.0
    %v4623 = vand.u32 %v4541, 4294901760
    %v4624 = vsub.f32 %v4541, %v4623
    %v4625 = vand.u32 %v4624, 4294901760
    %v4626 = vsub.f32 %v4624, %v4625
    %v4627 = vand.u32 %v4626, 4294901760
    %4628 = vmatpush1.msra.mxu0 %v4627
    %4629 = vmatprep.subr.mxu0 0.0
    %4630 = vmatpush1.msra.mxu0 0.0
    %4631 = vmatprep.subr.mxu0 0.0
    %4632 = vmatpush1.msra.mxu0 0.0
    %4633 = vmatprep.subr.mxu0 0.0
    %4634 = vmatpush1.msra.mxu0 0.0
    %4635 = vmatprep.subr.mxu0 0.0
    %4636 = vmatpush1.msra.mxu0 0.0
    %4637 = vmatprep.subr.mxu0 0.0
    %4638 = vmatpush1.msra.mxu0 0.0
    %4639 = vmatprep.subr.mxu0 0.0
    %4640 = vmatpush1.msra.mxu0 0.0
    %4641 = vmatprep.subr.mxu0 0.0
    %4642 = vmatpush1.msra.mxu0 0.0
    %4643 = vmatprep.subr.mxu0 0.0
    %4644 = vmatpush1.msra.mxu0 0.0
    %4645 = vmatprep.subr.mxu0 0.0
    %4646 = vmatpush1.msra.mxu0 0.0
    %4647 = vmatprep.subr.mxu0 0.0
    %4648 = vmatpush1.msra.mxu0 0.0
    %4649 = vmatprep.subr.mxu0 0.0
    %4650 = vmatpush1.msra.mxu0 0.0
    %4651 = vmatprep.subr.mxu0 0.0
    %4652 = vmatpush1.msra.mxu0 0.0
    %4653 = vmatprep.subr.mxu0 0.0
    %4654 = vmatpush1.msra.mxu0 0.0
    %4655 = vmatprep.subr.mxu0 0.0
    %4656 = vmatpush1.msra.mxu0 0.0
    %4657 = vmatprep.subr.mxu0 0.0
    %4658 = vmatpush1.msra.mxu0 0.0
    %4659 = vmatprep.subr.mxu0 0.0
    %4660 = vmatpush1.msra.mxu0 0.0
    %4661 = vmatprep.subr.mxu0 0.0
    %4662 = vmatpush1.msra.mxu0 0.0
    %4663 = vmatprep.subr.mxu0 0.0
    %4664 = vmatpush1.msra.mxu0 0.0
    %4665 = vmatprep.subr.mxu0 0.0
    %4666 = vmatpush1.msra.mxu0 0.0
    %4667 = vmatprep.subr.mxu0 0.0
    %4668 = vmatpush1.msra.mxu0 0.0
    %4669 = vmatprep.subr.mxu0 0.0
    %4670 = vmatpush1.msra.mxu0 0.0
    %4671 = vmatprep.subr.mxu0 0.0
    %4672 = vmatpush1.msra.mxu0 0.0
    %4673 = vmatprep.subr.mxu0 0.0
    %4674 = vmatpush1.msra.mxu0 0.0
    %4675 = vmatprep.subr.mxu0 0.0
    %4676 = vmatpush1.msra.mxu0 0.0
    %4677 = vmatprep.subr.mxu0 0.0
    %4678 = vmatpush1.msra.mxu0 0.0
    %4679 = vmatprep.subr.mxu0 0.0
    %4680 = vmatpush1.msra.mxu0 0.0
    %4681 = vmatprep.subr.mxu0 0.0
    %4682 = vmatpush1.msra.mxu0 0.0
    %4683 = vmatprep.subr.mxu0 0.0
    %4684 = vmatpush1.msra.mxu0 0.0
    %4685 = vmatprep.subr.mxu0 0.0
    %4686 = vmatpush1.msra.mxu0 0.0
    %4687 = vmatprep.subr.mxu0 0.0
    %4688 = vmatpush1.msra.mxu0 0.0
    %4689 = vmatprep.subr.mxu0 0.0
    %4690 = vmatpush1.msra.mxu0 0.0
    %4691 = vmatprep.mubr.f32.mxu0 0.0
    %v4692 = vand.u32 %v4544, 4294901760
    %4693 = vmatmul.mubr.f32.gmra.mrb[0].mxu0 %v4692
    %v4694 = vpop.f32.mrb[0].mxu0
    %v4695 = vadd.f32 %v4619, %v4694
    %v4696 = vpop.f32.mrb[0].mxu0
    %4697 = vdwg.mxu0
    %4698 = vmatprep.subr.mxu0 0.0
    %v4699 = vand.u32 %v4541, 4294901760
    %v4700 = vsub.f32 %v4541, %v4699
    %4701 = vmatpush1.msra.mxu0 %v4700
    %4702 = vmatprep.subr.mxu0 0.0
    %4703 = vmatpush1.msra.mxu0 0.0
    %4704 = vmatprep.subr.mxu0 0.0
    %4705 = vmatpush1.msra.mxu0 0.0
    %4706 = vmatprep.subr.mxu0 0.0
    %4707 = vmatpush1.msra.mxu0 0.0
    %4708 = vmatprep.subr.mxu0 0.0
    %4709 = vmatpush1.msra.mxu0 0.0
    %4710 = vmatprep.subr.mxu0 0.0
    %4711 = vmatpush1.msra.mxu0 0.0
    %4712 = vmatprep.subr.mxu0 0.0
    %4713 = vmatpush1.msra.mxu0 0.0
    %4714 = vmatprep.subr.mxu0 0.0
    %4715 = vmatpush1.msra.mxu0 0.0
    %4716 = vmatprep.subr.mxu0 0.0
    %4717 = vmatpush1.msra.mxu0 0.0
    %4718 = vmatprep.subr.mxu0 0.0
    %4719 = vmatpush1.msra.mxu0 0.0
    %4720 = vmatprep.subr.mxu0 0.0
    %4721 = vmatpush1.msra.mxu0 0.0
    %4722 = vmatprep.subr.mxu0 0.0
    %4723 = vmatpush1.msra.mxu0 0.0
    %4724 = vmatprep.subr.mxu0 0.0
    %4725 = vmatpush1.msra.mxu0 0.0
    %4726 = vmatprep.subr.mxu0 0.0
    %4727 = vmatpush1.msra.mxu0 0.0
    %4728 = vmatprep.subr.mxu0 0.0
    %4729 = vmatpush1.msra.mxu0 0.0
    %4730 = vmatprep.subr.mxu0 0.0
    %4731 = vmatpush1.msra.mxu0 0.0
    %4732 = vmatprep.subr.mxu0 0.0
    %4733 = vmatpush1.msra.mxu0 0.0
    %4734 = vmatprep.subr.mxu0 0.0
    %4735 = vmatpush1.msra.mxu0 0.0
    %4736 = vmatprep.subr.mxu0 0.0
    %4737 = vmatpush1.msra.mxu0 0.0
    %4738 = vmatprep.subr.mxu0 0.0
    %4739 = vmatpush1.msra.mxu0 0.0
    %4740 = vmatprep.subr.mxu0 0.0
    %4741 = vmatpush1.msra.mxu0 0.0
    %4742 = vmatprep.subr.mxu0 0.0
    %4743 = vmatpush1.msra.mxu0 0.0
    %4744 = vmatprep.subr.mxu0 0.0
    %4745 = vmatpush1.msra.mxu0 0.0
    %4746 = vmatprep.subr.mxu0 0.0
    %4747 = vmatpush1.msra.mxu0 0.0
    %4748 = vmatprep.subr.mxu0 0.0
    %4749 = vmatpush1.msra.mxu0 0.0
    %4750 = vmatprep.subr.mxu0 0.0
    %4751 = vmatpush1.msra.mxu0 0.0
    %4752 = vmatprep.subr.mxu0 0.0
    %4753 = vmatpush1.msra.mxu0 0.0
    %4754 = vmatprep.subr.mxu0 0.0
    %4755 = vmatpush1.msra.mxu0 0.0
    %4756 = vmatprep.subr.mxu0 0.0
    %4757 = vmatpush1.msra.mxu0 0.0
    %4758 = vmatprep.subr.mxu0 0.0
    %4759 = vmatpush1.msra.mxu0 0.0
    %4760 = vmatprep.subr.mxu0 0.0
    %4761 = vmatpush1.msra.mxu0 0.0
    %4762 = vmatprep.subr.mxu0 0.0
    %4763 = vmatpush1.msra.mxu0 0.0
    %4764 = vmatprep.mubr.f32.mxu0 0.0
    %v4765 = vand.u32 %v4544, 4294901760
    %v4766 = vsub.f32 %v4544, %v4765
    %4767 = vmatmul.mubr.f32.gmra.mrb[0].mxu0 %v4766
    %v4768 = vpop.f32.mrb[0].mxu0
    %v4769 = vadd.f32 %v4695, %v4768
    %v4770 = vpop.f32.mrb[0].mxu0
    %4771 = vdwg.mxu0
    %4772 = vmatprep.subr.mxu0 0.0
    %v4773 = vand.u32 %v4541, 4294901760
    %4774 = vmatpush1.msra.mxu0 %v4773
    %4775 = vmatprep.subr.mxu0 0.0
    %4776 = vmatpush1.msra.mxu0 0.0
    %4777 = vmatprep.subr.mxu0 0.0
    %4778 = vmatpush1.msra.mxu0 0.0
    %4779 = vmatprep.subr.mxu0 0.0
    %4780 = vmatpush1.msra.mxu0 0.0
    %4781 = vmatprep.subr.mxu0 0.0
    %4782 = vmatpush1.msra.mxu0 0.0
    %4783 = vmatprep.subr.mxu0 0.0
    %4784 = vmatpush1.msra.mxu0 0.0
    %4785 = vmatprep.subr.mxu0 0.0
    %4786 = vmatpush1.msra.mxu0 0.0
    %4787 = vmatprep.subr.mxu0 0.0
    %4788 = vmatpush1.msra.mxu0 0.0
    %4789 = vmatprep.subr.mxu0 0.0
    %4790 = vmatpush1.msra.mxu0 0.0
    %4791 = vmatprep.subr.mxu0 0.0
    %4792 = vmatpush1.msra.mxu0 0.0
    %4793 = vmatprep.subr.mxu0 0.0
    %4794 = vmatpush1.msra.mxu0 0.0
    %4795 = vmatprep.subr.mxu0 0.0
    %4796 = vmatpush1.msra.mxu0 0.0
    %4797 = vmatprep.subr.mxu0 0.0
    %4798 = vmatpush1.msra.mxu0 0.0
    %4799 = vmatprep.subr.mxu0 0.0
    %4800 = vmatpush1.msra.mxu0 0.0
    %4801 = vmatprep.subr.mxu0 0.0
    %4802 = vmatpush1.msra.mxu0 0.0
    %4803 = vmatprep.subr.mxu0 0.0
    %4804 = vmatpush1.msra.mxu0 0.0
    %4805 = vmatprep.subr.mxu0 0.0
    %4806 = vmatpush1.msra.mxu0 0.0
    %4807 = vmatprep.subr.mxu0 0.0
    %4808 = vmatpush1.msra.mxu0 0.0
    %4809 = vmatprep.subr.mxu0 0.0
    %4810 = vmatpush1.msra.mxu0 0.0
    %4811 = vmatprep.subr.mxu0 0.0
    %4812 = vmatpush1.msra.mxu0 0.0
    %4813 = vmatprep.subr.mxu0 0.0
    %4814 = vmatpush1.msra.mxu0 0.0
    %4815 = vmatprep.subr.mxu0 0.0
    %4816 = vmatpush1.msra.mxu0 0.0
    %4817 = vmatprep.subr.mxu0 0.0
    %4818 = vmatpush1.msra.mxu0 0.0
    %4819 = vmatprep.subr.mxu0 0.0
    %4820 = vmatpush1.msra.mxu0 0.0
    %4821 = vmatprep.subr.mxu0 0.0
    %4822 = vmatpush1.msra.mxu0 0.0
    %4823 = vmatprep.subr.mxu0 0.0
    %4824 = vmatpush1.msra.mxu0 0.0
    %4825 = vmatprep.subr.mxu0 0.0
    %4826 = vmatpush1.msra.mxu0 0.0
    %4827 = vmatprep.subr.mxu0 0.0
    %4828 = vmatpush1.msra.mxu0 0.0
    %4829 = vmatprep.subr.mxu0 0.0
    %4830 = vmatpush1.msra.mxu0 0.0
    %4831 = vmatprep.subr.mxu0 0.0
    %4832 = vmatpush1.msra.mxu0 0.0
    %4833 = vmatprep.subr.mxu0 0.0
    %4834 = vmatpush1.msra.mxu0 0.0
    %4835 = vmatprep.subr.mxu0 0.0
    %4836 = vmatpush1.msra.mxu0 0.0
    %4837 = vmatprep.mubr.f32.mxu0 0.0
    %v4838 = vand.u32 %v4544, 4294901760
    %v4839 = vsub.f32 %v4544, %v4838
    %v4840 = vand.u32 %v4839, 4294901760
    %4841 = vmatmul.mubr.f32.gmra.mrb[0].mxu0 %v4840
    %v4842 = vpop.f32.mrb[0].mxu0
    %v4843 = vadd.f32 %v4769, %v4842
    %v4844 = vpop.f32.mrb[0].mxu0
    %4845 = vdwg.mxu0
    %4846 = vmatprep.subr.mxu0 0.0
    %v4847 = vand.u32 %v4541, 4294901760
    %v4848 = vsub.f32 %v4541, %v4847
    %v4849 = vand.u32 %v4848, 4294901760
    %4850 = vmatpush1.msra.mxu0 %v4849
    %4851 = vmatprep.subr.mxu0 0.0
    %4852 = vmatpush1.msra.mxu0 0.0
    %4853 = vmatprep.subr.mxu0 0.0
    %4854 = vmatpush1.msra.mxu0 0.0
    %4855 = vmatprep.subr.mxu0 0.0
    %4856 = vmatpush1.msra.mxu0 0.0
    %4857 = vmatprep.subr.mxu0 0.0
    %4858 = vmatpush1.msra.mxu0 0.0
    %4859 = vmatprep.subr.mxu0 0.0
    %4860 = vmatpush1.msra.mxu0 0.0
    %4861 = vmatprep.subr.mxu0 0.0
    %4862 = vmatpush1.msra.mxu0 0.0
    %4863 = vmatprep.subr.mxu0 0.0
    %4864 = vmatpush1.msra.mxu0 0.0
    %4865 = vmatprep.subr.mxu0 0.0
    %4866 = vmatpush1.msra.mxu0 0.0
    %4867 = vmatprep.subr.mxu0 0.0
    %4868 = vmatpush1.msra.mxu0 0.0
    %4869 = vmatprep.subr.mxu0 0.0
    %4870 = vmatpush1.msra.mxu0 0.0
    %4871 = vmatprep.subr.mxu0 0.0
    %4872 = vmatpush1.msra.mxu0 0.0
    %4873 = vmatprep.subr.mxu0 0.0
    %4874 = vmatpush1.msra.mxu0 0.0
    %4875 = vmatprep.subr.mxu0 0.0
    %4876 = vmatpush1.msra.mxu0 0.0
    %4877 = vmatprep.subr.mxu0 0.0
    %4878 = vmatpush1.msra.mxu0 0.0
    %4879 = vmatprep.subr.mxu0 0.0
    %4880 = vmatpush1.msra.mxu0 0.0
    %4881 = vmatprep.subr.mxu0 0.0
    %4882 = vmatpush1.msra.mxu0 0.0
    %4883 = vmatprep.subr.mxu0 0.0
    %4884 = vmatpush1.msra.mxu0 0.0
    %4885 = vmatprep.subr.mxu0 0.0
    %4886 = vmatpush1.msra.mxu0 0.0
    %4887 = vmatprep.subr.mxu0 0.0
    %4888 = vmatpush1.msra.mxu0 0.0
    %4889 = vmatprep.subr.mxu0 0.0
    %4890 = vmatpush1.msra.mxu0 0.0
    %4891 = vmatprep.subr.mxu0 0.0
    %4892 = vmatpush1.msra.mxu0 0.0
    %4893 = vmatprep.subr.mxu0 0.0
    %4894 = vmatpush1.msra.mxu0 0.0
    %4895 = vmatprep.subr.mxu0 0.0
    %4896 = vmatpush1.msra.mxu0 0.0
    %4897 = vmatprep.subr.mxu0 0.0
    %4898 = vmatpush1.msra.mxu0 0.0
    %4899 = vmatprep.subr.mxu0 0.0
    %4900 = vmatpush1.msra.mxu0 0.0
    %4901 = vmatprep.subr.mxu0 0.0
    %4902 = vmatpush1.msra.mxu0 0.0
    %4903 = vmatprep.subr.mxu0 0.0
    %4904 = vmatpush1.msra.mxu0 0.0
    %4905 = vmatprep.subr.mxu0 0.0
    %4906 = vmatpush1.msra.mxu0 0.0
    %4907 = vmatprep.subr.mxu0 0.0
    %4908 = vmatpush1.msra.mxu0 0.0
    %4909 = vmatprep.subr.mxu0 0.0
    %4910 = vmatpush1.msra.mxu0 0.0
    %4911 = vmatprep.subr.mxu0 0.0
    %4912 = vmatpush1.msra.mxu0 0.0
    %4913 = vmatprep.mubr.f32.mxu0 0.0
    %v4914 = vand.u32 %v4544, 4294901760
    %4915 = vmatmul.mubr.f32.gmra.mrb[0].mxu0 %v4914
    %v4916 = vpop.f32.mrb[0].mxu0
    %v4917 = vadd.f32 %v4843, %v4916
    %v4918 = vpop.f32.mrb[0].mxu0
    %4919 = vdwg.mxu0
    %4920 = vmatprep.subr.mxu0 0.0
    %v4921 = vand.u32 %v4541, 4294901760
    %4922 = vmatpush1.msra.mxu0 %v4921
    %4923 = vmatprep.subr.mxu0 0.0
    %4924 = vmatpush1.msra.mxu0 0.0
    %4925 = vmatprep.subr.mxu0 0.0
    %4926 = vmatpush1.msra.mxu0 0.0
    %4927 = vmatprep.subr.mxu0 0.0
    %4928 = vmatpush1.msra.mxu0 0.0
    %4929 = vmatprep.subr.mxu0 0.0
    %4930 = vmatpush1.msra.mxu0 0.0
    %4931 = vmatprep.subr.mxu0 0.0
    %4932 = vmatpush1.msra.mxu0 0.0
    %4933 = vmatprep.subr.mxu0 0.0
    %4934 = vmatpush1.msra.mxu0 0.0
    %4935 = vmatprep.subr.mxu0 0.0
    %4936 = vmatpush1.msra.mxu0 0.0
    %4937 = vmatprep.subr.mxu0 0.0
    %4938 = vmatpush1.msra.mxu0 0.0
    %4939 = vmatprep.subr.mxu0 0.0
    %4940 = vmatpush1.msra.mxu0 0.0
    %4941 = vmatprep.subr.mxu0 0.0
    %4942 = vmatpush1.msra.mxu0 0.0
    %4943 = vmatprep.subr.mxu0 0.0
    %4944 = vmatpush1.msra.mxu0 0.0
    %4945 = vmatprep.subr.mxu0 0.0
    %4946 = vmatpush1.msra.mxu0 0.0
    %4947 = vmatprep.subr.mxu0 0.0
    %4948 = vmatpush1.msra.mxu0 0.0
    %4949 = vmatprep.subr.mxu0 0.0
    %4950 = vmatpush1.msra.mxu0 0.0
    %4951 = vmatprep.subr.mxu0 0.0
    %4952 = vmatpush1.msra.mxu0 0.0
    %4953 = vmatprep.subr.mxu0 0.0
    %4954 = vmatpush1.msra.mxu0 0.0
    %4955 = vmatprep.subr.mxu0 0.0
    %4956 = vmatpush1.msra.mxu0 0.0
    %4957 = vmatprep.subr.mxu0 0.0
    %4958 = vmatpush1.msra.mxu0 0.0
    %4959 = vmatprep.subr.mxu0 0.0
    %4960 = vmatpush1.msra.mxu0 0.0
    %4961 = vmatprep.subr.mxu0 0.0
    %4962 = vmatpush1.msra.mxu0 0.0
    %4963 = vmatprep.subr.mxu0 0.0
    %4964 = vmatpush1.msra.mxu0 0.0
    %4965 = vmatprep.subr.mxu0 0.0
    %4966 = vmatpush1.msra.mxu0 0.0
    %4967 = vmatprep.subr.mxu0 0.0
    %4968 = vmatpush1.msra.mxu0 0.0
    %4969 = vmatprep.subr.mxu0 0.0
    %4970 = vmatpush1.msra.mxu0 0.0
    %4971 = vmatprep.subr.mxu0 0.0
    %4972 = vmatpush1.msra.mxu0 0.0
    %4973 = vmatprep.subr.mxu0 0.0
    %4974 = vmatpush1.msra.mxu0 0.0
    %4975 = vmatprep.subr.mxu0 0.0
    %4976 = vmatpush1.msra.mxu0 0.0
    %4977 = vmatprep.subr.mxu0 0.0
    %4978 = vmatpush1.msra.mxu0 0.0
    %4979 = vmatprep.subr.mxu0 0.0
    %4980 = vmatpush1.msra.mxu0 0.0
    %4981 = vmatprep.subr.mxu0 0.0
    %4982 = vmatpush1.msra.mxu0 0.0
    %4983 = vmatprep.subr.mxu0 0.0
    %4984 = vmatpush1.msra.mxu0 0.0
    %4985 = vmatprep.mubr.f32.mxu0 0.0
    %v4986 = vand.u32 %v4544, 4294901760
    %4987 = vmatmul.mubr.f32.gmra.mrb[0].mxu0 %v4986
    %v4988 = vpop.f32.mrb[0].mxu0
    %v4989 = vadd.f32 %v4917, %v4988
    %v4990 = vpop.f32.mrb[0].mxu0
    %4991 = vdwg.mxu0
    %4993 = vrot.lane.b32.xlu0 %v1763, 120
    %v4994 = vpop.permute.xlu0 %4993
    %v4997 = vsel %vm1784, %v4538, 0
    %4999 = vmatprep.subr.mxu0 0.0
    %v5000 = vand.u32 %v4994, 4294901760
    %5001 = vmatpush1.msra.mxu0 %v5000
    %5002 = vmatprep.subr.mxu0 0.0
    %5003 = vmatpush1.msra.mxu0 0.0
    %5004 = vmatprep.subr.mxu0 0.0
    %5005 = vmatpush1.msra.mxu0 0.0
    %5006 = vmatprep.subr.mxu0 0.0
    %5007 = vmatpush1.msra.mxu0 0.0
    %5008 = vmatprep.subr.mxu0 0.0
    %5009 = vmatpush1.msra.mxu0 0.0
    %5010 = vmatprep.subr.mxu0 0.0
    %5011 = vmatpush1.msra.mxu0 0.0
    %5012 = vmatprep.subr.mxu0 0.0
    %5013 = vmatpush1.msra.mxu0 0.0
    %5014 = vmatprep.subr.mxu0 0.0
    %5015 = vmatpush1.msra.mxu0 0.0
    %5016 = vmatprep.subr.mxu0 0.0
    %5017 = vmatpush1.msra.mxu0 0.0
    %5018 = vmatprep.subr.mxu0 0.0
    %5019 = vmatpush1.msra.mxu0 0.0
    %5020 = vmatprep.subr.mxu0 0.0
    %5021 = vmatpush1.msra.mxu0 0.0
    %5022 = vmatprep.subr.mxu0 0.0
    %5023 = vmatpush1.msra.mxu0 0.0
    %5024 = vmatprep.subr.mxu0 0.0
    %5025 = vmatpush1.msra.mxu0 0.0
    %5026 = vmatprep.subr.mxu0 0.0
    %5027 = vmatpush1.msra.mxu0 0.0
    %5028 = vmatprep.subr.mxu0 0.0
    %5029 = vmatpush1.msra.mxu0 0.0
    %5030 = vmatprep.subr.mxu0 0.0
    %5031 = vmatpush1.msra.mxu0 0.0
    %5032 = vmatprep.subr.mxu0 0.0
    %5033 = vmatpush1.msra.mxu0 0.0
    %5034 = vmatprep.subr.mxu0 0.0
    %5035 = vmatpush1.msra.mxu0 0.0
    %5036 = vmatprep.subr.mxu0 0.0
    %5037 = vmatpush1.msra.mxu0 0.0
    %5038 = vmatprep.subr.mxu0 0.0
    %5039 = vmatpush1.msra.mxu0 0.0
    %5040 = vmatprep.subr.mxu0 0.0
    %5041 = vmatpush1.msra.mxu0 0.0
    %5042 = vmatprep.subr.mxu0 0.0
    %5043 = vmatpush1.msra.mxu0 0.0
    %5044 = vmatprep.subr.mxu0 0.0
    %5045 = vmatpush1.msra.mxu0 0.0
    %5046 = vmatprep.subr.mxu0 0.0
    %5047 = vmatpush1.msra.mxu0 0.0
    %5048 = vmatprep.subr.mxu0 0.0
    %5049 = vmatpush1.msra.mxu0 0.0
    %5050 = vmatprep.subr.mxu0 0.0
    %5051 = vmatpush1.msra.mxu0 0.0
    %5052 = vmatprep.subr.mxu0 0.0
    %5053 = vmatpush1.msra.mxu0 0.0
    %5054 = vmatprep.subr.mxu0 0.0
    %5055 = vmatpush1.msra.mxu0 0.0
    %5056 = vmatprep.subr.mxu0 0.0
    %5057 = vmatpush1.msra.mxu0 0.0
    %5058 = vmatprep.subr.mxu0 0.0
    %5059 = vmatpush1.msra.mxu0 0.0
    %5060 = vmatprep.subr.mxu0 0.0
    %5061 = vmatpush1.msra.mxu0 0.0
    %5062 = vmatprep.subr.mxu0 0.0
    %5063 = vmatpush1.msra.mxu0 0.0
    %5064 = vmatprep.mubr.f32.mxu0 0.0
    %v5065 = vand.u32 %v4997, 4294901760
    %v5066 = vsub.f32 %v4997, %v5065
    %v5067 = vand.u32 %v5066, 4294901760
    %v5068 = vsub.f32 %v5066, %v5067
    %v5069 = vand.u32 %v5068, 4294901760
    %5070 = vmatmul.mubr.f32.gmra.mrb[0].mxu0 %v5069
    %v5071 = vpop.f32.mrb[0].mxu0
    %v5072 = vadd.f32 0.0, %v5071
    %v5073 = vpop.f32.mrb[0].mxu0
    %5074 = vdwg.mxu0
    %5075 = vmatprep.subr.mxu0 0.0
    %v5076 = vand.u32 %v4994, 4294901760
    %v5077 = vsub.f32 %v4994, %v5076
    %v5078 = vand.u32 %v5077, 4294901760
    %v5079 = vsub.f32 %v5077, %v5078
    %v5080 = vand.u32 %v5079, 4294901760
    %5081 = vmatpush1.msra.mxu0 %v5080
    %5082 = vmatprep.subr.mxu0 0.0
    %5083 = vmatpush1.msra.mxu0 0.0
    %5084 = vmatprep.subr.mxu0 0.0
    %5085 = vmatpush1.msra.mxu0 0.0
    %5086 = vmatprep.subr.mxu0 0.0
    %5087 = vmatpush1.msra.mxu0 0.0
    %5088 = vmatprep.subr.mxu0 0.0
    %5089 = vmatpush1.msra.mxu0 0.0
    %5090 = vmatprep.subr.mxu0 0.0
    %5091 = vmatpush1.msra.mxu0 0.0
    %5092 = vmatprep.subr.mxu0 0.0
    %5093 = vmatpush1.msra.mxu0 0.0
    %5094 = vmatprep.subr.mxu0 0.0
    %5095 = vmatpush1.msra.mxu0 0.0
    %5096 = vmatprep.subr.mxu0 0.0
    %5097 = vmatpush1.msra.mxu0 0.0
    %5098 = vmatprep.subr.mxu0 0.0
    %5099 = vmatpush1.msra.mxu0 0.0
    %5100 = vmatprep.subr.mxu0 0.0
    %5101 = vmatpush1.msra.mxu0 0.0
    %5102 = vmatprep.subr.mxu0 0.0
    %5103 = vmatpush1.msra.mxu0 0.0
    %5104 = vmatprep.subr.mxu0 0.0
    %5105 = vmatpush1.msra.mxu0 0.0
    %5106 = vmatprep.subr.mxu0 0.0
    %5107 = vmatpush1.msra.mxu0 0.0
    %5108 = vmatprep.subr.mxu0 0.0
    %5109 = vmatpush1.msra.mxu0 0.0
    %5110 = vmatprep.subr.mxu0 0.0
    %5111 = vmatpush1.msra.mxu0 0.0
    %5112 = vmatprep.subr.mxu0 0.0
    %5113 = vmatpush1.msra.mxu0 0.0
    %5114 = vmatprep.subr.mxu0 0.0
    %5115 = vmatpush1.msra.mxu0 0.0
    %5116 = vmatprep.subr.mxu0 0.0
    %5117 = vmatpush1.msra.mxu0 0.0
    %5118 = vmatprep.subr.mxu0 0.0
    %5119 = vmatpush1.msra.mxu0 0.0
    %5120 = vmatprep.subr.mxu0 0.0
    %5121 = vmatpush1.msra.mxu0 0.0
    %5122 = vmatprep.subr.mxu0 0.0
    %5123 = vmatpush1.msra.mxu0 0.0
    %5124 = vmatprep.subr.mxu0 0.0
    %5125 = vmatpush1.msra.mxu0 0.0
    %5126 = vmatprep.subr.mxu0 0.0
    %5127 = vmatpush1.msra.mxu0 0.0
    %5128 = vmatprep.subr.mxu0 0.0
    %5129 = vmatpush1.msra.mxu0 0.0
    %5130 = vmatprep.subr.mxu0 0.0
    %5131 = vmatpush1.msra.mxu0 0.0
    %5132 = vmatprep.subr.mxu0 0.0
    %5133 = vmatpush1.msra.mxu0 0.0
    %5134 = vmatprep.subr.mxu0 0.0
    %5135 = vmatpush1.msra.mxu0 0.0
    %5136 = vmatprep.subr.mxu0 0.0
    %5137 = vmatpush1.msra.mxu0 0.0
    %5138 = vmatprep.subr.mxu0 0.0
    %5139 = vmatpush1.msra.mxu0 0.0
    %5140 = vmatprep.subr.mxu0 0.0
    %5141 = vmatpush1.msra.mxu0 0.0
    %5142 = vmatprep.subr.mxu0 0.0
    %5143 = vmatpush1.msra.mxu0 0.0
    %5144 = vmatprep.mubr.f32.mxu0 0.0
    %v5145 = vand.u32 %v4997, 4294901760
    %5146 = vmatmul.mubr.f32.gmra.mrb[0].mxu0 %v5145
    %v5147 = vpop.f32.mrb[0].mxu0
    %v5148 = vadd.f32 %v5072, %v5147
    %v5149 = vpop.f32.mrb[0].mxu0
    %5150 = vdwg.mxu0
    %5151 = vmatprep.subr.mxu0 0.0
    %v5152 = vand.u32 %v4994, 4294901760
    %v5153 = vsub.f32 %v4994, %v5152
    %5154 = vmatpush1.msra.mxu0 %v5153
    %5155 = vmatprep.subr.mxu0 0.0
    %5156 = vmatpush1.msra.mxu0 0.0
    %5157 = vmatprep.subr.mxu0 0.0
    %5158 = vmatpush1.msra.mxu0 0.0
    %5159 = vmatprep.subr.mxu0 0.0
    %5160 = vmatpush1.msra.mxu0 0.0
    %5161 = vmatprep.subr.mxu0 0.0
    %5162 = vmatpush1.msra.mxu0 0.0
    %5163 = vmatprep.subr.mxu0 0.0
    %5164 = vmatpush1.msra.mxu0 0.0
    %5165 = vmatprep.subr.mxu0 0.0
    %5166 = vmatpush1.msra.mxu0 0.0
    %5167 = vmatprep.subr.mxu0 0.0
    %5168 = vmatpush1.msra.mxu0 0.0
    %5169 = vmatprep.subr.mxu0 0.0
    %5170 = vmatpush1.msra.mxu0 0.0
    %5171 = vmatprep.subr.mxu0 0.0
    %5172 = vmatpush1.msra.mxu0 0.0
    %5173 = vmatprep.subr.mxu0 0.0
    %5174 = vmatpush1.msra.mxu0 0.0
    %5175 = vmatprep.subr.mxu0 0.0
    %5176 = vmatpush1.msra.mxu0 0.0
    %5177 = vmatprep.subr.mxu0 0.0
    %5178 = vmatpush1.msra.mxu0 0.0
    %5179 = vmatprep.subr.mxu0 0.0
    %5180 = vmatpush1.msra.mxu0 0.0
    %5181 = vmatprep.subr.mxu0 0.0
    %5182 = vmatpush1.msra.mxu0 0.0
    %5183 = vmatprep.subr.mxu0 0.0
    %5184 = vmatpush1.msra.mxu0 0.0
    %5185 = vmatprep.subr.mxu0 0.0
    %5186 = vmatpush1.msra.mxu0 0.0
    %5187 = vmatprep.subr.mxu0 0.0
    %5188 = vmatpush1.msra.mxu0 0.0
    %5189 = vmatprep.subr.mxu0 0.0
    %5190 = vmatpush1.msra.mxu0 0.0
    %5191 = vmatprep.subr.mxu0 0.0
    %5192 = vmatpush1.msra.mxu0 0.0
    %5193 = vmatprep.subr.mxu0 0.0
    %5194 = vmatpush1.msra.mxu0 0.0
    %5195 = vmatprep.subr.mxu0 0.0
    %5196 = vmatpush1.msra.mxu0 0.0
    %5197 = vmatprep.subr.mxu0 0.0
    %5198 = vmatpush1.msra.mxu0 0.0
    %5199 = vmatprep.subr.mxu0 0.0
    %5200 = vmatpush1.msra.mxu0 0.0
    %5201 = vmatprep.subr.mxu0 0.0
    %5202 = vmatpush1.msra.mxu0 0.0
    %5203 = vmatprep.subr.mxu0 0.0
    %5204 = vmatpush1.msra.mxu0 0.0
    %5205 = vmatprep.subr.mxu0 0.0
    %5206 = vmatpush1.msra.mxu0 0.0
    %5207 = vmatprep.subr.mxu0 0.0
    %5208 = vmatpush1.msra.mxu0 0.0
    %5209 = vmatprep.subr.mxu0 0.0
    %5210 = vmatpush1.msra.mxu0 0.0
    %5211 = vmatprep.subr.mxu0 0.0
    %5212 = vmatpush1.msra.mxu0 0.0
    %5213 = vmatprep.subr.mxu0 0.0
    %5214 = vmatpush1.msra.mxu0 0.0
    %5215 = vmatprep.subr.mxu0 0.0
    %5216 = vmatpush1.msra.mxu0 0.0
    %5217 = vmatprep.mubr.f32.mxu0 0.0
    %v5218 = vand.u32 %v4997, 4294901760
    %v5219 = vsub.f32 %v4997, %v5218
    %5220 = vmatmul.mubr.f32.gmra.mrb[0].mxu0 %v5219
    %v5221 = vpop.f32.mrb[0].mxu0
    %v5222 = vadd.f32 %v5148, %v5221
    %v5223 = vpop.f32.mrb[0].mxu0
    %5224 = vdwg.mxu0
    %5225 = vmatprep.subr.mxu0 0.0
    %v5226 = vand.u32 %v4994, 4294901760
    %5227 = vmatpush1.msra.mxu0 %v5226
    %5228 = vmatprep.subr.mxu0 0.0
    %5229 = vmatpush1.msra.mxu0 0.0
    %5230 = vmatprep.subr.mxu0 0.0
    %5231 = vmatpush1.msra.mxu0 0.0
    %5232 = vmatprep.subr.mxu0 0.0
    %5233 = vmatpush1.msra.mxu0 0.0
    %5234 = vmatprep.subr.mxu0 0.0
    %5235 = vmatpush1.msra.mxu0 0.0
    %5236 = vmatprep.subr.mxu0 0.0
    %5237 = vmatpush1.msra.mxu0 0.0
    %5238 = vmatprep.subr.mxu0 0.0
    %5239 = vmatpush1.msra.mxu0 0.0
    %5240 = vmatprep.subr.mxu0 0.0
    %5241 = vmatpush1.msra.mxu0 0.0
    %5242 = vmatprep.subr.mxu0 0.0
    %5243 = vmatpush1.msra.mxu0 0.0
    %5244 = vmatprep.subr.mxu0 0.0
    %5245 = vmatpush1.msra.mxu0 0.0
    %5246 = vmatprep.subr.mxu0 0.0
    %5247 = vmatpush1.msra.mxu0 0.0
    %5248 = vmatprep.subr.mxu0 0.0
    %5249 = vmatpush1.msra.mxu0 0.0
    %5250 = vmatprep.subr.mxu0 0.0
    %5251 = vmatpush1.msra.mxu0 0.0
    %5252 = vmatprep.subr.mxu0 0.0
    %5253 = vmatpush1.msra.mxu0 0.0
    %5254 = vmatprep.subr.mxu0 0.0
    %5255 = vmatpush1.msra.mxu0 0.0
    %5256 = vmatprep.subr.mxu0 0.0
    %5257 = vmatpush1.msra.mxu0 0.0
    %5258 = vmatprep.subr.mxu0 0.0
    %5259 = vmatpush1.msra.mxu0 0.0
    %5260 = vmatprep.subr.mxu0 0.0
    %5261 = vmatpush1.msra.mxu0 0.0
    %5262 = vmatprep.subr.mxu0 0.0
    %5263 = vmatpush1.msra.mxu0 0.0
    %5264 = vmatprep.subr.mxu0 0.0
    %5265 = vmatpush1.msra.mxu0 0.0
    %5266 = vmatprep.subr.mxu0 0.0
    %5267 = vmatpush1.msra.mxu0 0.0
    %5268 = vmatprep.subr.mxu0 0.0
    %5269 = vmatpush1.msra.mxu0 0.0
    %5270 = vmatprep.subr.mxu0 0.0
    %5271 = vmatpush1.msra.mxu0 0.0
    %5272 = vmatprep.subr.mxu0 0.0
    %5273 = vmatpush1.msra.mxu0 0.0
    %5274 = vmatprep.subr.mxu0 0.0
    %5275 = vmatpush1.msra.mxu0 0.0
    %5276 = vmatprep.subr.mxu0 0.0
    %5277 = vmatpush1.msra.mxu0 0.0
    %5278 = vmatprep.subr.mxu0 0.0
    %5279 = vmatpush1.msra.mxu0 0.0
    %5280 = vmatprep.subr.mxu0 0.0
    %5281 = vmatpush1.msra.mxu0 0.0
    %5282 = vmatprep.subr.mxu0 0.0
    %5283 = vmatpush1.msra.mxu0 0.0
    %5284 = vmatprep.subr.mxu0 0.0
    %5285 = vmatpush1.msra.mxu0 0.0
    %5286 = vmatprep.subr.mxu0 0.0
    %5287 = vmatpush1.msra.mxu0 0.0
    %5288 = vmatprep.subr.mxu0 0.0
    %5289 = vmatpush1.msra.mxu0 0.0
    %5290 = vmatprep.mubr.f32.mxu0 0.0
    %v5291 = vand.u32 %v4997, 4294901760
    %v5292 = vsub.f32 %v4997, %v5291
    %v5293 = vand.u32 %v5292, 4294901760
    %5294 = vmatmul.mubr.f32.gmra.mrb[0].mxu0 %v5293
    %v5295 = vpop.f32.mrb[0].mxu0
    %v5296 = vadd.f32 %v5222, %v5295
    %v5297 = vpop.f32.mrb[0].mxu0
    %5298 = vdwg.mxu0
    %5299 = vmatprep.subr.mxu0 0.0
    %v5300 = vand.u32 %v4994, 4294901760
    %v5301 = vsub.f32 %v4994, %v5300
    %v5302 = vand.u32 %v5301, 4294901760
    %5303 = vmatpush1.msra.mxu0 %v5302
    %5304 = vmatprep.subr.mxu0 0.0
    %5305 = vmatpush1.msra.mxu0 0.0
    %5306 = vmatprep.subr.mxu0 0.0
    %5307 = vmatpush1.msra.mxu0 0.0
    %5308 = vmatprep.subr.mxu0 0.0
    %5309 = vmatpush1.msra.mxu0 0.0
    %5310 = vmatprep.subr.mxu0 0.0
    %5311 = vmatpush1.msra.mxu0 0.0
    %5312 = vmatprep.subr.mxu0 0.0
    %5313 = vmatpush1.msra.mxu0 0.0
    %5314 = vmatprep.subr.mxu0 0.0
    %5315 = vmatpush1.msra.mxu0 0.0
    %5316 = vmatprep.subr.mxu0 0.0
    %5317 = vmatpush1.msra.mxu0 0.0
    %5318 = vmatprep.subr.mxu0 0.0
    %5319 = vmatpush1.msra.mxu0 0.0
    %5320 = vmatprep.subr.mxu0 0.0
    %5321 = vmatpush1.msra.mxu0 0.0
    %5322 = vmatprep.subr.mxu0 0.0
    %5323 = vmatpush1.msra.mxu0 0.0
    %5324 = vmatprep.subr.mxu0 0.0
    %5325 = vmatpush1.msra.mxu0 0.0
    %5326 = vmatprep.subr.mxu0 0.0
    %5327 = vmatpush1.msra.mxu0 0.0
    %5328 = vmatprep.subr.mxu0 0.0
    %5329 = vmatpush1.msra.mxu0 0.0
    %5330 = vmatprep.subr.mxu0 0.0
    %5331 = vmatpush1.msra.mxu0 0.0
    %5332 = vmatprep.subr.mxu0 0.0
    %5333 = vmatpush1.msra.mxu0 0.0
    %5334 = vmatprep.subr.mxu0 0.0
    %5335 = vmatpush1.msra.mxu0 0.0
    %5336 = vmatprep.subr.mxu0 0.0
    %5337 = vmatpush1.msra.mxu0 0.0
    %5338 = vmatprep.subr.mxu0 0.0
    %5339 = vmatpush1.msra.mxu0 0.0
    %5340 = vmatprep.subr.mxu0 0.0
    %5341 = vmatpush1.msra.mxu0 0.0
    %5342 = vmatprep.subr.mxu0 0.0
    %5343 = vmatpush1.msra.mxu0 0.0
    %5344 = vmatprep.subr.mxu0 0.0
    %5345 = vmatpush1.msra.mxu0 0.0
    %5346 = vmatprep.subr.mxu0 0.0
    %5347 = vmatpush1.msra.mxu0 0.0
    %5348 = vmatprep.subr.mxu0 0.0
    %5349 = vmatpush1.msra.mxu0 0.0
    %5350 = vmatprep.subr.mxu0 0.0
    %5351 = vmatpush1.msra.mxu0 0.0
    %5352 = vmatprep.subr.mxu0 0.0
    %5353 = vmatpush1.msra.mxu0 0.0
    %5354 = vmatprep.subr.mxu0 0.0
    %5355 = vmatpush1.msra.mxu0 0.0
    %5356 = vmatprep.subr.mxu0 0.0
    %5357 = vmatpush1.msra.mxu0 0.0
    %5358 = vmatprep.subr.mxu0 0.0
    %5359 = vmatpush1.msra.mxu0 0.0
    %5360 = vmatprep.subr.mxu0 0.0
    %5361 = vmatpush1.msra.mxu0 0.0
    %5362 = vmatprep.subr.mxu0 0.0
    %5363 = vmatpush1.msra.mxu0 0.0
    %5364 = vmatprep.subr.mxu0 0.0
    %5365 = vmatpush1.msra.mxu0 0.0
    %5366 = vmatprep.mubr.f32.mxu0 0.0
    %v5367 = vand.u32 %v4997, 4294901760
    %5368 = vmatmul.mubr.f32.gmra.mrb[0].mxu0 %v5367
    %v5369 = vpop.f32.mrb[0].mxu0
    %v5370 = vadd.f32 %v5296, %v5369
    %v5371 = vpop.f32.mrb[0].mxu0
    %5372 = vdwg.mxu0
    %5373 = vmatprep.subr.mxu0 0.0
    %v5374 = vand.u32 %v4994, 4294901760
    %5375 = vmatpush1.msra.mxu0 %v5374
    %5376 = vmatprep.subr.mxu0 0.0
    %5377 = vmatpush1.msra.mxu0 0.0
    %5378 = vmatprep.subr.mxu0 0.0
    %5379 = vmatpush1.msra.mxu0 0.0
    %5380 = vmatprep.subr.mxu0 0.0
    %5381 = vmatpush1.msra.mxu0 0.0
    %5382 = vmatprep.subr.mxu0 0.0
    %5383 = vmatpush1.msra.mxu0 0.0
    %5384 = vmatprep.subr.mxu0 0.0
    %5385 = vmatpush1.msra.mxu0 0.0
    %5386 = vmatprep.subr.mxu0 0.0
    %5387 = vmatpush1.msra.mxu0 0.0
    %5388 = vmatprep.subr.mxu0 0.0
    %5389 = vmatpush1.msra.mxu0 0.0
    %5390 = vmatprep.subr.mxu0 0.0
    %5391 = vmatpush1.msra.mxu0 0.0
    %5392 = vmatprep.subr.mxu0 0.0
    %5393 = vmatpush1.msra.mxu0 0.0
    %5394 = vmatprep.subr.mxu0 0.0
    %5395 = vmatpush1.msra.mxu0 0.0
    %5396 = vmatprep.subr.mxu0 0.0
    %5397 = vmatpush1.msra.mxu0 0.0
    %5398 = vmatprep.subr.mxu0 0.0
    %5399 = vmatpush1.msra.mxu0 0.0
    %5400 = vmatprep.subr.mxu0 0.0
    %5401 = vmatpush1.msra.mxu0 0.0
    %5402 = vmatprep.subr.mxu0 0.0
    %5403 = vmatpush1.msra.mxu0 0.0
    %5404 = vmatprep.subr.mxu0 0.0
    %5405 = vmatpush1.msra.mxu0 0.0
    %5406 = vmatprep.subr.mxu0 0.0
    %5407 = vmatpush1.msra.mxu0 0.0
    %5408 = vmatprep.subr.mxu0 0.0
    %5409 = vmatpush1.msra.mxu0 0.0
    %5410 = vmatprep.subr.mxu0 0.0
    %5411 = vmatpush1.msra.mxu0 0.0
    %5412 = vmatprep.subr.mxu0 0.0
    %5413 = vmatpush1.msra.mxu0 0.0
    %5414 = vmatprep.subr.mxu0 0.0
    %5415 = vmatpush1.msra.mxu0 0.0
    %5416 = vmatprep.subr.mxu0 0.0
    %5417 = vmatpush1.msra.mxu0 0.0
    %5418 = vmatprep.subr.mxu0 0.0
    %5419 = vmatpush1.msra.mxu0 0.0
    %5420 = vmatprep.subr.mxu0 0.0
    %5421 = vmatpush1.msra.mxu0 0.0
    %5422 = vmatprep.subr.mxu0 0.0
    %5423 = vmatpush1.msra.mxu0 0.0
    %5424 = vmatprep.subr.mxu0 0.0
    %5425 = vmatpush1.msra.mxu0 0.0
    %5426 = vmatprep.subr.mxu0 0.0
    %5427 = vmatpush1.msra.mxu0 0.0
    %5428 = vmatprep.subr.mxu0 0.0
    %5429 = vmatpush1.msra.mxu0 0.0
    %5430 = vmatprep.subr.mxu0 0.0
    %5431 = vmatpush1.msra.mxu0 0.0
    %5432 = vmatprep.subr.mxu0 0.0
    %5433 = vmatpush1.msra.mxu0 0.0
    %5434 = vmatprep.subr.mxu0 0.0
    %5435 = vmatpush1.msra.mxu0 0.0
    %5436 = vmatprep.subr.mxu0 0.0
    %5437 = vmatpush1.msra.mxu0 0.0
    %5438 = vmatprep.mubr.f32.mxu0 0.0
    %v5439 = vand.u32 %v4997, 4294901760
    %5440 = vmatmul.mubr.f32.gmra.mrb[0].mxu0 %v5439
    %v5441 = vpop.f32.mrb[0].mxu0
    %v5442 = vadd.f32 %v5370, %v5441
    %v5443 = vpop.f32.mrb[0].mxu0
    %5444 = vdwg.mxu0
    %v5446 = vsel %vm1784, %v4989, 0
    %v5449 = vsel %vm1784, %v5442, 0
    %5451 = vmatprep.subr.mxu0 0.0
    %v5452 = vand.u32 %v1781, 4294901760
    %5453 = vmatpush1.msra.mxu0 %v5452
    %5454 = vmatprep.subr.mxu0 0.0
    %5455 = vmatpush1.msra.mxu0 0.0
    %5456 = vmatprep.subr.mxu0 0.0
    %5457 = vmatpush1.msra.mxu0 0.0
    %5458 = vmatprep.subr.mxu0 0.0
    %5459 = vmatpush1.msra.mxu0 0.0
    %5460 = vmatprep.subr.mxu0 0.0
    %5461 = vmatpush1.msra.mxu0 0.0
    %5462 = vmatprep.subr.mxu0 0.0
    %5463 = vmatpush1.msra.mxu0 0.0
    %5464 = vmatprep.subr.mxu0 0.0
    %5465 = vmatpush1.msra.mxu0 0.0
    %5466 = vmatprep.subr.mxu0 0.0
    %5467 = vmatpush1.msra.mxu0 0.0
    %5468 = vmatprep.subr.mxu0 0.0
    %5469 = vmatpush1.msra.mxu0 0.0
    %5470 = vmatprep.subr.mxu0 0.0
    %5471 = vmatpush1.msra.mxu0 0.0
    %5472 = vmatprep.subr.mxu0 0.0
    %5473 = vmatpush1.msra.mxu0 0.0
    %5474 = vmatprep.subr.mxu0 0.0
    %5475 = vmatpush1.msra.mxu0 0.0
    %5476 = vmatprep.subr.mxu0 0.0
    %5477 = vmatpush1.msra.mxu0 0.0
    %5478 = vmatprep.subr.mxu0 0.0
    %5479 = vmatpush1.msra.mxu0 0.0
    %5480 = vmatprep.subr.mxu0 0.0
    %5481 = vmatpush1.msra.mxu0 0.0
    %5482 = vmatprep.subr.mxu0 0.0
    %5483 = vmatpush1.msra.mxu0 0.0
    %5484 = vmatprep.subr.mxu0 0.0
    %5485 = vmatpush1.msra.mxu0 0.0
    %5486 = vmatprep.subr.mxu0 0.0
    %5487 = vmatpush1.msra.mxu0 0.0
    %5488 = vmatprep.subr.mxu0 0.0
    %5489 = vmatpush1.msra.mxu0 0.0
    %5490 = vmatprep.subr.mxu0 0.0
    %5491 = vmatpush1.msra.mxu0 0.0
    %5492 = vmatprep.subr.mxu0 0.0
    %5493 = vmatpush1.msra.mxu0 0.0
    %5494 = vmatprep.subr.mxu0 0.0
    %5495 = vmatpush1.msra.mxu0 0.0
    %5496 = vmatprep.subr.mxu0 0.0
    %5497 = vmatpush1.msra.mxu0 0.0
    %5498 = vmatprep.subr.mxu0 0.0
    %5499 = vmatpush1.msra.mxu0 0.0
    %5500 = vmatprep.subr.mxu0 0.0
    %5501 = vmatpush1.msra.mxu0 0.0
    %5502 = vmatprep.subr.mxu0 0.0
    %5503 = vmatpush1.msra.mxu0 0.0
    %5504 = vmatprep.subr.mxu0 0.0
    %5505 = vmatpush1.msra.mxu0 0.0
    %5506 = vmatprep.subr.mxu0 0.0
    %5507 = vmatpush1.msra.mxu0 0.0
    %5508 = vmatprep.subr.mxu0 0.0
    %5509 = vmatpush1.msra.mxu0 0.0
    %5510 = vmatprep.subr.mxu0 0.0
    %5511 = vmatpush1.msra.mxu0 0.0
    %5512 = vmatprep.subr.mxu0 0.0
    %5513 = vmatpush1.msra.mxu0 0.0
    %5514 = vmatprep.subr.mxu0 0.0
    %5515 = vmatpush1.msra.mxu0 0.0
    %5516 = vmatprep.mubr.f32.mxu0 0.0
    %v5517 = vand.u32 %v5446, 4294901760
    %v5518 = vsub.f32 %v5446, %v5517
    %v5519 = vand.u32 %v5518, 4294901760
    %v5520 = vsub.f32 %v5518, %v5519
    %v5521 = vand.u32 %v5520, 4294901760
    %5522 = vmatmul.mubr.f32.gmra.mrb[0].mxu0 %v5521
    %v5523 = vpop.f32.mrb[0].mxu0
    %v5524 = vadd.f32 0.0, %v5523
    %v5525 = vpop.f32.mrb[0].mxu0
    %5526 = vmatprep.mubr.f32.mxu0 0.0
    %v5527 = vand.u32 %v5449, 4294901760
    %v5528 = vsub.f32 %v5449, %v5527
    %v5529 = vand.u32 %v5528, 4294901760
    %v5530 = vsub.f32 %v5528, %v5529
    %v5531 = vand.u32 %v5530, 4294901760
    %5532 = vmatmul.mubr.f32.gmra.mrb[0].mxu0 %v5531
    %v5533 = vpop.f32.mrb[0].mxu0
    %v5534 = vadd.f32 0.0, %v5533
    %v5535 = vpop.f32.mrb[0].mxu0
    %5536 = vdwg.mxu0
    %5537 = vmatprep.subr.mxu0 0.0
    %v5538 = vand.u32 %v1781, 4294901760
    %v5539 = vsub.f32 %v1781, %v5538
    %v5540 = vand.u32 %v5539, 4294901760
    %v5541 = vsub.f32 %v5539, %v5540
    %v5542 = vand.u32 %v5541, 4294901760
    %5543 = vmatpush1.msra.mxu0 %v5542
    %5544 = vmatprep.subr.mxu0 0.0
    %5545 = vmatpush1.msra.mxu0 0.0
    %5546 = vmatprep.subr.mxu0 0.0
    %5547 = vmatpush1.msra.mxu0 0.0
    %5548 = vmatprep.subr.mxu0 0.0
    %5549 = vmatpush1.msra.mxu0 0.0
    %5550 = vmatprep.subr.mxu0 0.0
    %5551 = vmatpush1.msra.mxu0 0.0
    %5552 = vmatprep.subr.mxu0 0.0
    %5553 = vmatpush1.msra.mxu0 0.0
    %5554 = vmatprep.subr.mxu0 0.0
    %5555 = vmatpush1.msra.mxu0 0.0
    %5556 = vmatprep.subr.mxu0 0.0
    %5557 = vmatpush1.msra.mxu0 0.0
    %5558 = vmatprep.subr.mxu0 0.0
    %5559 = vmatpush1.msra.mxu0 0.0
    %5560 = vmatprep.subr.mxu0 0.0
    %5561 = vmatpush1.msra.mxu0 0.0
    %5562 = vmatprep.subr.mxu0 0.0
    %5563 = vmatpush1.msra.mxu0 0.0
    %5564 = vmatprep.subr.mxu0 0.0
    %5565 = vmatpush1.msra.mxu0 0.0
    %5566 = vmatprep.subr.mxu0 0.0
    %5567 = vmatpush1.msra.mxu0 0.0
    %5568 = vmatprep.subr.mxu0 0.0
    %5569 = vmatpush1.msra.mxu0 0.0
    %5570 = vmatprep.subr.mxu0 0.0
    %5571 = vmatpush1.msra.mxu0 0.0
    %5572 = vmatprep.subr.mxu0 0.0
    %5573 = vmatpush1.msra.mxu0 0.0
    %5574 = vmatprep.subr.mxu0 0.0
    %5575 = vmatpush1.msra.mxu0 0.0
    %5576 = vmatprep.subr.mxu0 0.0
    %5577 = vmatpush1.msra.mxu0 0.0
    %5578 = vmatprep.subr.mxu0 0.0
    %5579 = vmatpush1.msra.mxu0 0.0
    %5580 = vmatprep.subr.mxu0 0.0
    %5581 = vmatpush1.msra.mxu0 0.0
    %5582 = vmatprep.subr.mxu0 0.0
    %5583 = vmatpush1.msra.mxu0 0.0
    %5584 = vmatprep.subr.mxu0 0.0
    %5585 = vmatpush1.msra.mxu0 0.0
    %5586 = vmatprep.subr.mxu0 0.0
    %5587 = vmatpush1.msra.mxu0 0.0
    %5588 = vmatprep.subr.mxu0 0.0
    %5589 = vmatpush1.msra.mxu0 0.0
    %5590 = vmatprep.subr.mxu0 0.0
    %5591 = vmatpush1.msra.mxu0 0.0
    %5592 = vmatprep.subr.mxu0 0.0
    %5593 = vmatpush1.msra.mxu0 0.0
    %5594 = vmatprep.subr.mxu0 0.0
    %5595 = vmatpush1.msra.mxu0 0.0
    %5596 = vmatprep.subr.mxu0 0.0
    %5597 = vmatpush1.msra.mxu0 0.0
    %5598 = vmatprep.subr.mxu0 0.0
    %5599 = vmatpush1.msra.mxu0 0.0
    %5600 = vmatprep.subr.mxu0 0.0
    %5601 = vmatpush1.msra.mxu0 0.0
    %5602 = vmatprep.subr.mxu0 0.0
    %5603 = vmatpush1.msra.mxu0 0.0
    %5604 = vmatprep.subr.mxu0 0.0
    %5605 = vmatpush1.msra.mxu0 0.0
    %5606 = vmatprep.mubr.f32.mxu0 0.0
    %v5607 = vand.u32 %v5446, 4294901760
    %5608 = vmatmul.mubr.f32.gmra.mrb[0].mxu0 %v5607
    %v5609 = vpop.f32.mrb[0].mxu0
    %v5610 = vadd.f32 %v5524, %v5609
    %v5611 = vpop.f32.mrb[0].mxu0
    %5612 = vmatprep.mubr.f32.mxu0 0.0
    %v5613 = vand.u32 %v5449, 4294901760
    %5614 = vmatmul.mubr.f32.gmra.mrb[0].mxu0 %v5613
    %v5615 = vpop.f32.mrb[0].mxu0
    %v5616 = vadd.f32 %v5534, %v5615
    %v5617 = vpop.f32.mrb[0].mxu0
    %5618 = vdwg.mxu0
    %5619 = vmatprep.subr.mxu0 0.0
    %v5620 = vand.u32 %v1781, 4294901760
    %v5621 = vsub.f32 %v1781, %v5620
    %5622 = vmatpush1.msra.mxu0 %v5621
    %5623 = vmatprep.subr.mxu0 0.0
    %5624 = vmatpush1.msra.mxu0 0.0
    %5625 = vmatprep.subr.mxu0 0.0
    %5626 = vmatpush1.msra.mxu0 0.0
    %5627 = vmatprep.subr.mxu0 0.0
    %5628 = vmatpush1.msra.mxu0 0.0
    %5629 = vmatprep.subr.mxu0 0.0
    %5630 = vmatpush1.msra.mxu0 0.0
    %5631 = vmatprep.subr.mxu0 0.0
    %5632 = vmatpush1.msra.mxu0 0.0
    %5633 = vmatprep.subr.mxu0 0.0
    %5634 = vmatpush1.msra.mxu0 0.0
    %5635 = vmatprep.subr.mxu0 0.0
    %5636 = vmatpush1.msra.mxu0 0.0
    %5637 = vmatprep.subr.mxu0 0.0
    %5638 = vmatpush1.msra.mxu0 0.0
    %5639 = vmatprep.subr.mxu0 0.0
    %5640 = vmatpush1.msra.mxu0 0.0
    %5641 = vmatprep.subr.mxu0 0.0
    %5642 = vmatpush1.msra.mxu0 0.0
    %5643 = vmatprep.subr.mxu0 0.0
    %5644 = vmatpush1.msra.mxu0 0.0
    %5645 = vmatprep.subr.mxu0 0.0
    %5646 = vmatpush1.msra.mxu0 0.0
    %5647 = vmatprep.subr.mxu0 0.0
    %5648 = vmatpush1.msra.mxu0 0.0
    %5649 = vmatprep.subr.mxu0 0.0
    %5650 = vmatpush1.msra.mxu0 0.0
    %5651 = vmatprep.subr.mxu0 0.0
    %5652 = vmatpush1.msra.mxu0 0.0
    %5653 = vmatprep.subr.mxu0 0.0
    %5654 = vmatpush1.msra.mxu0 0.0
    %5655 = vmatprep.subr.mxu0 0.0
    %5656 = vmatpush1.msra.mxu0 0.0
    %5657 = vmatprep.subr.mxu0 0.0
    %5658 = vmatpush1.msra.mxu0 0.0
    %5659 = vmatprep.subr.mxu0 0.0
    %5660 = vmatpush1.msra.mxu0 0.0
    %5661 = vmatprep.subr.mxu0 0.0
    %5662 = vmatpush1.msra.mxu0 0.0
    %5663 = vmatprep.subr.mxu0 0.0
    %5664 = vmatpush1.msra.mxu0 0.0
    %5665 = vmatprep.subr.mxu0 0.0
    %5666 = vmatpush1.msra.mxu0 0.0
    %5667 = vmatprep.subr.mxu0 0.0
    %5668 = vmatpush1.msra.mxu0 0.0
    %5669 = vmatprep.subr.mxu0 0.0
    %5670 = vmatpush1.msra.mxu0 0.0
    %5671 = vmatprep.subr.mxu0 0.0
    %5672 = vmatpush1.msra.mxu0 0.0
    %5673 = vmatprep.subr.mxu0 0.0
    %5674 = vmatpush1.msra.mxu0 0.0
    %5675 = vmatprep.subr.mxu0 0.0
    %5676 = vmatpush1.msra.mxu0 0.0
    %5677 = vmatprep.subr.mxu0 0.0
    %5678 = vmatpush1.msra.mxu0 0.0
    %5679 = vmatprep.subr.mxu0 0.0
    %5680 = vmatpush1.msra.mxu0 0.0
    %5681 = vmatprep.subr.mxu0 0.0
    %5682 = vmatpush1.msra.mxu0 0.0
    %5683 = vmatprep.subr.mxu0 0.0
    %5684 = vmatpush1.msra.mxu0 0.0
    %5685 = vmatprep.mubr.f32.mxu0 0.0
    %v5686 = vand.u32 %v5446, 4294901760
    %v5687 = vsub.f32 %v5446, %v5686
    %5688 = vmatmul.mubr.f32.gmra.mrb[0].mxu0 %v5687
    %v5689 = vpop.f32.mrb[0].mxu0
    %v5690 = vadd.f32 %v5610, %v5689
    %v5691 = vpop.f32.mrb[0].mxu0
    %5692 = vmatprep.mubr.f32.mxu0 0.0
    %v5693 = vand.u32 %v5449, 4294901760
    %v5694 = vsub.f32 %v5449, %v5693
    %5695 = vmatmul.mubr.f32.gmra.mrb[0].mxu0 %v5694
    %v5696 = vpop.f32.mrb[0].mxu0
    %v5697 = vadd.f32 %v5616, %v5696
    %v5698 = vpop.f32.mrb[0].mxu0
    %5699 = vdwg.mxu0
    %5700 = vmatprep.subr.mxu0 0.0
    %v5701 = vand.u32 %v1781, 4294901760
    %5702 = vmatpush1.msra.mxu0 %v5701
    %5703 = vmatprep.subr.mxu0 0.0
    %5704 = vmatpush1.msra.mxu0 0.0
    %5705 = vmatprep.subr.mxu0 0.0
    %5706 = vmatpush1.msra.mxu0 0.0
    %5707 = vmatprep.subr.mxu0 0.0
    %5708 = vmatpush1.msra.mxu0 0.0
    %5709 = vmatprep.subr.mxu0 0.0
    %5710 = vmatpush1.msra.mxu0 0.0
    %5711 = vmatprep.subr.mxu0 0.0
    %5712 = vmatpush1.msra.mxu0 0.0
    %5713 = vmatprep.subr.mxu0 0.0
    %5714 = vmatpush1.msra.mxu0 0.0
    %5715 = vmatprep.subr.mxu0 0.0
    %5716 = vmatpush1.msra.mxu0 0.0
    %5717 = vmatprep.subr.mxu0 0.0
    %5718 = vmatpush1.msra.mxu0 0.0
    %5719 = vmatprep.subr.mxu0 0.0
    %5720 = vmatpush1.msra.mxu0 0.0
    %5721 = vmatprep.subr.mxu0 0.0
    %5722 = vmatpush1.msra.mxu0 0.0
    %5723 = vmatprep.subr.mxu0 0.0
    %5724 = vmatpush1.msra.mxu0 0.0
    %5725 = vmatprep.subr.mxu0 0.0
    %5726 = vmatpush1.msra.mxu0 0.0
    %5727 = vmatprep.subr.mxu0 0.0
    %5728 = vmatpush1.msra.mxu0 0.0
    %5729 = vmatprep.subr.mxu0 0.0
    %5730 = vmatpush1.msra.mxu0 0.0
    %5731 = vmatprep.subr.mxu0 0.0
    %5732 = vmatpush1.msra.mxu0 0.0
    %5733 = vmatprep.subr.mxu0 0.0
    %5734 = vmatpush1.msra.mxu0 0.0
    %5735 = vmatprep.subr.mxu0 0.0
    %5736 = vmatpush1.msra.mxu0 0.0
    %5737 = vmatprep.subr.mxu0 0.0
    %5738 = vmatpush1.msra.mxu0 0.0
    %5739 = vmatprep.subr.mxu0 0.0
    %5740 = vmatpush1.msra.mxu0 0.0
    %5741 = vmatprep.subr.mxu0 0.0
    %5742 = vmatpush1.msra.mxu0 0.0
    %5743 = vmatprep.subr.mxu0 0.0
    %5744 = vmatpush1.msra.mxu0 0.0
    %5745 = vmatprep.subr.mxu0 0.0
    %5746 = vmatpush1.msra.mxu0 0.0
    %5747 = vmatprep.subr.mxu0 0.0
    %5748 = vmatpush1.msra.mxu0 0.0
    %5749 = vmatprep.subr.mxu0 0.0
    %5750 = vmatpush1.msra.mxu0 0.0
    %5751 = vmatprep.subr.mxu0 0.0
    %5752 = vmatpush1.msra.mxu0 0.0
    %5753 = vmatprep.subr.mxu0 0.0
    %5754 = vmatpush1.msra.mxu0 0.0
    %5755 = vmatprep.subr.mxu0 0.0
    %5756 = vmatpush1.msra.mxu0 0.0
    %5757 = vmatprep.subr.mxu0 0.0
    %5758 = vmatpush1.msra.mxu0 0.0
    %5759 = vmatprep.subr.mxu0 0.0
    %5760 = vmatpush1.msra.mxu0 0.0
    %5761 = vmatprep.subr.mxu0 0.0
    %5762 = vmatpush1.msra.mxu0 0.0
    %5763 = vmatprep.subr.mxu0 0.0
    %5764 = vmatpush1.msra.mxu0 0.0
    %5765 = vmatprep.mubr.f32.mxu0 0.0
    %v5766 = vand.u32 %v5446, 4294901760
    %v5767 = vsub.f32 %v5446, %v5766
    %v5768 = vand.u32 %v5767, 4294901760
    %5769 = vmatmul.mubr.f32.gmra.mrb[0].mxu0 %v5768
    %v5770 = vpop.f32.mrb[0].mxu0
    %v5771 = vadd.f32 %v5690, %v5770
    %v5772 = vpop.f32.mrb[0].mxu0
    %5773 = vmatprep.mubr.f32.mxu0 0.0
    %v5774 = vand.u32 %v5449, 4294901760
    %v5775 = vsub.f32 %v5449, %v5774
    %v5776 = vand.u32 %v5775, 4294901760
    %5777 = vmatmul.mubr.f32.gmra.mrb[0].mxu0 %v5776
    %v5778 = vpop.f32.mrb[0].mxu0
    %v5779 = vadd.f32 %v5697, %v5778
    %v5780 = vpop.f32.mrb[0].mxu0
    %5781 = vdwg.mxu0
    %5782 = vmatprep.subr.mxu0 0.0
    %v5783 = vand.u32 %v1781, 4294901760
    %v5784 = vsub.f32 %v1781, %v5783
    %v5785 = vand.u32 %v5784, 4294901760
    %5786 = vmatpush1.msra.mxu0 %v5785
    %5787 = vmatprep.subr.mxu0 0.0
    %5788 = vmatpush1.msra.mxu0 0.0
    %5789 = vmatprep.subr.mxu0 0.0
    %5790 = vmatpush1.msra.mxu0 0.0
    %5791 = vmatprep.subr.mxu0 0.0
    %5792 = vmatpush1.msra.mxu0 0.0
    %5793 = vmatprep.subr.mxu0 0.0
    %5794 = vmatpush1.msra.mxu0 0.0
    %5795 = vmatprep.subr.mxu0 0.0
    %5796 = vmatpush1.msra.mxu0 0.0
    %5797 = vmatprep.subr.mxu0 0.0
    %5798 = vmatpush1.msra.mxu0 0.0
    %5799 = vmatprep.subr.mxu0 0.0
    %5800 = vmatpush1.msra.mxu0 0.0
    %5801 = vmatprep.subr.mxu0 0.0
    %5802 = vmatpush1.msra.mxu0 0.0
    %5803 = vmatprep.subr.mxu0 0.0
    %5804 = vmatpush1.msra.mxu0 0.0
    %5805 = vmatprep.subr.mxu0 0.0
    %5806 = vmatpush1.msra.mxu0 0.0
    %5807 = vmatprep.subr.mxu0 0.0
    %5808 = vmatpush1.msra.mxu0 0.0
    %5809 = vmatprep.subr.mxu0 0.0
    %5810 = vmatpush1.msra.mxu0 0.0
    %5811 = vmatprep.subr.mxu0 0.0
    %5812 = vmatpush1.msra.mxu0 0.0
    %5813 = vmatprep.subr.mxu0 0.0
    %5814 = vmatpush1.msra.mxu0 0.0
    %5815 = vmatprep.subr.mxu0 0.0
    %5816 = vmatpush1.msra.mxu0 0.0
    %5817 = vmatprep.subr.mxu0 0.0
    %5818 = vmatpush1.msra.mxu0 0.0
    %5819 = vmatprep.subr.mxu0 0.0
    %5820 = vmatpush1.msra.mxu0 0.0
    %5821 = vmatprep.subr.mxu0 0.0
    %5822 = vmatpush1.msra.mxu0 0.0
    %5823 = vmatprep.subr.mxu0 0.0
    %5824 = vmatpush1.msra.mxu0 0.0
    %5825 = vmatprep.subr.mxu0 0.0
    %5826 = vmatpush1.msra.mxu0 0.0
    %5827 = vmatprep.subr.mxu0 0.0
    %5828 = vmatpush1.msra.mxu0 0.0
    %5829 = vmatprep.subr.mxu0 0.0
    %5830 = vmatpush1.msra.mxu0 0.0
    %5831 = vmatprep.subr.mxu0 0.0
    %5832 = vmatpush1.msra.mxu0 0.0
    %5833 = vmatprep.subr.mxu0 0.0
    %5834 = vmatpush1.msra.mxu0 0.0
    %5835 = vmatprep.subr.mxu0 0.0
    %5836 = vmatpush1.msra.mxu0 0.0
    %5837 = vmatprep.subr.mxu0 0.0
    %5838 = vmatpush1.msra.mxu0 0.0
    %5839 = vmatprep.subr.mxu0 0.0
    %5840 = vmatpush1.msra.mxu0 0.0
    %5841 = vmatprep.subr.mxu0 0.0
    %5842 = vmatpush1.msra.mxu0 0.0
    %5843 = vmatprep.subr.mxu0 0.0
    %5844 = vmatpush1.msra.mxu0 0.0
    %5845 = vmatprep.subr.mxu0 0.0
    %5846 = vmatpush1.msra.mxu0 0.0
    %5847 = vmatprep.subr.mxu0 0.0
    %5848 = vmatpush1.msra.mxu0 0.0
    %5849 = vmatprep.mubr.f32.mxu0 0.0
    %v5850 = vand.u32 %v5446, 4294901760
    %5851 = vmatmul.mubr.f32.gmra.mrb[0].mxu0 %v5850
    %v5852 = vpop.f32.mrb[0].mxu0
    %v5853 = vadd.f32 %v5771, %v5852
    %v5854 = vpop.f32.mrb[0].mxu0
    %5855 = vmatprep.mubr.f32.mxu0 0.0
    %v5856 = vand.u32 %v5449, 4294901760
    %5857 = vmatmul.mubr.f32.gmra.mrb[0].mxu0 %v5856
    %v5858 = vpop.f32.mrb[0].mxu0
    %v5859 = vadd.f32 %v5779, %v5858
    %v5860 = vpop.f32.mrb[0].mxu0
    %5861 = vdwg.mxu0
    %5862 = vmatprep.subr.mxu0 0.0
    %v5863 = vand.u32 %v1781, 4294901760
    %5864 = vmatpush1.msra.mxu0 %v5863
    %5865 = vmatprep.subr.mxu0 0.0
    %5866 = vmatpush1.msra.mxu0 0.0
    %5867 = vmatprep.subr.mxu0 0.0
    %5868 = vmatpush1.msra.mxu0 0.0
    %5869 = vmatprep.subr.mxu0 0.0
    %5870 = vmatpush1.msra.mxu0 0.0
    %5871 = vmatprep.subr.mxu0 0.0
    %5872 = vmatpush1.msra.mxu0 0.0
    %5873 = vmatprep.subr.mxu0 0.0
    %5874 = vmatpush1.msra.mxu0 0.0
    %5875 = vmatprep.subr.mxu0 0.0
    %5876 = vmatpush1.msra.mxu0 0.0
    %5877 = vmatprep.subr.mxu0 0.0
    %5878 = vmatpush1.msra.mxu0 0.0
    %5879 = vmatprep.subr.mxu0 0.0
    %5880 = vmatpush1.msra.mxu0 0.0
    %5881 = vmatprep.subr.mxu0 0.0
    %5882 = vmatpush1.msra.mxu0 0.0
    %5883 = vmatprep.subr.mxu0 0.0
    %5884 = vmatpush1.msra.mxu0 0.0
    %5885 = vmatprep.subr.mxu0 0.0
    %5886 = vmatpush1.msra.mxu0 0.0
    %5887 = vmatprep.subr.mxu0 0.0
    %5888 = vmatpush1.msra.mxu0 0.0
    %5889 = vmatprep.subr.mxu0 0.0
    %5890 = vmatpush1.msra.mxu0 0.0
    %5891 = vmatprep.subr.mxu0 0.0
    %5892 = vmatpush1.msra.mxu0 0.0
    %5893 = vmatprep.subr.mxu0 0.0
    %5894 = vmatpush1.msra.mxu0 0.0
    %5895 = vmatprep.subr.mxu0 0.0
    %5896 = vmatpush1.msra.mxu0 0.0
    %5897 = vmatprep.subr.mxu0 0.0
    %5898 = vmatpush1.msra.mxu0 0.0
    %5899 = vmatprep.subr.mxu0 0.0
    %5900 = vmatpush1.msra.mxu0 0.0
    %5901 = vmatprep.subr.mxu0 0.0
    %5902 = vmatpush1.msra.mxu0 0.0
    %5903 = vmatprep.subr.mxu0 0.0
    %5904 = vmatpush1.msra.mxu0 0.0
    %5905 = vmatprep.subr.mxu0 0.0
    %5906 = vmatpush1.msra.mxu0 0.0
    %5907 = vmatprep.subr.mxu0 0.0
    %5908 = vmatpush1.msra.mxu0 0.0
    %5909 = vmatprep.subr.mxu0 0.0
    %5910 = vmatpush1.msra.mxu0 0.0
    %5911 = vmatprep.subr.mxu0 0.0
    %5912 = vmatpush1.msra.mxu0 0.0
    %5913 = vmatprep.subr.mxu0 0.0
    %5914 = vmatpush1.msra.mxu0 0.0
    %5915 = vmatprep.subr.mxu0 0.0
    %5916 = vmatpush1.msra.mxu0 0.0
    %5917 = vmatprep.subr.mxu0 0.0
    %5918 = vmatpush1.msra.mxu0 0.0
    %5919 = vmatprep.subr.mxu0 0.0
    %5920 = vmatpush1.msra.mxu0 0.0
    %5921 = vmatprep.subr.mxu0 0.0
    %5922 = vmatpush1.msra.mxu0 0.0
    %5923 = vmatprep.subr.mxu0 0.0
    %5924 = vmatpush1.msra.mxu0 0.0
    %5925 = vmatprep.subr.mxu0 0.0
    %5926 = vmatpush1.msra.mxu0 0.0
    %5927 = vmatprep.mubr.f32.mxu0 0.0
    %v5928 = vand.u32 %v5446, 4294901760
    %5929 = vmatmul.mubr.f32.gmra.mrb[0].mxu0 %v5928
    %v5930 = vpop.f32.mrb[0].mxu0
    %v5931 = vadd.f32 %v5853, %v5930
    %v5932 = vpop.f32.mrb[0].mxu0
    %5933 = vmatprep.mubr.f32.mxu0 0.0
    %v5934 = vand.u32 %v5449, 4294901760
    %5935 = vmatmul.mubr.f32.gmra.mrb[0].mxu0 %v5934
    %v5936 = vpop.f32.mrb[0].mxu0
    %v5937 = vadd.f32 %v5859, %v5936
    %v5938 = vpop.f32.mrb[0].mxu0
    %5939 = vdwg.mxu0
    %v5941 = vsel %vm1784, %v3157, 0
    %v5944 = vsel %vm1784, %v3606, 0
    %5946 = vmatprep.subr.mxu0 0.0
    %v5947 = vand.u32 %v1780, 4294901760
    %5948 = vmatpush1.msra.mxu0 %v5947
    %5949 = vmatprep.subr.mxu0 0.0
    %5950 = vmatpush1.msra.mxu0 0.0
    %5951 = vmatprep.subr.mxu0 0.0
    %5952 = vmatpush1.msra.mxu0 0.0
    %5953 = vmatprep.subr.mxu0 0.0
    %5954 = vmatpush1.msra.mxu0 0.0
    %5955 = vmatprep.subr.mxu0 0.0
    %5956 = vmatpush1.msra.mxu0 0.0
    %5957 = vmatprep.subr.mxu0 0.0
    %5958 = vmatpush1.msra.mxu0 0.0
    %5959 = vmatprep.subr.mxu0 0.0
    %5960 = vmatpush1.msra.mxu0 0.0
    %5961 = vmatprep.subr.mxu0 0.0
    %5962 = vmatpush1.msra.mxu0 0.0
    %5963 = vmatprep.subr.mxu0 0.0
    %5964 = vmatpush1.msra.mxu0 0.0
    %5965 = vmatprep.subr.mxu0 0.0
    %5966 = vmatpush1.msra.mxu0 0.0
    %5967 = vmatprep.subr.mxu0 0.0
    %5968 = vmatpush1.msra.mxu0 0.0
    %5969 = vmatprep.subr.mxu0 0.0
    %5970 = vmatpush1.msra.mxu0 0.0
    %5971 = vmatprep.subr.mxu0 0.0
    %5972 = vmatpush1.msra.mxu0 0.0
    %5973 = vmatprep.subr.mxu0 0.0
    %5974 = vmatpush1.msra.mxu0 0.0
    %5975 = vmatprep.subr.mxu0 0.0
    %5976 = vmatpush1.msra.mxu0 0.0
    %5977 = vmatprep.subr.mxu0 0.0
    %5978 = vmatpush1.msra.mxu0 0.0
    %5979 = vmatprep.subr.mxu0 0.0
    %5980 = vmatpush1.msra.mxu0 0.0
    %5981 = vmatprep.subr.mxu0 0.0
    %5982 = vmatpush1.msra.mxu0 0.0
    %5983 = vmatprep.subr.mxu0 0.0
    %5984 = vmatpush1.msra.mxu0 0.0
    %5985 = vmatprep.subr.mxu0 0.0
    %5986 = vmatpush1.msra.mxu0 0.0
    %5987 = vmatprep.subr.mxu0 0.0
    %5988 = vmatpush1.msra.mxu0 0.0
    %5989 = vmatprep.subr.mxu0 0.0
    %5990 = vmatpush1.msra.mxu0 0.0
    %5991 = vmatprep.subr.mxu0 0.0
    %5992 = vmatpush1.msra.mxu0 0.0
    %5993 = vmatprep.subr.mxu0 0.0
    %5994 = vmatpush1.msra.mxu0 0.0
    %5995 = vmatprep.subr.mxu0 0.0
    %5996 = vmatpush1.msra.mxu0 0.0
    %5997 = vmatprep.subr.mxu0 0.0
    %5998 = vmatpush1.msra.mxu0 0.0
    %5999 = vmatprep.subr.mxu0 0.0
    %6000 = vmatpush1.msra.mxu0 0.0
    %6001 = vmatprep.subr.mxu0 0.0
    %6002 = vmatpush1.msra.mxu0 0.0
    %6003 = vmatprep.subr.mxu0 0.0
    %6004 = vmatpush1.msra.mxu0 0.0
    %6005 = vmatprep.subr.mxu0 0.0
    %6006 = vmatpush1.msra.mxu0 0.0
    %6007 = vmatprep.subr.mxu0 0.0
    %6008 = vmatpush1.msra.mxu0 0.0
    %6009 = vmatprep.subr.mxu0 0.0
    %6010 = vmatpush1.msra.mxu0 0.0
    %6011 = vmatprep.mubr.f32.mxu0 0.0
    %v6012 = vand.u32 %v5941, 4294901760
    %v6013 = vsub.f32 %v5941, %v6012
    %v6014 = vand.u32 %v6013, 4294901760
    %v6015 = vsub.f32 %v6013, %v6014
    %v6016 = vand.u32 %v6015, 4294901760
    %6017 = vmatmul.mubr.f32.gmra.mrb[0].mxu0 %v6016
    %v6018 = vpop.f32.mrb[0].mxu0
    %v6019 = vadd.f32 %v5931, %v6018
    %v6020 = vpop.f32.mrb[0].mxu0
    %6021 = vmatprep.mubr.f32.mxu0 0.0
    %v6022 = vand.u32 %v5944, 4294901760
    %v6023 = vsub.f32 %v5944, %v6022
    %v6024 = vand.u32 %v6023, 4294901760
    %v6025 = vsub.f32 %v6023, %v6024
    %v6026 = vand.u32 %v6025, 4294901760
    %6027 = vmatmul.mubr.f32.gmra.mrb[0].mxu0 %v6026
    %v6028 = vpop.f32.mrb[0].mxu0
    %v6029 = vadd.f32 %v5937, %v6028
    %v6030 = vpop.f32.mrb[0].mxu0
    %6031 = vdwg.mxu0
    %6032 = vmatprep.subr.mxu0 0.0
    %v6033 = vand.u32 %v1780, 4294901760
    %v6034 = vsub.f32 %v1780, %v6033
    %v6035 = vand.u32 %v6034, 4294901760
    %v6036 = vsub.f32 %v6034, %v6035
    %v6037 = vand.u32 %v6036, 4294901760
    %6038 = vmatpush1.msra.mxu0 %v6037
    %6039 = vmatprep.subr.mxu0 0.0
    %6040 = vmatpush1.msra.mxu0 0.0
    %6041 = vmatprep.subr.mxu0 0.0
    %6042 = vmatpush1.msra.mxu0 0.0
    %6043 = vmatprep.subr.mxu0 0.0
    %6044 = vmatpush1.msra.mxu0 0.0
    %6045 = vmatprep.subr.mxu0 0.0
    %6046 = vmatpush1.msra.mxu0 0.0
    %6047 = vmatprep.subr.mxu0 0.0
    %6048 = vmatpush1.msra.mxu0 0.0
    %6049 = vmatprep.subr.mxu0 0.0
    %6050 = vmatpush1.msra.mxu0 0.0
    %6051 = vmatprep.subr.mxu0 0.0
    %6052 = vmatpush1.msra.mxu0 0.0
    %6053 = vmatprep.subr.mxu0 0.0
    %6054 = vmatpush1.msra.mxu0 0.0
    %6055 = vmatprep.subr.mxu0 0.0
    %6056 = vmatpush1.msra.mxu0 0.0
    %6057 = vmatprep.subr.mxu0 0.0
    %6058 = vmatpush1.msra.mxu0 0.0
    %6059 = vmatprep.subr.mxu0 0.0
    %6060 = vmatpush1.msra.mxu0 0.0
    %6061 = vmatprep.subr.mxu0 0.0
    %6062 = vmatpush1.msra.mxu0 0.0
    %6063 = vmatprep.subr.mxu0 0.0
    %6064 = vmatpush1.msra.mxu0 0.0
    %6065 = vmatprep.subr.mxu0 0.0
    %6066 = vmatpush1.msra.mxu0 0.0
    %6067 = vmatprep.subr.mxu0 0.0
    %6068 = vmatpush1.msra.mxu0 0.0
    %6069 = vmatprep.subr.mxu0 0.0
    %6070 = vmatpush1.msra.mxu0 0.0
    %6071 = vmatprep.subr.mxu0 0.0
    %6072 = vmatpush1.msra.mxu0 0.0
    %6073 = vmatprep.subr.mxu0 0.0
    %6074 = vmatpush1.msra.mxu0 0.0
    %6075 = vmatprep.subr.mxu0 0.0
    %6076 = vmatpush1.msra.mxu0 0.0
    %6077 = vmatprep.subr.mxu0 0.0
    %6078 = vmatpush1.msra.mxu0 0.0
    %6079 = vmatprep.subr.mxu0 0.0
    %6080 = vmatpush1.msra.mxu0 0.0
    %6081 = vmatprep.subr.mxu0 0.0
    %6082 = vmatpush1.msra.mxu0 0.0
    %6083 = vmatprep.subr.mxu0 0.0
    %6084 = vmatpush1.msra.mxu0 0.0
    %6085 = vmatprep.subr.mxu0 0.0
    %6086 = vmatpush1.msra.mxu0 0.0
    %6087 = vmatprep.subr.mxu0 0.0
    %6088 = vmatpush1.msra.mxu0 0.0
    %6089 = vmatprep.subr.mxu0 0.0
    %6090 = vmatpush1.msra.mxu0 0.0
    %6091 = vmatprep.subr.mxu0 0.0
    %6092 = vmatpush1.msra.mxu0 0.0
    %6093 = vmatprep.subr.mxu0 0.0
    %6094 = vmatpush1.msra.mxu0 0.0
    %6095 = vmatprep.subr.mxu0 0.0
    %6096 = vmatpush1.msra.mxu0 0.0
    %6097 = vmatprep.subr.mxu0 0.0
    %6098 = vmatpush1.msra.mxu0 0.0
    %6099 = vmatprep.subr.mxu0 0.0
    %6100 = vmatpush1.msra.mxu0 0.0
    %6101 = vmatprep.mubr.f32.mxu0 0.0
    %v6102 = vand.u32 %v5941, 4294901760
    %6103 = vmatmul.mubr.f32.gmra.mrb[0].mxu0 %v6102
    %v6104 = vpop.f32.mrb[0].mxu0
    %v6105 = vadd.f32 %v6019, %v6104
    %v6106 = vpop.f32.mrb[0].mxu0
    %6107 = vmatprep.mubr.f32.mxu0 0.0
    %v6108 = vand.u32 %v5944, 4294901760
    %6109 = vmatmul.mubr.f32.gmra.mrb[0].mxu0 %v6108
    %v6110 = vpop.f32.mrb[0].mxu0
    %v6111 = vadd.f32 %v6029, %v6110
    %v6112 = vpop.f32.mrb[0].mxu0
    %6113 = vdwg.mxu0
    %6114 = vmatprep.subr.mxu0 0.0
    %v6115 = vand.u32 %v1780, 4294901760
    %v6116 = vsub.f32 %v1780, %v6115
    %6117 = vmatpush1.msra.mxu0 %v6116
    %6118 = vmatprep.subr.mxu0 0.0
    %6119 = vmatpush1.msra.mxu0 0.0
    %6120 = vmatprep.subr.mxu0 0.0
    %6121 = vmatpush1.msra.mxu0 0.0
    %6122 = vmatprep.subr.mxu0 0.0
    %6123 = vmatpush1.msra.mxu0 0.0
    %6124 = vmatprep.subr.mxu0 0.0
    %6125 = vmatpush1.msra.mxu0 0.0
    %6126 = vmatprep.subr.mxu0 0.0
    %6127 = vmatpush1.msra.mxu0 0.0
    %6128 = vmatprep.subr.mxu0 0.0
    %6129 = vmatpush1.msra.mxu0 0.0
    %6130 = vmatprep.subr.mxu0 0.0
    %6131 = vmatpush1.msra.mxu0 0.0
    %6132 = vmatprep.subr.mxu0 0.0
    %6133 = vmatpush1.msra.mxu0 0.0
    %6134 = vmatprep.subr.mxu0 0.0
    %6135 = vmatpush1.msra.mxu0 0.0
    %6136 = vmatprep.subr.mxu0 0.0
    %6137 = vmatpush1.msra.mxu0 0.0
    %6138 = vmatprep.subr.mxu0 0.0
    %6139 = vmatpush1.msra.mxu0 0.0
    %6140 = vmatprep.subr.mxu0 0.0
    %6141 = vmatpush1.msra.mxu0 0.0
    %6142 = vmatprep.subr.mxu0 0.0
    %6143 = vmatpush1.msra.mxu0 0.0
    %6144 = vmatprep.subr.mxu0 0.0
    %6145 = vmatpush1.msra.mxu0 0.0
    %6146 = vmatprep.subr.mxu0 0.0
    %6147 = vmatpush1.msra.mxu0 0.0
    %6148 = vmatprep.subr.mxu0 0.0
    %6149 = vmatpush1.msra.mxu0 0.0
    %6150 = vmatprep.subr.mxu0 0.0
    %6151 = vmatpush1.msra.mxu0 0.0
    %6152 = vmatprep.subr.mxu0 0.0
    %6153 = vmatpush1.msra.mxu0 0.0
    %6154 = vmatprep.subr.mxu0 0.0
    %6155 = vmatpush1.msra.mxu0 0.0
    %6156 = vmatprep.subr.mxu0 0.0
    %6157 = vmatpush1.msra.mxu0 0.0
    %6158 = vmatprep.subr.mxu0 0.0
    %6159 = vmatpush1.msra.mxu0 0.0
    %6160 = vmatprep.subr.mxu0 0.0
    %6161 = vmatpush1.msra.mxu0 0.0
    %6162 = vmatprep.subr.mxu0 0.0
    %6163 = vmatpush1.msra.mxu0 0.0
    %6164 = vmatprep.subr.mxu0 0.0
    %6165 = vmatpush1.msra.mxu0 0.0
    %6166 = vmatprep.subr.mxu0 0.0
    %6167 = vmatpush1.msra.mxu0 0.0
    %6168 = vmatprep.subr.mxu0 0.0
    %6169 = vmatpush1.msra.mxu0 0.0
    %6170 = vmatprep.subr.mxu0 0.0
    %6171 = vmatpush1.msra.mxu0 0.0
    %6172 = vmatprep.subr.mxu0 0.0
    %6173 = vmatpush1.msra.mxu0 0.0
    %6174 = vmatprep.subr.mxu0 0.0
    %6175 = vmatpush1.msra.mxu0 0.0
    %6176 = vmatprep.subr.mxu0 0.0
    %6177 = vmatpush1.msra.mxu0 0.0
    %6178 = vmatprep.subr.mxu0 0.0
    %6179 = vmatpush1.msra.mxu0 0.0
    %6180 = vmatprep.mubr.f32.mxu0 0.0
    %v6181 = vand.u32 %v5941, 4294901760
    %v6182 = vsub.f32 %v5941, %v6181
    %6183 = vmatmul.mubr.f32.gmra.mrb[0].mxu0 %v6182
    %v6184 = vpop.f32.mrb[0].mxu0
    %v6185 = vadd.f32 %v6105, %v6184
    %v6186 = vpop.f32.mrb[0].mxu0
    %6187 = vmatprep.mubr.f32.mxu0 0.0
    %v6188 = vand.u32 %v5944, 4294901760
    %v6189 = vsub.f32 %v5944, %v6188
    %6190 = vmatmul.mubr.f32.gmra.mrb[0].mxu0 %v6189
    %v6191 = vpop.f32.mrb[0].mxu0
    %v6192 = vadd.f32 %v6111, %v6191
    %v6193 = vpop.f32.mrb[0].mxu0
    %6194 = vdwg.mxu0
    %6195 = vmatprep.subr.mxu0 0.0
    %v6196 = vand.u32 %v1780, 4294901760
    %6197 = vmatpush1.msra.mxu0 %v6196
    %6198 = vmatprep.subr.mxu0 0.0
    %6199 = vmatpush1.msra.mxu0 0.0
    %6200 = vmatprep.subr.mxu0 0.0
    %6201 = vmatpush1.msra.mxu0 0.0
    %6202 = vmatprep.subr.mxu0 0.0
    %6203 = vmatpush1.msra.mxu0 0.0
    %6204 = vmatprep.subr.mxu0 0.0
    %6205 = vmatpush1.msra.mxu0 0.0
    %6206 = vmatprep.subr.mxu0 0.0
    %6207 = vmatpush1.msra.mxu0 0.0
    %6208 = vmatprep.subr.mxu0 0.0
    %6209 = vmatpush1.msra.mxu0 0.0
    %6210 = vmatprep.subr.mxu0 0.0
    %6211 = vmatpush1.msra.mxu0 0.0
    %6212 = vmatprep.subr.mxu0 0.0
    %6213 = vmatpush1.msra.mxu0 0.0
    %6214 = vmatprep.subr.mxu0 0.0
    %6215 = vmatpush1.msra.mxu0 0.0
    %6216 = vmatprep.subr.mxu0 0.0
    %6217 = vmatpush1.msra.mxu0 0.0
    %6218 = vmatprep.subr.mxu0 0.0
    %6219 = vmatpush1.msra.mxu0 0.0
    %6220 = vmatprep.subr.mxu0 0.0
    %6221 = vmatpush1.msra.mxu0 0.0
    %6222 = vmatprep.subr.mxu0 0.0
    %6223 = vmatpush1.msra.mxu0 0.0
    %6224 = vmatprep.subr.mxu0 0.0
    %6225 = vmatpush1.msra.mxu0 0.0
    %6226 = vmatprep.subr.mxu0 0.0
    %6227 = vmatpush1.msra.mxu0 0.0
    %6228 = vmatprep.subr.mxu0 0.0
    %6229 = vmatpush1.msra.mxu0 0.0
    %6230 = vmatprep.subr.mxu0 0.0
    %6231 = vmatpush1.msra.mxu0 0.0
    %6232 = vmatprep.subr.mxu0 0.0
    %6233 = vmatpush1.msra.mxu0 0.0
    %6234 = vmatprep.subr.mxu0 0.0
    %6235 = vmatpush1.msra.mxu0 0.0
    %6236 = vmatprep.subr.mxu0 0.0
    %6237 = vmatpush1.msra.mxu0 0.0
    %6238 = vmatprep.subr.mxu0 0.0
    %6239 = vmatpush1.msra.mxu0 0.0
    %6240 = vmatprep.subr.mxu0 0.0
    %6241 = vmatpush1.msra.mxu0 0.0
    %6242 = vmatprep.subr.mxu0 0.0
    %6243 = vmatpush1.msra.mxu0 0.0
    %6244 = vmatprep.subr.mxu0 0.0
    %6245 = vmatpush1.msra.mxu0 0.0
    %6246 = vmatprep.subr.mxu0 0.0
    %6247 = vmatpush1.msra.mxu0 0.0
    %6248 = vmatprep.subr.mxu0 0.0
    %6249 = vmatpush1.msra.mxu0 0.0
    %6250 = vmatprep.subr.mxu0 0.0
    %6251 = vmatpush1.msra.mxu0 0.0
    %6252 = vmatprep.subr.mxu0 0.0
    %6253 = vmatpush1.msra.mxu0 0.0
    %6254 = vmatprep.subr.mxu0 0.0
    %6255 = vmatpush1.msra.mxu0 0.0
    %6256 = vmatprep.subr.mxu0 0.0
    %6257 = vmatpush1.msra.mxu0 0.0
    %6258 = vmatprep.subr.mxu0 0.0
    %6259 = vmatpush1.msra.mxu0 0.0
    %6260 = vmatprep.mubr.f32.mxu0 0.0
    %v6261 = vand.u32 %v5941, 4294901760
    %v6262 = vsub.f32 %v5941, %v6261
    %v6263 = vand.u32 %v6262, 4294901760
    %6264 = vmatmul.mubr.f32.gmra.mrb[0].mxu0 %v6263
    %v6265 = vpop.f32.mrb[0].mxu0
    %v6266 = vadd.f32 %v6185, %v6265
    %v6267 = vpop.f32.mrb[0].mxu0
    %6268 = vmatprep.mubr.f32.mxu0 0.0
    %v6269 = vand.u32 %v5944, 4294901760
    %v6270 = vsub.f32 %v5944, %v6269
    %v6271 = vand.u32 %v6270, 4294901760
    %6272 = vmatmul.mubr.f32.gmra.mrb[0].mxu0 %v6271
    %v6273 = vpop.f32.mrb[0].mxu0
    %v6274 = vadd.f32 %v6192, %v6273
    %v6275 = vpop.f32.mrb[0].mxu0
    %6276 = vdwg.mxu0
    %6277 = vmatprep.subr.mxu0 0.0
    %v6278 = vand.u32 %v1780, 4294901760
    %v6279 = vsub.f32 %v1780, %v6278
    %v6280 = vand.u32 %v6279, 4294901760
    %6281 = vmatpush1.msra.mxu0 %v6280
    %6282 = vmatprep.subr.mxu0 0.0
    %6283 = vmatpush1.msra.mxu0 0.0
    %6284 = vmatprep.subr.mxu0 0.0
    %6285 = vmatpush1.msra.mxu0 0.0
    %6286 = vmatprep.subr.mxu0 0.0
    %6287 = vmatpush1.msra.mxu0 0.0
    %6288 = vmatprep.subr.mxu0 0.0
    %6289 = vmatpush1.msra.mxu0 0.0
    %6290 = vmatprep.subr.mxu0 0.0
    %6291 = vmatpush1.msra.mxu0 0.0
    %6292 = vmatprep.subr.mxu0 0.0
    %6293 = vmatpush1.msra.mxu0 0.0
    %6294 = vmatprep.subr.mxu0 0.0
    %6295 = vmatpush1.msra.mxu0 0.0
    %6296 = vmatprep.subr.mxu0 0.0
    %6297 = vmatpush1.msra.mxu0 0.0
    %6298 = vmatprep.subr.mxu0 0.0
    %6299 = vmatpush1.msra.mxu0 0.0
    %6300 = vmatprep.subr.mxu0 0.0
    %6301 = vmatpush1.msra.mxu0 0.0
    %6302 = vmatprep.subr.mxu0 0.0
    %6303 = vmatpush1.msra.mxu0 0.0
    %6304 = vmatprep.subr.mxu0 0.0
    %6305 = vmatpush1.msra.mxu0 0.0
    %6306 = vmatprep.subr.mxu0 0.0
    %6307 = vmatpush1.msra.mxu0 0.0
    %6308 = vmatprep.subr.mxu0 0.0
    %6309 = vmatpush1.msra.mxu0 0.0
    %6310 = vmatprep.subr.mxu0 0.0
    %6311 = vmatpush1.msra.mxu0 0.0
    %6312 = vmatprep.subr.mxu0 0.0
    %6313 = vmatpush1.msra.mxu0 0.0
    %6314 = vmatprep.subr.mxu0 0.0
    %6315 = vmatpush1.msra.mxu0 0.0
    %6316 = vmatprep.subr.mxu0 0.0
    %6317 = vmatpush1.msra.mxu0 0.0
    %6318 = vmatprep.subr.mxu0 0.0
    %6319 = vmatpush1.msra.mxu0 0.0
    %6320 = vmatprep.subr.mxu0 0.0
    %6321 = vmatpush1.msra.mxu0 0.0
    %6322 = vmatprep.subr.mxu0 0.0
    %6323 = vmatpush1.msra.mxu0 0.0
    %6324 = vmatprep.subr.mxu0 0.0
    %6325 = vmatpush1.msra.mxu0 0.0
    %6326 = vmatprep.subr.mxu0 0.0
    %6327 = vmatpush1.msra.mxu0 0.0
    %6328 = vmatprep.subr.mxu0 0.0
    %6329 = vmatpush1.msra.mxu0 0.0
    %6330 = vmatprep.subr.mxu0 0.0
    %6331 = vmatpush1.msra.mxu0 0.0
    %6332 = vmatprep.subr.mxu0 0.0
    %6333 = vmatpush1.msra.mxu0 0.0
    %6334 = vmatprep.subr.mxu0 0.0
    %6335 = vmatpush1.msra.mxu0 0.0
    %6336 = vmatprep.subr.mxu0 0.0
    %6337 = vmatpush1.msra.mxu0 0.0
    %6338 = vmatprep.subr.mxu0 0.0
    %6339 = vmatpush1.msra.mxu0 0.0
    %6340 = vmatprep.subr.mxu0 0.0
    %6341 = vmatpush1.msra.mxu0 0.0
    %6342 = vmatprep.subr.mxu0 0.0
    %6343 = vmatpush1.msra.mxu0 0.0
    %6344 = vmatprep.mubr.f32.mxu0 0.0
    %v6345 = vand.u32 %v5941, 4294901760
    %6346 = vmatmul.mubr.f32.gmra.mrb[0].mxu0 %v6345
    %v6347 = vpop.f32.mrb[0].mxu0
    %v6348 = vadd.f32 %v6266, %v6347
    %v6349 = vpop.f32.mrb[0].mxu0
    %6350 = vmatprep.mubr.f32.mxu0 0.0
    %v6351 = vand.u32 %v5944, 4294901760
    %6352 = vmatmul.mubr.f32.gmra.mrb[0].mxu0 %v6351
    %v6353 = vpop.f32.mrb[0].mxu0
    %v6354 = vadd.f32 %v6274, %v6353
    %v6355 = vpop.f32.mrb[0].mxu0
    %6356 = vdwg.mxu0
    %6357 = vmatprep.subr.mxu0 0.0
    %v6358 = vand.u32 %v1780, 4294901760
    %6359 = vmatpush1.msra.mxu0 %v6358
    %6360 = vmatprep.subr.mxu0 0.0
    %6361 = vmatpush1.msra.mxu0 0.0
    %6362 = vmatprep.subr.mxu0 0.0
    %6363 = vmatpush1.msra.mxu0 0.0
    %6364 = vmatprep.subr.mxu0 0.0
    %6365 = vmatpush1.msra.mxu0 0.0
    %6366 = vmatprep.subr.mxu0 0.0
    %6367 = vmatpush1.msra.mxu0 0.0
    %6368 = vmatprep.subr.mxu0 0.0
    %6369 = vmatpush1.msra.mxu0 0.0
    %6370 = vmatprep.subr.mxu0 0.0
    %6371 = vmatpush1.msra.mxu0 0.0
    %6372 = vmatprep.subr.mxu0 0.0
    %6373 = vmatpush1.msra.mxu0 0.0
    %6374 = vmatprep.subr.mxu0 0.0
    %6375 = vmatpush1.msra.mxu0 0.0
    %6376 = vmatprep.subr.mxu0 0.0
    %6377 = vmatpush1.msra.mxu0 0.0
    %6378 = vmatprep.subr.mxu0 0.0
    %6379 = vmatpush1.msra.mxu0 0.0
    %6380 = vmatprep.subr.mxu0 0.0
    %6381 = vmatpush1.msra.mxu0 0.0
    %6382 = vmatprep.subr.mxu0 0.0
    %6383 = vmatpush1.msra.mxu0 0.0
    %6384 = vmatprep.subr.mxu0 0.0
    %6385 = vmatpush1.msra.mxu0 0.0
    %6386 = vmatprep.subr.mxu0 0.0
    %6387 = vmatpush1.msra.mxu0 0.0
    %6388 = vmatprep.subr.mxu0 0.0
    %6389 = vmatpush1.msra.mxu0 0.0
    %6390 = vmatprep.subr.mxu0 0.0
    %6391 = vmatpush1.msra.mxu0 0.0
    %6392 = vmatprep.subr.mxu0 0.0
    %6393 = vmatpush1.msra.mxu0 0.0
    %6394 = vmatprep.subr.mxu0 0.0
    %6395 = vmatpush1.msra.mxu0 0.0
    %6396 = vmatprep.subr.mxu0 0.0
    %6397 = vmatpush1.msra.mxu0 0.0
    %6398 = vmatprep.subr.mxu0 0.0
    %6399 = vmatpush1.msra.mxu0 0.0
    %6400 = vmatprep.subr.mxu0 0.0
    %6401 = vmatpush1.msra.mxu0 0.0
    %6402 = vmatprep.subr.mxu0 0.0
    %6403 = vmatpush1.msra.mxu0 0.0
    %6404 = vmatprep.subr.mxu0 0.0
    %6405 = vmatpush1.msra.mxu0 0.0
    %6406 = vmatprep.subr.mxu0 0.0
    %6407 = vmatpush1.msra.mxu0 0.0
    %6408 = vmatprep.subr.mxu0 0.0
    %6409 = vmatpush1.msra.mxu0 0.0
    %6410 = vmatprep.subr.mxu0 0.0
    %6411 = vmatpush1.msra.mxu0 0.0
    %6412 = vmatprep.subr.mxu0 0.0
    %6413 = vmatpush1.msra.mxu0 0.0
    %6414 = vmatprep.subr.mxu0 0.0
    %6415 = vmatpush1.msra.mxu0 0.0
    %6416 = vmatprep.subr.mxu0 0.0
    %6417 = vmatpush1.msra.mxu0 0.0
    %6418 = vmatprep.subr.mxu0 0.0
    %6419 = vmatpush1.msra.mxu0 0.0
    %6420 = vmatprep.subr.mxu0 0.0
    %6421 = vmatpush1.msra.mxu0 0.0
    %6422 = vmatprep.mubr.f32.mxu0 0.0
    %v6423 = vand.u32 %v5941, 4294901760
    %6424 = vmatmul.mubr.f32.gmra.mrb[0].mxu0 %v6423
    %v6425 = vpop.f32.mrb[0].mxu0
    %v6426 = vadd.f32 %v6348, %v6425
    %v6427 = vpop.f32.mrb[0].mxu0
    %6428 = vmatprep.mubr.f32.mxu0 0.0
    %v6429 = vand.u32 %v5944, 4294901760
    %6430 = vmatmul.mubr.f32.gmra.mrb[0].mxu0 %v6429
    %v6431 = vpop.f32.mrb[0].mxu0
    %v6432 = vadd.f32 %v6354, %v6431
    %v6433 = vpop.f32.mrb[0].mxu0
    %6434 = vdwg.mxu0
    %6435 = vrot.lane.b32.xlu0 %v663, 112
    %v6436 = vpop.permute.xlu0 %6435
    %6437 = vrot.lane.b32.xlu0 %v1210, 112
    %v6438 = vpop.permute.xlu0 %6437
    %v6439 = vsel %vm1784, %v6436, 0
    %v6441 = vsel %vm1784, %v6438, 0
    %6443 = vmatprep.subr.mxu0 0.0
    %v6444 = vand.u32 %v6441, 4294901760
    %6445 = vmatpush1.xpose.msra.mxu0 %v6444
    %6446 = vmatprep.subr.mxu0 0.0
    %6447 = vmatpush1.xpose.msra.mxu0 0.0
    %6448 = vmatprep.subr.mxu0 0.0
    %6449 = vmatpush1.xpose.msra.mxu0 0.0
    %6450 = vmatprep.subr.mxu0 0.0
    %6451 = vmatpush1.xpose.msra.mxu0 0.0
    %6452 = vmatprep.subr.mxu0 0.0
    %6453 = vmatpush1.xpose.msra.mxu0 0.0
    %6454 = vmatprep.subr.mxu0 0.0
    %6455 = vmatpush1.xpose.msra.mxu0 0.0
    %6456 = vmatprep.subr.mxu0 0.0
    %6457 = vmatpush1.xpose.msra.mxu0 0.0
    %6458 = vmatprep.subr.mxu0 0.0
    %6459 = vmatpush1.xpose.msra.mxu0 0.0
    %6460 = vmatprep.subr.mxu0 0.0
    %6461 = vmatpush1.xpose.msra.mxu0 0.0
    %6462 = vmatprep.subr.mxu0 0.0
    %6463 = vmatpush1.xpose.msra.mxu0 0.0
    %6464 = vmatprep.subr.mxu0 0.0
    %6465 = vmatpush1.xpose.msra.mxu0 0.0
    %6466 = vmatprep.subr.mxu0 0.0
    %6467 = vmatpush1.xpose.msra.mxu0 0.0
    %6468 = vmatprep.subr.mxu0 0.0
    %6469 = vmatpush1.xpose.msra.mxu0 0.0
    %6470 = vmatprep.subr.mxu0 0.0
    %6471 = vmatpush1.xpose.msra.mxu0 0.0
    %6472 = vmatprep.subr.mxu0 0.0
    %6473 = vmatpush1.xpose.msra.mxu0 0.0
    %6474 = vmatprep.subr.mxu0 0.0
    %6475 = vmatpush1.xpose.msra.mxu0 0.0
    %6476 = vmatprep.subr.mxu0 0.0
    %6477 = vmatpush1.xpose.msra.mxu0 0.0
    %6478 = vmatprep.subr.mxu0 0.0
    %6479 = vmatpush1.xpose.msra.mxu0 0.0
    %6480 = vmatprep.subr.mxu0 0.0
    %6481 = vmatpush1.xpose.msra.mxu0 0.0
    %6482 = vmatprep.subr.mxu0 0.0
    %6483 = vmatpush1.xpose.msra.mxu0 0.0
    %6484 = vmatprep.subr.mxu0 0.0
    %6485 = vmatpush1.xpose.msra.mxu0 0.0
    %6486 = vmatprep.subr.mxu0 0.0
    %6487 = vmatpush1.xpose.msra.mxu0 0.0
    %6488 = vmatprep.subr.mxu0 0.0
    %6489 = vmatpush1.xpose.msra.mxu0 0.0
    %6490 = vmatprep.subr.mxu0 0.0
    %6491 = vmatpush1.xpose.msra.mxu0 0.0
    %6492 = vmatprep.subr.mxu0 0.0
    %6493 = vmatpush1.xpose.msra.mxu0 0.0
    %6494 = vmatprep.subr.mxu0 0.0
    %6495 = vmatpush1.xpose.msra.mxu0 0.0
    %6496 = vmatprep.subr.mxu0 0.0
    %6497 = vmatpush1.xpose.msra.mxu0 0.0
    %6498 = vmatprep.subr.mxu0 0.0
    %6499 = vmatpush1.xpose.msra.mxu0 0.0
    %6500 = vmatprep.subr.mxu0 0.0
    %6501 = vmatpush1.xpose.msra.mxu0 0.0
    %6502 = vmatprep.subr.mxu0 0.0
    %6503 = vmatpush1.xpose.msra.mxu0 0.0
    %6504 = vmatprep.subr.mxu0 0.0
    %6505 = vmatpush1.xpose.msra.mxu0 0.0
    %6506 = vmatprep.subr.mxu0 0.0
    %6507 = vmatpush1.xpose.msra.mxu0 0.0
    %6508 = vmatprep.mubr.f32.mxu0 0.0
    %v6509 = vand.u32 %v6439, 4294901760
    %v6510 = vsub.f32 %v6439, %v6509
    %v6511 = vand.u32 %v6510, 4294901760
    %v6512 = vsub.f32 %v6510, %v6511
    %v6513 = vand.u32 %v6512, 4294901760
    %6514 = vmatmul.mubr.f32.gmra.mrb[0].mxu0 %v6513
    %v6515 = vpop.f32.mrb[0].mxu0
    %v6516 = vadd.f32 %v1773, %v6515
    %v6517 = vpop.f32.mrb[0].mxu0
    %6518 = vdwg.mxu0
    %6519 = vmatprep.subr.mxu0 0.0
    %v6520 = vand.u32 %v6441, 4294901760
    %v6521 = vsub.f32 %v6441, %v6520
    %v6522 = vand.u32 %v6521, 4294901760
    %v6523 = vsub.f32 %v6521, %v6522
    %v6524 = vand.u32 %v6523, 4294901760
    %6525 = vmatpush1.xpose.msra.mxu0 %v6524
    %6526 = vmatprep.subr.mxu0 0.0
    %6527 = vmatpush1.xpose.msra.mxu0 0.0
    %6528 = vmatprep.subr.mxu0 0.0
    %6529 = vmatpush1.xpose.msra.mxu0 0.0
    %6530 = vmatprep.subr.mxu0 0.0
    %6531 = vmatpush1.xpose.msra.mxu0 0.0
    %6532 = vmatprep.subr.mxu0 0.0
    %6533 = vmatpush1.xpose.msra.mxu0 0.0
    %6534 = vmatprep.subr.mxu0 0.0
    %6535 = vmatpush1.xpose.msra.mxu0 0.0
    %6536 = vmatprep.subr.mxu0 0.0
    %6537 = vmatpush1.xpose.msra.mxu0 0.0
    %6538 = vmatprep.subr.mxu0 0.0
    %6539 = vmatpush1.xpose.msra.mxu0 0.0
    %6540 = vmatprep.subr.mxu0 0.0
    %6541 = vmatpush1.xpose.msra.mxu0 0.0
    %6542 = vmatprep.subr.mxu0 0.0
    %6543 = vmatpush1.xpose.msra.mxu0 0.0
    %6544 = vmatprep.subr.mxu0 0.0
    %6545 = vmatpush1.xpose.msra.mxu0 0.0
    %6546 = vmatprep.subr.mxu0 0.0
    %6547 = vmatpush1.xpose.msra.mxu0 0.0
    %6548 = vmatprep.subr.mxu0 0.0
    %6549 = vmatpush1.xpose.msra.mxu0 0.0
    %6550 = vmatprep.subr.mxu0 0.0
    %6551 = vmatpush1.xpose.msra.mxu0 0.0
    %6552 = vmatprep.subr.mxu0 0.0
    %6553 = vmatpush1.xpose.msra.mxu0 0.0
    %6554 = vmatprep.subr.mxu0 0.0
    %6555 = vmatpush1.xpose.msra.mxu0 0.0
    %6556 = vmatprep.subr.mxu0 0.0
    %6557 = vmatpush1.xpose.msra.mxu0 0.0
    %6558 = vmatprep.subr.mxu0 0.0
    %6559 = vmatpush1.xpose.msra.mxu0 0.0
    %6560 = vmatprep.subr.mxu0 0.0
    %6561 = vmatpush1.xpose.msra.mxu0 0.0
    %6562 = vmatprep.subr.mxu0 0.0
    %6563 = vmatpush1.xpose.msra.mxu0 0.0
    %6564 = vmatprep.subr.mxu0 0.0
    %6565 = vmatpush1.xpose.msra.mxu0 0.0
    %6566 = vmatprep.subr.mxu0 0.0
    %6567 = vmatpush1.xpose.msra.mxu0 0.0
    %6568 = vmatprep.subr.mxu0 0.0
    %6569 = vmatpush1.xpose.msra.mxu0 0.0
    %6570 = vmatprep.subr.mxu0 0.0
    %6571 = vmatpush1.xpose.msra.mxu0 0.0
    %6572 = vmatprep.subr.mxu0 0.0
    %6573 = vmatpush1.xpose.msra.mxu0 0.0
    %6574 = vmatprep.subr.mxu0 0.0
    %6575 = vmatpush1.xpose.msra.mxu0 0.0
    %6576 = vmatprep.subr.mxu0 0.0
    %6577 = vmatpush1.xpose.msra.mxu0 0.0
    %6578 = vmatprep.subr.mxu0 0.0
    %6579 = vmatpush1.xpose.msra.mxu0 0.0
    %6580 = vmatprep.subr.mxu0 0.0
    %6581 = vmatpush1.xpose.msra.mxu0 0.0
    %6582 = vmatprep.subr.mxu0 0.0
    %6583 = vmatpush1.xpose.msra.mxu0 0.0
    %6584 = vmatprep.subr.mxu0 0.0
    %6585 = vmatpush1.xpose.msra.mxu0 0.0
    %6586 = vmatprep.subr.mxu0 0.0
    %6587 = vmatpush1.xpose.msra.mxu0 0.0
    %6588 = vmatprep.mubr.f32.mxu0 0.0
    %v6589 = vand.u32 %v6439, 4294901760
    %6590 = vmatmul.mubr.f32.gmra.mrb[0].mxu0 %v6589
    %v6591 = vpop.f32.mrb[0].mxu0
    %v6592 = vadd.f32 %v6516, %v6591
    %v6593 = vpop.f32.mrb[0].mxu0
    %6594 = vdwg.mxu0
    %6595 = vmatprep.subr.mxu0 0.0
    %v6596 = vand.u32 %v6441, 4294901760
    %v6597 = vsub.f32 %v6441, %v6596
    %6598 = vmatpush1.xpose.msra.mxu0 %v6597
    %6599 = vmatprep.subr.mxu0 0.0
    %6600 = vmatpush1.xpose.msra.mxu0 0.0
    %6601 = vmatprep.subr.mxu0 0.0
    %6602 = vmatpush1.xpose.msra.mxu0 0.0
    %6603 = vmatprep.subr.mxu0 0.0
    %6604 = vmatpush1.xpose.msra.mxu0 0.0
    %6605 = vmatprep.subr.mxu0 0.0
    %6606 = vmatpush1.xpose.msra.mxu0 0.0
    %6607 = vmatprep.subr.mxu0 0.0
    %6608 = vmatpush1.xpose.msra.mxu0 0.0
    %6609 = vmatprep.subr.mxu0 0.0
    %6610 = vmatpush1.xpose.msra.mxu0 0.0
    %6611 = vmatprep.subr.mxu0 0.0
    %6612 = vmatpush1.xpose.msra.mxu0 0.0
    %6613 = vmatprep.subr.mxu0 0.0
    %6614 = vmatpush1.xpose.msra.mxu0 0.0
    %6615 = vmatprep.subr.mxu0 0.0
    %6616 = vmatpush1.xpose.msra.mxu0 0.0
    %6617 = vmatprep.subr.mxu0 0.0
    %6618 = vmatpush1.xpose.msra.mxu0 0.0
    %6619 = vmatprep.subr.mxu0 0.0
    %6620 = vmatpush1.xpose.msra.mxu0 0.0
    %6621 = vmatprep.subr.mxu0 0.0
    %6622 = vmatpush1.xpose.msra.mxu0 0.0
    %6623 = vmatprep.subr.mxu0 0.0
    %6624 = vmatpush1.xpose.msra.mxu0 0.0
    %6625 = vmatprep.subr.mxu0 0.0
    %6626 = vmatpush1.xpose.msra.mxu0 0.0
    %6627 = vmatprep.subr.mxu0 0.0
    %6628 = vmatpush1.xpose.msra.mxu0 0.0
    %6629 = vmatprep.subr.mxu0 0.0
    %6630 = vmatpush1.xpose.msra.mxu0 0.0
    %6631 = vmatprep.subr.mxu0 0.0
    %6632 = vmatpush1.xpose.msra.mxu0 0.0
    %6633 = vmatprep.subr.mxu0 0.0
    %6634 = vmatpush1.xpose.msra.mxu0 0.0
    %6635 = vmatprep.subr.mxu0 0.0
    %6636 = vmatpush1.xpose.msra.mxu0 0.0
    %6637 = vmatprep.subr.mxu0 0.0
    %6638 = vmatpush1.xpose.msra.mxu0 0.0
    %6639 = vmatprep.subr.mxu0 0.0
    %6640 = vmatpush1.xpose.msra.mxu0 0.0
    %6641 = vmatprep.subr.mxu0 0.0
    %6642 = vmatpush1.xpose.msra.mxu0 0.0
    %6643 = vmatprep.subr.mxu0 0.0
    %6644 = vmatpush1.xpose.msra.mxu0 0.0
    %6645 = vmatprep.subr.mxu0 0.0
    %6646 = vmatpush1.xpose.msra.mxu0 0.0
    %6647 = vmatprep.subr.mxu0 0.0
    %6648 = vmatpush1.xpose.msra.mxu0 0.0
    %6649 = vmatprep.subr.mxu0 0.0
    %6650 = vmatpush1.xpose.msra.mxu0 0.0
    %6651 = vmatprep.subr.mxu0 0.0
    %6652 = vmatpush1.xpose.msra.mxu0 0.0
    %6653 = vmatprep.subr.mxu0 0.0
    %6654 = vmatpush1.xpose.msra.mxu0 0.0
    %6655 = vmatprep.subr.mxu0 0.0
    %6656 = vmatpush1.xpose.msra.mxu0 0.0
    %6657 = vmatprep.subr.mxu0 0.0
    %6658 = vmatpush1.xpose.msra.mxu0 0.0
    %6659 = vmatprep.subr.mxu0 0.0
    %6660 = vmatpush1.xpose.msra.mxu0 0.0
    %6661 = vmatprep.mubr.f32.mxu0 0.0
    %v6662 = vand.u32 %v6439, 4294901760
    %v6663 = vsub.f32 %v6439, %v6662
    %6664 = vmatmul.mubr.f32.gmra.mrb[0].mxu0 %v6663
    %v6665 = vpop.f32.mrb[0].mxu0
    %v6666 = vadd.f32 %v6592, %v6665
    %v6667 = vpop.f32.mrb[0].mxu0
    %6668 = vdwg.mxu0
    %6669 = vmatprep.subr.mxu0 0.0
    %v6670 = vand.u32 %v6441, 4294901760
    %6671 = vmatpush1.xpose.msra.mxu0 %v6670
    %6672 = vmatprep.subr.mxu0 0.0
    %6673 = vmatpush1.xpose.msra.mxu0 0.0
    %6674 = vmatprep.subr.mxu0 0.0
    %6675 = vmatpush1.xpose.msra.mxu0 0.0
    %6676 = vmatprep.subr.mxu0 0.0
    %6677 = vmatpush1.xpose.msra.mxu0 0.0
    %6678 = vmatprep.subr.mxu0 0.0
    %6679 = vmatpush1.xpose.msra.mxu0 0.0
    %6680 = vmatprep.subr.mxu0 0.0
    %6681 = vmatpush1.xpose.msra.mxu0 0.0
    %6682 = vmatprep.subr.mxu0 0.0
    %6683 = vmatpush1.xpose.msra.mxu0 0.0
    %6684 = vmatprep.subr.mxu0 0.0
    %6685 = vmatpush1.xpose.msra.mxu0 0.0
    %6686 = vmatprep.subr.mxu0 0.0
    %6687 = vmatpush1.xpose.msra.mxu0 0.0
    %6688 = vmatprep.subr.mxu0 0.0
    %6689 = vmatpush1.xpose.msra.mxu0 0.0
    %6690 = vmatprep.subr.mxu0 0.0
    %6691 = vmatpush1.xpose.msra.mxu0 0.0
    %6692 = vmatprep.subr.mxu0 0.0
    %6693 = vmatpush1.xpose.msra.mxu0 0.0
    %6694 = vmatprep.subr.mxu0 0.0
    %6695 = vmatpush1.xpose.msra.mxu0 0.0
    %6696 = vmatprep.subr.mxu0 0.0
    %6697 = vmatpush1.xpose.msra.mxu0 0.0
    %6698 = vmatprep.subr.mxu0 0.0
    %6699 = vmatpush1.xpose.msra.mxu0 0.0
    %6700 = vmatprep.subr.mxu0 0.0
    %6701 = vmatpush1.xpose.msra.mxu0 0.0
    %6702 = vmatprep.subr.mxu0 0.0
    %6703 = vmatpush1.xpose.msra.mxu0 0.0
    %6704 = vmatprep.subr.mxu0 0.0
    %6705 = vmatpush1.xpose.msra.mxu0 0.0
    %6706 = vmatprep.subr.mxu0 0.0
    %6707 = vmatpush1.xpose.msra.mxu0 0.0
    %6708 = vmatprep.subr.mxu0 0.0
    %6709 = vmatpush1.xpose.msra.mxu0 0.0
    %6710 = vmatprep.subr.mxu0 0.0
    %6711 = vmatpush1.xpose.msra.mxu0 0.0
    %6712 = vmatprep.subr.mxu0 0.0
    %6713 = vmatpush1.xpose.msra.mxu0 0.0
    %6714 = vmatprep.subr.mxu0 0.0
    %6715 = vmatpush1.xpose.msra.mxu0 0.0
    %6716 = vmatprep.subr.mxu0 0.0
    %6717 = vmatpush1.xpose.msra.mxu0 0.0
    %6718 = vmatprep.subr.mxu0 0.0
    %6719 = vmatpush1.xpose.msra.mxu0 0.0
    %6720 = vmatprep.subr.mxu0 0.0
    %6721 = vmatpush1.xpose.msra.mxu0 0.0
    %6722 = vmatprep.subr.mxu0 0.0
    %6723 = vmatpush1.xpose.msra.mxu0 0.0
    %6724 = vmatprep.subr.mxu0 0.0
    %6725 = vmatpush1.xpose.msra.mxu0 0.0
    %6726 = vmatprep.subr.mxu0 0.0
    %6727 = vmatpush1.xpose.msra.mxu0 0.0
    %6728 = vmatprep.subr.mxu0 0.0
    %6729 = vmatpush1.xpose.msra.mxu0 0.0
    %6730 = vmatprep.subr.mxu0 0.0
    %6731 = vmatpush1.xpose.msra.mxu0 0.0
    %6732 = vmatprep.subr.mxu0 0.0
    %6733 = vmatpush1.xpose.msra.mxu0 0.0
    %6734 = vmatprep.mubr.f32.mxu0 0.0
    %v6735 = vand.u32 %v6439, 4294901760
    %v6736 = vsub.f32 %v6439, %v6735
    %v6737 = vand.u32 %v6736, 4294901760
    %6738 = vmatmul.mubr.f32.gmra.mrb[0].mxu0 %v6737
    %v6739 = vpop.f32.mrb[0].mxu0
    %v6740 = vadd.f32 %v6666, %v6739
    %v6741 = vpop.f32.mrb[0].mxu0
    %6742 = vdwg.mxu0
    %6743 = vmatprep.subr.mxu0 0.0
    %v6744 = vand.u32 %v6441, 4294901760
    %v6745 = vsub.f32 %v6441, %v6744
    %v6746 = vand.u32 %v6745, 4294901760
    %6747 = vmatpush1.xpose.msra.mxu0 %v6746
    %6748 = vmatprep.subr.mxu0 0.0
    %6749 = vmatpush1.xpose.msra.mxu0 0.0
    %6750 = vmatprep.subr.mxu0 0.0
    %6751 = vmatpush1.xpose.msra.mxu0 0.0
    %6752 = vmatprep.subr.mxu0 0.0
    %6753 = vmatpush1.xpose.msra.mxu0 0.0
    %6754 = vmatprep.subr.mxu0 0.0
    %6755 = vmatpush1.xpose.msra.mxu0 0.0
    %6756 = vmatprep.subr.mxu0 0.0
    %6757 = vmatpush1.xpose.msra.mxu0 0.0
    %6758 = vmatprep.subr.mxu0 0.0
    %6759 = vmatpush1.xpose.msra.mxu0 0.0
    %6760 = vmatprep.subr.mxu0 0.0
    %6761 = vmatpush1.xpose.msra.mxu0 0.0
    %6762 = vmatprep.subr.mxu0 0.0
    %6763 = vmatpush1.xpose.msra.mxu0 0.0
    %6764 = vmatprep.subr.mxu0 0.0
    %6765 = vmatpush1.xpose.msra.mxu0 0.0
    %6766 = vmatprep.subr.mxu0 0.0
    %6767 = vmatpush1.xpose.msra.mxu0 0.0
    %6768 = vmatprep.subr.mxu0 0.0
    %6769 = vmatpush1.xpose.msra.mxu0 0.0
    %6770 = vmatprep.subr.mxu0 0.0
    %6771 = vmatpush1.xpose.msra.mxu0 0.0
    %6772 = vmatprep.subr.mxu0 0.0
    %6773 = vmatpush1.xpose.msra.mxu0 0.0
    %6774 = vmatprep.subr.mxu0 0.0
    %6775 = vmatpush1.xpose.msra.mxu0 0.0
    %6776 = vmatprep.subr.mxu0 0.0
    %6777 = vmatpush1.xpose.msra.mxu0 0.0
    %6778 = vmatprep.subr.mxu0 0.0
    %6779 = vmatpush1.xpose.msra.mxu0 0.0
    %6780 = vmatprep.subr.mxu0 0.0
    %6781 = vmatpush1.xpose.msra.mxu0 0.0
    %6782 = vmatprep.subr.mxu0 0.0
    %6783 = vmatpush1.xpose.msra.mxu0 0.0
    %6784 = vmatprep.subr.mxu0 0.0
    %6785 = vmatpush1.xpose.msra.mxu0 0.0
    %6786 = vmatprep.subr.mxu0 0.0
    %6787 = vmatpush1.xpose.msra.mxu0 0.0
    %6788 = vmatprep.subr.mxu0 0.0
    %6789 = vmatpush1.xpose.msra.mxu0 0.0
    %6790 = vmatprep.subr.mxu0 0.0
    %6791 = vmatpush1.xpose.msra.mxu0 0.0
    %6792 = vmatprep.subr.mxu0 0.0
    %6793 = vmatpush1.xpose.msra.mxu0 0.0
    %6794 = vmatprep.subr.mxu0 0.0
    %6795 = vmatpush1.xpose.msra.mxu0 0.0
    %6796 = vmatprep.subr.mxu0 0.0
    %6797 = vmatpush1.xpose.msra.mxu0 0.0
    %6798 = vmatprep.subr.mxu0 0.0
    %6799 = vmatpush1.xpose.msra.mxu0 0.0
    %6800 = vmatprep.subr.mxu0 0.0
    %6801 = vmatpush1.xpose.msra.mxu0 0.0
    %6802 = vmatprep.subr.mxu0 0.0
    %6803 = vmatpush1.xpose.msra.mxu0 0.0
    %6804 = vmatprep.subr.mxu0 0.0
    %6805 = vmatpush1.xpose.msra.mxu0 0.0
    %6806 = vmatprep.subr.mxu0 0.0
    %6807 = vmatpush1.xpose.msra.mxu0 0.0
    %6808 = vmatprep.subr.mxu0 0.0
    %6809 = vmatpush1.xpose.msra.mxu0 0.0
    %6810 = vmatprep.mubr.f32.mxu0 0.0
    %v6811 = vand.u32 %v6439, 4294901760
    %6812 = vmatmul.mubr.f32.gmra.mrb[0].mxu0 %v6811
    %v6813 = vpop.f32.mrb[0].mxu0
    %v6814 = vadd.f32 %v6740, %v6813
    %v6815 = vpop.f32.mrb[0].mxu0
    %6816 = vdwg.mxu0
    %6817 = vmatprep.subr.mxu0 0.0
    %v6818 = vand.u32 %v6441, 4294901760
    %6819 = vmatpush1.xpose.msra.mxu0 %v6818
    %6820 = vmatprep.subr.mxu0 0.0
    %6821 = vmatpush1.xpose.msra.mxu0 0.0
    %6822 = vmatprep.subr.mxu0 0.0
    %6823 = vmatpush1.xpose.msra.mxu0 0.0
    %6824 = vmatprep.subr.mxu0 0.0
    %6825 = vmatpush1.xpose.msra.mxu0 0.0
    %6826 = vmatprep.subr.mxu0 0.0
    %6827 = vmatpush1.xpose.msra.mxu0 0.0
    %6828 = vmatprep.subr.mxu0 0.0
    %6829 = vmatpush1.xpose.msra.mxu0 0.0
    %6830 = vmatprep.subr.mxu0 0.0
    %6831 = vmatpush1.xpose.msra.mxu0 0.0
    %6832 = vmatprep.subr.mxu0 0.0
    %6833 = vmatpush1.xpose.msra.mxu0 0.0
    %6834 = vmatprep.subr.mxu0 0.0
    %6835 = vmatpush1.xpose.msra.mxu0 0.0
    %6836 = vmatprep.subr.mxu0 0.0
    %6837 = vmatpush1.xpose.msra.mxu0 0.0
    %6838 = vmatprep.subr.mxu0 0.0
    %6839 = vmatpush1.xpose.msra.mxu0 0.0
    %6840 = vmatprep.subr.mxu0 0.0
    %6841 = vmatpush1.xpose.msra.mxu0 0.0
    %6842 = vmatprep.subr.mxu0 0.0
    %6843 = vmatpush1.xpose.msra.mxu0 0.0
    %6844 = vmatprep.subr.mxu0 0.0
    %6845 = vmatpush1.xpose.msra.mxu0 0.0
    %6846 = vmatprep.subr.mxu0 0.0
    %6847 = vmatpush1.xpose.msra.mxu0 0.0
    %6848 = vmatprep.subr.mxu0 0.0
    %6849 = vmatpush1.xpose.msra.mxu0 0.0
    %6850 = vmatprep.subr.mxu0 0.0
    %6851 = vmatpush1.xpose.msra.mxu0 0.0
    %6852 = vmatprep.subr.mxu0 0.0
    %6853 = vmatpush1.xpose.msra.mxu0 0.0
    %6854 = vmatprep.subr.mxu0 0.0
    %6855 = vmatpush1.xpose.msra.mxu0 0.0
    %6856 = vmatprep.subr.mxu0 0.0
    %6857 = vmatpush1.xpose.msra.mxu0 0.0
    %6858 = vmatprep.subr.mxu0 0.0
    %6859 = vmatpush1.xpose.msra.mxu0 0.0
    %6860 = vmatprep.subr.mxu0 0.0
    %6861 = vmatpush1.xpose.msra.mxu0 0.0
    %6862 = vmatprep.subr.mxu0 0.0
    %6863 = vmatpush1.xpose.msra.mxu0 0.0
    %6864 = vmatprep.subr.mxu0 0.0
    %6865 = vmatpush1.xpose.msra.mxu0 0.0
    %6866 = vmatprep.subr.mxu0 0.0
    %6867 = vmatpush1.xpose.msra.mxu0 0.0
    %6868 = vmatprep.subr.mxu0 0.0
    %6869 = vmatpush1.xpose.msra.mxu0 0.0
    %6870 = vmatprep.subr.mxu0 0.0
    %6871 = vmatpush1.xpose.msra.mxu0 0.0
    %6872 = vmatprep.subr.mxu0 0.0
    %6873 = vmatpush1.xpose.msra.mxu0 0.0
    %6874 = vmatprep.subr.mxu0 0.0
    %6875 = vmatpush1.xpose.msra.mxu0 0.0
    %6876 = vmatprep.subr.mxu0 0.0
    %6877 = vmatpush1.xpose.msra.mxu0 0.0
    %6878 = vmatprep.subr.mxu0 0.0
    %6879 = vmatpush1.xpose.msra.mxu0 0.0
    %6880 = vmatprep.subr.mxu0 0.0
    %6881 = vmatpush1.xpose.msra.mxu0 0.0
    %6882 = vmatprep.mubr.f32.mxu0 0.0
    %v6883 = vand.u32 %v6439, 4294901760
    %6884 = vmatmul.mubr.f32.gmra.mrb[0].mxu0 %v6883
    %v6885 = vpop.f32.mrb[0].mxu0
    %v6886 = vadd.f32 %v6814, %v6885
    %v6887 = vpop.f32.mrb[0].mxu0
    %6888 = vdwg.mxu0
    %6889 = vrot.lane.b32.xlu0 %v669, 112
    %v6890 = vpop.permute.xlu0 %6889
    %6891 = vrot.lane.b32.xlu0 %v1216, 112
    %v6892 = vpop.permute.xlu0 %6891
    %v6893 = vsel %vm1784, %v6890, 0
    %v6895 = vsel %vm1784, %v6892, 0
    %6897 = vmatprep.subr.mxu0 0.0
    %v6898 = vand.u32 %v6895, 4294901760
    %6899 = vmatpush1.xpose.msra.mxu0 %v6898
    %6900 = vmatprep.subr.mxu0 0.0
    %6901 = vmatpush1.xpose.msra.mxu0 0.0
    %6902 = vmatprep.subr.mxu0 0.0
    %6903 = vmatpush1.xpose.msra.mxu0 0.0
    %6904 = vmatprep.subr.mxu0 0.0
    %6905 = vmatpush1.xpose.msra.mxu0 0.0
    %6906 = vmatprep.subr.mxu0 0.0
    %6907 = vmatpush1.xpose.msra.mxu0 0.0
    %6908 = vmatprep.subr.mxu0 0.0
    %6909 = vmatpush1.xpose.msra.mxu0 0.0
    %6910 = vmatprep.subr.mxu0 0.0
    %6911 = vmatpush1.xpose.msra.mxu0 0.0
    %6912 = vmatprep.subr.mxu0 0.0
    %6913 = vmatpush1.xpose.msra.mxu0 0.0
    %6914 = vmatprep.subr.mxu0 0.0
    %6915 = vmatpush1.xpose.msra.mxu0 0.0
    %6916 = vmatprep.subr.mxu0 0.0
    %6917 = vmatpush1.xpose.msra.mxu0 0.0
    %6918 = vmatprep.subr.mxu0 0.0
    %6919 = vmatpush1.xpose.msra.mxu0 0.0
    %6920 = vmatprep.subr.mxu0 0.0
    %6921 = vmatpush1.xpose.msra.mxu0 0.0
    %6922 = vmatprep.subr.mxu0 0.0
    %6923 = vmatpush1.xpose.msra.mxu0 0.0
    %6924 = vmatprep.subr.mxu0 0.0
    %6925 = vmatpush1.xpose.msra.mxu0 0.0
    %6926 = vmatprep.subr.mxu0 0.0
    %6927 = vmatpush1.xpose.msra.mxu0 0.0
    %6928 = vmatprep.subr.mxu0 0.0
    %6929 = vmatpush1.xpose.msra.mxu0 0.0
    %6930 = vmatprep.subr.mxu0 0.0
    %6931 = vmatpush1.xpose.msra.mxu0 0.0
    %6932 = vmatprep.subr.mxu0 0.0
    %6933 = vmatpush1.xpose.msra.mxu0 0.0
    %6934 = vmatprep.subr.mxu0 0.0
    %6935 = vmatpush1.xpose.msra.mxu0 0.0
    %6936 = vmatprep.subr.mxu0 0.0
    %6937 = vmatpush1.xpose.msra.mxu0 0.0
    %6938 = vmatprep.subr.mxu0 0.0
    %6939 = vmatpush1.xpose.msra.mxu0 0.0
    %6940 = vmatprep.subr.mxu0 0.0
    %6941 = vmatpush1.xpose.msra.mxu0 0.0
    %6942 = vmatprep.subr.mxu0 0.0
    %6943 = vmatpush1.xpose.msra.mxu0 0.0
    %6944 = vmatprep.subr.mxu0 0.0
    %6945 = vmatpush1.xpose.msra.mxu0 0.0
    %6946 = vmatprep.subr.mxu0 0.0
    %6947 = vmatpush1.xpose.msra.mxu0 0.0
    %6948 = vmatprep.subr.mxu0 0.0
    %6949 = vmatpush1.xpose.msra.mxu0 0.0
    %6950 = vmatprep.subr.mxu0 0.0
    %6951 = vmatpush1.xpose.msra.mxu0 0.0
    %6952 = vmatprep.subr.mxu0 0.0
    %6953 = vmatpush1.xpose.msra.mxu0 0.0
    %6954 = vmatprep.subr.mxu0 0.0
    %6955 = vmatpush1.xpose.msra.mxu0 0.0
    %6956 = vmatprep.subr.mxu0 0.0
    %6957 = vmatpush1.xpose.msra.mxu0 0.0
    %6958 = vmatprep.subr.mxu0 0.0
    %6959 = vmatpush1.xpose.msra.mxu0 0.0
    %6960 = vmatprep.subr.mxu0 0.0
    %6961 = vmatpush1.xpose.msra.mxu0 0.0
    %6962 = vmatprep.mubr.f32.mxu0 0.0
    %v6963 = vand.u32 %v6893, 4294901760
    %v6964 = vsub.f32 %v6893, %v6963
    %v6965 = vand.u32 %v6964, 4294901760
    %v6966 = vsub.f32 %v6964, %v6965
    %v6967 = vand.u32 %v6966, 4294901760
    %6968 = vmatmul.mubr.f32.gmra.mrb[0].mxu0 %v6967
    %v6969 = vpop.f32.mrb[0].mxu0
    %v6970 = vadd.f32 %v1777, %v6969
    %v6971 = vpop.f32.mrb[0].mxu0
    %6972 = vdwg.mxu0
    %6973 = vmatprep.subr.mxu0 0.0
    %v6974 = vand.u32 %v6895, 4294901760
    %v6975 = vsub.f32 %v6895, %v6974
    %v6976 = vand.u32 %v6975, 4294901760
    %v6977 = vsub.f32 %v6975, %v6976
    %v6978 = vand.u32 %v6977, 4294901760
    %6979 = vmatpush1.xpose.msra.mxu0 %v6978
    %6980 = vmatprep.subr.mxu0 0.0
    %6981 = vmatpush1.xpose.msra.mxu0 0.0
    %6982 = vmatprep.subr.mxu0 0.0
    %6983 = vmatpush1.xpose.msra.mxu0 0.0
    %6984 = vmatprep.subr.mxu0 0.0
    %6985 = vmatpush1.xpose.msra.mxu0 0.0
    %6986 = vmatprep.subr.mxu0 0.0
    %6987 = vmatpush1.xpose.msra.mxu0 0.0
    %6988 = vmatprep.subr.mxu0 0.0
    %6989 = vmatpush1.xpose.msra.mxu0 0.0
    %6990 = vmatprep.subr.mxu0 0.0
    %6991 = vmatpush1.xpose.msra.mxu0 0.0
    %6992 = vmatprep.subr.mxu0 0.0
    %6993 = vmatpush1.xpose.msra.mxu0 0.0
    %6994 = vmatprep.subr.mxu0 0.0
    %6995 = vmatpush1.xpose.msra.mxu0 0.0
    %6996 = vmatprep.subr.mxu0 0.0
    %6997 = vmatpush1.xpose.msra.mxu0 0.0
    %6998 = vmatprep.subr.mxu0 0.0
    %6999 = vmatpush1.xpose.msra.mxu0 0.0
    %7000 = vmatprep.subr.mxu0 0.0
    %7001 = vmatpush1.xpose.msra.mxu0 0.0
    %7002 = vmatprep.subr.mxu0 0.0
    %7003 = vmatpush1.xpose.msra.mxu0 0.0
    %7004 = vmatprep.subr.mxu0 0.0
    %7005 = vmatpush1.xpose.msra.mxu0 0.0
    %7006 = vmatprep.subr.mxu0 0.0
    %7007 = vmatpush1.xpose.msra.mxu0 0.0
    %7008 = vmatprep.subr.mxu0 0.0
    %7009 = vmatpush1.xpose.msra.mxu0 0.0
    %7010 = vmatprep.subr.mxu0 0.0
    %7011 = vmatpush1.xpose.msra.mxu0 0.0
    %7012 = vmatprep.subr.mxu0 0.0
    %7013 = vmatpush1.xpose.msra.mxu0 0.0
    %7014 = vmatprep.subr.mxu0 0.0
    %7015 = vmatpush1.xpose.msra.mxu0 0.0
    %7016 = vmatprep.subr.mxu0 0.0
    %7017 = vmatpush1.xpose.msra.mxu0 0.0
    %7018 = vmatprep.subr.mxu0 0.0
    %7019 = vmatpush1.xpose.msra.mxu0 0.0
    %7020 = vmatprep.subr.mxu0 0.0
    %7021 = vmatpush1.xpose.msra.mxu0 0.0
    %7022 = vmatprep.subr.mxu0 0.0
    %7023 = vmatpush1.xpose.msra.mxu0 0.0
    %7024 = vmatprep.subr.mxu0 0.0
    %7025 = vmatpush1.xpose.msra.mxu0 0.0
    %7026 = vmatprep.subr.mxu0 0.0
    %7027 = vmatpush1.xpose.msra.mxu0 0.0
    %7028 = vmatprep.subr.mxu0 0.0
    %7029 = vmatpush1.xpose.msra.mxu0 0.0
    %7030 = vmatprep.subr.mxu0 0.0
    %7031 = vmatpush1.xpose.msra.mxu0 0.0
    %7032 = vmatprep.subr.mxu0 0.0
    %7033 = vmatpush1.xpose.msra.mxu0 0.0
    %7034 = vmatprep.subr.mxu0 0.0
    %7035 = vmatpush1.xpose.msra.mxu0 0.0
    %7036 = vmatprep.subr.mxu0 0.0
    %7037 = vmatpush1.xpose.msra.mxu0 0.0
    %7038 = vmatprep.subr.mxu0 0.0
    %7039 = vmatpush1.xpose.msra.mxu0 0.0
    %7040 = vmatprep.subr.mxu0 0.0
    %7041 = vmatpush1.xpose.msra.mxu0 0.0
    %7042 = vmatprep.mubr.f32.mxu0 0.0
    %v7043 = vand.u32 %v6893, 4294901760
    %7044 = vmatmul.mubr.f32.gmra.mrb[0].mxu0 %v7043
    %v7045 = vpop.f32.mrb[0].mxu0
    %v7046 = vadd.f32 %v6970, %v7045
    %v7047 = vpop.f32.mrb[0].mxu0
    %7048 = vdwg.mxu0
    %7049 = vmatprep.subr.mxu0 0.0
    %v7050 = vand.u32 %v6895, 4294901760
    %v7051 = vsub.f32 %v6895, %v7050
    %7052 = vmatpush1.xpose.msra.mxu0 %v7051
    %7053 = vmatprep.subr.mxu0 0.0
    %7054 = vmatpush1.xpose.msra.mxu0 0.0
    %7055 = vmatprep.subr.mxu0 0.0
    %7056 = vmatpush1.xpose.msra.mxu0 0.0
    %7057 = vmatprep.subr.mxu0 0.0
    %7058 = vmatpush1.xpose.msra.mxu0 0.0
    %7059 = vmatprep.subr.mxu0 0.0
    %7060 = vmatpush1.xpose.msra.mxu0 0.0
    %7061 = vmatprep.subr.mxu0 0.0
    %7062 = vmatpush1.xpose.msra.mxu0 0.0
    %7063 = vmatprep.subr.mxu0 0.0
    %7064 = vmatpush1.xpose.msra.mxu0 0.0
    %7065 = vmatprep.subr.mxu0 0.0
    %7066 = vmatpush1.xpose.msra.mxu0 0.0
    %7067 = vmatprep.subr.mxu0 0.0
    %7068 = vmatpush1.xpose.msra.mxu0 0.0
    %7069 = vmatprep.subr.mxu0 0.0
    %7070 = vmatpush1.xpose.msra.mxu0 0.0
    %7071 = vmatprep.subr.mxu0 0.0
    %7072 = vmatpush1.xpose.msra.mxu0 0.0
    %7073 = vmatprep.subr.mxu0 0.0
    %7074 = vmatpush1.xpose.msra.mxu0 0.0
    %7075 = vmatprep.subr.mxu0 0.0
    %7076 = vmatpush1.xpose.msra.mxu0 0.0
    %7077 = vmatprep.subr.mxu0 0.0
    %7078 = vmatpush1.xpose.msra.mxu0 0.0
    %7079 = vmatprep.subr.mxu0 0.0
    %7080 = vmatpush1.xpose.msra.mxu0 0.0
    %7081 = vmatprep.subr.mxu0 0.0
    %7082 = vmatpush1.xpose.msra.mxu0 0.0
    %7083 = vmatprep.subr.mxu0 0.0
    %7084 = vmatpush1.xpose.msra.mxu0 0.0
    %7085 = vmatprep.subr.mxu0 0.0
    %7086 = vmatpush1.xpose.msra.mxu0 0.0
    %7087 = vmatprep.subr.mxu0 0.0
    %7088 = vmatpush1.xpose.msra.mxu0 0.0
    %7089 = vmatprep.subr.mxu0 0.0
    %7090 = vmatpush1.xpose.msra.mxu0 0.0
    %7091 = vmatprep.subr.mxu0 0.0
    %7092 = vmatpush1.xpose.msra.mxu0 0.0
    %7093 = vmatprep.subr.mxu0 0.0
    %7094 = vmatpush1.xpose.msra.mxu0 0.0
    %7095 = vmatprep.subr.mxu0 0.0
    %7096 = vmatpush1.xpose.msra.mxu0 0.0
    %7097 = vmatprep.subr.mxu0 0.0
    %7098 = vmatpush1.xpose.msra.mxu0 0.0
    %7099 = vmatprep.subr.mxu0 0.0
    %7100 = vmatpush1.xpose.msra.mxu0 0.0
    %7101 = vmatprep.subr.mxu0 0.0
    %7102 = vmatpush1.xpose.msra.mxu0 0.0
    %7103 = vmatprep.subr.mxu0 0.0
    %7104 = vmatpush1.xpose.msra.mxu0 0.0
    %7105 = vmatprep.subr.mxu0 0.0
    %7106 = vmatpush1.xpose.msra.mxu0 0.0
    %7107 = vmatprep.subr.mxu0 0.0
    %7108 = vmatpush1.xpose.msra.mxu0 0.0
    %7109 = vmatprep.subr.mxu0 0.0
    %7110 = vmatpush1.xpose.msra.mxu0 0.0
    %7111 = vmatprep.subr.mxu0 0.0
    %7112 = vmatpush1.xpose.msra.mxu0 0.0
    %7113 = vmatprep.subr.mxu0 0.0
    %7114 = vmatpush1.xpose.msra.mxu0 0.0
    %7115 = vmatprep.mubr.f32.mxu0 0.0
    %v7116 = vand.u32 %v6893, 4294901760
    %v7117 = vsub.f32 %v6893, %v7116
    %7118 = vmatmul.mubr.f32.gmra.mrb[0].mxu0 %v7117
    %v7119 = vpop.f32.mrb[0].mxu0
    %v7120 = vadd.f32 %v7046, %v7119
    %v7121 = vpop.f32.mrb[0].mxu0
    %7122 = vdwg.mxu0
    %7123 = vmatprep.subr.mxu0 0.0
    %v7124 = vand.u32 %v6895, 4294901760
    %7125 = vmatpush1.xpose.msra.mxu0 %v7124
    %7126 = vmatprep.subr.mxu0 0.0
    %7127 = vmatpush1.xpose.msra.mxu0 0.0
    %7128 = vmatprep.subr.mxu0 0.0
    %7129 = vmatpush1.xpose.msra.mxu0 0.0
    %7130 = vmatprep.subr.mxu0 0.0
    %7131 = vmatpush1.xpose.msra.mxu0 0.0
    %7132 = vmatprep.subr.mxu0 0.0
    %7133 = vmatpush1.xpose.msra.mxu0 0.0
    %7134 = vmatprep.subr.mxu0 0.0
    %7135 = vmatpush1.xpose.msra.mxu0 0.0
    %7136 = vmatprep.subr.mxu0 0.0
    %7137 = vmatpush1.xpose.msra.mxu0 0.0
    %7138 = vmatprep.subr.mxu0 0.0
    %7139 = vmatpush1.xpose.msra.mxu0 0.0
    %7140 = vmatprep.subr.mxu0 0.0
    %7141 = vmatpush1.xpose.msra.mxu0 0.0
    %7142 = vmatprep.subr.mxu0 0.0
    %7143 = vmatpush1.xpose.msra.mxu0 0.0
    %7144 = vmatprep.subr.mxu0 0.0
    %7145 = vmatpush1.xpose.msra.mxu0 0.0
    %7146 = vmatprep.subr.mxu0 0.0
    %7147 = vmatpush1.xpose.msra.mxu0 0.0
    %7148 = vmatprep.subr.mxu0 0.0
    %7149 = vmatpush1.xpose.msra.mxu0 0.0
    %7150 = vmatprep.subr.mxu0 0.0
    %7151 = vmatpush1.xpose.msra.mxu0 0.0
    %7152 = vmatprep.subr.mxu0 0.0
    %7153 = vmatpush1.xpose.msra.mxu0 0.0
    %7154 = vmatprep.subr.mxu0 0.0
    %7155 = vmatpush1.xpose.msra.mxu0 0.0
    %7156 = vmatprep.subr.mxu0 0.0
    %7157 = vmatpush1.xpose.msra.mxu0 0.0
    %7158 = vmatprep.subr.mxu0 0.0
    %7159 = vmatpush1.xpose.msra.mxu0 0.0
    %7160 = vmatprep.subr.mxu0 0.0
    %7161 = vmatpush1.xpose.msra.mxu0 0.0
    %7162 = vmatprep.subr.mxu0 0.0
    %7163 = vmatpush1.xpose.msra.mxu0 0.0
    %7164 = vmatprep.subr.mxu0 0.0
    %7165 = vmatpush1.xpose.msra.mxu0 0.0
    %7166 = vmatprep.subr.mxu0 0.0
    %7167 = vmatpush1.xpose.msra.mxu0 0.0
    %7168 = vmatprep.subr.mxu0 0.0
    %7169 = vmatpush1.xpose.msra.mxu0 0.0
    %7170 = vmatprep.subr.mxu0 0.0
    %7171 = vmatpush1.xpose.msra.mxu0 0.0
    %7172 = vmatprep.subr.mxu0 0.0
    %7173 = vmatpush1.xpose.msra.mxu0 0.0
    %7174 = vmatprep.subr.mxu0 0.0
    %7175 = vmatpush1.xpose.msra.mxu0 0.0
    %7176 = vmatprep.subr.mxu0 0.0
    %7177 = vmatpush1.xpose.msra.mxu0 0.0
    %7178 = vmatprep.subr.mxu0 0.0
    %7179 = vmatpush1.xpose.msra.mxu0 0.0
    %7180 = vmatprep.subr.mxu0 0.0
    %7181 = vmatpush1.xpose.msra.mxu0 0.0
    %7182 = vmatprep.subr.mxu0 0.0
    %7183 = vmatpush1.xpose.msra.mxu0 0.0
    %7184 = vmatprep.subr.mxu0 0.0
    %7185 = vmatpush1.xpose.msra.mxu0 0.0
    %7186 = vmatprep.subr.mxu0 0.0
    %7187 = vmatpush1.xpose.msra.mxu0 0.0
    %7188 = vmatprep.mubr.f32.mxu0 0.0
    %v7189 = vand.u32 %v6893, 4294901760
    %v7190 = vsub.f32 %v6893, %v7189
    %v7191 = vand.u32 %v7190, 4294901760
    %7192 = vmatmul.mubr.f32.gmra.mrb[0].mxu0 %v7191
    %v7193 = vpop.f32.mrb[0].mxu0
    %v7194 = vadd.f32 %v7120, %v7193
    %v7195 = vpop.f32.mrb[0].mxu0
    %7196 = vdwg.mxu0
    %7197 = vmatprep.subr.mxu0 0.0
    %v7198 = vand.u32 %v6895, 4294901760
    %v7199 = vsub.f32 %v6895, %v7198
    %v7200 = vand.u32 %v7199, 4294901760
    %7201 = vmatpush1.xpose.msra.mxu0 %v7200
    %7202 = vmatprep.subr.mxu0 0.0
    %7203 = vmatpush1.xpose.msra.mxu0 0.0
    %7204 = vmatprep.subr.mxu0 0.0
    %7205 = vmatpush1.xpose.msra.mxu0 0.0
    %7206 = vmatprep.subr.mxu0 0.0
    %7207 = vmatpush1.xpose.msra.mxu0 0.0
    %7208 = vmatprep.subr.mxu0 0.0
    %7209 = vmatpush1.xpose.msra.mxu0 0.0
    %7210 = vmatprep.subr.mxu0 0.0
    %7211 = vmatpush1.xpose.msra.mxu0 0.0
    %7212 = vmatprep.subr.mxu0 0.0
    %7213 = vmatpush1.xpose.msra.mxu0 0.0
    %7214 = vmatprep.subr.mxu0 0.0
    %7215 = vmatpush1.xpose.msra.mxu0 0.0
    %7216 = vmatprep.subr.mxu0 0.0
    %7217 = vmatpush1.xpose.msra.mxu0 0.0
    %7218 = vmatprep.subr.mxu0 0.0
    %7219 = vmatpush1.xpose.msra.mxu0 0.0
    %7220 = vmatprep.subr.mxu0 0.0
    %7221 = vmatpush1.xpose.msra.mxu0 0.0
    %7222 = vmatprep.subr.mxu0 0.0
    %7223 = vmatpush1.xpose.msra.mxu0 0.0
    %7224 = vmatprep.subr.mxu0 0.0
    %7225 = vmatpush1.xpose.msra.mxu0 0.0
    %7226 = vmatprep.subr.mxu0 0.0
    %7227 = vmatpush1.xpose.msra.mxu0 0.0
    %7228 = vmatprep.subr.mxu0 0.0
    %7229 = vmatpush1.xpose.msra.mxu0 0.0
    %7230 = vmatprep.subr.mxu0 0.0
    %7231 = vmatpush1.xpose.msra.mxu0 0.0
    %7232 = vmatprep.subr.mxu0 0.0
    %7233 = vmatpush1.xpose.msra.mxu0 0.0
    %7234 = vmatprep.subr.mxu0 0.0
    %7235 = vmatpush1.xpose.msra.mxu0 0.0
    %7236 = vmatprep.subr.mxu0 0.0
    %7237 = vmatpush1.xpose.msra.mxu0 0.0
    %7238 = vmatprep.subr.mxu0 0.0
    %7239 = vmatpush1.xpose.msra.mxu0 0.0
    %7240 = vmatprep.subr.mxu0 0.0
    %7241 = vmatpush1.xpose.msra.mxu0 0.0
    %7242 = vmatprep.subr.mxu0 0.0
    %7243 = vmatpush1.xpose.msra.mxu0 0.0
    %7244 = vmatprep.subr.mxu0 0.0
    %7245 = vmatpush1.xpose.msra.mxu0 0.0
    %7246 = vmatprep.subr.mxu0 0.0
    %7247 = vmatpush1.xpose.msra.mxu0 0.0
    %7248 = vmatprep.subr.mxu0 0.0
    %7249 = vmatpush1.xpose.msra.mxu0 0.0
    %7250 = vmatprep.subr.mxu0 0.0
    %7251 = vmatpush1.xpose.msra.mxu0 0.0
    %7252 = vmatprep.subr.mxu0 0.0
    %7253 = vmatpush1.xpose.msra.mxu0 0.0
    %7254 = vmatprep.subr.mxu0 0.0
    %7255 = vmatpush1.xpose.msra.mxu0 0.0
    %7256 = vmatprep.subr.mxu0 0.0
    %7257 = vmatpush1.xpose.msra.mxu0 0.0
    %7258 = vmatprep.subr.mxu0 0.0
    %7259 = vmatpush1.xpose.msra.mxu0 0.0
    %7260 = vmatprep.subr.mxu0 0.0
    %7261 = vmatpush1.xpose.msra.mxu0 0.0
    %7262 = vmatprep.subr.mxu0 0.0
    %7263 = vmatpush1.xpose.msra.mxu0 0.0
    %7264 = vmatprep.mubr.f32.mxu0 0.0
    %v7265 = vand.u32 %v6893, 4294901760
    %7266 = vmatmul.mubr.f32.gmra.mrb[0].mxu0 %v7265
    %v7267 = vpop.f32.mrb[0].mxu0
    %v7268 = vadd.f32 %v7194, %v7267
    %v7269 = vpop.f32.mrb[0].mxu0
    %7270 = vdwg.mxu0
    %7271 = vmatprep.subr.mxu0 0.0
    %v7272 = vand.u32 %v6895, 4294901760
    %7273 = vmatpush1.xpose.msra.mxu0 %v7272
    %7274 = vmatprep.subr.mxu0 0.0
    %7275 = vmatpush1.xpose.msra.mxu0 0.0
    %7276 = vmatprep.subr.mxu0 0.0
    %7277 = vmatpush1.xpose.msra.mxu0 0.0
    %7278 = vmatprep.subr.mxu0 0.0
    %7279 = vmatpush1.xpose.msra.mxu0 0.0
    %7280 = vmatprep.subr.mxu0 0.0
    %7281 = vmatpush1.xpose.msra.mxu0 0.0
    %7282 = vmatprep.subr.mxu0 0.0
    %7283 = vmatpush1.xpose.msra.mxu0 0.0
    %7284 = vmatprep.subr.mxu0 0.0
    %7285 = vmatpush1.xpose.msra.mxu0 0.0
    %7286 = vmatprep.subr.mxu0 0.0
    %7287 = vmatpush1.xpose.msra.mxu0 0.0
    %7288 = vmatprep.subr.mxu0 0.0
    %7289 = vmatpush1.xpose.msra.mxu0 0.0
    %7290 = vmatprep.subr.mxu0 0.0
    %7291 = vmatpush1.xpose.msra.mxu0 0.0
    %7292 = vmatprep.subr.mxu0 0.0
    %7293 = vmatpush1.xpose.msra.mxu0 0.0
    %7294 = vmatprep.subr.mxu0 0.0
    %7295 = vmatpush1.xpose.msra.mxu0 0.0
    %7296 = vmatprep.subr.mxu0 0.0
    %7297 = vmatpush1.xpose.msra.mxu0 0.0
    %7298 = vmatprep.subr.mxu0 0.0
    %7299 = vmatpush1.xpose.msra.mxu0 0.0
    %7300 = vmatprep.subr.mxu0 0.0
    %7301 = vmatpush1.xpose.msra.mxu0 0.0
    %7302 = vmatprep.subr.mxu0 0.0
    %7303 = vmatpush1.xpose.msra.mxu0 0.0
    %7304 = vmatprep.subr.mxu0 0.0
    %7305 = vmatpush1.xpose.msra.mxu0 0.0
    %7306 = vmatprep.subr.mxu0 0.0
    %7307 = vmatpush1.xpose.msra.mxu0 0.0
    %7308 = vmatprep.subr.mxu0 0.0
    %7309 = vmatpush1.xpose.msra.mxu0 0.0
    %7310 = vmatprep.subr.mxu0 0.0
    %7311 = vmatpush1.xpose.msra.mxu0 0.0
    %7312 = vmatprep.subr.mxu0 0.0
    %7313 = vmatpush1.xpose.msra.mxu0 0.0
    %7314 = vmatprep.subr.mxu0 0.0
    %7315 = vmatpush1.xpose.msra.mxu0 0.0
    %7316 = vmatprep.subr.mxu0 0.0
    %7317 = vmatpush1.xpose.msra.mxu0 0.0
    %7318 = vmatprep.subr.mxu0 0.0
    %7319 = vmatpush1.xpose.msra.mxu0 0.0
    %7320 = vmatprep.subr.mxu0 0.0
    %7321 = vmatpush1.xpose.msra.mxu0 0.0
    %7322 = vmatprep.subr.mxu0 0.0
    %7323 = vmatpush1.xpose.msra.mxu0 0.0
    %7324 = vmatprep.subr.mxu0 0.0
    %7325 = vmatpush1.xpose.msra.mxu0 0.0
    %7326 = vmatprep.subr.mxu0 0.0
    %7327 = vmatpush1.xpose.msra.mxu0 0.0
    %7328 = vmatprep.subr.mxu0 0.0
    %7329 = vmatpush1.xpose.msra.mxu0 0.0
    %7330 = vmatprep.subr.mxu0 0.0
    %7331 = vmatpush1.xpose.msra.mxu0 0.0
    %7332 = vmatprep.subr.mxu0 0.0
    %7333 = vmatpush1.xpose.msra.mxu0 0.0
    %7334 = vmatprep.subr.mxu0 0.0
    %7335 = vmatpush1.xpose.msra.mxu0 0.0
    %7336 = vmatprep.mubr.f32.mxu0 0.0
    %v7337 = vand.u32 %v6893, 4294901760
    %7338 = vmatmul.mubr.f32.gmra.mrb[0].mxu0 %v7337
    %v7339 = vpop.f32.mrb[0].mxu0
    %v7340 = vadd.f32 %v7268, %v7339
    %v7341 = vpop.f32.mrb[0].mxu0
    %7342 = vdwg.mxu0
    %v7343 = vsel %vm1784, %v6886, -inf
    %7344 = vmax.xlane.f32.xlu0 %v7343
    %v7345 = vpop.xlane.xlu0 %7344
    %v7346 = vsel %vm1784, %v7340, -inf
    %7347 = vmax.xlane.f32.xlu0 %v7346
    %v7348 = vpop.xlane.xlu0 %7347
    %v7349 = vsub.f32 %v6886, %v7345
    %v7350 = vsub.f32 %v7340, %v7348
    %v7351 = vmul.f32 %v7349, 1.442695
    %v7352 = vpow.pop %v7351
    %v7353 = vmul.f32 %v7350, 1.442695
    %v7354 = vpow.pop %v7353
    %v7355 = vsel %vm1784, %v7352, 0.0
    %7356 = vadd.xlane.f32.xlu0 %v7355
    %v7357 = vpop.xlane.xlu0 %7356
    %v7358 = vsel %vm1784, %v7354, 0.0
    %7359 = vadd.xlane.f32.xlu0 %v7358
    %v7360 = vpop.xlane.xlu0 %7359
    %v7361 = vrcp.pop %v7357
    %v7362 = vrcp.pop %v7360
    %v7363 = vmul.f32 %v7352, %v7361
    %v7364 = vmul.f32 %v7354, %v7362
    %7365 = vrot.lane.b32.xlu0 %v1757, 112
    %v7366 = vpop.permute.xlu0 %7365
    %v7369 = vsel %vm1784, %v7363, 0
    %7371 = vmatprep.subr.mxu0 0.0
    %v7372 = vand.u32 %v7366, 4294901760
    %7373 = vmatpush1.msra.mxu0 %v7372
    %7374 = vmatprep.subr.mxu0 0.0
    %7375 = vmatpush1.msra.mxu0 0.0
    %7376 = vmatprep.subr.mxu0 0.0
    %7377 = vmatpush1.msra.mxu0 0.0
    %7378 = vmatprep.subr.mxu0 0.0
    %7379 = vmatpush1.msra.mxu0 0.0
    %7380 = vmatprep.subr.mxu0 0.0
    %7381 = vmatpush1.msra.mxu0 0.0
    %7382 = vmatprep.subr.mxu0 0.0
    %7383 = vmatpush1.msra.mxu0 0.0
    %7384 = vmatprep.subr.mxu0 0.0
    %7385 = vmatpush1.msra.mxu0 0.0
    %7386 = vmatprep.subr.mxu0 0.0
    %7387 = vmatpush1.msra.mxu0 0.0
    %7388 = vmatprep.subr.mxu0 0.0
    %7389 = vmatpush1.msra.mxu0 0.0
    %7390 = vmatprep.subr.mxu0 0.0
    %7391 = vmatpush1.msra.mxu0 0.0
    %7392 = vmatprep.subr.mxu0 0.0
    %7393 = vmatpush1.msra.mxu0 0.0
    %7394 = vmatprep.subr.mxu0 0.0
    %7395 = vmatpush1.msra.mxu0 0.0
    %7396 = vmatprep.subr.mxu0 0.0
    %7397 = vmatpush1.msra.mxu0 0.0
    %7398 = vmatprep.subr.mxu0 0.0
    %7399 = vmatpush1.msra.mxu0 0.0
    %7400 = vmatprep.subr.mxu0 0.0
    %7401 = vmatpush1.msra.mxu0 0.0
    %7402 = vmatprep.subr.mxu0 0.0
    %7403 = vmatpush1.msra.mxu0 0.0
    %7404 = vmatprep.subr.mxu0 0.0
    %7405 = vmatpush1.msra.mxu0 0.0
    %7406 = vmatprep.subr.mxu0 0.0
    %7407 = vmatpush1.msra.mxu0 0.0
    %7408 = vmatprep.subr.mxu0 0.0
    %7409 = vmatpush1.msra.mxu0 0.0
    %7410 = vmatprep.subr.mxu0 0.0
    %7411 = vmatpush1.msra.mxu0 0.0
    %7412 = vmatprep.subr.mxu0 0.0
    %7413 = vmatpush1.msra.mxu0 0.0
    %7414 = vmatprep.subr.mxu0 0.0
    %7415 = vmatpush1.msra.mxu0 0.0
    %7416 = vmatprep.subr.mxu0 0.0
    %7417 = vmatpush1.msra.mxu0 0.0
    %7418 = vmatprep.subr.mxu0 0.0
    %7419 = vmatpush1.msra.mxu0 0.0
    %7420 = vmatprep.subr.mxu0 0.0
    %7421 = vmatpush1.msra.mxu0 0.0
    %7422 = vmatprep.subr.mxu0 0.0
    %7423 = vmatpush1.msra.mxu0 0.0
    %7424 = vmatprep.subr.mxu0 0.0
    %7425 = vmatpush1.msra.mxu0 0.0
    %7426 = vmatprep.subr.mxu0 0.0
    %7427 = vmatpush1.msra.mxu0 0.0
    %7428 = vmatprep.subr.mxu0 0.0
    %7429 = vmatpush1.msra.mxu0 0.0
    %7430 = vmatprep.subr.mxu0 0.0
    %7431 = vmatpush1.msra.mxu0 0.0
    %7432 = vmatprep.subr.mxu0 0.0
    %7433 = vmatpush1.msra.mxu0 0.0
    %7434 = vmatprep.subr.mxu0 0.0
    %7435 = vmatpush1.msra.mxu0 0.0
    %7436 = vmatprep.mubr.f32.mxu0 0.0
    %v7437 = vand.u32 %v7369, 4294901760
    %v7438 = vsub.f32 %v7369, %v7437
    %v7439 = vand.u32 %v7438, 4294901760
    %v7440 = vsub.f32 %v7438, %v7439
    %v7441 = vand.u32 %v7440, 4294901760
    %7442 = vmatmul.mubr.f32.gmra.mrb[0].mxu0 %v7441
    %v7443 = vpop.f32.mrb[0].mxu0
    %v7444 = vadd.f32 0.0, %v7443
    %v7445 = vpop.f32.mrb[0].mxu0
    %7446 = vdwg.mxu0
    %7447 = vmatprep.subr.mxu0 0.0
    %v7448 = vand.u32 %v7366, 4294901760
    %v7449 = vsub.f32 %v7366, %v7448
    %v7450 = vand.u32 %v7449, 4294901760
    %v7451 = vsub.f32 %v7449, %v7450
    %v7452 = vand.u32 %v7451, 4294901760
    %7453 = vmatpush1.msra.mxu0 %v7452
    %7454 = vmatprep.subr.mxu0 0.0
    %7455 = vmatpush1.msra.mxu0 0.0
    %7456 = vmatprep.subr.mxu0 0.0
    %7457 = vmatpush1.msra.mxu0 0.0
    %7458 = vmatprep.subr.mxu0 0.0
    %7459 = vmatpush1.msra.mxu0 0.0
    %7460 = vmatprep.subr.mxu0 0.0
    %7461 = vmatpush1.msra.mxu0 0.0
    %7462 = vmatprep.subr.mxu0 0.0
    %7463 = vmatpush1.msra.mxu0 0.0
    %7464 = vmatprep.subr.mxu0 0.0
    %7465 = vmatpush1.msra.mxu0 0.0
    %7466 = vmatprep.subr.mxu0 0.0
    %7467 = vmatpush1.msra.mxu0 0.0
    %7468 = vmatprep.subr.mxu0 0.0
    %7469 = vmatpush1.msra.mxu0 0.0
    %7470 = vmatprep.subr.mxu0 0.0
    %7471 = vmatpush1.msra.mxu0 0.0
    %7472 = vmatprep.subr.mxu0 0.0
    %7473 = vmatpush1.msra.mxu0 0.0
    %7474 = vmatprep.subr.mxu0 0.0
    %7475 = vmatpush1.msra.mxu0 0.0
    %7476 = vmatprep.subr.mxu0 0.0
    %7477 = vmatpush1.msra.mxu0 0.0
    %7478 = vmatprep.subr.mxu0 0.0
    %7479 = vmatpush1.msra.mxu0 0.0
    %7480 = vmatprep.subr.mxu0 0.0
    %7481 = vmatpush1.msra.mxu0 0.0
    %7482 = vmatprep.subr.mxu0 0.0
    %7483 = vmatpush1.msra.mxu0 0.0
    %7484 = vmatprep.subr.mxu0 0.0
    %7485 = vmatpush1.msra.mxu0 0.0
    %7486 = vmatprep.subr.mxu0 0.0
    %7487 = vmatpush1.msra.mxu0 0.0
    %7488 = vmatprep.subr.mxu0 0.0
    %7489 = vmatpush1.msra.mxu0 0.0
    %7490 = vmatprep.subr.mxu0 0.0
    %7491 = vmatpush1.msra.mxu0 0.0
    %7492 = vmatprep.subr.mxu0 0.0
    %7493 = vmatpush1.msra.mxu0 0.0
    %7494 = vmatprep.subr.mxu0 0.0
    %7495 = vmatpush1.msra.mxu0 0.0
    %7496 = vmatprep.subr.mxu0 0.0
    %7497 = vmatpush1.msra.mxu0 0.0
    %7498 = vmatprep.subr.mxu0 0.0
    %7499 = vmatpush1.msra.mxu0 0.0
    %7500 = vmatprep.subr.mxu0 0.0
    %7501 = vmatpush1.msra.mxu0 0.0
    %7502 = vmatprep.subr.mxu0 0.0
    %7503 = vmatpush1.msra.mxu0 0.0
    %7504 = vmatprep.subr.mxu0 0.0
    %7505 = vmatpush1.msra.mxu0 0.0
    %7506 = vmatprep.subr.mxu0 0.0
    %7507 = vmatpush1.msra.mxu0 0.0
    %7508 = vmatprep.subr.mxu0 0.0
    %7509 = vmatpush1.msra.mxu0 0.0
    %7510 = vmatprep.subr.mxu0 0.0
    %7511 = vmatpush1.msra.mxu0 0.0
    %7512 = vmatprep.subr.mxu0 0.0
    %7513 = vmatpush1.msra.mxu0 0.0
    %7514 = vmatprep.subr.mxu0 0.0
    %7515 = vmatpush1.msra.mxu0 0.0
    %7516 = vmatprep.mubr.f32.mxu0 0.0
    %v7517 = vand.u32 %v7369, 4294901760
    %7518 = vmatmul.mubr.f32.gmra.mrb[0].mxu0 %v7517
    %v7519 = vpop.f32.mrb[0].mxu0
    %v7520 = vadd.f32 %v7444, %v7519
    %v7521 = vpop.f32.mrb[0].mxu0
    %7522 = vdwg.mxu0
    %7523 = vmatprep.subr.mxu0 0.0
    %v7524 = vand.u32 %v7366, 4294901760
    %v7525 = vsub.f32 %v7366, %v7524
    %7526 = vmatpush1.msra.mxu0 %v7525
    %7527 = vmatprep.subr.mxu0 0.0
    %7528 = vmatpush1.msra.mxu0 0.0
    %7529 = vmatprep.subr.mxu0 0.0
    %7530 = vmatpush1.msra.mxu0 0.0
    %7531 = vmatprep.subr.mxu0 0.0
    %7532 = vmatpush1.msra.mxu0 0.0
    %7533 = vmatprep.subr.mxu0 0.0
    %7534 = vmatpush1.msra.mxu0 0.0
    %7535 = vmatprep.subr.mxu0 0.0
    %7536 = vmatpush1.msra.mxu0 0.0
    %7537 = vmatprep.subr.mxu0 0.0
    %7538 = vmatpush1.msra.mxu0 0.0
    %7539 = vmatprep.subr.mxu0 0.0
    %7540 = vmatpush1.msra.mxu0 0.0
    %7541 = vmatprep.subr.mxu0 0.0
    %7542 = vmatpush1.msra.mxu0 0.0
    %7543 = vmatprep.subr.mxu0 0.0
    %7544 = vmatpush1.msra.mxu0 0.0
    %7545 = vmatprep.subr.mxu0 0.0
    %7546 = vmatpush1.msra.mxu0 0.0
    %7547 = vmatprep.subr.mxu0 0.0
    %7548 = vmatpush1.msra.mxu0 0.0
    %7549 = vmatprep.subr.mxu0 0.0
    %7550 = vmatpush1.msra.mxu0 0.0
    %7551 = vmatprep.subr.mxu0 0.0
    %7552 = vmatpush1.msra.mxu0 0.0
    %7553 = vmatprep.subr.mxu0 0.0
    %7554 = vmatpush1.msra.mxu0 0.0
    %7555 = vmatprep.subr.mxu0 0.0
    %7556 = vmatpush1.msra.mxu0 0.0
    %7557 = vmatprep.subr.mxu0 0.0
    %7558 = vmatpush1.msra.mxu0 0.0
    %7559 = vmatprep.subr.mxu0 0.0
    %7560 = vmatpush1.msra.mxu0 0.0
    %7561 = vmatprep.subr.mxu0 0.0
    %7562 = vmatpush1.msra.mxu0 0.0
    %7563 = vmatprep.subr.mxu0 0.0
    %7564 = vmatpush1.msra.mxu0 0.0
    %7565 = vmatprep.subr.mxu0 0.0
    %7566 = vmatpush1.msra.mxu0 0.0
    %7567 = vmatprep.subr.mxu0 0.0
    %7568 = vmatpush1.msra.mxu0 0.0
    %7569 = vmatprep.subr.mxu0 0.0
    %7570 = vmatpush1.msra.mxu0 0.0
    %7571 = vmatprep.subr.mxu0 0.0
    %7572 = vmatpush1.msra.mxu0 0.0
    %7573 = vmatprep.subr.mxu0 0.0
    %7574 = vmatpush1.msra.mxu0 0.0
    %7575 = vmatprep.subr.mxu0 0.0
    %7576 = vmatpush1.msra.mxu0 0.0
    %7577 = vmatprep.subr.mxu0 0.0
    %7578 = vmatpush1.msra.mxu0 0.0
    %7579 = vmatprep.subr.mxu0 0.0
    %7580 = vmatpush1.msra.mxu0 0.0
    %7581 = vmatprep.subr.mxu0 0.0
    %7582 = vmatpush1.msra.mxu0 0.0
    %7583 = vmatprep.subr.mxu0 0.0
    %7584 = vmatpush1.msra.mxu0 0.0
    %7585 = vmatprep.subr.mxu0 0.0
    %7586 = vmatpush1.msra.mxu0 0.0
    %7587 = vmatprep.subr.mxu0 0.0
    %7588 = vmatpush1.msra.mxu0 0.0
    %7589 = vmatprep.mubr.f32.mxu0 0.0
    %v7590 = vand.u32 %v7369, 4294901760
    %v7591 = vsub.f32 %v7369, %v7590
    %7592 = vmatmul.mubr.f32.gmra.mrb[0].mxu0 %v7591
    %v7593 = vpop.f32.mrb[0].mxu0
    %v7594 = vadd.f32 %v7520, %v7593
    %v7595 = vpop.f32.mrb[0].mxu0
    %7596 = vdwg.mxu0
    %7597 = vmatprep.subr.mxu0 0.0
    %v7598 = vand.u32 %v7366, 4294901760
    %7599 = vmatpush1.msra.mxu0 %v7598
    %7600 = vmatprep.subr.mxu0 0.0
    %7601 = vmatpush1.msra.mxu0 0.0
    %7602 = vmatprep.subr.mxu0 0.0
    %7603 = vmatpush1.msra.mxu0 0.0
    %7604 = vmatprep.subr.mxu0 0.0
    %7605 = vmatpush1.msra.mxu0 0.0
    %7606 = vmatprep.subr.mxu0 0.0
    %7607 = vmatpush1.msra.mxu0 0.0
    %7608 = vmatprep.subr.mxu0 0.0
    %7609 = vmatpush1.msra.mxu0 0.0
    %7610 = vmatprep.subr.mxu0 0.0
    %7611 = vmatpush1.msra.mxu0 0.0
    %7612 = vmatprep.subr.mxu0 0.0
    %7613 = vmatpush1.msra.mxu0 0.0
    %7614 = vmatprep.subr.mxu0 0.0
    %7615 = vmatpush1.msra.mxu0 0.0
    %7616 = vmatprep.subr.mxu0 0.0
    %7617 = vmatpush1.msra.mxu0 0.0
    %7618 = vmatprep.subr.mxu0 0.0
    %7619 = vmatpush1.msra.mxu0 0.0
    %7620 = vmatprep.subr.mxu0 0.0
    %7621 = vmatpush1.msra.mxu0 0.0
    %7622 = vmatprep.subr.mxu0 0.0
    %7623 = vmatpush1.msra.mxu0 0.0
    %7624 = vmatprep.subr.mxu0 0.0
    %7625 = vmatpush1.msra.mxu0 0.0
    %7626 = vmatprep.subr.mxu0 0.0
    %7627 = vmatpush1.msra.mxu0 0.0
    %7628 = vmatprep.subr.mxu0 0.0
    %7629 = vmatpush1.msra.mxu0 0.0
    %7630 = vmatprep.subr.mxu0 0.0
    %7631 = vmatpush1.msra.mxu0 0.0
    %7632 = vmatprep.subr.mxu0 0.0
    %7633 = vmatpush1.msra.mxu0 0.0
    %7634 = vmatprep.subr.mxu0 0.0
    %7635 = vmatpush1.msra.mxu0 0.0
    %7636 = vmatprep.subr.mxu0 0.0
    %7637 = vmatpush1.msra.mxu0 0.0
    %7638 = vmatprep.subr.mxu0 0.0
    %7639 = vmatpush1.msra.mxu0 0.0
    %7640 = vmatprep.subr.mxu0 0.0
    %7641 = vmatpush1.msra.mxu0 0.0
    %7642 = vmatprep.subr.mxu0 0.0
    %7643 = vmatpush1.msra.mxu0 0.0
    %7644 = vmatprep.subr.mxu0 0.0
    %7645 = vmatpush1.msra.mxu0 0.0
    %7646 = vmatprep.subr.mxu0 0.0
    %7647 = vmatpush1.msra.mxu0 0.0
    %7648 = vmatprep.subr.mxu0 0.0
    %7649 = vmatpush1.msra.mxu0 0.0
    %7650 = vmatprep.subr.mxu0 0.0
    %7651 = vmatpush1.msra.mxu0 0.0
    %7652 = vmatprep.subr.mxu0 0.0
    %7653 = vmatpush1.msra.mxu0 0.0
    %7654 = vmatprep.subr.mxu0 0.0
    %7655 = vmatpush1.msra.mxu0 0.0
    %7656 = vmatprep.subr.mxu0 0.0
    %7657 = vmatpush1.msra.mxu0 0.0
    %7658 = vmatprep.subr.mxu0 0.0
    %7659 = vmatpush1.msra.mxu0 0.0
    %7660 = vmatprep.subr.mxu0 0.0
    %7661 = vmatpush1.msra.mxu0 0.0
    %7662 = vmatprep.mubr.f32.mxu0 0.0
    %v7663 = vand.u32 %v7369, 4294901760
    %v7664 = vsub.f32 %v7369, %v7663
    %v7665 = vand.u32 %v7664, 4294901760
    %7666 = vmatmul.mubr.f32.gmra.mrb[0].mxu0 %v7665
    %v7667 = vpop.f32.mrb[0].mxu0
    %v7668 = vadd.f32 %v7594, %v7667
    %v7669 = vpop.f32.mrb[0].mxu0
    %7670 = vdwg.mxu0
    %7671 = vmatprep.subr.mxu0 0.0
    %v7672 = vand.u32 %v7366, 4294901760
    %v7673 = vsub.f32 %v7366, %v7672
    %v7674 = vand.u32 %v7673, 4294901760
    %7675 = vmatpush1.msra.mxu0 %v7674
    %7676 = vmatprep.subr.mxu0 0.0
    %7677 = vmatpush1.msra.mxu0 0.0
    %7678 = vmatprep.subr.mxu0 0.0
    %7679 = vmatpush1.msra.mxu0 0.0
    %7680 = vmatprep.subr.mxu0 0.0
    %7681 = vmatpush1.msra.mxu0 0.0
    %7682 = vmatprep.subr.mxu0 0.0
    %7683 = vmatpush1.msra.mxu0 0.0
    %7684 = vmatprep.subr.mxu0 0.0
    %7685 = vmatpush1.msra.mxu0 0.0
    %7686 = vmatprep.subr.mxu0 0.0
    %7687 = vmatpush1.msra.mxu0 0.0
    %7688 = vmatprep.subr.mxu0 0.0
    %7689 = vmatpush1.msra.mxu0 0.0
    %7690 = vmatprep.subr.mxu0 0.0
    %7691 = vmatpush1.msra.mxu0 0.0
    %7692 = vmatprep.subr.mxu0 0.0
    %7693 = vmatpush1.msra.mxu0 0.0
    %7694 = vmatprep.subr.mxu0 0.0
    %7695 = vmatpush1.msra.mxu0 0.0
    %7696 = vmatprep.subr.mxu0 0.0
    %7697 = vmatpush1.msra.mxu0 0.0
    %7698 = vmatprep.subr.mxu0 0.0
    %7699 = vmatpush1.msra.mxu0 0.0
    %7700 = vmatprep.subr.mxu0 0.0
    %7701 = vmatpush1.msra.mxu0 0.0
    %7702 = vmatprep.subr.mxu0 0.0
    %7703 = vmatpush1.msra.mxu0 0.0
    %7704 = vmatprep.subr.mxu0 0.0
    %7705 = vmatpush1.msra.mxu0 0.0
    %7706 = vmatprep.subr.mxu0 0.0
    %7707 = vmatpush1.msra.mxu0 0.0
    %7708 = vmatprep.subr.mxu0 0.0
    %7709 = vmatpush1.msra.mxu0 0.0
    %7710 = vmatprep.subr.mxu0 0.0
    %7711 = vmatpush1.msra.mxu0 0.0
    %7712 = vmatprep.subr.mxu0 0.0
    %7713 = vmatpush1.msra.mxu0 0.0
    %7714 = vmatprep.subr.mxu0 0.0
    %7715 = vmatpush1.msra.mxu0 0.0
    %7716 = vmatprep.subr.mxu0 0.0
    %7717 = vmatpush1.msra.mxu0 0.0
    %7718 = vmatprep.subr.mxu0 0.0
    %7719 = vmatpush1.msra.mxu0 0.0
    %7720 = vmatprep.subr.mxu0 0.0
    %7721 = vmatpush1.msra.mxu0 0.0
    %7722 = vmatprep.subr.mxu0 0.0
    %7723 = vmatpush1.msra.mxu0 0.0
    %7724 = vmatprep.subr.mxu0 0.0
    %7725 = vmatpush1.msra.mxu0 0.0
    %7726 = vmatprep.subr.mxu0 0.0
    %7727 = vmatpush1.msra.mxu0 0.0
    %7728 = vmatprep.subr.mxu0 0.0
    %7729 = vmatpush1.msra.mxu0 0.0
    %7730 = vmatprep.subr.mxu0 0.0
    %7731 = vmatpush1.msra.mxu0 0.0
    %7732 = vmatprep.subr.mxu0 0.0
    %7733 = vmatpush1.msra.mxu0 0.0
    %7734 = vmatprep.subr.mxu0 0.0
    %7735 = vmatpush1.msra.mxu0 0.0
    %7736 = vmatprep.subr.mxu0 0.0
    %7737 = vmatpush1.msra.mxu0 0.0
    %7738 = vmatprep.mubr.f32.mxu0 0.0
    %v7739 = vand.u32 %v7369, 4294901760
    %7740 = vmatmul.mubr.f32.gmra.mrb[0].mxu0 %v7739
    %v7741 = vpop.f32.mrb[0].mxu0
    %v7742 = vadd.f32 %v7668, %v7741
    %v7743 = vpop.f32.mrb[0].mxu0
    %7744 = vdwg.mxu0
    %7745 = vmatprep.subr.mxu0 0.0
    %v7746 = vand.u32 %v7366, 4294901760
    %7747 = vmatpush1.msra.mxu0 %v7746
    %7748 = vmatprep.subr.mxu0 0.0
    %7749 = vmatpush1.msra.mxu0 0.0
    %7750 = vmatprep.subr.mxu0 0.0
    %7751 = vmatpush1.msra.mxu0 0.0
    %7752 = vmatprep.subr.mxu0 0.0
    %7753 = vmatpush1.msra.mxu0 0.0
    %7754 = vmatprep.subr.mxu0 0.0
    %7755 = vmatpush1.msra.mxu0 0.0
    %7756 = vmatprep.subr.mxu0 0.0
    %7757 = vmatpush1.msra.mxu0 0.0
    %7758 = vmatprep.subr.mxu0 0.0
    %7759 = vmatpush1.msra.mxu0 0.0
    %7760 = vmatprep.subr.mxu0 0.0
    %7761 = vmatpush1.msra.mxu0 0.0
    %7762 = vmatprep.subr.mxu0 0.0
    %7763 = vmatpush1.msra.mxu0 0.0
    %7764 = vmatprep.subr.mxu0 0.0
    %7765 = vmatpush1.msra.mxu0 0.0
    %7766 = vmatprep.subr.mxu0 0.0
    %7767 = vmatpush1.msra.mxu0 0.0
    %7768 = vmatprep.subr.mxu0 0.0
    %7769 = vmatpush1.msra.mxu0 0.0
    %7770 = vmatprep.subr.mxu0 0.0
    %7771 = vmatpush1.msra.mxu0 0.0
    %7772 = vmatprep.subr.mxu0 0.0
    %7773 = vmatpush1.msra.mxu0 0.0
    %7774 = vmatprep.subr.mxu0 0.0
    %7775 = vmatpush1.msra.mxu0 0.0
    %7776 = vmatprep.subr.mxu0 0.0
    %7777 = vmatpush1.msra.mxu0 0.0
    %7778 = vmatprep.subr.mxu0 0.0
    %7779 = vmatpush1.msra.mxu0 0.0
    %7780 = vmatprep.subr.mxu0 0.0
    %7781 = vmatpush1.msra.mxu0 0.0
    %7782 = vmatprep.subr.mxu0 0.0
    %7783 = vmatpush1.msra.mxu0 0.0
    %7784 = vmatprep.subr.mxu0 0.0
    %7785 = vmatpush1.msra.mxu0 0.0
    %7786 = vmatprep.subr.mxu0 0.0
    %7787 = vmatpush1.msra.mxu0 0.0
    %7788 = vmatprep.subr.mxu0 0.0
    %7789 = vmatpush1.msra.mxu0 0.0
    %7790 = vmatprep.subr.mxu0 0.0
    %7791 = vmatpush1.msra.mxu0 0.0
    %7792 = vmatprep.subr.mxu0 0.0
    %7793 = vmatpush1.msra.mxu0 0.0
    %7794 = vmatprep.subr.mxu0 0.0
    %7795 = vmatpush1.msra.mxu0 0.0
    %7796 = vmatprep.subr.mxu0 0.0
    %7797 = vmatpush1.msra.mxu0 0.0
    %7798 = vmatprep.subr.mxu0 0.0
    %7799 = vmatpush1.msra.mxu0 0.0
    %7800 = vmatprep.subr.mxu0 0.0
    %7801 = vmatpush1.msra.mxu0 0.0
    %7802 = vmatprep.subr.mxu0 0.0
    %7803 = vmatpush1.msra.mxu0 0.0
    %7804 = vmatprep.subr.mxu0 0.0
    %7805 = vmatpush1.msra.mxu0 0.0
    %7806 = vmatprep.subr.mxu0 0.0
    %7807 = vmatpush1.msra.mxu0 0.0
    %7808 = vmatprep.subr.mxu0 0.0
    %7809 = vmatpush1.msra.mxu0 0.0
    %7810 = vmatprep.mubr.f32.mxu0 0.0
    %v7811 = vand.u32 %v7369, 4294901760
    %7812 = vmatmul.mubr.f32.gmra.mrb[0].mxu0 %v7811
    %v7813 = vpop.f32.mrb[0].mxu0
    %v7814 = vadd.f32 %v7742, %v7813
    %v7815 = vpop.f32.mrb[0].mxu0
    %7816 = vdwg.mxu0
    %7817 = vrot.lane.b32.xlu0 %v1763, 112
    %v7818 = vpop.permute.xlu0 %7817
    %v7821 = vsel %vm1784, %v7364, 0
    %7823 = vmatprep.subr.mxu0 0.0
    %v7824 = vand.u32 %v7818, 4294901760
    %7825 = vmatpush1.msra.mxu0 %v7824
    %7826 = vmatprep.subr.mxu0 0.0
    %7827 = vmatpush1.msra.mxu0 0.0
    %7828 = vmatprep.subr.mxu0 0.0
    %7829 = vmatpush1.msra.mxu0 0.0
    %7830 = vmatprep.subr.mxu0 0.0
    %7831 = vmatpush1.msra.mxu0 0.0
    %7832 = vmatprep.subr.mxu0 0.0
    %7833 = vmatpush1.msra.mxu0 0.0
    %7834 = vmatprep.subr.mxu0 0.0
    %7835 = vmatpush1.msra.mxu0 0.0
    %7836 = vmatprep.subr.mxu0 0.0
    %7837 = vmatpush1.msra.mxu0 0.0
    %7838 = vmatprep.subr.mxu0 0.0
    %7839 = vmatpush1.msra.mxu0 0.0
    %7840 = vmatprep.subr.mxu0 0.0
    %7841 = vmatpush1.msra.mxu0 0.0
    %7842 = vmatprep.subr.mxu0 0.0
    %7843 = vmatpush1.msra.mxu0 0.0
    %7844 = vmatprep.subr.mxu0 0.0
    %7845 = vmatpush1.msra.mxu0 0.0
    %7846 = vmatprep.subr.mxu0 0.0
    %7847 = vmatpush1.msra.mxu0 0.0
    %7848 = vmatprep.subr.mxu0 0.0
    %7849 = vmatpush1.msra.mxu0 0.0
    %7850 = vmatprep.subr.mxu0 0.0
    %7851 = vmatpush1.msra.mxu0 0.0
    %7852 = vmatprep.subr.mxu0 0.0
    %7853 = vmatpush1.msra.mxu0 0.0
    %7854 = vmatprep.subr.mxu0 0.0
    %7855 = vmatpush1.msra.mxu0 0.0
    %7856 = vmatprep.subr.mxu0 0.0
    %7857 = vmatpush1.msra.mxu0 0.0
    %7858 = vmatprep.subr.mxu0 0.0
    %7859 = vmatpush1.msra.mxu0 0.0
    %7860 = vmatprep.subr.mxu0 0.0
    %7861 = vmatpush1.msra.mxu0 0.0
    %7862 = vmatprep.subr.mxu0 0.0
    %7863 = vmatpush1.msra.mxu0 0.0
    %7864 = vmatprep.subr.mxu0 0.0
    %7865 = vmatpush1.msra.mxu0 0.0
    %7866 = vmatprep.subr.mxu0 0.0
    %7867 = vmatpush1.msra.mxu0 0.0
    %7868 = vmatprep.subr.mxu0 0.0
    %7869 = vmatpush1.msra.mxu0 0.0
    %7870 = vmatprep.subr.mxu0 0.0
    %7871 = vmatpush1.msra.mxu0 0.0
    %7872 = vmatprep.subr.mxu0 0.0
    %7873 = vmatpush1.msra.mxu0 0.0
    %7874 = vmatprep.subr.mxu0 0.0
    %7875 = vmatpush1.msra.mxu0 0.0
    %7876 = vmatprep.subr.mxu0 0.0
    %7877 = vmatpush1.msra.mxu0 0.0
    %7878 = vmatprep.subr.mxu0 0.0
    %7879 = vmatpush1.msra.mxu0 0.0
    %7880 = vmatprep.subr.mxu0 0.0
    %7881 = vmatpush1.msra.mxu0 0.0
    %7882 = vmatprep.subr.mxu0 0.0
    %7883 = vmatpush1.msra.mxu0 0.0
    %7884 = vmatprep.subr.mxu0 0.0
    %7885 = vmatpush1.msra.mxu0 0.0
    %7886 = vmatprep.subr.mxu0 0.0
    %7887 = vmatpush1.msra.mxu0 0.0
    %7888 = vmatprep.mubr.f32.mxu0 0.0
    %v7889 = vand.u32 %v7821, 4294901760
    %v7890 = vsub.f32 %v7821, %v7889
    %v7891 = vand.u32 %v7890, 4294901760
    %v7892 = vsub.f32 %v7890, %v7891
    %v7893 = vand.u32 %v7892, 4294901760
    %7894 = vmatmul.mubr.f32.gmra.mrb[0].mxu0 %v7893
    %v7895 = vpop.f32.mrb[0].mxu0
    %v7896 = vadd.f32 0.0, %v7895
    %v7897 = vpop.f32.mrb[0].mxu0
    %7898 = vdwg.mxu0
    %7899 = vmatprep.subr.mxu0 0.0
    %v7900 = vand.u32 %v7818, 4294901760
    %v7901 = vsub.f32 %v7818, %v7900
    %v7902 = vand.u32 %v7901, 4294901760
    %v7903 = vsub.f32 %v7901, %v7902
    %v7904 = vand.u32 %v7903, 4294901760
    %7905 = vmatpush1.msra.mxu0 %v7904
    %7906 = vmatprep.subr.mxu0 0.0
    %7907 = vmatpush1.msra.mxu0 0.0
    %7908 = vmatprep.subr.mxu0 0.0
    %7909 = vmatpush1.msra.mxu0 0.0
    %7910 = vmatprep.subr.mxu0 0.0
    %7911 = vmatpush1.msra.mxu0 0.0
    %7912 = vmatprep.subr.mxu0 0.0
    %7913 = vmatpush1.msra.mxu0 0.0
    %7914 = vmatprep.subr.mxu0 0.0
    %7915 = vmatpush1.msra.mxu0 0.0
    %7916 = vmatprep.subr.mxu0 0.0
    %7917 = vmatpush1.msra.mxu0 0.0
    %7918 = vmatprep.subr.mxu0 0.0
    %7919 = vmatpush1.msra.mxu0 0.0
    %7920 = vmatprep.subr.mxu0 0.0
    %7921 = vmatpush1.msra.mxu0 0.0
    %7922 = vmatprep.subr.mxu0 0.0
    %7923 = vmatpush1.msra.mxu0 0.0
    %7924 = vmatprep.subr.mxu0 0.0
    %7925 = vmatpush1.msra.mxu0 0.0
    %7926 = vmatprep.subr.mxu0 0.0
    %7927 = vmatpush1.msra.mxu0 0.0
    %7928 = vmatprep.subr.mxu0 0.0
    %7929 = vmatpush1.msra.mxu0 0.0
    %7930 = vmatprep.subr.mxu0 0.0
    %7931 = vmatpush1.msra.mxu0 0.0
    %7932 = vmatprep.subr.mxu0 0.0
    %7933 = vmatpush1.msra.mxu0 0.0
    %7934 = vmatprep.subr.mxu0 0.0
    %7935 = vmatpush1.msra.mxu0 0.0
    %7936 = vmatprep.subr.mxu0 0.0
    %7937 = vmatpush1.msra.mxu0 0.0
    %7938 = vmatprep.subr.mxu0 0.0
    %7939 = vmatpush1.msra.mxu0 0.0
    %7940 = vmatprep.subr.mxu0 0.0
    %7941 = vmatpush1.msra.mxu0 0.0
    %7942 = vmatprep.subr.mxu0 0.0
    %7943 = vmatpush1.msra.mxu0 0.0
    %7944 = vmatprep.subr.mxu0 0.0
    %7945 = vmatpush1.msra.mxu0 0.0
    %7946 = vmatprep.subr.mxu0 0.0
    %7947 = vmatpush1.msra.mxu0 0.0
    %7948 = vmatprep.subr.mxu0 0.0
    %7949 = vmatpush1.msra.mxu0 0.0
    %7950 = vmatprep.subr.mxu0 0.0
    %7951 = vmatpush1.msra.mxu0 0.0
    %7952 = vmatprep.subr.mxu0 0.0
    %7953 = vmatpush1.msra.mxu0 0.0
    %7954 = vmatprep.subr.mxu0 0.0
    %7955 = vmatpush1.msra.mxu0 0.0
    %7956 = vmatprep.subr.mxu0 0.0
    %7957 = vmatpush1.msra.mxu0 0.0
    %7958 = vmatprep.subr.mxu0 0.0
    %7959 = vmatpush1.msra.mxu0 0.0
    %7960 = vmatprep.subr.mxu0 0.0
    %7961 = vmatpush1.msra.mxu0 0.0
    %7962 = vmatprep.subr.mxu0 0.0
    %7963 = vmatpush1.msra.mxu0 0.0
    %7964 = vmatprep.subr.mxu0 0.0
    %7965 = vmatpush1.msra.mxu0 0.0
    %7966 = vmatprep.subr.mxu0 0.0
    %7967 = vmatpush1.msra.mxu0 0.0
    %7968 = vmatprep.mubr.f32.mxu0 0.0
    %v7969 = vand.u32 %v7821, 4294901760
    %7970 = vmatmul.mubr.f32.gmra.mrb[0].mxu0 %v7969
    %v7971 = vpop.f32.mrb[0].mxu0
    %v7972 = vadd.f32 %v7896, %v7971
    %v7973 = vpop.f32.mrb[0].mxu0
    %7974 = vdwg.mxu0
    %7975 = vmatprep.subr.mxu0 0.0
    %v7976 = vand.u32 %v7818, 4294901760
    %v7977 = vsub.f32 %v7818, %v7976
    %7978 = vmatpush1.msra.mxu0 %v7977
    %7979 = vmatprep.subr.mxu0 0.0
    %7980 = vmatpush1.msra.mxu0 0.0
    %7981 = vmatprep.subr.mxu0 0.0
    %7982 = vmatpush1.msra.mxu0 0.0
    %7983 = vmatprep.subr.mxu0 0.0
    %7984 = vmatpush1.msra.mxu0 0.0
    %7985 = vmatprep.subr.mxu0 0.0
    %7986 = vmatpush1.msra.mxu0 0.0
    %7987 = vmatprep.subr.mxu0 0.0
    %7988 = vmatpush1.msra.mxu0 0.0
    %7989 = vmatprep.subr.mxu0 0.0
    %7990 = vmatpush1.msra.mxu0 0.0
    %7991 = vmatprep.subr.mxu0 0.0
    %7992 = vmatpush1.msra.mxu0 0.0
    %7993 = vmatprep.subr.mxu0 0.0
    %7994 = vmatpush1.msra.mxu0 0.0
    %7995 = vmatprep.subr.mxu0 0.0
    %7996 = vmatpush1.msra.mxu0 0.0
    %7997 = vmatprep.subr.mxu0 0.0
    %7998 = vmatpush1.msra.mxu0 0.0
    %7999 = vmatprep.subr.mxu0 0.0
    %8000 = vmatpush1.msra.mxu0 0.0
    %8001 = vmatprep.subr.mxu0 0.0
    %8002 = vmatpush1.msra.mxu0 0.0
    %8003 = vmatprep.subr.mxu0 0.0
    %8004 = vmatpush1.msra.mxu0 0.0
    %8005 = vmatprep.subr.mxu0 0.0
    %8006 = vmatpush1.msra.mxu0 0.0
    %8007 = vmatprep.subr.mxu0 0.0
    %8008 = vmatpush1.msra.mxu0 0.0
    %8009 = vmatprep.subr.mxu0 0.0
    %8010 = vmatpush1.msra.mxu0 0.0
    %8011 = vmatprep.subr.mxu0 0.0
    %8012 = vmatpush1.msra.mxu0 0.0
    %8013 = vmatprep.subr.mxu0 0.0
    %8014 = vmatpush1.msra.mxu0 0.0
    %8015 = vmatprep.subr.mxu0 0.0
    %8016 = vmatpush1.msra.mxu0 0.0
    %8017 = vmatprep.subr.mxu0 0.0
    %8018 = vmatpush1.msra.mxu0 0.0
    %8019 = vmatprep.subr.mxu0 0.0
    %8020 = vmatpush1.msra.mxu0 0.0
    %8021 = vmatprep.subr.mxu0 0.0
    %8022 = vmatpush1.msra.mxu0 0.0
    %8023 = vmatprep.subr.mxu0 0.0
    %8024 = vmatpush1.msra.mxu0 0.0
    %8025 = vmatprep.subr.mxu0 0.0
    %8026 = vmatpush1.msra.mxu0 0.0
    %8027 = vmatprep.subr.mxu0 0.0
    %8028 = vmatpush1.msra.mxu0 0.0
    %8029 = vmatprep.subr.mxu0 0.0
    %8030 = vmatpush1.msra.mxu0 0.0
    %8031 = vmatprep.subr.mxu0 0.0
    %8032 = vmatpush1.msra.mxu0 0.0
    %8033 = vmatprep.subr.mxu0 0.0
    %8034 = vmatpush1.msra.mxu0 0.0
    %8035 = vmatprep.subr.mxu0 0.0
    %8036 = vmatpush1.msra.mxu0 0.0
    %8037 = vmatprep.subr.mxu0 0.0
    %8038 = vmatpush1.msra.mxu0 0.0
    %8039 = vmatprep.subr.mxu0 0.0
    %8040 = vmatpush1.msra.mxu0 0.0
    %8041 = vmatprep.mubr.f32.mxu0 0.0
    %v8042 = vand.u32 %v7821, 4294901760
    %v8043 = vsub.f32 %v7821, %v8042
    %8044 = vmatmul.mubr.f32.gmra.mrb[0].mxu0 %v8043
    %v8045 = vpop.f32.mrb[0].mxu0
    %v8046 = vadd.f32 %v7972, %v8045
    %v8047 = vpop.f32.mrb[0].mxu0
    %8048 = vdwg.mxu0
    %8049 = vmatprep.subr.mxu0 0.0
    %v8050 = vand.u32 %v7818, 4294901760
    %8051 = vmatpush1.msra.mxu0 %v8050
    %8052 = vmatprep.subr.mxu0 0.0
    %8053 = vmatpush1.msra.mxu0 0.0
    %8054 = vmatprep.subr.mxu0 0.0
    %8055 = vmatpush1.msra.mxu0 0.0
    %8056 = vmatprep.subr.mxu0 0.0
    %8057 = vmatpush1.msra.mxu0 0.0
    %8058 = vmatprep.subr.mxu0 0.0
    %8059 = vmatpush1.msra.mxu0 0.0
    %8060 = vmatprep.subr.mxu0 0.0
    %8061 = vmatpush1.msra.mxu0 0.0
    %8062 = vmatprep.subr.mxu0 0.0
    %8063 = vmatpush1.msra.mxu0 0.0
    %8064 = vmatprep.subr.mxu0 0.0
    %8065 = vmatpush1.msra.mxu0 0.0
    %8066 = vmatprep.subr.mxu0 0.0
    %8067 = vmatpush1.msra.mxu0 0.0
    %8068 = vmatprep.subr.mxu0 0.0
    %8069 = vmatpush1.msra.mxu0 0.0
    %8070 = vmatprep.subr.mxu0 0.0
    %8071 = vmatpush1.msra.mxu0 0.0
    %8072 = vmatprep.subr.mxu0 0.0
    %8073 = vmatpush1.msra.mxu0 0.0
    %8074 = vmatprep.subr.mxu0 0.0
    %8075 = vmatpush1.msra.mxu0 0.0
    %8076 = vmatprep.subr.mxu0 0.0
    %8077 = vmatpush1.msra.mxu0 0.0
    %8078 = vmatprep.subr.mxu0 0.0
    %8079 = vmatpush1.msra.mxu0 0.0
    %8080 = vmatprep.subr.mxu0 0.0
    %8081 = vmatpush1.msra.mxu0 0.0
    %8082 = vmatprep.subr.mxu0 0.0
    %8083 = vmatpush1.msra.mxu0 0.0
    %8084 = vmatprep.subr.mxu0 0.0
    %8085 = vmatpush1.msra.mxu0 0.0
    %8086 = vmatprep.subr.mxu0 0.0
    %8087 = vmatpush1.msra.mxu0 0.0
    %8088 = vmatprep.subr.mxu0 0.0
    %8089 = vmatpush1.msra.mxu0 0.0
    %8090 = vmatprep.subr.mxu0 0.0
    %8091 = vmatpush1.msra.mxu0 0.0
    %8092 = vmatprep.subr.mxu0 0.0
    %8093 = vmatpush1.msra.mxu0 0.0
    %8094 = vmatprep.subr.mxu0 0.0
    %8095 = vmatpush1.msra.mxu0 0.0
    %8096 = vmatprep.subr.mxu0 0.0
    %8097 = vmatpush1.msra.mxu0 0.0
    %8098 = vmatprep.subr.mxu0 0.0
    %8099 = vmatpush1.msra.mxu0 0.0
    %8100 = vmatprep.subr.mxu0 0.0
    %8101 = vmatpush1.msra.mxu0 0.0
    %8102 = vmatprep.subr.mxu0 0.0
    %8103 = vmatpush1.msra.mxu0 0.0
    %8104 = vmatprep.subr.mxu0 0.0
    %8105 = vmatpush1.msra.mxu0 0.0
    %8106 = vmatprep.subr.mxu0 0.0
    %8107 = vmatpush1.msra.mxu0 0.0
    %8108 = vmatprep.subr.mxu0 0.0
    %8109 = vmatpush1.msra.mxu0 0.0
    %8110 = vmatprep.subr.mxu0 0.0
    %8111 = vmatpush1.msra.mxu0 0.0
    %8112 = vmatprep.subr.mxu0 0.0
    %8113 = vmatpush1.msra.mxu0 0.0
    %8114 = vmatprep.mubr.f32.mxu0 0.0
    %v8115 = vand.u32 %v7821, 4294901760
    %v8116 = vsub.f32 %v7821, %v8115
    %v8117 = vand.u32 %v8116, 4294901760
    %8118 = vmatmul.mubr.f32.gmra.mrb[0].mxu0 %v8117
    %v8119 = vpop.f32.mrb[0].mxu0
    %v8120 = vadd.f32 %v8046, %v8119
    %v8121 = vpop.f32.mrb[0].mxu0
    %8122 = vdwg.mxu0
    %8123 = vmatprep.subr.mxu0 0.0
    %v8124 = vand.u32 %v7818, 4294901760
    %v8125 = vsub.f32 %v7818, %v8124
    %v8126 = vand.u32 %v8125, 4294901760
    %8127 = vmatpush1.msra.mxu0 %v8126
    %8128 = vmatprep.subr.mxu0 0.0
    %8129 = vmatpush1.msra.mxu0 0.0
    %8130 = vmatprep.subr.mxu0 0.0
    %8131 = vmatpush1.msra.mxu0 0.0
    %8132 = vmatprep.subr.mxu0 0.0
    %8133 = vmatpush1.msra.mxu0 0.0
    %8134 = vmatprep.subr.mxu0 0.0
    %8135 = vmatpush1.msra.mxu0 0.0
    %8136 = vmatprep.subr.mxu0 0.0
    %8137 = vmatpush1.msra.mxu0 0.0
    %8138 = vmatprep.subr.mxu0 0.0
    %8139 = vmatpush1.msra.mxu0 0.0
    %8140 = vmatprep.subr.mxu0 0.0
    %8141 = vmatpush1.msra.mxu0 0.0
    %8142 = vmatprep.subr.mxu0 0.0
    %8143 = vmatpush1.msra.mxu0 0.0
    %8144 = vmatprep.subr.mxu0 0.0
    %8145 = vmatpush1.msra.mxu0 0.0
    %8146 = vmatprep.subr.mxu0 0.0
    %8147 = vmatpush1.msra.mxu0 0.0
    %8148 = vmatprep.subr.mxu0 0.0
    %8149 = vmatpush1.msra.mxu0 0.0
    %8150 = vmatprep.subr.mxu0 0.0
    %8151 = vmatpush1.msra.mxu0 0.0
    %8152 = vmatprep.subr.mxu0 0.0
    %8153 = vmatpush1.msra.mxu0 0.0
    %8154 = vmatprep.subr.mxu0 0.0
    %8155 = vmatpush1.msra.mxu0 0.0
    %8156 = vmatprep.subr.mxu0 0.0
    %8157 = vmatpush1.msra.mxu0 0.0
    %8158 = vmatprep.subr.mxu0 0.0
    %8159 = vmatpush1.msra.mxu0 0.0
    %8160 = vmatprep.subr.mxu0 0.0
    %8161 = vmatpush1.msra.mxu0 0.0
    %8162 = vmatprep.subr.mxu0 0.0
    %8163 = vmatpush1.msra.mxu0 0.0
    %8164 = vmatprep.subr.mxu0 0.0
    %8165 = vmatpush1.msra.mxu0 0.0
    %8166 = vmatprep.subr.mxu0 0.0
    %8167 = vmatpush1.msra.mxu0 0.0
    %8168 = vmatprep.subr.mxu0 0.0
    %8169 = vmatpush1.msra.mxu0 0.0
    %8170 = vmatprep.subr.mxu0 0.0
    %8171 = vmatpush1.msra.mxu0 0.0
    %8172 = vmatprep.subr.mxu0 0.0
    %8173 = vmatpush1.msra.mxu0 0.0
    %8174 = vmatprep.subr.mxu0 0.0
    %8175 = vmatpush1.msra.mxu0 0.0
    %8176 = vmatprep.subr.mxu0 0.0
    %8177 = vmatpush1.msra.mxu0 0.0
    %8178 = vmatprep.subr.mxu0 0.0
    %8179 = vmatpush1.msra.mxu0 0.0
    %8180 = vmatprep.subr.mxu0 0.0
    %8181 = vmatpush1.msra.mxu0 0.0
    %8182 = vmatprep.subr.mxu0 0.0
    %8183 = vmatpush1.msra.mxu0 0.0
    %8184 = vmatprep.subr.mxu0 0.0
    %8185 = vmatpush1.msra.mxu0 0.0
    %8186 = vmatprep.subr.mxu0 0.0
    %8187 = vmatpush1.msra.mxu0 0.0
    %8188 = vmatprep.subr.mxu0 0.0
    %8189 = vmatpush1.msra.mxu0 0.0
    %8190 = vmatprep.mubr.f32.mxu0 0.0
    %v8191 = vand.u32 %v7821, 4294901760
    %8192 = vmatmul.mubr.f32.gmra.mrb[0].mxu0 %v8191
    %v8193 = vpop.f32.mrb[0].mxu0
    %v8194 = vadd.f32 %v8120, %v8193
    %v8195 = vpop.f32.mrb[0].mxu0
    %8196 = vdwg.mxu0
    %8197 = vmatprep.subr.mxu0 0.0
    %v8198 = vand.u32 %v7818, 4294901760
    %8199 = vmatpush1.msra.mxu0 %v8198
    %8200 = vmatprep.subr.mxu0 0.0
    %8201 = vmatpush1.msra.mxu0 0.0
    %8202 = vmatprep.subr.mxu0 0.0
    %8203 = vmatpush1.msra.mxu0 0.0
    %8204 = vmatprep.subr.mxu0 0.0
    %8205 = vmatpush1.msra.mxu0 0.0
    %8206 = vmatprep.subr.mxu0 0.0
    %8207 = vmatpush1.msra.mxu0 0.0
    %8208 = vmatprep.subr.mxu0 0.0
    %8209 = vmatpush1.msra.mxu0 0.0
    %8210 = vmatprep.subr.mxu0 0.0
    %8211 = vmatpush1.msra.mxu0 0.0
    %8212 = vmatprep.subr.mxu0 0.0
    %8213 = vmatpush1.msra.mxu0 0.0
    %8214 = vmatprep.subr.mxu0 0.0
    %8215 = vmatpush1.msra.mxu0 0.0
    %8216 = vmatprep.subr.mxu0 0.0
    %8217 = vmatpush1.msra.mxu0 0.0
    %8218 = vmatprep.subr.mxu0 0.0
    %8219 = vmatpush1.msra.mxu0 0.0
    %8220 = vmatprep.subr.mxu0 0.0
    %8221 = vmatpush1.msra.mxu0 0.0
    %8222 = vmatprep.subr.mxu0 0.0
    %8223 = vmatpush1.msra.mxu0 0.0
    %8224 = vmatprep.subr.mxu0 0.0
    %8225 = vmatpush1.msra.mxu0 0.0
    %8226 = vmatprep.subr.mxu0 0.0
    %8227 = vmatpush1.msra.mxu0 0.0
    %8228 = vmatprep.subr.mxu0 0.0
    %8229 = vmatpush1.msra.mxu0 0.0
    %8230 = vmatprep.subr.mxu0 0.0
    %8231 = vmatpush1.msra.mxu0 0.0
    %8232 = vmatprep.subr.mxu0 0.0
    %8233 = vmatpush1.msra.mxu0 0.0
    %8234 = vmatprep.subr.mxu0 0.0
    %8235 = vmatpush1.msra.mxu0 0.0
    %8236 = vmatprep.subr.mxu0 0.0
    %8237 = vmatpush1.msra.mxu0 0.0
    %8238 = vmatprep.subr.mxu0 0.0
    %8239 = vmatpush1.msra.mxu0 0.0
    %8240 = vmatprep.subr.mxu0 0.0
    %8241 = vmatpush1.msra.mxu0 0.0
    %8242 = vmatprep.subr.mxu0 0.0
    %8243 = vmatpush1.msra.mxu0 0.0
    %8244 = vmatprep.subr.mxu0 0.0
    %8245 = vmatpush1.msra.mxu0 0.0
    %8246 = vmatprep.subr.mxu0 0.0
    %8247 = vmatpush1.msra.mxu0 0.0
    %8248 = vmatprep.subr.mxu0 0.0
    %8249 = vmatpush1.msra.mxu0 0.0
    %8250 = vmatprep.subr.mxu0 0.0
    %8251 = vmatpush1.msra.mxu0 0.0
    %8252 = vmatprep.subr.mxu0 0.0
    %8253 = vmatpush1.msra.mxu0 0.0
    %8254 = vmatprep.subr.mxu0 0.0
    %8255 = vmatpush1.msra.mxu0 0.0
    %8256 = vmatprep.subr.mxu0 0.0
    %8257 = vmatpush1.msra.mxu0 0.0
    %8258 = vmatprep.subr.mxu0 0.0
    %8259 = vmatpush1.msra.mxu0 0.0
    %8260 = vmatprep.subr.mxu0 0.0
    %8261 = vmatpush1.msra.mxu0 0.0
    %8262 = vmatprep.mubr.f32.mxu0 0.0
    %v8263 = vand.u32 %v7821, 4294901760
    %8264 = vmatmul.mubr.f32.gmra.mrb[0].mxu0 %v8263
    %v8265 = vpop.f32.mrb[0].mxu0
    %v8266 = vadd.f32 %v8194, %v8265
    %v8267 = vpop.f32.mrb[0].mxu0
    %8268 = vdwg.mxu0
    %v8270 = vsel %vm1784, %v7814, 0
    %v8273 = vsel %vm1784, %v8266, 0
    %8275 = vmatprep.subr.mxu0 0.0
    %v8276 = vand.u32 %v1782, 4294901760
    %8277 = vmatpush1.msra.mxu0 %v8276
    %8278 = vmatprep.subr.mxu0 0.0
    %8279 = vmatpush1.msra.mxu0 0.0
    %8280 = vmatprep.subr.mxu0 0.0
    %8281 = vmatpush1.msra.mxu0 0.0
    %8282 = vmatprep.subr.mxu0 0.0
    %8283 = vmatpush1.msra.mxu0 0.0
    %8284 = vmatprep.subr.mxu0 0.0
    %8285 = vmatpush1.msra.mxu0 0.0
    %8286 = vmatprep.subr.mxu0 0.0
    %8287 = vmatpush1.msra.mxu0 0.0
    %8288 = vmatprep.subr.mxu0 0.0
    %8289 = vmatpush1.msra.mxu0 0.0
    %8290 = vmatprep.subr.mxu0 0.0
    %8291 = vmatpush1.msra.mxu0 0.0
    %8292 = vmatprep.subr.mxu0 0.0
    %8293 = vmatpush1.msra.mxu0 0.0
    %8294 = vmatprep.subr.mxu0 0.0
    %8295 = vmatpush1.msra.mxu0 0.0
    %8296 = vmatprep.subr.mxu0 0.0
    %8297 = vmatpush1.msra.mxu0 0.0
    %8298 = vmatprep.subr.mxu0 0.0
    %8299 = vmatpush1.msra.mxu0 0.0
    %8300 = vmatprep.subr.mxu0 0.0
    %8301 = vmatpush1.msra.mxu0 0.0
    %8302 = vmatprep.subr.mxu0 0.0
    %8303 = vmatpush1.msra.mxu0 0.0
    %8304 = vmatprep.subr.mxu0 0.0
    %8305 = vmatpush1.msra.mxu0 0.0
    %8306 = vmatprep.subr.mxu0 0.0
    %8307 = vmatpush1.msra.mxu0 0.0
    %8308 = vmatprep.subr.mxu0 0.0
    %8309 = vmatpush1.msra.mxu0 0.0
    %8310 = vmatprep.subr.mxu0 0.0
    %8311 = vmatpush1.msra.mxu0 0.0
    %8312 = vmatprep.subr.mxu0 0.0
    %8313 = vmatpush1.msra.mxu0 0.0
    %8314 = vmatprep.subr.mxu0 0.0
    %8315 = vmatpush1.msra.mxu0 0.0
    %8316 = vmatprep.subr.mxu0 0.0
    %8317 = vmatpush1.msra.mxu0 0.0
    %8318 = vmatprep.subr.mxu0 0.0
    %8319 = vmatpush1.msra.mxu0 0.0
    %8320 = vmatprep.subr.mxu0 0.0
    %8321 = vmatpush1.msra.mxu0 0.0
    %8322 = vmatprep.subr.mxu0 0.0
    %8323 = vmatpush1.msra.mxu0 0.0
    %8324 = vmatprep.subr.mxu0 0.0
    %8325 = vmatpush1.msra.mxu0 0.0
    %8326 = vmatprep.subr.mxu0 0.0
    %8327 = vmatpush1.msra.mxu0 0.0
    %8328 = vmatprep.subr.mxu0 0.0
    %8329 = vmatpush1.msra.mxu0 0.0
    %8330 = vmatprep.subr.mxu0 0.0
    %8331 = vmatpush1.msra.mxu0 0.0
    %8332 = vmatprep.subr.mxu0 0.0
    %8333 = vmatpush1.msra.mxu0 0.0
    %8334 = vmatprep.subr.mxu0 0.0
    %8335 = vmatpush1.msra.mxu0 0.0
    %8336 = vmatprep.subr.mxu0 0.0
    %8337 = vmatpush1.msra.mxu0 0.0
    %8338 = vmatprep.subr.mxu0 0.0
    %8339 = vmatpush1.msra.mxu0 0.0
    %8340 = vmatprep.mubr.f32.mxu0 0.0
    %v8341 = vand.u32 %v8270, 4294901760
    %v8342 = vsub.f32 %v8270, %v8341
    %v8343 = vand.u32 %v8342, 4294901760
    %v8344 = vsub.f32 %v8342, %v8343
    %v8345 = vand.u32 %v8344, 4294901760
    %8346 = vmatmul.mubr.f32.gmra.mrb[0].mxu0 %v8345
    %v8347 = vpop.f32.mrb[0].mxu0
    %v8348 = vadd.f32 0.0, %v8347
    %v8349 = vpop.f32.mrb[0].mxu0
    %8350 = vmatprep.mubr.f32.mxu0 0.0
    %v8351 = vand.u32 %v8273, 4294901760
    %v8352 = vsub.f32 %v8273, %v8351
    %v8353 = vand.u32 %v8352, 4294901760
    %v8354 = vsub.f32 %v8352, %v8353
    %v8355 = vand.u32 %v8354, 4294901760
    %8356 = vmatmul.mubr.f32.gmra.mrb[0].mxu0 %v8355
    %v8357 = vpop.f32.mrb[0].mxu0
    %v8358 = vadd.f32 0.0, %v8357
    %v8359 = vpop.f32.mrb[0].mxu0
    %8360 = vdwg.mxu0
    %8361 = vmatprep.subr.mxu0 0.0
    %v8362 = vand.u32 %v1782, 4294901760
    %v8363 = vsub.f32 %v1782, %v8362
    %v8364 = vand.u32 %v8363, 4294901760
    %v8365 = vsub.f32 %v8363, %v8364
    %v8366 = vand.u32 %v8365, 4294901760
    %8367 = vmatpush1.msra.mxu0 %v8366
    %8368 = vmatprep.subr.mxu0 0.0
    %8369 = vmatpush1.msra.mxu0 0.0
    %8370 = vmatprep.subr.mxu0 0.0
    %8371 = vmatpush1.msra.mxu0 0.0
    %8372 = vmatprep.subr.mxu0 0.0
    %8373 = vmatpush1.msra.mxu0 0.0
    %8374 = vmatprep.subr.mxu0 0.0
    %8375 = vmatpush1.msra.mxu0 0.0
    %8376 = vmatprep.subr.mxu0 0.0
    %8377 = vmatpush1.msra.mxu0 0.0
    %8378 = vmatprep.subr.mxu0 0.0
    %8379 = vmatpush1.msra.mxu0 0.0
    %8380 = vmatprep.subr.mxu0 0.0
    %8381 = vmatpush1.msra.mxu0 0.0
    %8382 = vmatprep.subr.mxu0 0.0
    %8383 = vmatpush1.msra.mxu0 0.0
    %8384 = vmatprep.subr.mxu0 0.0
    %8385 = vmatpush1.msra.mxu0 0.0
    %8386 = vmatprep.subr.mxu0 0.0
    %8387 = vmatpush1.msra.mxu0 0.0
    %8388 = vmatprep.subr.mxu0 0.0
    %8389 = vmatpush1.msra.mxu0 0.0
    %8390 = vmatprep.subr.mxu0 0.0
    %8391 = vmatpush1.msra.mxu0 0.0
    %8392 = vmatprep.subr.mxu0 0.0
    %8393 = vmatpush1.msra.mxu0 0.0
    %8394 = vmatprep.subr.mxu0 0.0
    %8395 = vmatpush1.msra.mxu0 0.0
    %8396 = vmatprep.subr.mxu0 0.0
    %8397 = vmatpush1.msra.mxu0 0.0
    %8398 = vmatprep.subr.mxu0 0.0
    %8399 = vmatpush1.msra.mxu0 0.0
    %8400 = vmatprep.subr.mxu0 0.0
    %8401 = vmatpush1.msra.mxu0 0.0
    %8402 = vmatprep.subr.mxu0 0.0
    %8403 = vmatpush1.msra.mxu0 0.0
    %8404 = vmatprep.subr.mxu0 0.0
    %8405 = vmatpush1.msra.mxu0 0.0
    %8406 = vmatprep.subr.mxu0 0.0
    %8407 = vmatpush1.msra.mxu0 0.0
    %8408 = vmatprep.subr.mxu0 0.0
    %8409 = vmatpush1.msra.mxu0 0.0
    %8410 = vmatprep.subr.mxu0 0.0
    %8411 = vmatpush1.msra.mxu0 0.0
    %8412 = vmatprep.subr.mxu0 0.0
    %8413 = vmatpush1.msra.mxu0 0.0
    %8414 = vmatprep.subr.mxu0 0.0
    %8415 = vmatpush1.msra.mxu0 0.0
    %8416 = vmatprep.subr.mxu0 0.0
    %8417 = vmatpush1.msra.mxu0 0.0
    %8418 = vmatprep.subr.mxu0 0.0
    %8419 = vmatpush1.msra.mxu0 0.0
    %8420 = vmatprep.subr.mxu0 0.0
    %8421 = vmatpush1.msra.mxu0 0.0
    %8422 = vmatprep.subr.mxu0 0.0
    %8423 = vmatpush1.msra.mxu0 0.0
    %8424 = vmatprep.subr.mxu0 0.0
    %8425 = vmatpush1.msra.mxu0 0.0
    %8426 = vmatprep.subr.mxu0 0.0
    %8427 = vmatpush1.msra.mxu0 0.0
    %8428 = vmatprep.subr.mxu0 0.0
    %8429 = vmatpush1.msra.mxu0 0.0
    %8430 = vmatprep.mubr.f32.mxu0 0.0
    %v8431 = vand.u32 %v8270, 4294901760
    %8432 = vmatmul.mubr.f32.gmra.mrb[0].mxu0 %v8431
    %v8433 = vpop.f32.mrb[0].mxu0
    %v8434 = vadd.f32 %v8348, %v8433
    %v8435 = vpop.f32.mrb[0].mxu0
    %8436 = vmatprep.mubr.f32.mxu0 0.0
    %v8437 = vand.u32 %v8273, 4294901760
    %8438 = vmatmul.mubr.f32.gmra.mrb[0].mxu0 %v8437
    %v8439 = vpop.f32.mrb[0].mxu0
    %v8440 = vadd.f32 %v8358, %v8439
    %v8441 = vpop.f32.mrb[0].mxu0
    %8442 = vdwg.mxu0
    %8443 = vmatprep.subr.mxu0 0.0
    %v8444 = vand.u32 %v1782, 4294901760
    %v8445 = vsub.f32 %v1782, %v8444
    %8446 = vmatpush1.msra.mxu0 %v8445
    %8447 = vmatprep.subr.mxu0 0.0
    %8448 = vmatpush1.msra.mxu0 0.0
    %8449 = vmatprep.subr.mxu0 0.0
    %8450 = vmatpush1.msra.mxu0 0.0
    %8451 = vmatprep.subr.mxu0 0.0
    %8452 = vmatpush1.msra.mxu0 0.0
    %8453 = vmatprep.subr.mxu0 0.0
    %8454 = vmatpush1.msra.mxu0 0.0
    %8455 = vmatprep.subr.mxu0 0.0
    %8456 = vmatpush1.msra.mxu0 0.0
    %8457 = vmatprep.subr.mxu0 0.0
    %8458 = vmatpush1.msra.mxu0 0.0
    %8459 = vmatprep.subr.mxu0 0.0
    %8460 = vmatpush1.msra.mxu0 0.0
    %8461 = vmatprep.subr.mxu0 0.0
    %8462 = vmatpush1.msra.mxu0 0.0
    %8463 = vmatprep.subr.mxu0 0.0
    %8464 = vmatpush1.msra.mxu0 0.0
    %8465 = vmatprep.subr.mxu0 0.0
    %8466 = vmatpush1.msra.mxu0 0.0
    %8467 = vmatprep.subr.mxu0 0.0
    %8468 = vmatpush1.msra.mxu0 0.0
    %8469 = vmatprep.subr.mxu0 0.0
    %8470 = vmatpush1.msra.mxu0 0.0
    %8471 = vmatprep.subr.mxu0 0.0
    %8472 = vmatpush1.msra.mxu0 0.0
    %8473 = vmatprep.subr.mxu0 0.0
    %8474 = vmatpush1.msra.mxu0 0.0
    %8475 = vmatprep.subr.mxu0 0.0
    %8476 = vmatpush1.msra.mxu0 0.0
    %8477 = vmatprep.subr.mxu0 0.0
    %8478 = vmatpush1.msra.mxu0 0.0
    %8479 = vmatprep.subr.mxu0 0.0
    %8480 = vmatpush1.msra.mxu0 0.0
    %8481 = vmatprep.subr.mxu0 0.0
    %8482 = vmatpush1.msra.mxu0 0.0
    %8483 = vmatprep.subr.mxu0 0.0
    %8484 = vmatpush1.msra.mxu0 0.0
    %8485 = vmatprep.subr.mxu0 0.0
    %8486 = vmatpush1.msra.mxu0 0.0
    %8487 = vmatprep.subr.mxu0 0.0
    %8488 = vmatpush1.msra.mxu0 0.0
    %8489 = vmatprep.subr.mxu0 0.0
    %8490 = vmatpush1.msra.mxu0 0.0
    %8491 = vmatprep.subr.mxu0 0.0
    %8492 = vmatpush1.msra.mxu0 0.0
    %8493 = vmatprep.subr.mxu0 0.0
    %8494 = vmatpush1.msra.mxu0 0.0
    %8495 = vmatprep.subr.mxu0 0.0
    %8496 = vmatpush1.msra.mxu0 0.0
    %8497 = vmatprep.subr.mxu0 0.0
    %8498 = vmatpush1.msra.mxu0 0.0
    %8499 = vmatprep.subr.mxu0 0.0
    %8500 = vmatpush1.msra.mxu0 0.0
    %8501 = vmatprep.subr.mxu0 0.0
    %8502 = vmatpush1.msra.mxu0 0.0
    %8503 = vmatprep.subr.mxu0 0.0
    %8504 = vmatpush1.msra.mxu0 0.0
    %8505 = vmatprep.subr.mxu0 0.0
    %8506 = vmatpush1.msra.mxu0 0.0
    %8507 = vmatprep.subr.mxu0 0.0
    %8508 = vmatpush1.msra.mxu0 0.0
    %8509 = vmatprep.mubr.f32.mxu0 0.0
    %v8510 = vand.u32 %v8270, 4294901760
    %v8511 = vsub.f32 %v8270, %v8510
    %8512 = vmatmul.mubr.f32.gmra.mrb[0].mxu0 %v8511
    %v8513 = vpop.f32.mrb[0].mxu0
    %v8514 = vadd.f32 %v8434, %v8513
    %v8515 = vpop.f32.mrb[0].mxu0
    %8516 = vmatprep.mubr.f32.mxu0 0.0
    %v8517 = vand.u32 %v8273, 4294901760
    %v8518 = vsub.f32 %v8273, %v8517
    %8519 = vmatmul.mubr.f32.gmra.mrb[0].mxu0 %v8518
    %v8520 = vpop.f32.mrb[0].mxu0
    %v8521 = vadd.f32 %v8440, %v8520
    %v8522 = vpop.f32.mrb[0].mxu0
    %8523 = vdwg.mxu0
    %8524 = vmatprep.subr.mxu0 0.0
    %v8525 = vand.u32 %v1782, 4294901760
    %8526 = vmatpush1.msra.mxu0 %v8525
    %8527 = vmatprep.subr.mxu0 0.0
    %8528 = vmatpush1.msra.mxu0 0.0
    %8529 = vmatprep.subr.mxu0 0.0
    %8530 = vmatpush1.msra.mxu0 0.0
    %8531 = vmatprep.subr.mxu0 0.0
    %8532 = vmatpush1.msra.mxu0 0.0
    %8533 = vmatprep.subr.mxu0 0.0
    %8534 = vmatpush1.msra.mxu0 0.0
    %8535 = vmatprep.subr.mxu0 0.0
    %8536 = vmatpush1.msra.mxu0 0.0
    %8537 = vmatprep.subr.mxu0 0.0
    %8538 = vmatpush1.msra.mxu0 0.0
    %8539 = vmatprep.subr.mxu0 0.0
    %8540 = vmatpush1.msra.mxu0 0.0
    %8541 = vmatprep.subr.mxu0 0.0
    %8542 = vmatpush1.msra.mxu0 0.0
    %8543 = vmatprep.subr.mxu0 0.0
    %8544 = vmatpush1.msra.mxu0 0.0
    %8545 = vmatprep.subr.mxu0 0.0
    %8546 = vmatpush1.msra.mxu0 0.0
    %8547 = vmatprep.subr.mxu0 0.0
    %8548 = vmatpush1.msra.mxu0 0.0
    %8549 = vmatprep.subr.mxu0 0.0
    %8550 = vmatpush1.msra.mxu0 0.0
    %8551 = vmatprep.subr.mxu0 0.0
    %8552 = vmatpush1.msra.mxu0 0.0
    %8553 = vmatprep.subr.mxu0 0.0
    %8554 = vmatpush1.msra.mxu0 0.0
    %8555 = vmatprep.subr.mxu0 0.0
    %8556 = vmatpush1.msra.mxu0 0.0
    %8557 = vmatprep.subr.mxu0 0.0
    %8558 = vmatpush1.msra.mxu0 0.0
    %8559 = vmatprep.subr.mxu0 0.0
    %8560 = vmatpush1.msra.mxu0 0.0
    %8561 = vmatprep.subr.mxu0 0.0
    %8562 = vmatpush1.msra.mxu0 0.0
    %8563 = vmatprep.subr.mxu0 0.0
    %8564 = vmatpush1.msra.mxu0 0.0
    %8565 = vmatprep.subr.mxu0 0.0
    %8566 = vmatpush1.msra.mxu0 0.0
    %8567 = vmatprep.subr.mxu0 0.0
    %8568 = vmatpush1.msra.mxu0 0.0
    %8569 = vmatprep.subr.mxu0 0.0
    %8570 = vmatpush1.msra.mxu0 0.0
    %8571 = vmatprep.subr.mxu0 0.0
    %8572 = vmatpush1.msra.mxu0 0.0
    %8573 = vmatprep.subr.mxu0 0.0
    %8574 = vmatpush1.msra.mxu0 0.0
    %8575 = vmatprep.subr.mxu0 0.0
    %8576 = vmatpush1.msra.mxu0 0.0
    %8577 = vmatprep.subr.mxu0 0.0
    %8578 = vmatpush1.msra.mxu0 0.0
    %8579 = vmatprep.subr.mxu0 0.0
    %8580 = vmatpush1.msra.mxu0 0.0
    %8581 = vmatprep.subr.mxu0 0.0
    %8582 = vmatpush1.msra.mxu0 0.0
    %8583 = vmatprep.subr.mxu0 0.0
    %8584 = vmatpush1.msra.mxu0 0.0
    %8585 = vmatprep.subr.mxu0 0.0
    %8586 = vmatpush1.msra.mxu0 0.0
    %8587 = vmatprep.subr.mxu0 0.0
    %8588 = vmatpush1.msra.mxu0 0.0
    %8589 = vmatprep.mubr.f32.mxu0 0.0
    %v8590 = vand.u32 %v8270, 4294901760
    %v8591 = vsub.f32 %v8270, %v8590
    %v8592 = vand.u32 %v8591, 4294901760
    %8593 = vmatmul.mubr.f32.gmra.mrb[0].mxu0 %v8592
    %v8594 = vpop.f32.mrb[0].mxu0
    %v8595 = vadd.f32 %v8514, %v8594
    %v8596 = vpop.f32.mrb[0].mxu0
    %8597 = vmatprep.mubr.f32.mxu0 0.0
    %v8598 = vand.u32 %v8273, 4294901760
    %v8599 = vsub.f32 %v8273, %v8598
    %v8600 = vand.u32 %v8599, 4294901760
    %8601 = vmatmul.mubr.f32.gmra.mrb[0].mxu0 %v8600
    %v8602 = vpop.f32.mrb[0].mxu0
    %v8603 = vadd.f32 %v8521, %v8602
    %v8604 = vpop.f32.mrb[0].mxu0
    %8605 = vdwg.mxu0
    %8606 = vmatprep.subr.mxu0 0.0
    %v8607 = vand.u32 %v1782, 4294901760
    %v8608 = vsub.f32 %v1782, %v8607
    %v8609 = vand.u32 %v8608, 4294901760
    %8610 = vmatpush1.msra.mxu0 %v8609
    %8611 = vmatprep.subr.mxu0 0.0
    %8612 = vmatpush1.msra.mxu0 0.0
    %8613 = vmatprep.subr.mxu0 0.0
    %8614 = vmatpush1.msra.mxu0 0.0
    %8615 = vmatprep.subr.mxu0 0.0
    %8616 = vmatpush1.msra.mxu0 0.0
    %8617 = vmatprep.subr.mxu0 0.0
    %8618 = vmatpush1.msra.mxu0 0.0
    %8619 = vmatprep.subr.mxu0 0.0
    %8620 = vmatpush1.msra.mxu0 0.0
    %8621 = vmatprep.subr.mxu0 0.0
    %8622 = vmatpush1.msra.mxu0 0.0
    %8623 = vmatprep.subr.mxu0 0.0
    %8624 = vmatpush1.msra.mxu0 0.0
    %8625 = vmatprep.subr.mxu0 0.0
    %8626 = vmatpush1.msra.mxu0 0.0
    %8627 = vmatprep.subr.mxu0 0.0
    %8628 = vmatpush1.msra.mxu0 0.0
    %8629 = vmatprep.subr.mxu0 0.0
    %8630 = vmatpush1.msra.mxu0 0.0
    %8631 = vmatprep.subr.mxu0 0.0
    %8632 = vmatpush1.msra.mxu0 0.0
    %8633 = vmatprep.subr.mxu0 0.0
    %8634 = vmatpush1.msra.mxu0 0.0
    %8635 = vmatprep.subr.mxu0 0.0
    %8636 = vmatpush1.msra.mxu0 0.0
    %8637 = vmatprep.subr.mxu0 0.0
    %8638 = vmatpush1.msra.mxu0 0.0
    %8639 = vmatprep.subr.mxu0 0.0
    %8640 = vmatpush1.msra.mxu0 0.0
    %8641 = vmatprep.subr.mxu0 0.0
    %8642 = vmatpush1.msra.mxu0 0.0
    %8643 = vmatprep.subr.mxu0 0.0
    %8644 = vmatpush1.msra.mxu0 0.0
    %8645 = vmatprep.subr.mxu0 0.0
    %8646 = vmatpush1.msra.mxu0 0.0
    %8647 = vmatprep.subr.mxu0 0.0
    %8648 = vmatpush1.msra.mxu0 0.0
    %8649 = vmatprep.subr.mxu0 0.0
    %8650 = vmatpush1.msra.mxu0 0.0
    %8651 = vmatprep.subr.mxu0 0.0
    %8652 = vmatpush1.msra.mxu0 0.0
    %8653 = vmatprep.subr.mxu0 0.0
    %8654 = vmatpush1.msra.mxu0 0.0
    %8655 = vmatprep.subr.mxu0 0.0
    %8656 = vmatpush1.msra.mxu0 0.0
    %8657 = vmatprep.subr.mxu0 0.0
    %8658 = vmatpush1.msra.mxu0 0.0
    %8659 = vmatprep.subr.mxu0 0.0
    %8660 = vmatpush1.msra.mxu0 0.0
    %8661 = vmatprep.subr.mxu0 0.0
    %8662 = vmatpush1.msra.mxu0 0.0
    %8663 = vmatprep.subr.mxu0 0.0
    %8664 = vmatpush1.msra.mxu0 0.0
    %8665 = vmatprep.subr.mxu0 0.0
    %8666 = vmatpush1.msra.mxu0 0.0
    %8667 = vmatprep.subr.mxu0 0.0
    %8668 = vmatpush1.msra.mxu0 0.0
    %8669 = vmatprep.subr.mxu0 0.0
    %8670 = vmatpush1.msra.mxu0 0.0
    %8671 = vmatprep.subr.mxu0 0.0
    %8672 = vmatpush1.msra.mxu0 0.0
    %8673 = vmatprep.mubr.f32.mxu0 0.0
    %v8674 = vand.u32 %v8270, 4294901760
    %8675 = vmatmul.mubr.f32.gmra.mrb[0].mxu0 %v8674
    %v8676 = vpop.f32.mrb[0].mxu0
    %v8677 = vadd.f32 %v8595, %v8676
    %v8678 = vpop.f32.mrb[0].mxu0
    %8679 = vmatprep.mubr.f32.mxu0 0.0
    %v8680 = vand.u32 %v8273, 4294901760
    %8681 = vmatmul.mubr.f32.gmra.mrb[0].mxu0 %v8680
    %v8682 = vpop.f32.mrb[0].mxu0
    %v8683 = vadd.f32 %v8603, %v8682
    %v8684 = vpop.f32.mrb[0].mxu0
    %8685 = vdwg.mxu0
    %8686 = vmatprep.subr.mxu0 0.0
    %v8687 = vand.u32 %v1782, 4294901760
    %8688 = vmatpush1.msra.mxu0 %v8687
    %8689 = vmatprep.subr.mxu0 0.0
    %8690 = vmatpush1.msra.mxu0 0.0
    %8691 = vmatprep.subr.mxu0 0.0
    %8692 = vmatpush1.msra.mxu0 0.0
    %8693 = vmatprep.subr.mxu0 0.0
    %8694 = vmatpush1.msra.mxu0 0.0
    %8695 = vmatprep.subr.mxu0 0.0
    %8696 = vmatpush1.msra.mxu0 0.0
    %8697 = vmatprep.subr.mxu0 0.0
    %8698 = vmatpush1.msra.mxu0 0.0
    %8699 = vmatprep.subr.mxu0 0.0
    %8700 = vmatpush1.msra.mxu0 0.0
    %8701 = vmatprep.subr.mxu0 0.0
    %8702 = vmatpush1.msra.mxu0 0.0
    %8703 = vmatprep.subr.mxu0 0.0
    %8704 = vmatpush1.msra.mxu0 0.0
    %8705 = vmatprep.subr.mxu0 0.0
    %8706 = vmatpush1.msra.mxu0 0.0
    %8707 = vmatprep.subr.mxu0 0.0
    %8708 = vmatpush1.msra.mxu0 0.0
    %8709 = vmatprep.subr.mxu0 0.0
    %8710 = vmatpush1.msra.mxu0 0.0
    %8711 = vmatprep.subr.mxu0 0.0
    %8712 = vmatpush1.msra.mxu0 0.0
    %8713 = vmatprep.subr.mxu0 0.0
    %8714 = vmatpush1.msra.mxu0 0.0
    %8715 = vmatprep.subr.mxu0 0.0
    %8716 = vmatpush1.msra.mxu0 0.0
    %8717 = vmatprep.subr.mxu0 0.0
    %8718 = vmatpush1.msra.mxu0 0.0
    %8719 = vmatprep.subr.mxu0 0.0
    %8720 = vmatpush1.msra.mxu0 0.0
    %8721 = vmatprep.subr.mxu0 0.0
    %8722 = vmatpush1.msra.mxu0 0.0
    %8723 = vmatprep.subr.mxu0 0.0
    %8724 = vmatpush1.msra.mxu0 0.0
    %8725 = vmatprep.subr.mxu0 0.0
    %8726 = vmatpush1.msra.mxu0 0.0
    %8727 = vmatprep.subr.mxu0 0.0
    %8728 = vmatpush1.msra.mxu0 0.0
    %8729 = vmatprep.subr.mxu0 0.0
    %8730 = vmatpush1.msra.mxu0 0.0
    %8731 = vmatprep.subr.mxu0 0.0
    %8732 = vmatpush1.msra.mxu0 0.0
    %8733 = vmatprep.subr.mxu0 0.0
    %8734 = vmatpush1.msra.mxu0 0.0
    %8735 = vmatprep.subr.mxu0 0.0
    %8736 = vmatpush1.msra.mxu0 0.0
    %8737 = vmatprep.subr.mxu0 0.0
    %8738 = vmatpush1.msra.mxu0 0.0
    %8739 = vmatprep.subr.mxu0 0.0
    %8740 = vmatpush1.msra.mxu0 0.0
    %8741 = vmatprep.subr.mxu0 0.0
    %8742 = vmatpush1.msra.mxu0 0.0
    %8743 = vmatprep.subr.mxu0 0.0
    %8744 = vmatpush1.msra.mxu0 0.0
    %8745 = vmatprep.subr.mxu0 0.0
    %8746 = vmatpush1.msra.mxu0 0.0
    %8747 = vmatprep.subr.mxu0 0.0
    %8748 = vmatpush1.msra.mxu0 0.0
    %8749 = vmatprep.subr.mxu0 0.0
    %8750 = vmatpush1.msra.mxu0 0.0
    %8751 = vmatprep.mubr.f32.mxu0 0.0
    %v8752 = vand.u32 %v8270, 4294901760
    %8753 = vmatmul.mubr.f32.gmra.mrb[0].mxu0 %v8752
    %v8754 = vpop.f32.mrb[0].mxu0
    %v8755 = vadd.f32 %v8677, %v8754
    %v8756 = vpop.f32.mrb[0].mxu0
    %8757 = vmatprep.mubr.f32.mxu0 0.0
    %v8758 = vand.u32 %v8273, 4294901760
    %8759 = vmatmul.mubr.f32.gmra.mrb[0].mxu0 %v8758
    %v8760 = vpop.f32.mrb[0].mxu0
    %v8761 = vadd.f32 %v8683, %v8760
    %v8762 = vpop.f32.mrb[0].mxu0
    %8763 = vdwg.mxu0
    %v8764 = vadd.f32 %v6426, %v8755
    %v8765 = vadd.f32 %v6432, %v8761
    %8766 = vrot.lane.b32.xlu0 %v663, 104
    %v8767 = vpop.permute.xlu0 %8766
    %8768 = vrot.lane.b32.xlu0 %v1210, 104
    %v8769 = vpop.permute.xlu0 %8768
    %v8770 = vsel %vm1784, %v8767, 0
    %v8772 = vsel %vm1784, %v8769, 0
    %8774 = vmatprep.subr.mxu0 0.0
    %v8775 = vand.u32 %v8772, 4294901760
    %8776 = vmatpush1.xpose.msra.mxu0 %v8775
    %8777 = vmatprep.subr.mxu0 0.0
    %8778 = vmatpush1.xpose.msra.mxu0 0.0
    %8779 = vmatprep.subr.mxu0 0.0
    %8780 = vmatpush1.xpose.msra.mxu0 0.0
    %8781 = vmatprep.subr.mxu0 0.0
    %8782 = vmatpush1.xpose.msra.mxu0 0.0
    %8783 = vmatprep.subr.mxu0 0.0
    %8784 = vmatpush1.xpose.msra.mxu0 0.0
    %8785 = vmatprep.subr.mxu0 0.0
    %8786 = vmatpush1.xpose.msra.mxu0 0.0
    %8787 = vmatprep.subr.mxu0 0.0
    %8788 = vmatpush1.xpose.msra.mxu0 0.0
    %8789 = vmatprep.subr.mxu0 0.0
    %8790 = vmatpush1.xpose.msra.mxu0 0.0
    %8791 = vmatprep.subr.mxu0 0.0
    %8792 = vmatpush1.xpose.msra.mxu0 0.0
    %8793 = vmatprep.subr.mxu0 0.0
    %8794 = vmatpush1.xpose.msra.mxu0 0.0
    %8795 = vmatprep.subr.mxu0 0.0
    %8796 = vmatpush1.xpose.msra.mxu0 0.0
    %8797 = vmatprep.subr.mxu0 0.0
    %8798 = vmatpush1.xpose.msra.mxu0 0.0
    %8799 = vmatprep.subr.mxu0 0.0
    %8800 = vmatpush1.xpose.msra.mxu0 0.0
    %8801 = vmatprep.subr.mxu0 0.0
    %8802 = vmatpush1.xpose.msra.mxu0 0.0
    %8803 = vmatprep.subr.mxu0 0.0
    %8804 = vmatpush1.xpose.msra.mxu0 0.0
    %8805 = vmatprep.subr.mxu0 0.0
    %8806 = vmatpush1.xpose.msra.mxu0 0.0
    %8807 = vmatprep.subr.mxu0 0.0
    %8808 = vmatpush1.xpose.msra.mxu0 0.0
    %8809 = vmatprep.subr.mxu0 0.0
    %8810 = vmatpush1.xpose.msra.mxu0 0.0
    %8811 = vmatprep.subr.mxu0 0.0
    %8812 = vmatpush1.xpose.msra.mxu0 0.0
    %8813 = vmatprep.subr.mxu0 0.0
    %8814 = vmatpush1.xpose.msra.mxu0 0.0
    %8815 = vmatprep.subr.mxu0 0.0
    %8816 = vmatpush1.xpose.msra.mxu0 0.0
    %8817 = vmatprep.subr.mxu0 0.0
    %8818 = vmatpush1.xpose.msra.mxu0 0.0
    %8819 = vmatprep.subr.mxu0 0.0
    %8820 = vmatpush1.xpose.msra.mxu0 0.0
    %8821 = vmatprep.subr.mxu0 0.0
    %8822 = vmatpush1.xpose.msra.mxu0 0.0
    %8823 = vmatprep.subr.mxu0 0.0
    %8824 = vmatpush1.xpose.msra.mxu0 0.0
    %8825 = vmatprep.subr.mxu0 0.0
    %8826 = vmatpush1.xpose.msra.mxu0 0.0
    %8827 = vmatprep.subr.mxu0 0.0
    %8828 = vmatpush1.xpose.msra.mxu0 0.0
    %8829 = vmatprep.subr.mxu0 0.0
    %8830 = vmatpush1.xpose.msra.mxu0 0.0
    %8831 = vmatprep.subr.mxu0 0.0
    %8832 = vmatpush1.xpose.msra.mxu0 0.0
    %8833 = vmatprep.subr.mxu0 0.0
    %8834 = vmatpush1.xpose.msra.mxu0 0.0
    %8835 = vmatprep.subr.mxu0 0.0
    %8836 = vmatpush1.xpose.msra.mxu0 0.0
    %8837 = vmatprep.subr.mxu0 0.0
    %8838 = vmatpush1.xpose.msra.mxu0 0.0
    %8839 = vmatprep.mubr.f32.mxu0 0.0
    %v8840 = vand.u32 %v8770, 4294901760
    %v8841 = vsub.f32 %v8770, %v8840
    %v8842 = vand.u32 %v8841, 4294901760
    %v8843 = vsub.f32 %v8841, %v8842
    %v8844 = vand.u32 %v8843, 4294901760
    %8845 = vmatmul.mubr.f32.gmra.mrb[0].mxu0 %v8844
    %v8846 = vpop.f32.mrb[0].mxu0
    %v8847 = vadd.f32 %v1773, %v8846
    %v8848 = vpop.f32.mrb[0].mxu0
    %8849 = vdwg.mxu0
    %8850 = vmatprep.subr.mxu0 0.0
    %v8851 = vand.u32 %v8772, 4294901760
    %v8852 = vsub.f32 %v8772, %v8851
    %v8853 = vand.u32 %v8852, 4294901760
    %v8854 = vsub.f32 %v8852, %v8853
    %v8855 = vand.u32 %v8854, 4294901760
    %8856 = vmatpush1.xpose.msra.mxu0 %v8855
    %8857 = vmatprep.subr.mxu0 0.0
    %8858 = vmatpush1.xpose.msra.mxu0 0.0
    %8859 = vmatprep.subr.mxu0 0.0
    %8860 = vmatpush1.xpose.msra.mxu0 0.0
    %8861 = vmatprep.subr.mxu0 0.0
    %8862 = vmatpush1.xpose.msra.mxu0 0.0
    %8863 = vmatprep.subr.mxu0 0.0
    %8864 = vmatpush1.xpose.msra.mxu0 0.0
    %8865 = vmatprep.subr.mxu0 0.0
    %8866 = vmatpush1.xpose.msra.mxu0 0.0
    %8867 = vmatprep.subr.mxu0 0.0
    %8868 = vmatpush1.xpose.msra.mxu0 0.0
    %8869 = vmatprep.subr.mxu0 0.0
    %8870 = vmatpush1.xpose.msra.mxu0 0.0
    %8871 = vmatprep.subr.mxu0 0.0
    %8872 = vmatpush1.xpose.msra.mxu0 0.0
    %8873 = vmatprep.subr.mxu0 0.0
    %8874 = vmatpush1.xpose.msra.mxu0 0.0
    %8875 = vmatprep.subr.mxu0 0.0
    %8876 = vmatpush1.xpose.msra.mxu0 0.0
    %8877 = vmatprep.subr.mxu0 0.0
    %8878 = vmatpush1.xpose.msra.mxu0 0.0
    %8879 = vmatprep.subr.mxu0 0.0
    %8880 = vmatpush1.xpose.msra.mxu0 0.0
    %8881 = vmatprep.subr.mxu0 0.0
    %8882 = vmatpush1.xpose.msra.mxu0 0.0
    %8883 = vmatprep.subr.mxu0 0.0
    %8884 = vmatpush1.xpose.msra.mxu0 0.0
    %8885 = vmatprep.subr.mxu0 0.0
    %8886 = vmatpush1.xpose.msra.mxu0 0.0
    %8887 = vmatprep.subr.mxu0 0.0
    %8888 = vmatpush1.xpose.msra.mxu0 0.0
    %8889 = vmatprep.subr.mxu0 0.0
    %8890 = vmatpush1.xpose.msra.mxu0 0.0
    %8891 = vmatprep.subr.mxu0 0.0
    %8892 = vmatpush1.xpose.msra.mxu0 0.0
    %8893 = vmatprep.subr.mxu0 0.0
    %8894 = vmatpush1.xpose.msra.mxu0 0.0
    %8895 = vmatprep.subr.mxu0 0.0
    %8896 = vmatpush1.xpose.msra.mxu0 0.0
    %8897 = vmatprep.subr.mxu0 0.0
    %8898 = vmatpush1.xpose.msra.mxu0 0.0
    %8899 = vmatprep.subr.mxu0 0.0
    %8900 = vmatpush1.xpose.msra.mxu0 0.0
    %8901 = vmatprep.subr.mxu0 0.0
    %8902 = vmatpush1.xpose.msra.mxu0 0.0
    %8903 = vmatprep.subr.mxu0 0.0
    %8904 = vmatpush1.xpose.msra.mxu0 0.0
    %8905 = vmatprep.subr.mxu0 0.0
    %8906 = vmatpush1.xpose.msra.mxu0 0.0
    %8907 = vmatprep.subr.mxu0 0.0
    %8908 = vmatpush1.xpose.msra.mxu0 0.0
    %8909 = vmatprep.subr.mxu0 0.0
    %8910 = vmatpush1.xpose.msra.mxu0 0.0
    %8911 = vmatprep.subr.mxu0 0.0
    %8912 = vmatpush1.xpose.msra.mxu0 0.0
    %8913 = vmatprep.subr.mxu0 0.0
    %8914 = vmatpush1.xpose.msra.mxu0 0.0
    %8915 = vmatprep.subr.mxu0 0.0
    %8916 = vmatpush1.xpose.msra.mxu0 0.0
    %8917 = vmatprep.subr.mxu0 0.0
    %8918 = vmatpush1.xpose.msra.mxu0 0.0
    %8919 = vmatprep.mubr.f32.mxu0 0.0
    %v8920 = vand.u32 %v8770, 4294901760
    %8921 = vmatmul.mubr.f32.gmra.mrb[0].mxu0 %v8920
    %v8922 = vpop.f32.mrb[0].mxu0
    %v8923 = vadd.f32 %v8847, %v8922
    %v8924 = vpop.f32.mrb[0].mxu0
    %8925 = vdwg.mxu0
    %8926 = vmatprep.subr.mxu0 0.0
    %v8927 = vand.u32 %v8772, 4294901760
    %v8928 = vsub.f32 %v8772, %v8927
    %8929 = vmatpush1.xpose.msra.mxu0 %v8928
    %8930 = vmatprep.subr.mxu0 0.0
    %8931 = vmatpush1.xpose.msra.mxu0 0.0
    %8932 = vmatprep.subr.mxu0 0.0
    %8933 = vmatpush1.xpose.msra.mxu0 0.0
    %8934 = vmatprep.subr.mxu0 0.0
    %8935 = vmatpush1.xpose.msra.mxu0 0.0
    %8936 = vmatprep.subr.mxu0 0.0
    %8937 = vmatpush1.xpose.msra.mxu0 0.0
    %8938 = vmatprep.subr.mxu0 0.0
    %8939 = vmatpush1.xpose.msra.mxu0 0.0
    %8940 = vmatprep.subr.mxu0 0.0
    %8941 = vmatpush1.xpose.msra.mxu0 0.0
    %8942 = vmatprep.subr.mxu0 0.0
    %8943 = vmatpush1.xpose.msra.mxu0 0.0
    %8944 = vmatprep.subr.mxu0 0.0
    %8945 = vmatpush1.xpose.msra.mxu0 0.0
    %8946 = vmatprep.subr.mxu0 0.0
    %8947 = vmatpush1.xpose.msra.mxu0 0.0
    %8948 = vmatprep.subr.mxu0 0.0
    %8949 = vmatpush1.xpose.msra.mxu0 0.0
    %8950 = vmatprep.subr.mxu0 0.0
    %8951 = vmatpush1.xpose.msra.mxu0 0.0
    %8952 = vmatprep.subr.mxu0 0.0
    %8953 = vmatpush1.xpose.msra.mxu0 0.0
    %8954 = vmatprep.subr.mxu0 0.0
    %8955 = vmatpush1.xpose.msra.mxu0 0.0
    %8956 = vmatprep.subr.mxu0 0.0
    %8957 = vmatpush1.xpose.msra.mxu0 0.0
    %8958 = vmatprep.subr.mxu0 0.0
    %8959 = vmatpush1.xpose.msra.mxu0 0.0
    %8960 = vmatprep.subr.mxu0 0.0
    %8961 = vmatpush1.xpose.msra.mxu0 0.0
    %8962 = vmatprep.subr.mxu0 0.0
    %8963 = vmatpush1.xpose.msra.mxu0 0.0
    %8964 = vmatprep.subr.mxu0 0.0
    %8965 = vmatpush1.xpose.msra.mxu0 0.0
    %8966 = vmatprep.subr.mxu0 0.0
    %8967 = vmatpush1.xpose.msra.mxu0 0.0
    %8968 = vmatprep.subr.mxu0 0.0
    %8969 = vmatpush1.xpose.msra.mxu0 0.0
    %8970 = vmatprep.subr.mxu0 0.0
    %8971 = vmatpush1.xpose.msra.mxu0 0.0
    %8972 = vmatprep.subr.mxu0 0.0
    %8973 = vmatpush1.xpose.msra.mxu0 0.0
    %8974 = vmatprep.subr.mxu0 0.0
    %8975 = vmatpush1.xpose.msra.mxu0 0.0
    %8976 = vmatprep.subr.mxu0 0.0
    %8977 = vmatpush1.xpose.msra.mxu0 0.0
    %8978 = vmatprep.subr.mxu0 0.0
    %8979 = vmatpush1.xpose.msra.mxu0 0.0
    %8980 = vmatprep.subr.mxu0 0.0
    %8981 = vmatpush1.xpose.msra.mxu0 0.0
    %8982 = vmatprep.subr.mxu0 0.0
    %8983 = vmatpush1.xpose.msra.mxu0 0.0
    %8984 = vmatprep.subr.mxu0 0.0
    %8985 = vmatpush1.xpose.msra.mxu0 0.0
    %8986 = vmatprep.subr.mxu0 0.0
    %8987 = vmatpush1.xpose.msra.mxu0 0.0
    %8988 = vmatprep.subr.mxu0 0.0
    %8989 = vmatpush1.xpose.msra.mxu0 0.0
    %8990 = vmatprep.subr.mxu0 0.0
    %8991 = vmatpush1.xpose.msra.mxu0 0.0
    %8992 = vmatprep.mubr.f32.mxu0 0.0
    %v8993 = vand.u32 %v8770, 4294901760
    %v8994 = vsub.f32 %v8770, %v8993
    %8995 = vmatmul.mubr.f32.gmra.mrb[0].mxu0 %v8994
    %v8996 = vpop.f32.mrb[0].mxu0
    %v8997 = vadd.f32 %v8923, %v8996
    %v8998 = vpop.f32.mrb[0].mxu0
    %8999 = vdwg.mxu0
    %9000 = vmatprep.subr.mxu0 0.0
    %v9001 = vand.u32 %v8772, 4294901760
    %9002 = vmatpush1.xpose.msra.mxu0 %v9001
    %9003 = vmatprep.subr.mxu0 0.0
    %9004 = vmatpush1.xpose.msra.mxu0 0.0
    %9005 = vmatprep.subr.mxu0 0.0
    %9006 = vmatpush1.xpose.msra.mxu0 0.0
    %9007 = vmatprep.subr.mxu0 0.0
    %9008 = vmatpush1.xpose.msra.mxu0 0.0
    %9009 = vmatprep.subr.mxu0 0.0
    %9010 = vmatpush1.xpose.msra.mxu0 0.0
    %9011 = vmatprep.subr.mxu0 0.0
    %9012 = vmatpush1.xpose.msra.mxu0 0.0
    %9013 = vmatprep.subr.mxu0 0.0
    %9014 = vmatpush1.xpose.msra.mxu0 0.0
    %9015 = vmatprep.subr.mxu0 0.0
    %9016 = vmatpush1.xpose.msra.mxu0 0.0
    %9017 = vmatprep.subr.mxu0 0.0
    %9018 = vmatpush1.xpose.msra.mxu0 0.0
    %9019 = vmatprep.subr.mxu0 0.0
    %9020 = vmatpush1.xpose.msra.mxu0 0.0
    %9021 = vmatprep.subr.mxu0 0.0
    %9022 = vmatpush1.xpose.msra.mxu0 0.0
    %9023 = vmatprep.subr.mxu0 0.0
    %9024 = vmatpush1.xpose.msra.mxu0 0.0
    %9025 = vmatprep.subr.mxu0 0.0
    %9026 = vmatpush1.xpose.msra.mxu0 0.0
    %9027 = vmatprep.subr.mxu0 0.0
    %9028 = vmatpush1.xpose.msra.mxu0 0.0
    %9029 = vmatprep.subr.mxu0 0.0
    %9030 = vmatpush1.xpose.msra.mxu0 0.0
    %9031 = vmatprep.subr.mxu0 0.0
    %9032 = vmatpush1.xpose.msra.mxu0 0.0
    %9033 = vmatprep.subr.mxu0 0.0
    %9034 = vmatpush1.xpose.msra.mxu0 0.0
    %9035 = vmatprep.subr.mxu0 0.0
    %9036 = vmatpush1.xpose.msra.mxu0 0.0
    %9037 = vmatprep.subr.mxu0 0.0
    %9038 = vmatpush1.xpose.msra.mxu0 0.0
    %9039 = vmatprep.subr.mxu0 0.0
    %9040 = vmatpush1.xpose.msra.mxu0 0.0
    %9041 = vmatprep.subr.mxu0 0.0
    %9042 = vmatpush1.xpose.msra.mxu0 0.0
    %9043 = vmatprep.subr.mxu0 0.0
    %9044 = vmatpush1.xpose.msra.mxu0 0.0
    %9045 = vmatprep.subr.mxu0 0.0
    %9046 = vmatpush1.xpose.msra.mxu0 0.0
    %9047 = vmatprep.subr.mxu0 0.0
    %9048 = vmatpush1.xpose.msra.mxu0 0.0
    %9049 = vmatprep.subr.mxu0 0.0
    %9050 = vmatpush1.xpose.msra.mxu0 0.0
    %9051 = vmatprep.subr.mxu0 0.0
    %9052 = vmatpush1.xpose.msra.mxu0 0.0
    %9053 = vmatprep.subr.mxu0 0.0
    %9054 = vmatpush1.xpose.msra.mxu0 0.0
    %9055 = vmatprep.subr.mxu0 0.0
    %9056 = vmatpush1.xpose.msra.mxu0 0.0
    %9057 = vmatprep.subr.mxu0 0.0
    %9058 = vmatpush1.xpose.msra.mxu0 0.0
    %9059 = vmatprep.subr.mxu0 0.0
    %9060 = vmatpush1.xpose.msra.mxu0 0.0
    %9061 = vmatprep.subr.mxu0 0.0
    %9062 = vmatpush1.xpose.msra.mxu0 0.0
    %9063 = vmatprep.subr.mxu0 0.0
    %9064 = vmatpush1.xpose.msra.mxu0 0.0
    %9065 = vmatprep.mubr.f32.mxu0 0.0
    %v9066 = vand.u32 %v8770, 4294901760
    %v9067 = vsub.f32 %v8770, %v9066
    %v9068 = vand.u32 %v9067, 4294901760
    %9069 = vmatmul.mubr.f32.gmra.mrb[0].mxu0 %v9068
    %v9070 = vpop.f32.mrb[0].mxu0
    %v9071 = vadd.f32 %v8997, %v9070
    %v9072 = vpop.f32.mrb[0].mxu0
    %9073 = vdwg.mxu0
    %9074 = vmatprep.subr.mxu0 0.0
    %v9075 = vand.u32 %v8772, 4294901760
    %v9076 = vsub.f32 %v8772, %v9075
    %v9077 = vand.u32 %v9076, 4294901760
    %9078 = vmatpush1.xpose.msra.mxu0 %v9077
    %9079 = vmatprep.subr.mxu0 0.0
    %9080 = vmatpush1.xpose.msra.mxu0 0.0
    %9081 = vmatprep.subr.mxu0 0.0
    %9082 = vmatpush1.xpose.msra.mxu0 0.0
    %9083 = vmatprep.subr.mxu0 0.0
    %9084 = vmatpush1.xpose.msra.mxu0 0.0
    %9085 = vmatprep.subr.mxu0 0.0
    %9086 = vmatpush1.xpose.msra.mxu0 0.0
    %9087 = vmatprep.subr.mxu0 0.0
    %9088 = vmatpush1.xpose.msra.mxu0 0.0
    %9089 = vmatprep.subr.mxu0 0.0
    %9090 = vmatpush1.xpose.msra.mxu0 0.0
    %9091 = vmatprep.subr.mxu0 0.0
    %9092 = vmatpush1.xpose.msra.mxu0 0.0
    %9093 = vmatprep.subr.mxu0 0.0
    %9094 = vmatpush1.xpose.msra.mxu0 0.0
    %9095 = vmatprep.subr.mxu0 0.0
    %9096 = vmatpush1.xpose.msra.mxu0 0.0
    %9097 = vmatprep.subr.mxu0 0.0
    %9098 = vmatpush1.xpose.msra.mxu0 0.0
    %9099 = vmatprep.subr.mxu0 0.0
    %9100 = vmatpush1.xpose.msra.mxu0 0.0
    %9101 = vmatprep.subr.mxu0 0.0
    %9102 = vmatpush1.xpose.msra.mxu0 0.0
    %9103 = vmatprep.subr.mxu0 0.0
    %9104 = vmatpush1.xpose.msra.mxu0 0.0
    %9105 = vmatprep.subr.mxu0 0.0
    %9106 = vmatpush1.xpose.msra.mxu0 0.0
    %9107 = vmatprep.subr.mxu0 0.0
    %9108 = vmatpush1.xpose.msra.mxu0 0.0
    %9109 = vmatprep.subr.mxu0 0.0
    %9110 = vmatpush1.xpose.msra.mxu0 0.0
    %9111 = vmatprep.subr.mxu0 0.0
    %9112 = vmatpush1.xpose.msra.mxu0 0.0
    %9113 = vmatprep.subr.mxu0 0.0
    %9114 = vmatpush1.xpose.msra.mxu0 0.0
    %9115 = vmatprep.subr.mxu0 0.0
    %9116 = vmatpush1.xpose.msra.mxu0 0.0
    %9117 = vmatprep.subr.mxu0 0.0
    %9118 = vmatpush1.xpose.msra.mxu0 0.0
    %9119 = vmatprep.subr.mxu0 0.0
    %9120 = vmatpush1.xpose.msra.mxu0 0.0
    %9121 = vmatprep.subr.mxu0 0.0
    %9122 = vmatpush1.xpose.msra.mxu0 0.0
    %9123 = vmatprep.subr.mxu0 0.0
    %9124 = vmatpush1.xpose.msra.mxu0 0.0
    %9125 = vmatprep.subr.mxu0 0.0
    %9126 = vmatpush1.xpose.msra.mxu0 0.0
    %9127 = vmatprep.subr.mxu0 0.0
    %9128 = vmatpush1.xpose.msra.mxu0 0.0
    %9129 = vmatprep.subr.mxu0 0.0
    %9130 = vmatpush1.xpose.msra.mxu0 0.0
    %9131 = vmatprep.subr.mxu0 0.0
    %9132 = vmatpush1.xpose.msra.mxu0 0.0
    %9133 = vmatprep.subr.mxu0 0.0
    %9134 = vmatpush1.xpose.msra.mxu0 0.0
    %9135 = vmatprep.subr.mxu0 0.0
    %9136 = vmatpush1.xpose.msra.mxu0 0.0
    %9137 = vmatprep.subr.mxu0 0.0
    %9138 = vmatpush1.xpose.msra.mxu0 0.0
    %9139 = vmatprep.subr.mxu0 0.0
    %9140 = vmatpush1.xpose.msra.mxu0 0.0
    %9141 = vmatprep.mubr.f32.mxu0 0.0
    %v9142 = vand.u32 %v8770, 4294901760
    %9143 = vmatmul.mubr.f32.gmra.mrb[0].mxu0 %v9142
    %v9144 = vpop.f32.mrb[0].mxu0
    %v9145 = vadd.f32 %v9071, %v9144
    %v9146 = vpop.f32.mrb[0].mxu0
    %9147 = vdwg.mxu0
    %9148 = vmatprep.subr.mxu0 0.0
    %v9149 = vand.u32 %v8772, 4294901760
    %9150 = vmatpush1.xpose.msra.mxu0 %v9149
    %9151 = vmatprep.subr.mxu0 0.0
    %9152 = vmatpush1.xpose.msra.mxu0 0.0
    %9153 = vmatprep.subr.mxu0 0.0
    %9154 = vmatpush1.xpose.msra.mxu0 0.0
    %9155 = vmatprep.subr.mxu0 0.0
    %9156 = vmatpush1.xpose.msra.mxu0 0.0
    %9157 = vmatprep.subr.mxu0 0.0
    %9158 = vmatpush1.xpose.msra.mxu0 0.0
    %9159 = vmatprep.subr.mxu0 0.0
    %9160 = vmatpush1.xpose.msra.mxu0 0.0
    %9161 = vmatprep.subr.mxu0 0.0
    %9162 = vmatpush1.xpose.msra.mxu0 0.0
    %9163 = vmatprep.subr.mxu0 0.0
    %9164 = vmatpush1.xpose.msra.mxu0 0.0
    %9165 = vmatprep.subr.mxu0 0.0
    %9166 = vmatpush1.xpose.msra.mxu0 0.0
    %9167 = vmatprep.subr.mxu0 0.0
    %9168 = vmatpush1.xpose.msra.mxu0 0.0
    %9169 = vmatprep.subr.mxu0 0.0
    %9170 = vmatpush1.xpose.msra.mxu0 0.0
    %9171 = vmatprep.subr.mxu0 0.0
    %9172 = vmatpush1.xpose.msra.mxu0 0.0
    %9173 = vmatprep.subr.mxu0 0.0
    %9174 = vmatpush1.xpose.msra.mxu0 0.0
    %9175 = vmatprep.subr.mxu0 0.0
    %9176 = vmatpush1.xpose.msra.mxu0 0.0
    %9177 = vmatprep.subr.mxu0 0.0
    %9178 = vmatpush1.xpose.msra.mxu0 0.0
    %9179 = vmatprep.subr.mxu0 0.0
    %9180 = vmatpush1.xpose.msra.mxu0 0.0
    %9181 = vmatprep.subr.mxu0 0.0
    %9182 = vmatpush1.xpose.msra.mxu0 0.0
    %9183 = vmatprep.subr.mxu0 0.0
    %9184 = vmatpush1.xpose.msra.mxu0 0.0
    %9185 = vmatprep.subr.mxu0 0.0
    %9186 = vmatpush1.xpose.msra.mxu0 0.0
    %9187 = vmatprep.subr.mxu0 0.0
    %9188 = vmatpush1.xpose.msra.mxu0 0.0
    %9189 = vmatprep.subr.mxu0 0.0
    %9190 = vmatpush1.xpose.msra.mxu0 0.0
    %9191 = vmatprep.subr.mxu0 0.0
    %9192 = vmatpush1.xpose.msra.mxu0 0.0
    %9193 = vmatprep.subr.mxu0 0.0
    %9194 = vmatpush1.xpose.msra.mxu0 0.0
    %9195 = vmatprep.subr.mxu0 0.0
    %9196 = vmatpush1.xpose.msra.mxu0 0.0
    %9197 = vmatprep.subr.mxu0 0.0
    %9198 = vmatpush1.xpose.msra.mxu0 0.0
    %9199 = vmatprep.subr.mxu0 0.0
    %9200 = vmatpush1.xpose.msra.mxu0 0.0
    %9201 = vmatprep.subr.mxu0 0.0
    %9202 = vmatpush1.xpose.msra.mxu0 0.0
    %9203 = vmatprep.subr.mxu0 0.0
    %9204 = vmatpush1.xpose.msra.mxu0 0.0
    %9205 = vmatprep.subr.mxu0 0.0
    %9206 = vmatpush1.xpose.msra.mxu0 0.0
    %9207 = vmatprep.subr.mxu0 0.0
    %9208 = vmatpush1.xpose.msra.mxu0 0.0
    %9209 = vmatprep.subr.mxu0 0.0
    %9210 = vmatpush1.xpose.msra.mxu0 0.0
    %9211 = vmatprep.subr.mxu0 0.0
    %9212 = vmatpush1.xpose.msra.mxu0 0.0
    %9213 = vmatprep.mubr.f32.mxu0 0.0
    %v9214 = vand.u32 %v8770, 4294901760
    %9215 = vmatmul.mubr.f32.gmra.mrb[0].mxu0 %v9214
    %v9216 = vpop.f32.mrb[0].mxu0
    %v9217 = vadd.f32 %v9145, %v9216
    %v9218 = vpop.f32.mrb[0].mxu0
    %9219 = vdwg.mxu0
    %9220 = vrot.lane.b32.xlu0 %v669, 104
    %v9221 = vpop.permute.xlu0 %9220
    %9222 = vrot.lane.b32.xlu0 %v1216, 104
    %v9223 = vpop.permute.xlu0 %9222
    %v9224 = vsel %vm1784, %v9221, 0
    %v9226 = vsel %vm1784, %v9223, 0
    %9228 = vmatprep.subr.mxu0 0.0
    %v9229 = vand.u32 %v9226, 4294901760
    %9230 = vmatpush1.xpose.msra.mxu0 %v9229
    %9231 = vmatprep.subr.mxu0 0.0
    %9232 = vmatpush1.xpose.msra.mxu0 0.0
    %9233 = vmatprep.subr.mxu0 0.0
    %9234 = vmatpush1.xpose.msra.mxu0 0.0
    %9235 = vmatprep.subr.mxu0 0.0
    %9236 = vmatpush1.xpose.msra.mxu0 0.0
    %9237 = vmatprep.subr.mxu0 0.0
    %9238 = vmatpush1.xpose.msra.mxu0 0.0
    %9239 = vmatprep.subr.mxu0 0.0
    %9240 = vmatpush1.xpose.msra.mxu0 0.0
    %9241 = vmatprep.subr.mxu0 0.0
    %9242 = vmatpush1.xpose.msra.mxu0 0.0
    %9243 = vmatprep.subr.mxu0 0.0
    %9244 = vmatpush1.xpose.msra.mxu0 0.0
    %9245 = vmatprep.subr.mxu0 0.0
    %9246 = vmatpush1.xpose.msra.mxu0 0.0
    %9247 = vmatprep.subr.mxu0 0.0
    %9248 = vmatpush1.xpose.msra.mxu0 0.0
    %9249 = vmatprep.subr.mxu0 0.0
    %9250 = vmatpush1.xpose.msra.mxu0 0.0
    %9251 = vmatprep.subr.mxu0 0.0
    %9252 = vmatpush1.xpose.msra.mxu0 0.0
    %9253 = vmatprep.subr.mxu0 0.0
    %9254 = vmatpush1.xpose.msra.mxu0 0.0
    %9255 = vmatprep.subr.mxu0 0.0
    %9256 = vmatpush1.xpose.msra.mxu0 0.0
    %9257 = vmatprep.subr.mxu0 0.0
    %9258 = vmatpush1.xpose.msra.mxu0 0.0
    %9259 = vmatprep.subr.mxu0 0.0
    %9260 = vmatpush1.xpose.msra.mxu0 0.0
    %9261 = vmatprep.subr.mxu0 0.0
    %9262 = vmatpush1.xpose.msra.mxu0 0.0
    %9263 = vmatprep.subr.mxu0 0.0
    %9264 = vmatpush1.xpose.msra.mxu0 0.0
    %9265 = vmatprep.subr.mxu0 0.0
    %9266 = vmatpush1.xpose.msra.mxu0 0.0
    %9267 = vmatprep.subr.mxu0 0.0
    %9268 = vmatpush1.xpose.msra.mxu0 0.0
    %9269 = vmatprep.subr.mxu0 0.0
    %9270 = vmatpush1.xpose.msra.mxu0 0.0
    %9271 = vmatprep.subr.mxu0 0.0
    %9272 = vmatpush1.xpose.msra.mxu0 0.0
    %9273 = vmatprep.subr.mxu0 0.0
    %9274 = vmatpush1.xpose.msra.mxu0 0.0
    %9275 = vmatprep.subr.mxu0 0.0
    %9276 = vmatpush1.xpose.msra.mxu0 0.0
    %9277 = vmatprep.subr.mxu0 0.0
    %9278 = vmatpush1.xpose.msra.mxu0 0.0
    %9279 = vmatprep.subr.mxu0 0.0
    %9280 = vmatpush1.xpose.msra.mxu0 0.0
    %9281 = vmatprep.subr.mxu0 0.0
    %9282 = vmatpush1.xpose.msra.mxu0 0.0
    %9283 = vmatprep.subr.mxu0 0.0
    %9284 = vmatpush1.xpose.msra.mxu0 0.0
    %9285 = vmatprep.subr.mxu0 0.0
    %9286 = vmatpush1.xpose.msra.mxu0 0.0
    %9287 = vmatprep.subr.mxu0 0.0
    %9288 = vmatpush1.xpose.msra.mxu0 0.0
    %9289 = vmatprep.subr.mxu0 0.0
    %9290 = vmatpush1.xpose.msra.mxu0 0.0
    %9291 = vmatprep.subr.mxu0 0.0
    %9292 = vmatpush1.xpose.msra.mxu0 0.0
    %9293 = vmatprep.mubr.f32.mxu0 0.0
    %v9294 = vand.u32 %v9224, 4294901760
    %v9295 = vsub.f32 %v9224, %v9294
    %v9296 = vand.u32 %v9295, 4294901760
    %v9297 = vsub.f32 %v9295, %v9296
    %v9298 = vand.u32 %v9297, 4294901760
    %9299 = vmatmul.mubr.f32.gmra.mrb[0].mxu0 %v9298
    %v9300 = vpop.f32.mrb[0].mxu0
    %v9301 = vadd.f32 %v1777, %v9300
    %v9302 = vpop.f32.mrb[0].mxu0
    %9303 = vdwg.mxu0
    %9304 = vmatprep.subr.mxu0 0.0
    %v9305 = vand.u32 %v9226, 4294901760
    %v9306 = vsub.f32 %v9226, %v9305
    %v9307 = vand.u32 %v9306, 4294901760
    %v9308 = vsub.f32 %v9306, %v9307
    %v9309 = vand.u32 %v9308, 4294901760
    %9310 = vmatpush1.xpose.msra.mxu0 %v9309
    %9311 = vmatprep.subr.mxu0 0.0
    %9312 = vmatpush1.xpose.msra.mxu0 0.0
    %9313 = vmatprep.subr.mxu0 0.0
    %9314 = vmatpush1.xpose.msra.mxu0 0.0
    %9315 = vmatprep.subr.mxu0 0.0
    %9316 = vmatpush1.xpose.msra.mxu0 0.0
    %9317 = vmatprep.subr.mxu0 0.0
    %9318 = vmatpush1.xpose.msra.mxu0 0.0
    %9319 = vmatprep.subr.mxu0 0.0
    %9320 = vmatpush1.xpose.msra.mxu0 0.0
    %9321 = vmatprep.subr.mxu0 0.0
    %9322 = vmatpush1.xpose.msra.mxu0 0.0
    %9323 = vmatprep.subr.mxu0 0.0
    %9324 = vmatpush1.xpose.msra.mxu0 0.0
    %9325 = vmatprep.subr.mxu0 0.0
    %9326 = vmatpush1.xpose.msra.mxu0 0.0
    %9327 = vmatprep.subr.mxu0 0.0
    %9328 = vmatpush1.xpose.msra.mxu0 0.0
    %9329 = vmatprep.subr.mxu0 0.0
    %9330 = vmatpush1.xpose.msra.mxu0 0.0
    %9331 = vmatprep.subr.mxu0 0.0
    %9332 = vmatpush1.xpose.msra.mxu0 0.0
    %9333 = vmatprep.subr.mxu0 0.0
    %9334 = vmatpush1.xpose.msra.mxu0 0.0
    %9335 = vmatprep.subr.mxu0 0.0
    %9336 = vmatpush1.xpose.msra.mxu0 0.0
    %9337 = vmatprep.subr.mxu0 0.0
    %9338 = vmatpush1.xpose.msra.mxu0 0.0
    %9339 = vmatprep.subr.mxu0 0.0
    %9340 = vmatpush1.xpose.msra.mxu0 0.0
    %9341 = vmatprep.subr.mxu0 0.0
    %9342 = vmatpush1.xpose.msra.mxu0 0.0
    %9343 = vmatprep.subr.mxu0 0.0
    %9344 = vmatpush1.xpose.msra.mxu0 0.0
    %9345 = vmatprep.subr.mxu0 0.0
    %9346 = vmatpush1.xpose.msra.mxu0 0.0
    %9347 = vmatprep.subr.mxu0 0.0
    %9348 = vmatpush1.xpose.msra.mxu0 0.0
    %9349 = vmatprep.subr.mxu0 0.0
    %9350 = vmatpush1.xpose.msra.mxu0 0.0
    %9351 = vmatprep.subr.mxu0 0.0
    %9352 = vmatpush1.xpose.msra.mxu0 0.0
    %9353 = vmatprep.subr.mxu0 0.0
    %9354 = vmatpush1.xpose.msra.mxu0 0.0
    %9355 = vmatprep.subr.mxu0 0.0
    %9356 = vmatpush1.xpose.msra.mxu0 0.0
    %9357 = vmatprep.subr.mxu0 0.0
    %9358 = vmatpush1.xpose.msra.mxu0 0.0
    %9359 = vmatprep.subr.mxu0 0.0
    %9360 = vmatpush1.xpose.msra.mxu0 0.0
    %9361 = vmatprep.subr.mxu0 0.0
    %9362 = vmatpush1.xpose.msra.mxu0 0.0
    %9363 = vmatprep.subr.mxu0 0.0
    %9364 = vmatpush1.xpose.msra.mxu0 0.0
    %9365 = vmatprep.subr.mxu0 0.0
    %9366 = vmatpush1.xpose.msra.mxu0 0.0
    %9367 = vmatprep.subr.mxu0 0.0
    %9368 = vmatpush1.xpose.msra.mxu0 0.0
    %9369 = vmatprep.subr.mxu0 0.0
    %9370 = vmatpush1.xpose.msra.mxu0 0.0
    %9371 = vmatprep.subr.mxu0 0.0
    %9372 = vmatpush1.xpose.msra.mxu0 0.0
    %9373 = vmatprep.mubr.f32.mxu0 0.0
    %v9374 = vand.u32 %v9224, 4294901760
    %9375 = vmatmul.mubr.f32.gmra.mrb[0].mxu0 %v9374
    %v9376 = vpop.f32.mrb[0].mxu0
    %v9377 = vadd.f32 %v9301, %v9376
    %v9378 = vpop.f32.mrb[0].mxu0
    %9379 = vdwg.mxu0
    %9380 = vmatprep.subr.mxu0 0.0
    %v9381 = vand.u32 %v9226, 4294901760
    %v9382 = vsub.f32 %v9226, %v9381
    %9383 = vmatpush1.xpose.msra.mxu0 %v9382
    %9384 = vmatprep.subr.mxu0 0.0
    %9385 = vmatpush1.xpose.msra.mxu0 0.0
    %9386 = vmatprep.subr.mxu0 0.0
    %9387 = vmatpush1.xpose.msra.mxu0 0.0
    %9388 = vmatprep.subr.mxu0 0.0
    %9389 = vmatpush1.xpose.msra.mxu0 0.0
    %9390 = vmatprep.subr.mxu0 0.0
    %9391 = vmatpush1.xpose.msra.mxu0 0.0
    %9392 = vmatprep.subr.mxu0 0.0
    %9393 = vmatpush1.xpose.msra.mxu0 0.0
    %9394 = vmatprep.subr.mxu0 0.0
    %9395 = vmatpush1.xpose.msra.mxu0 0.0
    %9396 = vmatprep.subr.mxu0 0.0
    %9397 = vmatpush1.xpose.msra.mxu0 0.0
    %9398 = vmatprep.subr.mxu0 0.0
    %9399 = vmatpush1.xpose.msra.mxu0 0.0
    %9400 = vmatprep.subr.mxu0 0.0
    %9401 = vmatpush1.xpose.msra.mxu0 0.0
    %9402 = vmatprep.subr.mxu0 0.0
    %9403 = vmatpush1.xpose.msra.mxu0 0.0
    %9404 = vmatprep.subr.mxu0 0.0
    %9405 = vmatpush1.xpose.msra.mxu0 0.0
    %9406 = vmatprep.subr.mxu0 0.0
    %9407 = vmatpush1.xpose.msra.mxu0 0.0
    %9408 = vmatprep.subr.mxu0 0.0
    %9409 = vmatpush1.xpose.msra.mxu0 0.0
    %9410 = vmatprep.subr.mxu0 0.0
    %9411 = vmatpush1.xpose.msra.mxu0 0.0
    %9412 = vmatprep.subr.mxu0 0.0
    %9413 = vmatpush1.xpose.msra.mxu0 0.0
    %9414 = vmatprep.subr.mxu0 0.0
    %9415 = vmatpush1.xpose.msra.mxu0 0.0
    %9416 = vmatprep.subr.mxu0 0.0
    %9417 = vmatpush1.xpose.msra.mxu0 0.0
    %9418 = vmatprep.subr.mxu0 0.0
    %9419 = vmatpush1.xpose.msra.mxu0 0.0
    %9420 = vmatprep.subr.mxu0 0.0
    %9421 = vmatpush1.xpose.msra.mxu0 0.0
    %9422 = vmatprep.subr.mxu0 0.0
    %9423 = vmatpush1.xpose.msra.mxu0 0.0
    %9424 = vmatprep.subr.mxu0 0.0
    %9425 = vmatpush1.xpose.msra.mxu0 0.0
    %9426 = vmatprep.subr.mxu0 0.0
    %9427 = vmatpush1.xpose.msra.mxu0 0.0
    %9428 = vmatprep.subr.mxu0 0.0
    %9429 = vmatpush1.xpose.msra.mxu0 0.0
    %9430 = vmatprep.subr.mxu0 0.0
    %9431 = vmatpush1.xpose.msra.mxu0 0.0
    %9432 = vmatprep.subr.mxu0 0.0
    %9433 = vmatpush1.xpose.msra.mxu0 0.0
    %9434 = vmatprep.subr.mxu0 0.0
    %9435 = vmatpush1.xpose.msra.mxu0 0.0
    %9436 = vmatprep.subr.mxu0 0.0
    %9437 = vmatpush1.xpose.msra.mxu0 0.0
    %9438 = vmatprep.subr.mxu0 0.0
    %9439 = vmatpush1.xpose.msra.mxu0 0.0
    %9440 = vmatprep.subr.mxu0 0.0
    %9441 = vmatpush1.xpose.msra.mxu0 0.0
    %9442 = vmatprep.subr.mxu0 0.0
    %9443 = vmatpush1.xpose.msra.mxu0 0.0
    %9444 = vmatprep.subr.mxu0 0.0
    %9445 = vmatpush1.xpose.msra.mxu0 0.0
    %9446 = vmatprep.mubr.f32.mxu0 0.0
    %v9447 = vand.u32 %v9224, 4294901760
    %v9448 = vsub.f32 %v9224, %v9447
    %9449 = vmatmul.mubr.f32.gmra.mrb[0].mxu0 %v9448
    %v9450 = vpop.f32.mrb[0].mxu0
    %v9451 = vadd.f32 %v9377, %v9450
    %v9452 = vpop.f32.mrb[0].mxu0
    %9453 = vdwg.mxu0
    %9454 = vmatprep.subr.mxu0 0.0
    %v9455 = vand.u32 %v9226, 4294901760
    %9456 = vmatpush1.xpose.msra.mxu0 %v9455
    %9457 = vmatprep.subr.mxu0 0.0
    %9458 = vmatpush1.xpose.msra.mxu0 0.0
    %9459 = vmatprep.subr.mxu0 0.0
    %9460 = vmatpush1.xpose.msra.mxu0 0.0
    %9461 = vmatprep.subr.mxu0 0.0
    %9462 = vmatpush1.xpose.msra.mxu0 0.0
    %9463 = vmatprep.subr.mxu0 0.0
    %9464 = vmatpush1.xpose.msra.mxu0 0.0
    %9465 = vmatprep.subr.mxu0 0.0
    %9466 = vmatpush1.xpose.msra.mxu0 0.0
    %9467 = vmatprep.subr.mxu0 0.0
    %9468 = vmatpush1.xpose.msra.mxu0 0.0
    %9469 = vmatprep.subr.mxu0 0.0
    %9470 = vmatpush1.xpose.msra.mxu0 0.0
    %9471 = vmatprep.subr.mxu0 0.0
    %9472 = vmatpush1.xpose.msra.mxu0 0.0
    %9473 = vmatprep.subr.mxu0 0.0
    %9474 = vmatpush1.xpose.msra.mxu0 0.0
    %9475 = vmatprep.subr.mxu0 0.0
    %9476 = vmatpush1.xpose.msra.mxu0 0.0
    %9477 = vmatprep.subr.mxu0 0.0
    %9478 = vmatpush1.xpose.msra.mxu0 0.0
    %9479 = vmatprep.subr.mxu0 0.0
    %9480 = vmatpush1.xpose.msra.mxu0 0.0
    %9481 = vmatprep.subr.mxu0 0.0
    %9482 = vmatpush1.xpose.msra.mxu0 0.0
    %9483 = vmatprep.subr.mxu0 0.0
    %9484 = vmatpush1.xpose.msra.mxu0 0.0
    %9485 = vmatprep.subr.mxu0 0.0
    %9486 = vmatpush1.xpose.msra.mxu0 0.0
    %9487 = vmatprep.subr.mxu0 0.0
    %9488 = vmatpush1.xpose.msra.mxu0 0.0
    %9489 = vmatprep.subr.mxu0 0.0
    %9490 = vmatpush1.xpose.msra.mxu0 0.0
    %9491 = vmatprep.subr.mxu0 0.0
    %9492 = vmatpush1.xpose.msra.mxu0 0.0
    %9493 = vmatprep.subr.mxu0 0.0
    %9494 = vmatpush1.xpose.msra.mxu0 0.0
    %9495 = vmatprep.subr.mxu0 0.0
    %9496 = vmatpush1.xpose.msra.mxu0 0.0
    %9497 = vmatprep.subr.mxu0 0.0
    %9498 = vmatpush1.xpose.msra.mxu0 0.0
    %9499 = vmatprep.subr.mxu0 0.0
    %9500 = vmatpush1.xpose.msra.mxu0 0.0
    %9501 = vmatprep.subr.mxu0 0.0
    %9502 = vmatpush1.xpose.msra.mxu0 0.0
    %9503 = vmatprep.subr.mxu0 0.0
    %9504 = vmatpush1.xpose.msra.mxu0 0.0
    %9505 = vmatprep.subr.mxu0 0.0
    %9506 = vmatpush1.xpose.msra.mxu0 0.0
    %9507 = vmatprep.subr.mxu0 0.0
    %9508 = vmatpush1.xpose.msra.mxu0 0.0
    %9509 = vmatprep.subr.mxu0 0.0
    %9510 = vmatpush1.xpose.msra.mxu0 0.0
    %9511 = vmatprep.subr.mxu0 0.0
    %9512 = vmatpush1.xpose.msra.mxu0 0.0
    %9513 = vmatprep.subr.mxu0 0.0
    %9514 = vmatpush1.xpose.msra.mxu0 0.0
    %9515 = vmatprep.subr.mxu0 0.0
    %9516 = vmatpush1.xpose.msra.mxu0 0.0
    %9517 = vmatprep.subr.mxu0 0.0
    %9518 = vmatpush1.xpose.msra.mxu0 0.0
    %9519 = vmatprep.mubr.f32.mxu0 0.0
    %v9520 = vand.u32 %v9224, 4294901760
    %v9521 = vsub.f32 %v9224, %v9520
    %v9522 = vand.u32 %v9521, 4294901760
    %9523 = vmatmul.mubr.f32.gmra.mrb[0].mxu0 %v9522
    %v9524 = vpop.f32.mrb[0].mxu0
    %v9525 = vadd.f32 %v9451, %v9524
    %v9526 = vpop.f32.mrb[0].mxu0
    %9527 = vdwg.mxu0
    %9528 = vmatprep.subr.mxu0 0.0
    %v9529 = vand.u32 %v9226, 4294901760
    %v9530 = vsub.f32 %v9226, %v9529
    %v9531 = vand.u32 %v9530, 4294901760
    %9532 = vmatpush1.xpose.msra.mxu0 %v9531
    %9533 = vmatprep.subr.mxu0 0.0
    %9534 = vmatpush1.xpose.msra.mxu0 0.0
    %9535 = vmatprep.subr.mxu0 0.0
    %9536 = vmatpush1.xpose.msra.mxu0 0.0
    %9537 = vmatprep.subr.mxu0 0.0
    %9538 = vmatpush1.xpose.msra.mxu0 0.0
    %9539 = vmatprep.subr.mxu0 0.0
    %9540 = vmatpush1.xpose.msra.mxu0 0.0
    %9541 = vmatprep.subr.mxu0 0.0
    %9542 = vmatpush1.xpose.msra.mxu0 0.0
    %9543 = vmatprep.subr.mxu0 0.0
    %9544 = vmatpush1.xpose.msra.mxu0 0.0
    %9545 = vmatprep.subr.mxu0 0.0
    %9546 = vmatpush1.xpose.msra.mxu0 0.0
    %9547 = vmatprep.subr.mxu0 0.0
    %9548 = vmatpush1.xpose.msra.mxu0 0.0
    %9549 = vmatprep.subr.mxu0 0.0
    %9550 = vmatpush1.xpose.msra.mxu0 0.0
    %9551 = vmatprep.subr.mxu0 0.0
    %9552 = vmatpush1.xpose.msra.mxu0 0.0
    %9553 = vmatprep.subr.mxu0 0.0
    %9554 = vmatpush1.xpose.msra.mxu0 0.0
    %9555 = vmatprep.subr.mxu0 0.0
    %9556 = vmatpush1.xpose.msra.mxu0 0.0
    %9557 = vmatprep.subr.mxu0 0.0
    %9558 = vmatpush1.xpose.msra.mxu0 0.0
    %9559 = vmatprep.subr.mxu0 0.0
    %9560 = vmatpush1.xpose.msra.mxu0 0.0
    %9561 = vmatprep.subr.mxu0 0.0
    %9562 = vmatpush1.xpose.msra.mxu0 0.0
    %9563 = vmatprep.subr.mxu0 0.0
    %9564 = vmatpush1.xpose.msra.mxu0 0.0
    %9565 = vmatprep.subr.mxu0 0.0
    %9566 = vmatpush1.xpose.msra.mxu0 0.0
    %9567 = vmatprep.subr.mxu0 0.0
    %9568 = vmatpush1.xpose.msra.mxu0 0.0
    %9569 = vmatprep.subr.mxu0 0.0
    %9570 = vmatpush1.xpose.msra.mxu0 0.0
    %9571 = vmatprep.subr.mxu0 0.0
    %9572 = vmatpush1.xpose.msra.mxu0 0.0
    %9573 = vmatprep.subr.mxu0 0.0
    %9574 = vmatpush1.xpose.msra.mxu0 0.0
    %9575 = vmatprep.subr.mxu0 0.0
    %9576 = vmatpush1.xpose.msra.mxu0 0.0
    %9577 = vmatprep.subr.mxu0 0.0
    %9578 = vmatpush1.xpose.msra.mxu0 0.0
    %9579 = vmatprep.subr.mxu0 0.0
    %9580 = vmatpush1.xpose.msra.mxu0 0.0
    %9581 = vmatprep.subr.mxu0 0.0
    %9582 = vmatpush1.xpose.msra.mxu0 0.0
    %9583 = vmatprep.subr.mxu0 0.0
    %9584 = vmatpush1.xpose.msra.mxu0 0.0
    %9585 = vmatprep.subr.mxu0 0.0
    %9586 = vmatpush1.xpose.msra.mxu0 0.0
    %9587 = vmatprep.subr.mxu0 0.0
    %9588 = vmatpush1.xpose.msra.mxu0 0.0
    %9589 = vmatprep.subr.mxu0 0.0
    %9590 = vmatpush1.xpose.msra.mxu0 0.0
    %9591 = vmatprep.subr.mxu0 0.0
    %9592 = vmatpush1.xpose.msra.mxu0 0.0
    %9593 = vmatprep.subr.mxu0 0.0
    %9594 = vmatpush1.xpose.msra.mxu0 0.0
    %9595 = vmatprep.mubr.f32.mxu0 0.0
    %v9596 = vand.u32 %v9224, 4294901760
    %9597 = vmatmul.mubr.f32.gmra.mrb[0].mxu0 %v9596
    %v9598 = vpop.f32.mrb[0].mxu0
    %v9599 = vadd.f32 %v9525, %v9598
    %v9600 = vpop.f32.mrb[0].mxu0
    %9601 = vdwg.mxu0
    %9602 = vmatprep.subr.mxu0 0.0
    %v9603 = vand.u32 %v9226, 4294901760
    %9604 = vmatpush1.xpose.msra.mxu0 %v9603
    %9605 = vmatprep.subr.mxu0 0.0
    %9606 = vmatpush1.xpose.msra.mxu0 0.0
    %9607 = vmatprep.subr.mxu0 0.0
    %9608 = vmatpush1.xpose.msra.mxu0 0.0
    %9609 = vmatprep.subr.mxu0 0.0
    %9610 = vmatpush1.xpose.msra.mxu0 0.0
    %9611 = vmatprep.subr.mxu0 0.0
    %9612 = vmatpush1.xpose.msra.mxu0 0.0
    %9613 = vmatprep.subr.mxu0 0.0
    %9614 = vmatpush1.xpose.msra.mxu0 0.0
    %9615 = vmatprep.subr.mxu0 0.0
    %9616 = vmatpush1.xpose.msra.mxu0 0.0
    %9617 = vmatprep.subr.mxu0 0.0
    %9618 = vmatpush1.xpose.msra.mxu0 0.0
    %9619 = vmatprep.subr.mxu0 0.0
    %9620 = vmatpush1.xpose.msra.mxu0 0.0
    %9621 = vmatprep.subr.mxu0 0.0
    %9622 = vmatpush1.xpose.msra.mxu0 0.0
    %9623 = vmatprep.subr.mxu0 0.0
    %9624 = vmatpush1.xpose.msra.mxu0 0.0
    %9625 = vmatprep.subr.mxu0 0.0
    %9626 = vmatpush1.xpose.msra.mxu0 0.0
    %9627 = vmatprep.subr.mxu0 0.0
    %9628 = vmatpush1.xpose.msra.mxu0 0.0
    %9629 = vmatprep.subr.mxu0 0.0
    %9630 = vmatpush1.xpose.msra.mxu0 0.0
    %9631 = vmatprep.subr.mxu0 0.0
    %9632 = vmatpush1.xpose.msra.mxu0 0.0
    %9633 = vmatprep.subr.mxu0 0.0
    %9634 = vmatpush1.xpose.msra.mxu0 0.0
    %9635 = vmatprep.subr.mxu0 0.0
    %9636 = vmatpush1.xpose.msra.mxu0 0.0
    %9637 = vmatprep.subr.mxu0 0.0
    %9638 = vmatpush1.xpose.msra.mxu0 0.0
    %9639 = vmatprep.subr.mxu0 0.0
    %9640 = vmatpush1.xpose.msra.mxu0 0.0
    %9641 = vmatprep.subr.mxu0 0.0
    %9642 = vmatpush1.xpose.msra.mxu0 0.0
    %9643 = vmatprep.subr.mxu0 0.0
    %9644 = vmatpush1.xpose.msra.mxu0 0.0
    %9645 = vmatprep.subr.mxu0 0.0
    %9646 = vmatpush1.xpose.msra.mxu0 0.0
    %9647 = vmatprep.subr.mxu0 0.0
    %9648 = vmatpush1.xpose.msra.mxu0 0.0
    %9649 = vmatprep.subr.mxu0 0.0
    %9650 = vmatpush1.xpose.msra.mxu0 0.0
    %9651 = vmatprep.subr.mxu0 0.0
    %9652 = vmatpush1.xpose.msra.mxu0 0.0
    %9653 = vmatprep.subr.mxu0 0.0
    %9654 = vmatpush1.xpose.msra.mxu0 0.0
    %9655 = vmatprep.subr.mxu0 0.0
    %9656 = vmatpush1.xpose.msra.mxu0 0.0
    %9657 = vmatprep.subr.mxu0 0.0
    %9658 = vmatpush1.xpose.msra.mxu0 0.0
    %9659 = vmatprep.subr.mxu0 0.0
    %9660 = vmatpush1.xpose.msra.mxu0 0.0
    %9661 = vmatprep.subr.mxu0 0.0
    %9662 = vmatpush1.xpose.msra.mxu0 0.0
    %9663 = vmatprep.subr.mxu0 0.0
    %9664 = vmatpush1.xpose.msra.mxu0 0.0
    %9665 = vmatprep.subr.mxu0 0.0
    %9666 = vmatpush1.xpose.msra.mxu0 0.0
    %9667 = vmatprep.mubr.f32.mxu0 0.0
    %v9668 = vand.u32 %v9224, 4294901760
    %9669 = vmatmul.mubr.f32.gmra.mrb[0].mxu0 %v9668
    %v9670 = vpop.f32.mrb[0].mxu0
    %v9671 = vadd.f32 %v9599, %v9670
    %v9672 = vpop.f32.mrb[0].mxu0
    %9673 = vdwg.mxu0
    %v9674 = vsel %vm1784, %v9217, -inf
    %9675 = vmax.xlane.f32.xlu0 %v9674
    %v9676 = vpop.xlane.xlu0 %9675
    %v9677 = vsel %vm1784, %v9671, -inf
    %9678 = vmax.xlane.f32.xlu0 %v9677
    %v9679 = vpop.xlane.xlu0 %9678
    %v9680 = vsub.f32 %v9217, %v9676
    %v9681 = vsub.f32 %v9671, %v9679
    %v9682 = vmul.f32 %v9680, 1.442695
    %v9683 = vpow.pop %v9682
    %v9684 = vmul.f32 %v9681, 1.442695
    %v9685 = vpow.pop %v9684
    %v9686 = vsel %vm1784, %v9683, 0.0
    %9687 = vadd.xlane.f32.xlu0 %v9686
    %v9688 = vpop.xlane.xlu0 %9687
    %v9689 = vsel %vm1784, %v9685, 0.0
    %9690 = vadd.xlane.f32.xlu0 %v9689
    %v9691 = vpop.xlane.xlu0 %9690
    %v9692 = vrcp.pop %v9688
    %v9693 = vrcp.pop %v9691
    %v9694 = vmul.f32 %v9683, %v9692
    %v9695 = vmul.f32 %v9685, %v9693
    %9696 = vrot.lane.b32.xlu0 %v1757, 104
    %v9697 = vpop.permute.xlu0 %9696
    %v9700 = vsel %vm1784, %v9694, 0
    %9702 = vmatprep.subr.mxu0 0.0
    %v9703 = vand.u32 %v9697, 4294901760
    %9704 = vmatpush1.msra.mxu0 %v9703
    %9705 = vmatprep.subr.mxu0 0.0
    %9706 = vmatpush1.msra.mxu0 0.0
    %9707 = vmatprep.subr.mxu0 0.0
    %9708 = vmatpush1.msra.mxu0 0.0
    %9709 = vmatprep.subr.mxu0 0.0
    %9710 = vmatpush1.msra.mxu0 0.0
    %9711 = vmatprep.subr.mxu0 0.0
    %9712 = vmatpush1.msra.mxu0 0.0
    %9713 = vmatprep.subr.mxu0 0.0
    %9714 = vmatpush1.msra.mxu0 0.0
    %9715 = vmatprep.subr.mxu0 0.0
    %9716 = vmatpush1.msra.mxu0 0.0
    %9717 = vmatprep.subr.mxu0 0.0
    %9718 = vmatpush1.msra.mxu0 0.0
    %9719 = vmatprep.subr.mxu0 0.0
    %9720 = vmatpush1.msra.mxu0 0.0
    %9721 = vmatprep.subr.mxu0 0.0
    %9722 = vmatpush1.msra.mxu0 0.0
    %9723 = vmatprep.subr.mxu0 0.0
    %9724 = vmatpush1.msra.mxu0 0.0
    %9725 = vmatprep.subr.mxu0 0.0
    %9726 = vmatpush1.msra.mxu0 0.0
    %9727 = vmatprep.subr.mxu0 0.0
    %9728 = vmatpush1.msra.mxu0 0.0
    %9729 = vmatprep.subr.mxu0 0.0
    %9730 = vmatpush1.msra.mxu0 0.0
    %9731 = vmatprep.subr.mxu0 0.0
    %9732 = vmatpush1.msra.mxu0 0.0
    %9733 = vmatprep.subr.mxu0 0.0
    %9734 = vmatpush1.msra.mxu0 0.0
    %9735 = vmatprep.subr.mxu0 0.0
    %9736 = vmatpush1.msra.mxu0 0.0
    %9737 = vmatprep.subr.mxu0 0.0
    %9738 = vmatpush1.msra.mxu0 0.0
    %9739 = vmatprep.subr.mxu0 0.0
    %9740 = vmatpush1.msra.mxu0 0.0
    %9741 = vmatprep.subr.mxu0 0.0
    %9742 = vmatpush1.msra.mxu0 0.0
    %9743 = vmatprep.subr.mxu0 0.0
    %9744 = vmatpush1.msra.mxu0 0.0
    %9745 = vmatprep.subr.mxu0 0.0
    %9746 = vmatpush1.msra.mxu0 0.0
    %9747 = vmatprep.subr.mxu0 0.0
    %9748 = vmatpush1.msra.mxu0 0.0
    %9749 = vmatprep.subr.mxu0 0.0
    %9750 = vmatpush1.msra.mxu0 0.0
    %9751 = vmatprep.subr.mxu0 0.0
    %9752 = vmatpush1.msra.mxu0 0.0
    %9753 = vmatprep.subr.mxu0 0.0
    %9754 = vmatpush1.msra.mxu0 0.0
    %9755 = vmatprep.subr.mxu0 0.0
    %9756 = vmatpush1.msra.mxu0 0.0
    %9757 = vmatprep.subr.mxu0 0.0
    %9758 = vmatpush1.msra.mxu0 0.0
    %9759 = vmatprep.subr.mxu0 0.0
    %9760 = vmatpush1.msra.mxu0 0.0
    %9761 = vmatprep.subr.mxu0 0.0
    %9762 = vmatpush1.msra.mxu0 0.0
    %9763 = vmatprep.subr.mxu0 0.0
    %9764 = vmatpush1.msra.mxu0 0.0
    %9765 = vmatprep.subr.mxu0 0.0
    %9766 = vmatpush1.msra.mxu0 0.0
    %9767 = vmatprep.mubr.f32.mxu0 0.0
    %v9768 = vand.u32 %v9700, 4294901760
    %v9769 = vsub.f32 %v9700, %v9768
    %v9770 = vand.u32 %v9769, 4294901760
    %v9771 = vsub.f32 %v9769, %v9770
    %v9772 = vand.u32 %v9771, 4294901760
    %9773 = vmatmul.mubr.f32.gmra.mrb[0].mxu0 %v9772
    %v9774 = vpop.f32.mrb[0].mxu0
    %v9775 = vadd.f32 0.0, %v9774
    %v9776 = vpop.f32.mrb[0].mxu0
    %9777 = vdwg.mxu0
    %9778 = vmatprep.subr.mxu0 0.0
    %v9779 = vand.u32 %v9697, 4294901760
    %v9780 = vsub.f32 %v9697, %v9779
    %v9781 = vand.u32 %v9780, 4294901760
    %v9782 = vsub.f32 %v9780, %v9781
    %v9783 = vand.u32 %v9782, 4294901760
    %9784 = vmatpush1.msra.mxu0 %v9783
    %9785 = vmatprep.subr.mxu0 0.0
    %9786 = vmatpush1.msra.mxu0 0.0
    %9787 = vmatprep.subr.mxu0 0.0
    %9788 = vmatpush1.msra.mxu0 0.0
    %9789 = vmatprep.subr.mxu0 0.0
    %9790 = vmatpush1.msra.mxu0 0.0
    %9791 = vmatprep.subr.mxu0 0.0
    %9792 = vmatpush1.msra.mxu0 0.0
    %9793 = vmatprep.subr.mxu0 0.0
    %9794 = vmatpush1.msra.mxu0 0.0
    %9795 = vmatprep.subr.mxu0 0.0
    %9796 = vmatpush1.msra.mxu0 0.0
    %9797 = vmatprep.subr.mxu0 0.0
    %9798 = vmatpush1.msra.mxu0 0.0
    %9799 = vmatprep.subr.mxu0 0.0
    %9800 = vmatpush1.msra.mxu0 0.0
    %9801 = vmatprep.subr.mxu0 0.0
    %9802 = vmatpush1.msra.mxu0 0.0
    %9803 = vmatprep.subr.mxu0 0.0
    %9804 = vmatpush1.msra.mxu0 0.0
    %9805 = vmatprep.subr.mxu0 0.0
    %9806 = vmatpush1.msra.mxu0 0.0
    %9807 = vmatprep.subr.mxu0 0.0
    %9808 = vmatpush1.msra.mxu0 0.0
    %9809 = vmatprep.subr.mxu0 0.0
    %9810 = vmatpush1.msra.mxu0 0.0
    %9811 = vmatprep.subr.mxu0 0.0
    %9812 = vmatpush1.msra.mxu0 0.0
    %9813 = vmatprep.subr.mxu0 0.0
    %9814 = vmatpush1.msra.mxu0 0.0
    %9815 = vmatprep.subr.mxu0 0.0
    %9816 = vmatpush1.msra.mxu0 0.0
    %9817 = vmatprep.subr.mxu0 0.0
    %9818 = vmatpush1.msra.mxu0 0.0
    %9819 = vmatprep.subr.mxu0 0.0
    %9820 = vmatpush1.msra.mxu0 0.0
    %9821 = vmatprep.subr.mxu0 0.0
    %9822 = vmatpush1.msra.mxu0 0.0
    %9823 = vmatprep.subr.mxu0 0.0
    %9824 = vmatpush1.msra.mxu0 0.0
    %9825 = vmatprep.subr.mxu0 0.0
    %9826 = vmatpush1.msra.mxu0 0.0
    %9827 = vmatprep.subr.mxu0 0.0
    %9828 = vmatpush1.msra.mxu0 0.0
    %9829 = vmatprep.subr.mxu0 0.0
    %9830 = vmatpush1.msra.mxu0 0.0
    %9831 = vmatprep.subr.mxu0 0.0
    %9832 = vmatpush1.msra.mxu0 0.0
    %9833 = vmatprep.subr.mxu0 0.0
    %9834 = vmatpush1.msra.mxu0 0.0
    %9835 = vmatprep.subr.mxu0 0.0
    %9836 = vmatpush1.msra.mxu0 0.0
    %9837 = vmatprep.subr.mxu0 0.0
    %9838 = vmatpush1.msra.mxu0 0.0
    %9839 = vmatprep.subr.mxu0 0.0
    %9840 = vmatpush1.msra.mxu0 0.0
    %9841 = vmatprep.subr.mxu0 0.0
    %9842 = vmatpush1.msra.mxu0 0.0
    %9843 = vmatprep.subr.mxu0 0.0
    %9844 = vmatpush1.msra.mxu0 0.0
    %9845 = vmatprep.subr.mxu0 0.0
    %9846 = vmatpush1.msra.mxu0 0.0
    %9847 = vmatprep.mubr.f32.mxu0 0.0
    %v9848 = vand.u32 %v9700, 4294901760
    %9849 = vmatmul.mubr.f32.gmra.mrb[0].mxu0 %v9848
    %v9850 = vpop.f32.mrb[0].mxu0
    %v9851 = vadd.f32 %v9775, %v9850
    %v9852 = vpop.f32.mrb[0].mxu0
    %9853 = vdwg.mxu0
    %9854 = vmatprep.subr.mxu0 0.0
    %v9855 = vand.u32 %v9697, 4294901760
    %v9856 = vsub.f32 %v9697, %v9855
    %9857 = vmatpush1.msra.mxu0 %v9856
    %9858 = vmatprep.subr.mxu0 0.0
    %9859 = vmatpush1.msra.mxu0 0.0
    %9860 = vmatprep.subr.mxu0 0.0
    %9861 = vmatpush1.msra.mxu0 0.0
    %9862 = vmatprep.subr.mxu0 0.0
    %9863 = vmatpush1.msra.mxu0 0.0
    %9864 = vmatprep.subr.mxu0 0.0
    %9865 = vmatpush1.msra.mxu0 0.0
    %9866 = vmatprep.subr.mxu0 0.0
    %9867 = vmatpush1.msra.mxu0 0.0
    %9868 = vmatprep.subr.mxu0 0.0
    %9869 = vmatpush1.msra.mxu0 0.0
    %9870 = vmatprep.subr.mxu0 0.0
    %9871 = vmatpush1.msra.mxu0 0.0
    %9872 = vmatprep.subr.mxu0 0.0
    %9873 = vmatpush1.msra.mxu0 0.0
    %9874 = vmatprep.subr.mxu0 0.0
    %9875 = vmatpush1.msra.mxu0 0.0
    %9876 = vmatprep.subr.mxu0 0.0
    %9877 = vmatpush1.msra.mxu0 0.0
    %9878 = vmatprep.subr.mxu0 0.0
    %9879 = vmatpush1.msra.mxu0 0.0
    %9880 = vmatprep.subr.mxu0 0.0
    %9881 = vmatpush1.msra.mxu0 0.0
    %9882 = vmatprep.subr.mxu0 0.0
    %9883 = vmatpush1.msra.mxu0 0.0
    %9884 = vmatprep.subr.mxu0 0.0
    %9885 = vmatpush1.msra.mxu0 0.0
    %9886 = vmatprep.subr.mxu0 0.0
    %9887 = vmatpush1.msra.mxu0 0.0
    %9888 = vmatprep.subr.mxu0 0.0
    %9889 = vmatpush1.msra.mxu0 0.0
    %9890 = vmatprep.subr.mxu0 0.0
    %9891 = vmatpush1.msra.mxu0 0.0
    %9892 = vmatprep.subr.mxu0 0.0
    %9893 = vmatpush1.msra.mxu0 0.0
    %9894 = vmatprep.subr.mxu0 0.0
    %9895 = vmatpush1.msra.mxu0 0.0
    %9896 = vmatprep.subr.mxu0 0.0
    %9897 = vmatpush1.msra.mxu0 0.0
    %9898 = vmatprep.subr.mxu0 0.0
    %9899 = vmatpush1.msra.mxu0 0.0
    %9900 = vmatprep.subr.mxu0 0.0
    %9901 = vmatpush1.msra.mxu0 0.0
    %9902 = vmatprep.subr.mxu0 0.0
    %9903 = vmatpush1.msra.mxu0 0.0
    %9904 = vmatprep.subr.mxu0 0.0
    %9905 = vmatpush1.msra.mxu0 0.0
    %9906 = vmatprep.subr.mxu0 0.0
    %9907 = vmatpush1.msra.mxu0 0.0
    %9908 = vmatprep.subr.mxu0 0.0
    %9909 = vmatpush1.msra.mxu0 0.0
    %9910 = vmatprep.subr.mxu0 0.0
    %9911 = vmatpush1.msra.mxu0 0.0
    %9912 = vmatprep.subr.mxu0 0.0
    %9913 = vmatpush1.msra.mxu0 0.0
    %9914 = vmatprep.subr.mxu0 0.0
    %9915 = vmatpush1.msra.mxu0 0.0
    %9916 = vmatprep.subr.mxu0 0.0
    %9917 = vmatpush1.msra.mxu0 0.0
    %9918 = vmatprep.subr.mxu0 0.0
    %9919 = vmatpush1.msra.mxu0 0.0
    %9920 = vmatprep.mubr.f32.mxu0 0.0
    %v9921 = vand.u32 %v9700, 4294901760
    %v9922 = vsub.f32 %v9700, %v9921
    %9923 = vmatmul.mubr.f32.gmra.mrb[0].mxu0 %v9922
    %v9924 = vpop.f32.mrb[0].mxu0
    %v9925 = vadd.f32 %v9851, %v9924
    %v9926 = vpop.f32.mrb[0].mxu0
    %9927 = vdwg.mxu0
    %9928 = vmatprep.subr.mxu0 0.0
    %v9929 = vand.u32 %v9697, 4294901760
    %9930 = vmatpush1.msra.mxu0 %v9929
    %9931 = vmatprep.subr.mxu0 0.0
    %9932 = vmatpush1.msra.mxu0 0.0
    %9933 = vmatprep.subr.mxu0 0.0
    %9934 = vmatpush1.msra.mxu0 0.0
    %9935 = vmatprep.subr.mxu0 0.0
    %9936 = vmatpush1.msra.mxu0 0.0
    %9937 = vmatprep.subr.mxu0 0.0
    %9938 = vmatpush1.msra.mxu0 0.0
    %9939 = vmatprep.subr.mxu0 0.0
    %9940 = vmatpush1.msra.mxu0 0.0
    %9941 = vmatprep.subr.mxu0 0.0
    %9942 = vmatpush1.msra.mxu0 0.0
    %9943 = vmatprep.subr.mxu0 0.0
    %9944 = vmatpush1.msra.mxu0 0.0
    %9945 = vmatprep.subr.mxu0 0.0
    %9946 = vmatpush1.msra.mxu0 0.0
    %9947 = vmatprep.subr.mxu0 0.0
    %9948 = vmatpush1.msra.mxu0 0.0
    %9949 = vmatprep.subr.mxu0 0.0
    %9950 = vmatpush1.msra.mxu0 0.0
    %9951 = vmatprep.subr.mxu0 0.0
    %9952 = vmatpush1.msra.mxu0 0.0
    %9953 = vmatprep.subr.mxu0 0.0
    %9954 = vmatpush1.msra.mxu0 0.0
    %9955 = vmatprep.subr.mxu0 0.0
    %9956 = vmatpush1.msra.mxu0 0.0
    %9957 = vmatprep.subr.mxu0 0.0
    %9958 = vmatpush1.msra.mxu0 0.0
    %9959 = vmatprep.subr.mxu0 0.0
    %9960 = vmatpush1.msra.mxu0 0.0
    %9961 = vmatprep.subr.mxu0 0.0
    %9962 = vmatpush1.msra.mxu0 0.0
    %9963 = vmatprep.subr.mxu0 0.0
    %9964 = vmatpush1.msra.mxu0 0.0
    %9965 = vmatprep.subr.mxu0 0.0
    %9966 = vmatpush1.msra.mxu0 0.0
    %9967 = vmatprep.subr.mxu0 0.0
    %9968 = vmatpush1.msra.mxu0 0.0
    %9969 = vmatprep.subr.mxu0 0.0
    %9970 = vmatpush1.msra.mxu0 0.0
    %9971 = vmatprep.subr.mxu0 0.0
    %9972 = vmatpush1.msra.mxu0 0.0
    %9973 = vmatprep.subr.mxu0 0.0
    %9974 = vmatpush1.msra.mxu0 0.0
    %9975 = vmatprep.subr.mxu0 0.0
    %9976 = vmatpush1.msra.mxu0 0.0
    %9977 = vmatprep.subr.mxu0 0.0
    %9978 = vmatpush1.msra.mxu0 0.0
    %9979 = vmatprep.subr.mxu0 0.0
    %9980 = vmatpush1.msra.mxu0 0.0
    %9981 = vmatprep.subr.mxu0 0.0
    %9982 = vmatpush1.msra.mxu0 0.0
    %9983 = vmatprep.subr.mxu0 0.0
    %9984 = vmatpush1.msra.mxu0 0.0
    %9985 = vmatprep.subr.mxu0 0.0
    %9986 = vmatpush1.msra.mxu0 0.0
    %9987 = vmatprep.subr.mxu0 0.0
    %9988 = vmatpush1.msra.mxu0 0.0
    %9989 = vmatprep.subr.mxu0 0.0
    %9990 = vmatpush1.msra.mxu0 0.0
    %9991 = vmatprep.subr.mxu0 0.0
    %9992 = vmatpush1.msra.mxu0 0.0
    %9993 = vmatprep.mubr.f32.mxu0 0.0
    %v9994 = vand.u32 %v9700, 4294901760
    %v9995 = vsub.f32 %v9700, %v9994
    %v9996 = vand.u32 %v9995, 4294901760
    %9997 = vmatmul.mubr.f32.gmra.mrb[0].mxu0 %v9996
    %v9998 = vpop.f32.mrb[0].mxu0
    %v9999 = vadd.f32 %v9925, %v9998
    %v10000 = vpop.f32.mrb[0].mxu0
    %10001 = vdwg.mxu0
    %10002 = vmatprep.subr.mxu0 0.0
    %v10003 = vand.u32 %v9697, 4294901760
    %v10004 = vsub.f32 %v9697, %v10003
    %v10005 = vand.u32 %v10004, 4294901760
    %10006 = vmatpush1.msra.mxu0 %v10005
    %10007 = vmatprep.subr.mxu0 0.0
    %10008 = vmatpush1.msra.mxu0 0.0
    %10009 = vmatprep.subr.mxu0 0.0
    %10010 = vmatpush1.msra.mxu0 0.0
    %10011 = vmatprep.subr.mxu0 0.0
    %10012 = vmatpush1.msra.mxu0 0.0
    %10013 = vmatprep.subr.mxu0 0.0
    %10014 = vmatpush1.msra.mxu0 0.0
    %10015 = vmatprep.subr.mxu0 0.0
    %10016 = vmatpush1.msra.mxu0 0.0
    %10017 = vmatprep.subr.mxu0 0.0
    %10018 = vmatpush1.msra.mxu0 0.0
    %10019 = vmatprep.subr.mxu0 0.0
    %10020 = vmatpush1.msra.mxu0 0.0
    %10021 = vmatprep.subr.mxu0 0.0
    %10022 = vmatpush1.msra.mxu0 0.0
    %10023 = vmatprep.subr.mxu0 0.0
    %10024 = vmatpush1.msra.mxu0 0.0
    %10025 = vmatprep.subr.mxu0 0.0
    %10026 = vmatpush1.msra.mxu0 0.0
    %10027 = vmatprep.subr.mxu0 0.0
    %10028 = vmatpush1.msra.mxu0 0.0
    %10029 = vmatprep.subr.mxu0 0.0
    %10030 = vmatpush1.msra.mxu0 0.0
    %10031 = vmatprep.subr.mxu0 0.0
    %10032 = vmatpush1.msra.mxu0 0.0
    %10033 = vmatprep.subr.mxu0 0.0
    %10034 = vmatpush1.msra.mxu0 0.0
    %10035 = vmatprep.subr.mxu0 0.0
    %10036 = vmatpush1.msra.mxu0 0.0
    %10037 = vmatprep.subr.mxu0 0.0
    %10038 = vmatpush1.msra.mxu0 0.0
    %10039 = vmatprep.subr.mxu0 0.0
    %10040 = vmatpush1.msra.mxu0 0.0
    %10041 = vmatprep.subr.mxu0 0.0
    %10042 = vmatpush1.msra.mxu0 0.0
    %10043 = vmatprep.subr.mxu0 0.0
    %10044 = vmatpush1.msra.mxu0 0.0
    %10045 = vmatprep.subr.mxu0 0.0
    %10046 = vmatpush1.msra.mxu0 0.0
    %10047 = vmatprep.subr.mxu0 0.0
    %10048 = vmatpush1.msra.mxu0 0.0
    %10049 = vmatprep.subr.mxu0 0.0
    %10050 = vmatpush1.msra.mxu0 0.0
    %10051 = vmatprep.subr.mxu0 0.0
    %10052 = vmatpush1.msra.mxu0 0.0
    %10053 = vmatprep.subr.mxu0 0.0
    %10054 = vmatpush1.msra.mxu0 0.0
    %10055 = vmatprep.subr.mxu0 0.0
    %10056 = vmatpush1.msra.mxu0 0.0
    %10057 = vmatprep.subr.mxu0 0.0
    %10058 = vmatpush1.msra.mxu0 0.0
    %10059 = vmatprep.subr.mxu0 0.0
    %10060 = vmatpush1.msra.mxu0 0.0
    %10061 = vmatprep.subr.mxu0 0.0
    %10062 = vmatpush1.msra.mxu0 0.0
    %10063 = vmatprep.subr.mxu0 0.0
    %10064 = vmatpush1.msra.mxu0 0.0
    %10065 = vmatprep.subr.mxu0 0.0
    %10066 = vmatpush1.msra.mxu0 0.0
    %10067 = vmatprep.subr.mxu0 0.0
    %10068 = vmatpush1.msra.mxu0 0.0
    %10069 = vmatprep.mubr.f32.mxu0 0.0
    %v10070 = vand.u32 %v9700, 4294901760
    %10071 = vmatmul.mubr.f32.gmra.mrb[0].mxu0 %v10070
    %v10072 = vpop.f32.mrb[0].mxu0
    %v10073 = vadd.f32 %v9999, %v10072
    %v10074 = vpop.f32.mrb[0].mxu0
    %10075 = vdwg.mxu0
    %10076 = vmatprep.subr.mxu0 0.0
    %v10077 = vand.u32 %v9697, 4294901760
    %10078 = vmatpush1.msra.mxu0 %v10077
    %10079 = vmatprep.subr.mxu0 0.0
    %10080 = vmatpush1.msra.mxu0 0.0
    %10081 = vmatprep.subr.mxu0 0.0
    %10082 = vmatpush1.msra.mxu0 0.0
    %10083 = vmatprep.subr.mxu0 0.0
    %10084 = vmatpush1.msra.mxu0 0.0
    %10085 = vmatprep.subr.mxu0 0.0
    %10086 = vmatpush1.msra.mxu0 0.0
    %10087 = vmatprep.subr.mxu0 0.0
    %10088 = vmatpush1.msra.mxu0 0.0
    %10089 = vmatprep.subr.mxu0 0.0
    %10090 = vmatpush1.msra.mxu0 0.0
    %10091 = vmatprep.subr.mxu0 0.0
    %10092 = vmatpush1.msra.mxu0 0.0
    %10093 = vmatprep.subr.mxu0 0.0
    %10094 = vmatpush1.msra.mxu0 0.0
    %10095 = vmatprep.subr.mxu0 0.0
    %10096 = vmatpush1.msra.mxu0 0.0
    %10097 = vmatprep.subr.mxu0 0.0
    %10098 = vmatpush1.msra.mxu0 0.0
    %10099 = vmatprep.subr.mxu0 0.0
    %10100 = vmatpush1.msra.mxu0 0.0
    %10101 = vmatprep.subr.mxu0 0.0
    %10102 = vmatpush1.msra.mxu0 0.0
    %10103 = vmatprep.subr.mxu0 0.0
    %10104 = vmatpush1.msra.mxu0 0.0
    %10105 = vmatprep.subr.mxu0 0.0
    %10106 = vmatpush1.msra.mxu0 0.0
    %10107 = vmatprep.subr.mxu0 0.0
    %10108 = vmatpush1.msra.mxu0 0.0
    %10109 = vmatprep.subr.mxu0 0.0
    %10110 = vmatpush1.msra.mxu0 0.0
    %10111 = vmatprep.subr.mxu0 0.0
    %10112 = vmatpush1.msra.mxu0 0.0
    %10113 = vmatprep.subr.mxu0 0.0
    %10114 = vmatpush1.msra.mxu0 0.0
    %10115 = vmatprep.subr.mxu0 0.0
    %10116 = vmatpush1.msra.mxu0 0.0
    %10117 = vmatprep.subr.mxu0 0.0
    %10118 = vmatpush1.msra.mxu0 0.0
    %10119 = vmatprep.subr.mxu0 0.0
    %10120 = vmatpush1.msra.mxu0 0.0
    %10121 = vmatprep.subr.mxu0 0.0
    %10122 = vmatpush1.msra.mxu0 0.0
    %10123 = vmatprep.subr.mxu0 0.0
    %10124 = vmatpush1.msra.mxu0 0.0
    %10125 = vmatprep.subr.mxu0 0.0
    %10126 = vmatpush1.msra.mxu0 0.0
    %10127 = vmatprep.subr.mxu0 0.0
    %10128 = vmatpush1.msra.mxu0 0.0
    %10129 = vmatprep.subr.mxu0 0.0
    %10130 = vmatpush1.msra.mxu0 0.0
    %10131 = vmatprep.subr.mxu0 0.0
    %10132 = vmatpush1.msra.mxu0 0.0
    %10133 = vmatprep.subr.mxu0 0.0
    %10134 = vmatpush1.msra.mxu0 0.0
    %10135 = vmatprep.subr.mxu0 0.0
    %10136 = vmatpush1.msra.mxu0 0.0
    %10137 = vmatprep.subr.mxu0 0.0
    %10138 = vmatpush1.msra.mxu0 0.0
    %10139 = vmatprep.subr.mxu0 0.0
    %10140 = vmatpush1.msra.mxu0 0.0
    %10141 = vmatprep.mubr.f32.mxu0 0.0
    %v10142 = vand.u32 %v9700, 4294901760
    %10143 = vmatmul.mubr.f32.gmra.mrb[0].mxu0 %v10142
    %v10144 = vpop.f32.mrb[0].mxu0
    %v10145 = vadd.f32 %v10073, %v10144
    %v10146 = vpop.f32.mrb[0].mxu0
    %10147 = vdwg.mxu0
    %10148 = vrot.lane.b32.xlu0 %v1763, 104
    %v10149 = vpop.permute.xlu0 %10148
    %v10152 = vsel %vm1784, %v9695, 0
    %10154 = vmatprep.subr.mxu0 0.0
    %v10155 = vand.u32 %v10149, 4294901760
    %10156 = vmatpush1.msra.mxu0 %v10155
    %10157 = vmatprep.subr.mxu0 0.0
    %10158 = vmatpush1.msra.mxu0 0.0
    %10159 = vmatprep.subr.mxu0 0.0
    %10160 = vmatpush1.msra.mxu0 0.0
    %10161 = vmatprep.subr.mxu0 0.0
    %10162 = vmatpush1.msra.mxu0 0.0
    %10163 = vmatprep.subr.mxu0 0.0
    %10164 = vmatpush1.msra.mxu0 0.0
    %10165 = vmatprep.subr.mxu0 0.0
    %10166 = vmatpush1.msra.mxu0 0.0
    %10167 = vmatprep.subr.mxu0 0.0
    %10168 = vmatpush1.msra.mxu0 0.0
    %10169 = vmatprep.subr.mxu0 0.0
    %10170 = vmatpush1.msra.mxu0 0.0
    %10171 = vmatprep.subr.mxu0 0.0
    %10172 = vmatpush1.msra.mxu0 0.0
    %10173 = vmatprep.subr.mxu0 0.0
    %10174 = vmatpush1.msra.mxu0 0.0
    %10175 = vmatprep.subr.mxu0 0.0
    %10176 = vmatpush1.msra.mxu0 0.0
    %10177 = vmatprep.subr.mxu0 0.0
    %10178 = vmatpush1.msra.mxu0 0.0
    %10179 = vmatprep.subr.mxu0 0.0
    %10180 = vmatpush1.msra.mxu0 0.0
    %10181 = vmatprep.subr.mxu0 0.0
    %10182 = vmatpush1.msra.mxu0 0.0
    %10183 = vmatprep.subr.mxu0 0.0
    %10184 = vmatpush1.msra.mxu0 0.0
    %10185 = vmatprep.subr.mxu0 0.0
    %10186 = vmatpush1.msra.mxu0 0.0
    %10187 = vmatprep.subr.mxu0 0.0
    %10188 = vmatpush1.msra.mxu0 0.0
    %10189 = vmatprep.subr.mxu0 0.0
    %10190 = vmatpush1.msra.mxu0 0.0
    %10191 = vmatprep.subr.mxu0 0.0
    %10192 = vmatpush1.msra.mxu0 0.0
    %10193 = vmatprep.subr.mxu0 0.0
    %10194 = vmatpush1.msra.mxu0 0.0
    %10195 = vmatprep.subr.mxu0 0.0
    %10196 = vmatpush1.msra.mxu0 0.0
    %10197 = vmatprep.subr.mxu0 0.0
    %10198 = vmatpush1.msra.mxu0 0.0
    %10199 = vmatprep.subr.mxu0 0.0
    %10200 = vmatpush1.msra.mxu0 0.0
    %10201 = vmatprep.subr.mxu0 0.0
    %10202 = vmatpush1.msra.mxu0 0.0
    %10203 = vmatprep.subr.mxu0 0.0
    %10204 = vmatpush1.msra.mxu0 0.0
    %10205 = vmatprep.subr.mxu0 0.0
    %10206 = vmatpush1.msra.mxu0 0.0
    %10207 = vmatprep.subr.mxu0 0.0
    %10208 = vmatpush1.msra.mxu0 0.0
    %10209 = vmatprep.subr.mxu0 0.0
    %10210 = vmatpush1.msra.mxu0 0.0
    %10211 = vmatprep.subr.mxu0 0.0
    %10212 = vmatpush1.msra.mxu0 0.0
    %10213 = vmatprep.subr.mxu0 0.0
    %10214 = vmatpush1.msra.mxu0 0.0
    %10215 = vmatprep.subr.mxu0 0.0
    %10216 = vmatpush1.msra.mxu0 0.0
    %10217 = vmatprep.subr.mxu0 0.0
    %10218 = vmatpush1.msra.mxu0 0.0
    %10219 = vmatprep.mubr.f32.mxu0 0.0
    %v10220 = vand.u32 %v10152, 4294901760
    %v10221 = vsub.f32 %v10152, %v10220
    %v10222 = vand.u32 %v10221, 4294901760
    %v10223 = vsub.f32 %v10221, %v10222
    %v10224 = vand.u32 %v10223, 4294901760
    %10225 = vmatmul.mubr.f32.gmra.mrb[0].mxu0 %v10224
    %v10226 = vpop.f32.mrb[0].mxu0
    %v10227 = vadd.f32 0.0, %v10226
    %v10228 = vpop.f32.mrb[0].mxu0
    %10229 = vdwg.mxu0
    %10230 = vmatprep.subr.mxu0 0.0
    %v10231 = vand.u32 %v10149, 4294901760
    %v10232 = vsub.f32 %v10149, %v10231
    %v10233 = vand.u32 %v10232, 4294901760
    %v10234 = vsub.f32 %v10232, %v10233
    %v10235 = vand.u32 %v10234, 4294901760
    %10236 = vmatpush1.msra.mxu0 %v10235
    %10237 = vmatprep.subr.mxu0 0.0
    %10238 = vmatpush1.msra.mxu0 0.0
    %10239 = vmatprep.subr.mxu0 0.0
    %10240 = vmatpush1.msra.mxu0 0.0
    %10241 = vmatprep.subr.mxu0 0.0
    %10242 = vmatpush1.msra.mxu0 0.0
    %10243 = vmatprep.subr.mxu0 0.0
    %10244 = vmatpush1.msra.mxu0 0.0
    %10245 = vmatprep.subr.mxu0 0.0
    %10246 = vmatpush1.msra.mxu0 0.0
    %10247 = vmatprep.subr.mxu0 0.0
    %10248 = vmatpush1.msra.mxu0 0.0
    %10249 = vmatprep.subr.mxu0 0.0
    %10250 = vmatpush1.msra.mxu0 0.0
    %10251 = vmatprep.subr.mxu0 0.0
    %10252 = vmatpush1.msra.mxu0 0.0
    %10253 = vmatprep.subr.mxu0 0.0
    %10254 = vmatpush1.msra.mxu0 0.0
    %10255 = vmatprep.subr.mxu0 0.0
    %10256 = vmatpush1.msra.mxu0 0.0
    %10257 = vmatprep.subr.mxu0 0.0
    %10258 = vmatpush1.msra.mxu0 0.0
    %10259 = vmatprep.subr.mxu0 0.0
    %10260 = vmatpush1.msra.mxu0 0.0
    %10261 = vmatprep.subr.mxu0 0.0
    %10262 = vmatpush1.msra.mxu0 0.0
    %10263 = vmatprep.subr.mxu0 0.0
    %10264 = vmatpush1.msra.mxu0 0.0
    %10265 = vmatprep.subr.mxu0 0.0
    %10266 = vmatpush1.msra.mxu0 0.0
    %10267 = vmatprep.subr.mxu0 0.0
    %10268 = vmatpush1.msra.mxu0 0.0
    %10269 = vmatprep.subr.mxu0 0.0
    %10270 = vmatpush1.msra.mxu0 0.0
    %10271 = vmatprep.subr.mxu0 0.0
    %10272 = vmatpush1.msra.mxu0 0.0
    %10273 = vmatprep.subr.mxu0 0.0
    %10274 = vmatpush1.msra.mxu0 0.0
    %10275 = vmatprep.subr.mxu0 0.0
    %10276 = vmatpush1.msra.mxu0 0.0
    %10277 = vmatprep.subr.mxu0 0.0
    %10278 = vmatpush1.msra.mxu0 0.0
    %10279 = vmatprep.subr.mxu0 0.0
    %10280 = vmatpush1.msra.mxu0 0.0
    %10281 = vmatprep.subr.mxu0 0.0
    %10282 = vmatpush1.msra.mxu0 0.0
    %10283 = vmatprep.subr.mxu0 0.0
    %10284 = vmatpush1.msra.mxu0 0.0
    %10285 = vmatprep.subr.mxu0 0.0
    %10286 = vmatpush1.msra.mxu0 0.0
    %10287 = vmatprep.subr.mxu0 0.0
    %10288 = vmatpush1.msra.mxu0 0.0
    %10289 = vmatprep.subr.mxu0 0.0
    %10290 = vmatpush1.msra.mxu0 0.0
    %10291 = vmatprep.subr.mxu0 0.0
    %10292 = vmatpush1.msra.mxu0 0.0
    %10293 = vmatprep.subr.mxu0 0.0
    %10294 = vmatpush1.msra.mxu0 0.0
    %10295 = vmatprep.subr.mxu0 0.0
    %10296 = vmatpush1.msra.mxu0 0.0
    %10297 = vmatprep.subr.mxu0 0.0
    %10298 = vmatpush1.msra.mxu0 0.0
    %10299 = vmatprep.mubr.f32.mxu0 0.0
    %v10300 = vand.u32 %v10152, 4294901760
    %10301 = vmatmul.mubr.f32.gmra.mrb[0].mxu0 %v10300
    %v10302 = vpop.f32.mrb[0].mxu0
    %v10303 = vadd.f32 %v10227, %v10302
    %v10304 = vpop.f32.mrb[0].mxu0
    %10305 = vdwg.mxu0
    %10306 = vmatprep.subr.mxu0 0.0
    %v10307 = vand.u32 %v10149, 4294901760
    %v10308 = vsub.f32 %v10149, %v10307
    %10309 = vmatpush1.msra.mxu0 %v10308
    %10310 = vmatprep.subr.mxu0 0.0
    %10311 = vmatpush1.msra.mxu0 0.0
    %10312 = vmatprep.subr.mxu0 0.0
    %10313 = vmatpush1.msra.mxu0 0.0
    %10314 = vmatprep.subr.mxu0 0.0
    %10315 = vmatpush1.msra.mxu0 0.0
    %10316 = vmatprep.subr.mxu0 0.0
    %10317 = vmatpush1.msra.mxu0 0.0
    %10318 = vmatprep.subr.mxu0 0.0
    %10319 = vmatpush1.msra.mxu0 0.0
    %10320 = vmatprep.subr.mxu0 0.0
    %10321 = vmatpush1.msra.mxu0 0.0
    %10322 = vmatprep.subr.mxu0 0.0
    %10323 = vmatpush1.msra.mxu0 0.0
    %10324 = vmatprep.subr.mxu0 0.0
    %10325 = vmatpush1.msra.mxu0 0.0
    %10326 = vmatprep.subr.mxu0 0.0
    %10327 = vmatpush1.msra.mxu0 0.0
    %10328 = vmatprep.subr.mxu0 0.0
    %10329 = vmatpush1.msra.mxu0 0.0
    %10330 = vmatprep.subr.mxu0 0.0
    %10331 = vmatpush1.msra.mxu0 0.0
    %10332 = vmatprep.subr.mxu0 0.0
    %10333 = vmatpush1.msra.mxu0 0.0
    %10334 = vmatprep.subr.mxu0 0.0
    %10335 = vmatpush1.msra.mxu0 0.0
    %10336 = vmatprep.subr.mxu0 0.0
    %10337 = vmatpush1.msra.mxu0 0.0
    %10338 = vmatprep.subr.mxu0 0.0
    %10339 = vmatpush1.msra.mxu0 0.0
    %10340 = vmatprep.subr.mxu0 0.0
    %10341 = vmatpush1.msra.mxu0 0.0
    %10342 = vmatprep.subr.mxu0 0.0
    %10343 = vmatpush1.msra.mxu0 0.0
    %10344 = vmatprep.subr.mxu0 0.0
    %10345 = vmatpush1.msra.mxu0 0.0
    %10346 = vmatprep.subr.mxu0 0.0
    %10347 = vmatpush1.msra.mxu0 0.0
    %10348 = vmatprep.subr.mxu0 0.0
    %10349 = vmatpush1.msra.mxu0 0.0
    %10350 = vmatprep.subr.mxu0 0.0
    %10351 = vmatpush1.msra.mxu0 0.0
    %10352 = vmatprep.subr.mxu0 0.0
    %10353 = vmatpush1.msra.mxu0 0.0
    %10354 = vmatprep.subr.mxu0 0.0
    %10355 = vmatpush1.msra.mxu0 0.0
    %10356 = vmatprep.subr.mxu0 0.0
    %10357 = vmatpush1.msra.mxu0 0.0
    %10358 = vmatprep.subr.mxu0 0.0
    %10359 = vmatpush1.msra.mxu0 0.0
    %10360 = vmatprep.subr.mxu0 0.0
    %10361 = vmatpush1.msra.mxu0 0.0
    %10362 = vmatprep.subr.mxu0 0.0
    %10363 = vmatpush1.msra.mxu0 0.0
    %10364 = vmatprep.subr.mxu0 0.0
    %10365 = vmatpush1.msra.mxu0 0.0
    %10366 = vmatprep.subr.mxu0 0.0
    %10367 = vmatpush1.msra.mxu0 0.0
    %10368 = vmatprep.subr.mxu0 0.0
    %10369 = vmatpush1.msra.mxu0 0.0
    %10370 = vmatprep.subr.mxu0 0.0
    %10371 = vmatpush1.msra.mxu0 0.0
    %10372 = vmatprep.mubr.f32.mxu0 0.0
    %v10373 = vand.u32 %v10152, 4294901760
    %v10374 = vsub.f32 %v10152, %v10373
    %10375 = vmatmul.mubr.f32.gmra.mrb[0].mxu0 %v10374
    %v10376 = vpop.f32.mrb[0].mxu0
    %v10377 = vadd.f32 %v10303, %v10376
    %v10378 = vpop.f32.mrb[0].mxu0
    %10379 = vdwg.mxu0
    %10380 = vmatprep.subr.mxu0 0.0
    %v10381 = vand.u32 %v10149, 4294901760
    %10382 = vmatpush1.msra.mxu0 %v10381
    %10383 = vmatprep.subr.mxu0 0.0
    %10384 = vmatpush1.msra.mxu0 0.0
    %10385 = vmatprep.subr.mxu0 0.0
    %10386 = vmatpush1.msra.mxu0 0.0
    %10387 = vmatprep.subr.mxu0 0.0
    %10388 = vmatpush1.msra.mxu0 0.0
    %10389 = vmatprep.subr.mxu0 0.0
    %10390 = vmatpush1.msra.mxu0 0.0
    %10391 = vmatprep.subr.mxu0 0.0
    %10392 = vmatpush1.msra.mxu0 0.0
    %10393 = vmatprep.subr.mxu0 0.0
    %10394 = vmatpush1.msra.mxu0 0.0
    %10395 = vmatprep.subr.mxu0 0.0
    %10396 = vmatpush1.msra.mxu0 0.0
    %10397 = vmatprep.subr.mxu0 0.0
    %10398 = vmatpush1.msra.mxu0 0.0
    %10399 = vmatprep.subr.mxu0 0.0
    %10400 = vmatpush1.msra.mxu0 0.0
    %10401 = vmatprep.subr.mxu0 0.0
    %10402 = vmatpush1.msra.mxu0 0.0
    %10403 = vmatprep.subr.mxu0 0.0
    %10404 = vmatpush1.msra.mxu0 0.0
    %10405 = vmatprep.subr.mxu0 0.0
    %10406 = vmatpush1.msra.mxu0 0.0
    %10407 = vmatprep.subr.mxu0 0.0
    %10408 = vmatpush1.msra.mxu0 0.0
    %10409 = vmatprep.subr.mxu0 0.0
    %10410 = vmatpush1.msra.mxu0 0.0
    %10411 = vmatprep.subr.mxu0 0.0
    %10412 = vmatpush1.msra.mxu0 0.0
    %10413 = vmatprep.subr.mxu0 0.0
    %10414 = vmatpush1.msra.mxu0 0.0
    %10415 = vmatprep.subr.mxu0 0.0
    %10416 = vmatpush1.msra.mxu0 0.0
    %10417 = vmatprep.subr.mxu0 0.0
    %10418 = vmatpush1.msra.mxu0 0.0
    %10419 = vmatprep.subr.mxu0 0.0
    %10420 = vmatpush1.msra.mxu0 0.0
    %10421 = vmatprep.subr.mxu0 0.0
    %10422 = vmatpush1.msra.mxu0 0.0
    %10423 = vmatprep.subr.mxu0 0.0
    %10424 = vmatpush1.msra.mxu0 0.0
    %10425 = vmatprep.subr.mxu0 0.0
    %10426 = vmatpush1.msra.mxu0 0.0
    %10427 = vmatprep.subr.mxu0 0.0
    %10428 = vmatpush1.msra.mxu0 0.0
    %10429 = vmatprep.subr.mxu0 0.0
    %10430 = vmatpush1.msra.mxu0 0.0
    %10431 = vmatprep.subr.mxu0 0.0
    %10432 = vmatpush1.msra.mxu0 0.0
    %10433 = vmatprep.subr.mxu0 0.0
    %10434 = vmatpush1.msra.mxu0 0.0
    %10435 = vmatprep.subr.mxu0 0.0
    %10436 = vmatpush1.msra.mxu0 0.0
    %10437 = vmatprep.subr.mxu0 0.0
    %10438 = vmatpush1.msra.mxu0 0.0
    %10439 = vmatprep.subr.mxu0 0.0
    %10440 = vmatpush1.msra.mxu0 0.0
    %10441 = vmatprep.subr.mxu0 0.0
    %10442 = vmatpush1.msra.mxu0 0.0
    %10443 = vmatprep.subr.mxu0 0.0
    %10444 = vmatpush1.msra.mxu0 0.0
    %10445 = vmatprep.mubr.f32.mxu0 0.0
    %v10446 = vand.u32 %v10152, 4294901760
    %v10447 = vsub.f32 %v10152, %v10446
    %v10448 = vand.u32 %v10447, 4294901760
    %10449 = vmatmul.mubr.f32.gmra.mrb[0].mxu0 %v10448
    %v10450 = vpop.f32.mrb[0].mxu0
    %v10451 = vadd.f32 %v10377, %v10450
    %v10452 = vpop.f32.mrb[0].mxu0
    %10453 = vdwg.mxu0
    %10454 = vmatprep.subr.mxu0 0.0
    %v10455 = vand.u32 %v10149, 4294901760
    %v10456 = vsub.f32 %v10149, %v10455
    %v10457 = vand.u32 %v10456, 4294901760
    %10458 = vmatpush1.msra.mxu0 %v10457
    %10459 = vmatprep.subr.mxu0 0.0
    %10460 = vmatpush1.msra.mxu0 0.0
    %10461 = vmatprep.subr.mxu0 0.0
    %10462 = vmatpush1.msra.mxu0 0.0
    %10463 = vmatprep.subr.mxu0 0.0
    %10464 = vmatpush1.msra.mxu0 0.0
    %10465 = vmatprep.subr.mxu0 0.0
    %10466 = vmatpush1.msra.mxu0 0.0
    %10467 = vmatprep.subr.mxu0 0.0
    %10468 = vmatpush1.msra.mxu0 0.0
    %10469 = vmatprep.subr.mxu0 0.0
    %10470 = vmatpush1.msra.mxu0 0.0
    %10471 = vmatprep.subr.mxu0 0.0
    %10472 = vmatpush1.msra.mxu0 0.0
    %10473 = vmatprep.subr.mxu0 0.0
    %10474 = vmatpush1.msra.mxu0 0.0
    %10475 = vmatprep.subr.mxu0 0.0
    %10476 = vmatpush1.msra.mxu0 0.0
    %10477 = vmatprep.subr.mxu0 0.0
    %10478 = vmatpush1.msra.mxu0 0.0
    %10479 = vmatprep.subr.mxu0 0.0
    %10480 = vmatpush1.msra.mxu0 0.0
    %10481 = vmatprep.subr.mxu0 0.0
    %10482 = vmatpush1.msra.mxu0 0.0
    %10483 = vmatprep.subr.mxu0 0.0
    %10484 = vmatpush1.msra.mxu0 0.0
    %10485 = vmatprep.subr.mxu0 0.0
    %10486 = vmatpush1.msra.mxu0 0.0
    %10487 = vmatprep.subr.mxu0 0.0
    %10488 = vmatpush1.msra.mxu0 0.0
    %10489 = vmatprep.subr.mxu0 0.0
    %10490 = vmatpush1.msra.mxu0 0.0
    %10491 = vmatprep.subr.mxu0 0.0
    %10492 = vmatpush1.msra.mxu0 0.0
    %10493 = vmatprep.subr.mxu0 0.0
    %10494 = vmatpush1.msra.mxu0 0.0
    %10495 = vmatprep.subr.mxu0 0.0
    %10496 = vmatpush1.msra.mxu0 0.0
    %10497 = vmatprep.subr.mxu0 0.0
    %10498 = vmatpush1.msra.mxu0 0.0
    %10499 = vmatprep.subr.mxu0 0.0
    %10500 = vmatpush1.msra.mxu0 0.0
    %10501 = vmatprep.subr.mxu0 0.0
    %10502 = vmatpush1.msra.mxu0 0.0
    %10503 = vmatprep.subr.mxu0 0.0
    %10504 = vmatpush1.msra.mxu0 0.0
    %10505 = vmatprep.subr.mxu0 0.0
    %10506 = vmatpush1.msra.mxu0 0.0
    %10507 = vmatprep.subr.mxu0 0.0
    %10508 = vmatpush1.msra.mxu0 0.0
    %10509 = vmatprep.subr.mxu0 0.0
    %10510 = vmatpush1.msra.mxu0 0.0
    %10511 = vmatprep.subr.mxu0 0.0
    %10512 = vmatpush1.msra.mxu0 0.0
    %10513 = vmatprep.subr.mxu0 0.0
    %10514 = vmatpush1.msra.mxu0 0.0
    %10515 = vmatprep.subr.mxu0 0.0
    %10516 = vmatpush1.msra.mxu0 0.0
    %10517 = vmatprep.subr.mxu0 0.0
    %10518 = vmatpush1.msra.mxu0 0.0
    %10519 = vmatprep.subr.mxu0 0.0
    %10520 = vmatpush1.msra.mxu0 0.0
    %10521 = vmatprep.mubr.f32.mxu0 0.0
    %v10522 = vand.u32 %v10152, 4294901760
    %10523 = vmatmul.mubr.f32.gmra.mrb[0].mxu0 %v10522
    %v10524 = vpop.f32.mrb[0].mxu0
    %v10525 = vadd.f32 %v10451, %v10524
    %v10526 = vpop.f32.mrb[0].mxu0
    %10527 = vdwg.mxu0
    %10528 = vmatprep.subr.mxu0 0.0
    %v10529 = vand.u32 %v10149, 4294901760
    %10530 = vmatpush1.msra.mxu0 %v10529
    %10531 = vmatprep.subr.mxu0 0.0
    %10532 = vmatpush1.msra.mxu0 0.0
    %10533 = vmatprep.subr.mxu0 0.0
    %10534 = vmatpush1.msra.mxu0 0.0
    %10535 = vmatprep.subr.mxu0 0.0
    %10536 = vmatpush1.msra.mxu0 0.0
    %10537 = vmatprep.subr.mxu0 0.0
    %10538 = vmatpush1.msra.mxu0 0.0
    %10539 = vmatprep.subr.mxu0 0.0
    %10540 = vmatpush1.msra.mxu0 0.0
    %10541 = vmatprep.subr.mxu0 0.0
    %10542 = vmatpush1.msra.mxu0 0.0
    %10543 = vmatprep.subr.mxu0 0.0
    %10544 = vmatpush1.msra.mxu0 0.0
    %10545 = vmatprep.subr.mxu0 0.0
    %10546 = vmatpush1.msra.mxu0 0.0
    %10547 = vmatprep.subr.mxu0 0.0
    %10548 = vmatpush1.msra.mxu0 0.0
    %10549 = vmatprep.subr.mxu0 0.0
    %10550 = vmatpush1.msra.mxu0 0.0
    %10551 = vmatprep.subr.mxu0 0.0
    %10552 = vmatpush1.msra.mxu0 0.0
    %10553 = vmatprep.subr.mxu0 0.0
    %10554 = vmatpush1.msra.mxu0 0.0
    %10555 = vmatprep.subr.mxu0 0.0
    %10556 = vmatpush1.msra.mxu0 0.0
    %10557 = vmatprep.subr.mxu0 0.0
    %10558 = vmatpush1.msra.mxu0 0.0
    %10559 = vmatprep.subr.mxu0 0.0
    %10560 = vmatpush1.msra.mxu0 0.0
    %10561 = vmatprep.subr.mxu0 0.0
    %10562 = vmatpush1.msra.mxu0 0.0
    %10563 = vmatprep.subr.mxu0 0.0
    %10564 = vmatpush1.msra.mxu0 0.0
    %10565 = vmatprep.subr.mxu0 0.0
    %10566 = vmatpush1.msra.mxu0 0.0
    %10567 = vmatprep.subr.mxu0 0.0
    %10568 = vmatpush1.msra.mxu0 0.0
    %10569 = vmatprep.subr.mxu0 0.0
    %10570 = vmatpush1.msra.mxu0 0.0
    %10571 = vmatprep.subr.mxu0 0.0
    %10572 = vmatpush1.msra.mxu0 0.0
    %10573 = vmatprep.subr.mxu0 0.0
    %10574 = vmatpush1.msra.mxu0 0.0
    %10575 = vmatprep.subr.mxu0 0.0
    %10576 = vmatpush1.msra.mxu0 0.0
    %10577 = vmatprep.subr.mxu0 0.0
    %10578 = vmatpush1.msra.mxu0 0.0
    %10579 = vmatprep.subr.mxu0 0.0
    %10580 = vmatpush1.msra.mxu0 0.0
    %10581 = vmatprep.subr.mxu0 0.0
    %10582 = vmatpush1.msra.mxu0 0.0
    %10583 = vmatprep.subr.mxu0 0.0
    %10584 = vmatpush1.msra.mxu0 0.0
    %10585 = vmatprep.subr.mxu0 0.0
    %10586 = vmatpush1.msra.mxu0 0.0
    %10587 = vmatprep.subr.mxu0 0.0
    %10588 = vmatpush1.msra.mxu0 0.0
    %10589 = vmatprep.subr.mxu0 0.0
    %10590 = vmatpush1.msra.mxu0 0.0
    %10591 = vmatprep.subr.mxu0 0.0
    %10592 = vmatpush1.msra.mxu0 0.0
    %10593 = vmatprep.mubr.f32.mxu0 0.0
    %v10594 = vand.u32 %v10152, 4294901760
    %10595 = vmatmul.mubr.f32.gmra.mrb[0].mxu0 %v10594
    %v10596 = vpop.f32.mrb[0].mxu0
    %v10597 = vadd.f32 %v10525, %v10596
    %v10598 = vpop.f32.mrb[0].mxu0
    %10599 = vdwg.mxu0
    %v10601 = vsel %vm1784, %v10145, 0
    %v10604 = vsel %vm1784, %v10597, 0
    %10606 = vmatprep.subr.mxu0 0.0
    %v10607 = vand.u32 %v1783, 4294901760
    %10608 = vmatpush1.msra.mxu0 %v10607
    %10609 = vmatprep.subr.mxu0 0.0
    %10610 = vmatpush1.msra.mxu0 0.0
    %10611 = vmatprep.subr.mxu0 0.0
    %10612 = vmatpush1.msra.mxu0 0.0
    %10613 = vmatprep.subr.mxu0 0.0
    %10614 = vmatpush1.msra.mxu0 0.0
    %10615 = vmatprep.subr.mxu0 0.0
    %10616 = vmatpush1.msra.mxu0 0.0
    %10617 = vmatprep.subr.mxu0 0.0
    %10618 = vmatpush1.msra.mxu0 0.0
    %10619 = vmatprep.subr.mxu0 0.0
    %10620 = vmatpush1.msra.mxu0 0.0
    %10621 = vmatprep.subr.mxu0 0.0
    %10622 = vmatpush1.msra.mxu0 0.0
    %10623 = vmatprep.subr.mxu0 0.0
    %10624 = vmatpush1.msra.mxu0 0.0
    %10625 = vmatprep.subr.mxu0 0.0
    %10626 = vmatpush1.msra.mxu0 0.0
    %10627 = vmatprep.subr.mxu0 0.0
    %10628 = vmatpush1.msra.mxu0 0.0
    %10629 = vmatprep.subr.mxu0 0.0
    %10630 = vmatpush1.msra.mxu0 0.0
    %10631 = vmatprep.subr.mxu0 0.0
    %10632 = vmatpush1.msra.mxu0 0.0
    %10633 = vmatprep.subr.mxu0 0.0
    %10634 = vmatpush1.msra.mxu0 0.0
    %10635 = vmatprep.subr.mxu0 0.0
    %10636 = vmatpush1.msra.mxu0 0.0
    %10637 = vmatprep.subr.mxu0 0.0
    %10638 = vmatpush1.msra.mxu0 0.0
    %10639 = vmatprep.subr.mxu0 0.0
    %10640 = vmatpush1.msra.mxu0 0.0
    %10641 = vmatprep.subr.mxu0 0.0
    %10642 = vmatpush1.msra.mxu0 0.0
    %10643 = vmatprep.subr.mxu0 0.0
    %10644 = vmatpush1.msra.mxu0 0.0
    %10645 = vmatprep.subr.mxu0 0.0
    %10646 = vmatpush1.msra.mxu0 0.0
    %10647 = vmatprep.subr.mxu0 0.0
    %10648 = vmatpush1.msra.mxu0 0.0
    %10649 = vmatprep.subr.mxu0 0.0
    %10650 = vmatpush1.msra.mxu0 0.0
    %10651 = vmatprep.subr.mxu0 0.0
    %10652 = vmatpush1.msra.mxu0 0.0
    %10653 = vmatprep.subr.mxu0 0.0
    %10654 = vmatpush1.msra.mxu0 0.0
    %10655 = vmatprep.subr.mxu0 0.0
    %10656 = vmatpush1.msra.mxu0 0.0
    %10657 = vmatprep.subr.mxu0 0.0
    %10658 = vmatpush1.msra.mxu0 0.0
    %10659 = vmatprep.subr.mxu0 0.0
    %10660 = vmatpush1.msra.mxu0 0.0
    %10661 = vmatprep.subr.mxu0 0.0
    %10662 = vmatpush1.msra.mxu0 0.0
    %10663 = vmatprep.subr.mxu0 0.0
    %10664 = vmatpush1.msra.mxu0 0.0
    %10665 = vmatprep.subr.mxu0 0.0
    %10666 = vmatpush1.msra.mxu0 0.0
    %10667 = vmatprep.subr.mxu0 0.0
    %10668 = vmatpush1.msra.mxu0 0.0
    %10669 = vmatprep.subr.mxu0 0.0
    %10670 = vmatpush1.msra.mxu0 0.0
    %10671 = vmatprep.mubr.f32.mxu0 0.0
    %v10672 = vand.u32 %v10601, 4294901760
    %v10673 = vsub.f32 %v10601, %v10672
    %v10674 = vand.u32 %v10673, 4294901760
    %v10675 = vsub.f32 %v10673, %v10674
    %v10676 = vand.u32 %v10675, 4294901760
    %10677 = vmatmul.mubr.f32.gmra.mrb[0].mxu0 %v10676
    %v10678 = vpop.f32.mrb[0].mxu0
    %v10679 = vadd.f32 0.0, %v10678
    %v10680 = vpop.f32.mrb[0].mxu0
    %10681 = vmatprep.mubr.f32.mxu0 0.0
    %v10682 = vand.u32 %v10604, 4294901760
    %v10683 = vsub.f32 %v10604, %v10682
    %v10684 = vand.u32 %v10683, 4294901760
    %v10685 = vsub.f32 %v10683, %v10684
    %v10686 = vand.u32 %v10685, 4294901760
    %10687 = vmatmul.mubr.f32.gmra.mrb[0].mxu0 %v10686
    %v10688 = vpop.f32.mrb[0].mxu0
    %v10689 = vadd.f32 0.0, %v10688
    %v10690 = vpop.f32.mrb[0].mxu0
    %10691 = vdwg.mxu0
    %10692 = vmatprep.subr.mxu0 0.0
    %v10693 = vand.u32 %v1783, 4294901760
    %v10694 = vsub.f32 %v1783, %v10693
    %v10695 = vand.u32 %v10694, 4294901760
    %v10696 = vsub.f32 %v10694, %v10695
    %v10697 = vand.u32 %v10696, 4294901760
    %10698 = vmatpush1.msra.mxu0 %v10697
    %10699 = vmatprep.subr.mxu0 0.0
    %10700 = vmatpush1.msra.mxu0 0.0
    %10701 = vmatprep.subr.mxu0 0.0
    %10702 = vmatpush1.msra.mxu0 0.0
    %10703 = vmatprep.subr.mxu0 0.0
    %10704 = vmatpush1.msra.mxu0 0.0
    %10705 = vmatprep.subr.mxu0 0.0
    %10706 = vmatpush1.msra.mxu0 0.0
    %10707 = vmatprep.subr.mxu0 0.0
    %10708 = vmatpush1.msra.mxu0 0.0
    %10709 = vmatprep.subr.mxu0 0.0
    %10710 = vmatpush1.msra.mxu0 0.0
    %10711 = vmatprep.subr.mxu0 0.0
    %10712 = vmatpush1.msra.mxu0 0.0
    %10713 = vmatprep.subr.mxu0 0.0
    %10714 = vmatpush1.msra.mxu0 0.0
    %10715 = vmatprep.subr.mxu0 0.0
    %10716 = vmatpush1.msra.mxu0 0.0
    %10717 = vmatprep.subr.mxu0 0.0
    %10718 = vmatpush1.msra.mxu0 0.0
    %10719 = vmatprep.subr.mxu0 0.0
    %10720 = vmatpush1.msra.mxu0 0.0
    %10721 = vmatprep.subr.mxu0 0.0
    %10722 = vmatpush1.msra.mxu0 0.0
    %10723 = vmatprep.subr.mxu0 0.0
    %10724 = vmatpush1.msra.mxu0 0.0
    %10725 = vmatprep.subr.mxu0 0.0
    %10726 = vmatpush1.msra.mxu0 0.0
    %10727 = vmatprep.subr.mxu0 0.0
    %10728 = vmatpush1.msra.mxu0 0.0
    %10729 = vmatprep.subr.mxu0 0.0
    %10730 = vmatpush1.msra.mxu0 0.0
    %10731 = vmatprep.subr.mxu0 0.0
    %10732 = vmatpush1.msra.mxu0 0.0
    %10733 = vmatprep.subr.mxu0 0.0
    %10734 = vmatpush1.msra.mxu0 0.0
    %10735 = vmatprep.subr.mxu0 0.0
    %10736 = vmatpush1.msra.mxu0 0.0
    %10737 = vmatprep.subr.mxu0 0.0
    %10738 = vmatpush1.msra.mxu0 0.0
    %10739 = vmatprep.subr.mxu0 0.0
    %10740 = vmatpush1.msra.mxu0 0.0
    %10741 = vmatprep.subr.mxu0 0.0
    %10742 = vmatpush1.msra.mxu0 0.0
    %10743 = vmatprep.subr.mxu0 0.0
    %10744 = vmatpush1.msra.mxu0 0.0
    %10745 = vmatprep.subr.mxu0 0.0
    %10746 = vmatpush1.msra.mxu0 0.0
    %10747 = vmatprep.subr.mxu0 0.0
    %10748 = vmatpush1.msra.mxu0 0.0
    %10749 = vmatprep.subr.mxu0 0.0
    %10750 = vmatpush1.msra.mxu0 0.0
    %10751 = vmatprep.subr.mxu0 0.0
    %10752 = vmatpush1.msra.mxu0 0.0
    %10753 = vmatprep.subr.mxu0 0.0
    %10754 = vmatpush1.msra.mxu0 0.0
    %10755 = vmatprep.subr.mxu0 0.0
    %10756 = vmatpush1.msra.mxu0 0.0
    %10757 = vmatprep.subr.mxu0 0.0
    %10758 = vmatpush1.msra.mxu0 0.0
    %10759 = vmatprep.subr.mxu0 0.0
    %10760 = vmatpush1.msra.mxu0 0.0
    %10761 = vmatprep.mubr.f32.mxu0 0.0
    %v10762 = vand.u32 %v10601, 4294901760
    %10763 = vmatmul.mubr.f32.gmra.mrb[0].mxu0 %v10762
    %v10764 = vpop.f32.mrb[0].mxu0
    %v10765 = vadd.f32 %v10679, %v10764
    %v10766 = vpop.f32.mrb[0].mxu0
    %10767 = vmatprep.mubr.f32.mxu0 0.0
    %v10768 = vand.u32 %v10604, 4294901760
    %10769 = vmatmul.mubr.f32.gmra.mrb[0].mxu0 %v10768
    %v10770 = vpop.f32.mrb[0].mxu0
    %v10771 = vadd.f32 %v10689, %v10770
    %v10772 = vpop.f32.mrb[0].mxu0
    %10773 = vdwg.mxu0
    %10774 = vmatprep.subr.mxu0 0.0
    %v10775 = vand.u32 %v1783, 4294901760
    %v10776 = vsub.f32 %v1783, %v10775
    %10777 = vmatpush1.msra.mxu0 %v10776
    %10778 = vmatprep.subr.mxu0 0.0
    %10779 = vmatpush1.msra.mxu0 0.0
    %10780 = vmatprep.subr.mxu0 0.0
    %10781 = vmatpush1.msra.mxu0 0.0
    %10782 = vmatprep.subr.mxu0 0.0
    %10783 = vmatpush1.msra.mxu0 0.0
    %10784 = vmatprep.subr.mxu0 0.0
    %10785 = vmatpush1.msra.mxu0 0.0
    %10786 = vmatprep.subr.mxu0 0.0
    %10787 = vmatpush1.msra.mxu0 0.0
    %10788 = vmatprep.subr.mxu0 0.0
    %10789 = vmatpush1.msra.mxu0 0.0
    %10790 = vmatprep.subr.mxu0 0.0
    %10791 = vmatpush1.msra.mxu0 0.0
    %10792 = vmatprep.subr.mxu0 0.0
    %10793 = vmatpush1.msra.mxu0 0.0
    %10794 = vmatprep.subr.mxu0 0.0
    %10795 = vmatpush1.msra.mxu0 0.0
    %10796 = vmatprep.subr.mxu0 0.0
    %10797 = vmatpush1.msra.mxu0 0.0
    %10798 = vmatprep.subr.mxu0 0.0
    %10799 = vmatpush1.msra.mxu0 0.0
    %10800 = vmatprep.subr.mxu0 0.0
    %10801 = vmatpush1.msra.mxu0 0.0
    %10802 = vmatprep.subr.mxu0 0.0
    %10803 = vmatpush1.msra.mxu0 0.0
    %10804 = vmatprep.subr.mxu0 0.0
    %10805 = vmatpush1.msra.mxu0 0.0
    %10806 = vmatprep.subr.mxu0 0.0
    %10807 = vmatpush1.msra.mxu0 0.0
    %10808 = vmatprep.subr.mxu0 0.0
    %10809 = vmatpush1.msra.mxu0 0.0
    %10810 = vmatprep.subr.mxu0 0.0
    %10811 = vmatpush1.msra.mxu0 0.0
    %10812 = vmatprep.subr.mxu0 0.0
    %10813 = vmatpush1.msra.mxu0 0.0
    %10814 = vmatprep.subr.mxu0 0.0
    %10815 = vmatpush1.msra.mxu0 0.0
    %10816 = vmatprep.subr.mxu0 0.0
    %10817 = vmatpush1.msra.mxu0 0.0
    %10818 = vmatprep.subr.mxu0 0.0
    %10819 = vmatpush1.msra.mxu0 0.0
    %10820 = vmatprep.subr.mxu0 0.0
    %10821 = vmatpush1.msra.mxu0 0.0
    %10822 = vmatprep.subr.mxu0 0.0
    %10823 = vmatpush1.msra.mxu0 0.0
    %10824 = vmatprep.subr.mxu0 0.0
    %10825 = vmatpush1.msra.mxu0 0.0
    %10826 = vmatprep.subr.mxu0 0.0
    %10827 = vmatpush1.msra.mxu0 0.0
    %10828 = vmatprep.subr.mxu0 0.0
    %10829 = vmatpush1.msra.mxu0 0.0
    %10830 = vmatprep.subr.mxu0 0.0
    %10831 = vmatpush1.msra.mxu0 0.0
    %10832 = vmatprep.subr.mxu0 0.0
    %10833 = vmatpush1.msra.mxu0 0.0
    %10834 = vmatprep.subr.mxu0 0.0
    %10835 = vmatpush1.msra.mxu0 0.0
    %10836 = vmatprep.subr.mxu0 0.0
    %10837 = vmatpush1.msra.mxu0 0.0
    %10838 = vmatprep.subr.mxu0 0.0
    %10839 = vmatpush1.msra.mxu0 0.0
    %10840 = vmatprep.mubr.f32.mxu0 0.0
    %v10841 = vand.u32 %v10601, 4294901760
    %v10842 = vsub.f32 %v10601, %v10841
    %10843 = vmatmul.mubr.f32.gmra.mrb[0].mxu0 %v10842
    %v10844 = vpop.f32.mrb[0].mxu0
    %v10845 = vadd.f32 %v10765, %v10844
    %v10846 = vpop.f32.mrb[0].mxu0
    %10847 = vmatprep.mubr.f32.mxu0 0.0
    %v10848 = vand.u32 %v10604, 4294901760
    %v10849 = vsub.f32 %v10604, %v10848
    %10850 = vmatmul.mubr.f32.gmra.mrb[0].mxu0 %v10849
    %v10851 = vpop.f32.mrb[0].mxu0
    %v10852 = vadd.f32 %v10771, %v10851
    %v10853 = vpop.f32.mrb[0].mxu0
    %10854 = vdwg.mxu0
    %10855 = vmatprep.subr.mxu0 0.0
    %v10856 = vand.u32 %v1783, 4294901760
    %10857 = vmatpush1.msra.mxu0 %v10856
    %10858 = vmatprep.subr.mxu0 0.0
    %10859 = vmatpush1.msra.mxu0 0.0
    %10860 = vmatprep.subr.mxu0 0.0
    %10861 = vmatpush1.msra.mxu0 0.0
    %10862 = vmatprep.subr.mxu0 0.0
    %10863 = vmatpush1.msra.mxu0 0.0
    %10864 = vmatprep.subr.mxu0 0.0
    %10865 = vmatpush1.msra.mxu0 0.0
    %10866 = vmatprep.subr.mxu0 0.0
    %10867 = vmatpush1.msra.mxu0 0.0
    %10868 = vmatprep.subr.mxu0 0.0
    %10869 = vmatpush1.msra.mxu0 0.0
    %10870 = vmatprep.subr.mxu0 0.0
    %10871 = vmatpush1.msra.mxu0 0.0
    %10872 = vmatprep.subr.mxu0 0.0
    %10873 = vmatpush1.msra.mxu0 0.0
    %10874 = vmatprep.subr.mxu0 0.0
    %10875 = vmatpush1.msra.mxu0 0.0
    %10876 = vmatprep.subr.mxu0 0.0
    %10877 = vmatpush1.msra.mxu0 0.0
    %10878 = vmatprep.subr.mxu0 0.0
    %10879 = vmatpush1.msra.mxu0 0.0
    %10880 = vmatprep.subr.mxu0 0.0
    %10881 = vmatpush1.msra.mxu0 0.0
    %10882 = vmatprep.subr.mxu0 0.0
    %10883 = vmatpush1.msra.mxu0 0.0
    %10884 = vmatprep.subr.mxu0 0.0
    %10885 = vmatpush1.msra.mxu0 0.0
    %10886 = vmatprep.subr.mxu0 0.0
    %10887 = vmatpush1.msra.mxu0 0.0
    %10888 = vmatprep.subr.mxu0 0.0
    %10889 = vmatpush1.msra.mxu0 0.0
    %10890 = vmatprep.subr.mxu0 0.0
    %10891 = vmatpush1.msra.mxu0 0.0
    %10892 = vmatprep.subr.mxu0 0.0
    %10893 = vmatpush1.msra.mxu0 0.0
    %10894 = vmatprep.subr.mxu0 0.0
    %10895 = vmatpush1.msra.mxu0 0.0
    %10896 = vmatprep.subr.mxu0 0.0
    %10897 = vmatpush1.msra.mxu0 0.0
    %10898 = vmatprep.subr.mxu0 0.0
    %10899 = vmatpush1.msra.mxu0 0.0
    %10900 = vmatprep.subr.mxu0 0.0
    %10901 = vmatpush1.msra.mxu0 0.0
    %10902 = vmatprep.subr.mxu0 0.0
    %10903 = vmatpush1.msra.mxu0 0.0
    %10904 = vmatprep.subr.mxu0 0.0
    %10905 = vmatpush1.msra.mxu0 0.0
    %10906 = vmatprep.subr.mxu0 0.0
    %10907 = vmatpush1.msra.mxu0 0.0
    %10908 = vmatprep.subr.mxu0 0.0
    %10909 = vmatpush1.msra.mxu0 0.0
    %10910 = vmatprep.subr.mxu0 0.0
    %10911 = vmatpush1.msra.mxu0 0.0
    %10912 = vmatprep.subr.mxu0 0.0
    %10913 = vmatpush1.msra.mxu0 0.0
    %10914 = vmatprep.subr.mxu0 0.0
    %10915 = vmatpush1.msra.mxu0 0.0
    %10916 = vmatprep.subr.mxu0 0.0
    %10917 = vmatpush1.msra.mxu0 0.0
    %10918 = vmatprep.subr.mxu0 0.0
    %10919 = vmatpush1.msra.mxu0 0.0
    %10920 = vmatprep.mubr.f32.mxu0 0.0
    %v10921 = vand.u32 %v10601, 4294901760
    %v10922 = vsub.f32 %v10601, %v10921
    %v10923 = vand.u32 %v10922, 4294901760
    %10924 = vmatmul.mubr.f32.gmra.mrb[0].mxu0 %v10923
    %v10925 = vpop.f32.mrb[0].mxu0
    %v10926 = vadd.f32 %v10845, %v10925
    %v10927 = vpop.f32.mrb[0].mxu0
    %10928 = vmatprep.mubr.f32.mxu0 0.0
    %v10929 = vand.u32 %v10604, 4294901760
    %v10930 = vsub.f32 %v10604, %v10929
    %v10931 = vand.u32 %v10930, 4294901760
    %10932 = vmatmul.mubr.f32.gmra.mrb[0].mxu0 %v10931
    %v10933 = vpop.f32.mrb[0].mxu0
    %v10934 = vadd.f32 %v10852, %v10933
    %v10935 = vpop.f32.mrb[0].mxu0
    %10936 = vdwg.mxu0
    %10937 = vmatprep.subr.mxu0 0.0
    %v10938 = vand.u32 %v1783, 4294901760
    %v10939 = vsub.f32 %v1783, %v10938
    %v10940 = vand.u32 %v10939, 4294901760
    %10941 = vmatpush1.msra.mxu0 %v10940
    %10942 = vmatprep.subr.mxu0 0.0
    %10943 = vmatpush1.msra.mxu0 0.0
    %10944 = vmatprep.subr.mxu0 0.0
    %10945 = vmatpush1.msra.mxu0 0.0
    %10946 = vmatprep.subr.mxu0 0.0
    %10947 = vmatpush1.msra.mxu0 0.0
    %10948 = vmatprep.subr.mxu0 0.0
    %10949 = vmatpush1.msra.mxu0 0.0
    %10950 = vmatprep.subr.mxu0 0.0
    %10951 = vmatpush1.msra.mxu0 0.0
    %10952 = vmatprep.subr.mxu0 0.0
    %10953 = vmatpush1.msra.mxu0 0.0
    %10954 = vmatprep.subr.mxu0 0.0
    %10955 = vmatpush1.msra.mxu0 0.0
    %10956 = vmatprep.subr.mxu0 0.0
    %10957 = vmatpush1.msra.mxu0 0.0
    %10958 = vmatprep.subr.mxu0 0.0
    %10959 = vmatpush1.msra.mxu0 0.0
    %10960 = vmatprep.subr.mxu0 0.0
    %10961 = vmatpush1.msra.mxu0 0.0
    %10962 = vmatprep.subr.mxu0 0.0
    %10963 = vmatpush1.msra.mxu0 0.0
    %10964 = vmatprep.subr.mxu0 0.0
    %10965 = vmatpush1.msra.mxu0 0.0
    %10966 = vmatprep.subr.mxu0 0.0
    %10967 = vmatpush1.msra.mxu0 0.0
    %10968 = vmatprep.subr.mxu0 0.0
    %10969 = vmatpush1.msra.mxu0 0.0
    %10970 = vmatprep.subr.mxu0 0.0
    %10971 = vmatpush1.msra.mxu0 0.0
    %10972 = vmatprep.subr.mxu0 0.0
    %10973 = vmatpush1.msra.mxu0 0.0
    %10974 = vmatprep.subr.mxu0 0.0
    %10975 = vmatpush1.msra.mxu0 0.0
    %10976 = vmatprep.subr.mxu0 0.0
    %10977 = vmatpush1.msra.mxu0 0.0
    %10978 = vmatprep.subr.mxu0 0.0
    %10979 = vmatpush1.msra.mxu0 0.0
    %10980 = vmatprep.subr.mxu0 0.0
    %10981 = vmatpush1.msra.mxu0 0.0
    %10982 = vmatprep.subr.mxu0 0.0
    %10983 = vmatpush1.msra.mxu0 0.0
    %10984 = vmatprep.subr.mxu0 0.0
    %10985 = vmatpush1.msra.mxu0 0.0
    %10986 = vmatprep.subr.mxu0 0.0
    %10987 = vmatpush1.msra.mxu0 0.0
    %10988 = vmatprep.subr.mxu0 0.0
    %10989 = vmatpush1.msra.mxu0 0.0
    %10990 = vmatprep.subr.mxu0 0.0
    %10991 = vmatpush1.msra.mxu0 0.0
    %10992 = vmatprep.subr.mxu0 0.0
    %10993 = vmatpush1.msra.mxu0 0.0
    %10994 = vmatprep.subr.mxu0 0.0
    %10995 = vmatpush1.msra.mxu0 0.0
    %10996 = vmatprep.subr.mxu0 0.0
    %10997 = vmatpush1.msra.mxu0 0.0
    %10998 = vmatprep.subr.mxu0 0.0
    %10999 = vmatpush1.msra.mxu0 0.0
    %11000 = vmatprep.subr.mxu0 0.0
    %11001 = vmatpush1.msra.mxu0 0.0
    %11002 = vmatprep.subr.mxu0 0.0
    %11003 = vmatpush1.msra.mxu0 0.0
    %11004 = vmatprep.mubr.f32.mxu0 0.0
    %v11005 = vand.u32 %v10601, 4294901760
    %11006 = vmatmul.mubr.f32.gmra.mrb[0].mxu0 %v11005
    %v11007 = vpop.f32.mrb[0].mxu0
    %v11008 = vadd.f32 %v10926, %v11007
    %v11009 = vpop.f32.mrb[0].mxu0
    %11010 = vmatprep.mubr.f32.mxu0 0.0
    %v11011 = vand.u32 %v10604, 4294901760
    %11012 = vmatmul.mubr.f32.gmra.mrb[0].mxu0 %v11011
    %v11013 = vpop.f32.mrb[0].mxu0
    %v11014 = vadd.f32 %v10934, %v11013
    %v11015 = vpop.f32.mrb[0].mxu0
    %11016 = vdwg.mxu0
    %11017 = vmatprep.subr.mxu0 0.0
    %v11018 = vand.u32 %v1783, 4294901760
    %11019 = vmatpush1.msra.mxu0 %v11018
    %11020 = vmatprep.subr.mxu0 0.0
    %11021 = vmatpush1.msra.mxu0 0.0
    %11022 = vmatprep.subr.mxu0 0.0
    %11023 = vmatpush1.msra.mxu0 0.0
    %11024 = vmatprep.subr.mxu0 0.0
    %11025 = vmatpush1.msra.mxu0 0.0
    %11026 = vmatprep.subr.mxu0 0.0
    %11027 = vmatpush1.msra.mxu0 0.0
    %11028 = vmatprep.subr.mxu0 0.0
    %11029 = vmatpush1.msra.mxu0 0.0
    %11030 = vmatprep.subr.mxu0 0.0
    %11031 = vmatpush1.msra.mxu0 0.0
    %11032 = vmatprep.subr.mxu0 0.0
    %11033 = vmatpush1.msra.mxu0 0.0
    %11034 = vmatprep.subr.mxu0 0.0
    %11035 = vmatpush1.msra.mxu0 0.0
    %11036 = vmatprep.subr.mxu0 0.0
    %11037 = vmatpush1.msra.mxu0 0.0
    %11038 = vmatprep.subr.mxu0 0.0
    %11039 = vmatpush1.msra.mxu0 0.0
    %11040 = vmatprep.subr.mxu0 0.0
    %11041 = vmatpush1.msra.mxu0 0.0
    %11042 = vmatprep.subr.mxu0 0.0
    %11043 = vmatpush1.msra.mxu0 0.0
    %11044 = vmatprep.subr.mxu0 0.0
    %11045 = vmatpush1.msra.mxu0 0.0
    %11046 = vmatprep.subr.mxu0 0.0
    %11047 = vmatpush1.msra.mxu0 0.0
    %11048 = vmatprep.subr.mxu0 0.0
    %11049 = vmatpush1.msra.mxu0 0.0
    %11050 = vmatprep.subr.mxu0 0.0
    %11051 = vmatpush1.msra.mxu0 0.0
    %11052 = vmatprep.subr.mxu0 0.0
    %11053 = vmatpush1.msra.mxu0 0.0
    %11054 = vmatprep.subr.mxu0 0.0
    %11055 = vmatpush1.msra.mxu0 0.0
    %11056 = vmatprep.subr.mxu0 0.0
    %11057 = vmatpush1.msra.mxu0 0.0
    %11058 = vmatprep.subr.mxu0 0.0
    %11059 = vmatpush1.msra.mxu0 0.0
    %11060 = vmatprep.subr.mxu0 0.0
    %11061 = vmatpush1.msra.mxu0 0.0
    %11062 = vmatprep.subr.mxu0 0.0
    %11063 = vmatpush1.msra.mxu0 0.0
    %11064 = vmatprep.subr.mxu0 0.0
    %11065 = vmatpush1.msra.mxu0 0.0
    %11066 = vmatprep.subr.mxu0 0.0
    %11067 = vmatpush1.msra.mxu0 0.0
    %11068 = vmatprep.subr.mxu0 0.0
    %11069 = vmatpush1.msra.mxu0 0.0
    %11070 = vmatprep.subr.mxu0 0.0
    %11071 = vmatpush1.msra.mxu0 0.0
    %11072 = vmatprep.subr.mxu0 0.0
    %11073 = vmatpush1.msra.mxu0 0.0
    %11074 = vmatprep.subr.mxu0 0.0
    %11075 = vmatpush1.msra.mxu0 0.0
    %11076 = vmatprep.subr.mxu0 0.0
    %11077 = vmatpush1.msra.mxu0 0.0
    %11078 = vmatprep.subr.mxu0 0.0
    %11079 = vmatpush1.msra.mxu0 0.0
    %11080 = vmatprep.subr.mxu0 0.0
    %11081 = vmatpush1.msra.mxu0 0.0
    %11082 = vmatprep.mubr.f32.mxu0 0.0
    %v11083 = vand.u32 %v10601, 4294901760
    %11084 = vmatmul.mubr.f32.gmra.mrb[0].mxu0 %v11083
    %v11085 = vpop.f32.mrb[0].mxu0
    %v11086 = vadd.f32 %v11008, %v11085
    %v11087 = vpop.f32.mrb[0].mxu0
    %11088 = vmatprep.mubr.f32.mxu0 0.0
    %v11089 = vand.u32 %v10604, 4294901760
    %11090 = vmatmul.mubr.f32.gmra.mrb[0].mxu0 %v11089
    %v11091 = vpop.f32.mrb[0].mxu0
    %v11092 = vadd.f32 %v11014, %v11091
    %v11093 = vpop.f32.mrb[0].mxu0
    %11094 = vdwg.mxu0
    %v11095 = vadd.f32 %v8764, %v11086
    %v11096 = vadd.f32 %v8765, %v11092
    %v11097 = vld [vmem:[%s11] sm:$0x1]
    %v11099 = vlaneseq
    %v11100 = vshrl.u32 %v11099, 7
    %v11101 = vsub.s32 0, %v11100
    %v11102 = vrot.slane %v11097, %v11101
    %v11104 = vadd.f32 %v11095, %v11102
    %v11105 = vadd.f32 %v11096, %v11102
    %11106 = vst.msk [vmem:[#allocation13] sm:$0xff] %vm137, %v11104
    %11107 = vst.msk [vmem:[#allocation13 + $0x8] sm:$0xff] %vm137, %v11105
    // Predicated region
    $region74: #{tpu_custom_call.1} parent=1 // pred_check
      _
    $region75: #{tpu_custom_call.1} parent=1 // pred_check_branch
      %11109 = sbr.rel (0) target = $region77
    $region76: #{tpu_custom_call.1} parent=1 // pred_region
      %s11111 = ssub.s32 256, 256
      %11112 = vsyncadd [#allocation4], %s11111
      %s11113 = sshll.u32 [#allocation13], 4
      %s11114 = int_to_ptr.vmem [resolvable:$true] %s11113
      %11119 = dma.vmem_to_hbm [thread:$0]  %s11114, 256, %s12, [#allocation4], 128, 128, 8
    $region77: #{tpu_custom_call.1} parent=1 // pred_fallthru
      _
    // Predicated region
    $region78: #{tpu_custom_call.1} parent=1 // pred_check
      _
    $region79: #{tpu_custom_call.1} parent=1 // pred_check_branch
      %11121 = sbr.rel (0) target = $region81
    $region80: #{tpu_custom_call.1} parent=1 // pred_region
      %11122 = dma.done [#allocation4], 256
    $region81: #{tpu_custom_call.1} parent=1 // pred_fallthru
      _
    %11123 = vsyncpa [#allocation3], 1
    %11124 = vsyncpa [#allocation6], 1
    %11125 = vsyncpa [#allocation9], 1
    %11126 = vsyncpa [#allocation12], 1
    %11127 = vsyncpa [#allocation4], 1

</llo_original>
